<compile_context>
chip_gen: v7x
topology: tpu7x:2x2x1
jax: 0.10.0
libtpu: 0.0.40
codegen_flags: <defaults>
</compile_context>

<pallas_src>
import functools

import jax
import jax.numpy as jnp
from jax.experimental import pallas as pl
from jax.experimental.pallas import tpu as pltpu


# ------------------------------ Pallas kernel -------------------------------

def _rcab_kernel(x_ref, w1_ref, b1_ref, w2_ref, b2_ref,
                 wd1_ref, bd1_ref, wd2_ref, bd2_ref, o_ref,
                 hp_ref, col_ref, *, H, W, C, K):
    """Fused RCAB forward for one sample.

    x_ref  : (1, H, W, C) f32   input (conv1 source and residual)
    w1_ref : (K*K*C, C)   bf16  conv1 weight, rows ordered (ky, kx, cin)
    b1_ref : (1, C)       f32
    w2_ref : (K*K*C, C)   bf16  conv2 weight
    b2_ref : (1, C)       f32
    wd1_ref: (Cr, C) f32  bd1_ref: (Cr, 1) f32   (CA squeeze 1x1 conv)
    wd2_ref: (Cr, C) f32  bd2_ref: (1, C)  f32   (CA excite 1x1 conv, pre-transposed)
    o_ref  : (1, H, W, C) f32
    hp_ref : VMEM (H+K-1, W+K-1, C) bf16  zero-haloed activation scratch
    col_ref: VMEM (H*W, K*K*C)      bf16  im2col scratch
    """
    pad = K // 2
    HP, WP = H + K - 1, W + K - 1

    # Zero the halo scratch every step (borders must be zero on every core /
    # every grid step; the interior is fully overwritten below).  VMEM-only,
    # so this is a handful of store bundles, not HBM traffic.
    hp_ref[...] = jnp.zeros((HP, WP, C), jnp.bfloat16)

    x = x_ref[0]                                               # (H, W, C) f32
    hp_ref[pl.ds(pad, H), pl.ds(pad, W), :] = x.astype(jnp.bfloat16)

    def im2col():
        # Pack the K*K shifted windows of the halo'd activation into the
        # (H*W, K*K*C) scratch so each conv is a single K*K*C-deep MXU dot.
        for ky in range(K):
            for kx in range(K):
                col_ref[:, pl.ds((ky * K + kx) * C, C)] = (
                    hp_ref[pl.ds(ky, H), pl.ds(kx, W), :].reshape(H * W, C))

    # ---- conv1 + bias + ReLU (activation stays in VMEM, re-haloed in place).
    im2col()
    y1 = jnp.dot(col_ref[...], w1_ref[...], preferred_element_type=jnp.float32)
    y1 = jnp.maximum(y1 + b1_ref[...], 0.0)                    # (H*W, C) f32
    hp_ref[pl.ds(pad, H), pl.ds(pad, W), :] = (
        y1.reshape(H, W, C).astype(jnp.bfloat16))

    # ---- conv2 + bias.
    im2col()
    res = jnp.dot(col_ref[...], w2_ref[...],
                  preferred_element_type=jnp.float32) + b2_ref[...]   # (H*W, C)

    # ---- Channel attention: global avg pool -> 1x1 -> ReLU -> 1x1 -> sigmoid.
    pooled = jnp.mean(res, axis=0, keepdims=True)                     # (1, C)
    hid = jnp.maximum(
        jnp.sum(pooled * wd1_ref[...], axis=1, keepdims=True) + bd1_ref[...],
        0.0)                                                          # (Cr, 1)
    logits = (jnp.sum(hid * wd2_ref[...], axis=0, keepdims=True)
              + bd2_ref[...])                                         # (1, C)
    att = pl.reciprocal(1.0 + jnp.exp(-logits), approx=True)          # sigmoid

    # ---- gate + residual add.
    out = res * att + x.reshape(H * W, C)
    o_ref[...] = out.reshape(1, H, W, C).astype(o_ref.dtype)


# -------------------------------- wrapper -----------------------------------

def _conv_weight_to_mat(w):
    """PyTorch Conv2d weight (Cout, Cin, K, K) -> (K*K*Cin, Cout), rows (ky, kx, cin)."""
    cout, cin, k, _ = w.shape
    return jnp.transpose(w, (2, 3, 1, 0)).reshape(k * k * cin, cout)


def rcab_forward(x, p):
    """RCAB forward. x: (N, C, H, W) f32 -> (N, C, H, W) f32."""
    n, c, h, w = x.shape
    k = p['w_conv1'].shape[2]
    cr = p['w_du1'].shape[0]

    x_nhwc = jnp.transpose(x, (0, 2, 3, 1)).astype(jnp.float32)

    w1 = _conv_weight_to_mat(p['w_conv1']).astype(jnp.bfloat16)
    w2 = _conv_weight_to_mat(p['w_conv2']).astype(jnp.bfloat16)
    b1 = p['b_conv1'].reshape(1, c).astype(jnp.float32)
    b2 = p['b_conv2'].reshape(1, c).astype(jnp.float32)
    wd1 = p['w_du1'].reshape(cr, c).astype(jnp.float32)          # [j, c]
    bd1 = p['b_du1'].reshape(cr, 1).astype(jnp.float32)
    wd2 = p['w_du2'].reshape(c, cr).T.astype(jnp.float32)        # [j, c] = W2[c, j]
    bd2 = p['b_du2'].reshape(1, c).astype(jnp.float32)

    kern = functools.partial(_rcab_kernel, H=h, W=w, C=c, K=k)
    rep = lambda i: (0, 0)                                       # replicated blocks

    out_nhwc = pl.pallas_call(
        kern,
        out_shape=jax.ShapeDtypeStruct((n, h, w, c), jnp.float32),
        grid=(n,),
        in_specs=[
            pl.BlockSpec((1, h, w, c), lambda i: (i, 0, 0, 0)),  # x
            pl.BlockSpec((k * k * c, c), rep),                   # w1
            pl.BlockSpec((1, c), rep),                           # b1
            pl.BlockSpec((k * k * c, c), rep),                   # w2
            pl.BlockSpec((1, c), rep),                           # b2
            pl.BlockSpec((cr, c), rep),                          # wd1
            pl.BlockSpec((cr, 1), rep),                          # bd1
            pl.BlockSpec((cr, c), rep),                          # wd2
            pl.BlockSpec((1, c), rep),                           # bd2
        ],
        out_specs=pl.BlockSpec((1, h, w, c), lambda i: (i, 0, 0, 0)),
        scratch_shapes=[
            pltpu.VMEM((h + k - 1, w + k - 1, c), jnp.bfloat16),  # halo'd act
            pltpu.VMEM((h * w, k * k * c), jnp.bfloat16),         # im2col
        ],
        compiler_params=pltpu.CompilerParams(
            dimension_semantics=("parallel",)),
    )(x_nhwc, w1, b1, w2, b2, wd1, bd1, wd2, bd2)

    return jnp.transpose(out_nhwc, (0, 3, 1, 2))


# ------------------------------- reference ----------------------------------

def rcab_reference(x, p):
    """Pure-JAX (lax.conv) RCAB reference for a numeric sanity check."""
    dn = ('NCHW', 'OIHW', 'NCHW')
    k = p['w_conv1'].shape[2]
    pad = k // 2
    pads = [(pad, pad), (pad, pad)]
    h = jax.lax.conv_general_dilated(x, p['w_conv1'], (1, 1), pads,
                                     dimension_numbers=dn)
    h = jnp.maximum(h + p['b_conv1'][None, :, None, None], 0.0)
    r = jax.lax.conv_general_dilated(h, p['w_conv2'], (1, 1), pads,
                                     dimension_numbers=dn)
    r = r + p['b_conv2'][None, :, None, None]
    pooled = jnp.mean(r, axis=(2, 3), keepdims=True)
    hid = jax.lax.conv_general_dilated(pooled, p['w_du1'], (1, 1),
                                       [(0, 0), (0, 0)], dimension_numbers=dn)
    hid = jnp.maximum(hid + p['b_du1'][None, :, None, None], 0.0)
    att = jax.lax.conv_general_dilated(hid, p['w_du2'], (1, 1),
                                       [(0, 0), (0, 0)], dimension_numbers=dn)
    att = jax.nn.sigmoid(att + p['b_du2'][None, :, None, None])
    return r * att + x


# ----------------------------- params / main --------------------------------

def init_params(n_feat, ksize, reduction, key):
    cr = max(n_feat // reduction, 1)
    ks = jax.random.split(key, 8)

    def wn(k, shape, fan_in):
        return jax.random.normal(k, shape, jnp.float32) / jnp.sqrt(float(fan_in))

    p = {}
    p['w_conv1'] = wn(ks[0], (n_feat, n_feat, ksize, ksize), n_feat * ksize * ksize)
    p['b_conv1'] = 0.1 * jax.random.normal(ks[1], (n_feat,), jnp.float32)
    p['w_conv2'] = wn(ks[2], (n_feat, n_feat, ksize, ksize), n_feat * ksize * ksize)
    p['b_conv2'] = 0.1 * jax.random.normal(ks[3], (n_feat,), jnp.float32)
    p['w_du1'] = wn(ks[4], (cr, n_feat, 1, 1), n_feat)       # Conv2d(C, C//r, 1)
    p['b_du1'] = 0.1 * jax.random.normal(ks[5], (cr,), jnp.float32)
    p['w_du2'] = wn(ks[6], (n_feat, cr, 1, 1), cr)           # Conv2d(C//r, C, 1)
    p['b_du2'] = 0.1 * jax.random.normal(ks[7], (n_feat,), jnp.float32)
    return p


if __name__ == "__main__":
    key = jax.random.PRNGKey(0)
    kx, kp = jax.random.split(key)
    n_feat, kernel_size, reduction = 32, 3, 16
    x = jax.random.normal(kx, (2, n_feat, 16, 16), jnp.float32)
    params = init_params(n_feat, kernel_size, reduction, kp)

    out = jax.jit(rcab_forward)(x, params)
    out = jax.block_until_ready(out)
    assert out.shape == x.shape and out.dtype == jnp.float32
    assert bool(jnp.all(jnp.isfinite(out)))

    # Loose tolerance: conv inputs are bf16 on the MXU (f32 accumulation).
    ref = rcab_reference(x, params)
    max_err = float(jnp.max(jnp.abs(out - ref)))
    assert max_err < 0.2, f"mismatch vs reference: max abs err {max_err}"
    print("KERNEL_OK")
</pallas_src>

<mosaic_0001>
module attributes {stable_mosaic.version = 11 : i64} {
  func.func @_rcab_kernel(%arg0: i32, %arg1: memref<1x16x16x32xf32, #tpu.memory_space<vmem>>, %arg2: memref<288x32xbf16, #tpu.memory_space<vmem>>, %arg3: memref<1x32xf32, #tpu.memory_space<vmem>>, %arg4: memref<288x32xbf16, #tpu.memory_space<vmem>>, %arg5: memref<1x32xf32, #tpu.memory_space<vmem>>, %arg6: memref<2x32xf32, #tpu.memory_space<vmem>>, %arg7: memref<2x1xf32, #tpu.memory_space<vmem>>, %arg8: memref<2x32xf32, #tpu.memory_space<vmem>>, %arg9: memref<1x32xf32, #tpu.memory_space<vmem>>, %arg10: memref<1x16x16x32xf32, #tpu.memory_space<vmem>>, %arg11: memref<18x18x32xbf16, #tpu.memory_space<vmem>>, %arg12: memref<256x288xbf16, #tpu.memory_space<vmem>>) attributes {dimension_semantics = [#tpu.dimension_semantics<parallel>], iteration_bounds = array<i64: 2>, scalar_prefetch = 0 : i64, scratch_operands = 2 : i64, tpu.core_type = #tpu.core_type<tc>, window_params = [{transform_indices = @transform_0, window_bounds = array<i64: 1, 16, 16, 32>}, {pipeline_mode = #tpu.pipeline_mode<synchronous>, transform_indices = @transform_1, window_bounds = array<i64: 288, 32>}, {pipeline_mode = #tpu.pipeline_mode<synchronous>, transform_indices = @transform_2, window_bounds = array<i64: 1, 32>}, {pipeline_mode = #tpu.pipeline_mode<synchronous>, transform_indices = @transform_3, window_bounds = array<i64: 288, 32>}, {pipeline_mode = #tpu.pipeline_mode<synchronous>, transform_indices = @transform_4, window_bounds = array<i64: 1, 32>}, {pipeline_mode = #tpu.pipeline_mode<synchronous>, transform_indices = @transform_5, window_bounds = array<i64: 2, 32>}, {pipeline_mode = #tpu.pipeline_mode<synchronous>, transform_indices = @transform_6, window_bounds = array<i64: 2, 1>}, {pipeline_mode = #tpu.pipeline_mode<synchronous>, transform_indices = @transform_7, window_bounds = array<i64: 2, 32>}, {pipeline_mode = #tpu.pipeline_mode<synchronous>, transform_indices = @transform_8, window_bounds = array<i64: 1, 32>}, {transform_indices = @transform_9, window_bounds = array<i64: 1, 16, 16, 32>}]} {
    %cst = arith.constant 0.000000e+00 : bf16
    %0 = vector.broadcast %cst : bf16 to vector<18x18x32xbf16>
    %c0 = arith.constant 0 : index
    %c0_0 = arith.constant 0 : index
    %c0_1 = arith.constant 0 : index
    %1 = vector.load %arg11[%c0, %c0_0, %c0_1] : memref<18x18x32xbf16, #tpu.memory_space<vmem>>, vector<18x18x32xbf16>
    tpu.vector_store %arg11[%c0, %c0_0, %c0_1], %0 {strides = array<i32>} : memref<18x18x32xbf16, #tpu.memory_space<vmem>>, vector<18x18x32xbf16>,
    %c0_2 = arith.constant 0 : index
    %c0_3 = arith.constant 0 : index
    %c0_4 = arith.constant 0 : index
    %c0_5 = arith.constant 0 : index
    %2 = vector.load %arg1[%c0_2, %c0_3, %c0_4, %c0_5] : memref<1x16x16x32xf32, #tpu.memory_space<vmem>>, vector<1x16x16x32xf32>
    %3 = vector.shape_cast %2 : vector<1x16x16x32xf32> to vector<16x16x32xf32>
    %4 = arith.truncf %3 : vector<16x16x32xf32> to vector<16x16x32xbf16>
    %c1 = arith.constant 1 : index
    %c1_6 = arith.constant 1 : index
    %c0_7 = arith.constant 0 : index
    %5 = vector.load %arg11[%c1, %c1_6, %c0_7] : memref<18x18x32xbf16, #tpu.memory_space<vmem>>, vector<16x16x32xbf16>
    tpu.vector_store %arg11[%c1, %c1_6, %c0_7], %4 {strides = array<i32>} : memref<18x18x32xbf16, #tpu.memory_space<vmem>>, vector<16x16x32xbf16>,
    %c0_8 = arith.constant 0 : index
    %c0_9 = arith.constant 0 : index
    %c0_10 = arith.constant 0 : index
    %6 = vector.load %arg11[%c0_8, %c0_9, %c0_10] : memref<18x18x32xbf16, #tpu.memory_space<vmem>>, vector<16x16x32xbf16>
    %7 = vector.shape_cast %6 : vector<16x16x32xbf16> to vector<256x32xbf16>
    %c0_11 = arith.constant 0 : index
    %c0_12 = arith.constant 0 : index
    %8 = vector.load %arg12[%c0_11, %c0_12] : memref<256x288xbf16, #tpu.memory_space<vmem>>, vector<256x32xbf16>
    tpu.vector_store %arg12[%c0_11, %c0_12], %7 {strides = array<i32>} : memref<256x288xbf16, #tpu.memory_space<vmem>>, vector<256x32xbf16>,
    %c0_13 = arith.constant 0 : index
    %c1_14 = arith.constant 1 : index
    %c0_15 = arith.constant 0 : index
    %9 = vector.load %arg11[%c0_13, %c1_14, %c0_15] : memref<18x18x32xbf16, #tpu.memory_space<vmem>>, vector<16x16x32xbf16>
    %10 = vector.shape_cast %9 : vector<16x16x32xbf16> to vector<256x32xbf16>
    %c0_16 = arith.constant 0 : index
    %c32 = arith.constant 32 : index
    %11 = vector.load %arg12[%c0_16, %c32] : memref<256x288xbf16, #tpu.memory_space<vmem>>, vector<256x32xbf16>
    tpu.vector_store %arg12[%c0_16, %c32], %10 {strides = array<i32>} : memref<256x288xbf16, #tpu.memory_space<vmem>>, vector<256x32xbf16>,
    %c0_17 = arith.constant 0 : index
    %c2 = arith.constant 2 : index
    %c0_18 = arith.constant 0 : index
    %12 = vector.load %arg11[%c0_17, %c2, %c0_18] : memref<18x18x32xbf16, #tpu.memory_space<vmem>>, vector<16x16x32xbf16>
    %13 = vector.shape_cast %12 : vector<16x16x32xbf16> to vector<256x32xbf16>
    %c0_19 = arith.constant 0 : index
    %c64 = arith.constant 64 : index
    %14 = vector.load %arg12[%c0_19, %c64] : memref<256x288xbf16, #tpu.memory_space<vmem>>, vector<256x32xbf16>
    tpu.vector_store %arg12[%c0_19, %c64], %13 {strides = array<i32>} : memref<256x288xbf16, #tpu.memory_space<vmem>>, vector<256x32xbf16>,
    %c1_20 = arith.constant 1 : index
    %c0_21 = arith.constant 0 : index
    %c0_22 = arith.constant 0 : index
    %15 = vector.load %arg11[%c1_20, %c0_21, %c0_22] : memref<18x18x32xbf16, #tpu.memory_space<vmem>>, vector<16x16x32xbf16>
    %16 = vector.shape_cast %15 : vector<16x16x32xbf16> to vector<256x32xbf16>
    %c0_23 = arith.constant 0 : index
    %c96 = arith.constant 96 : index
    %17 = vector.load %arg12[%c0_23, %c96] : memref<256x288xbf16, #tpu.memory_space<vmem>>, vector<256x32xbf16>
    tpu.vector_store %arg12[%c0_23, %c96], %16 {strides = array<i32>} : memref<256x288xbf16, #tpu.memory_space<vmem>>, vector<256x32xbf16>,
    %c1_24 = arith.constant 1 : index
    %c1_25 = arith.constant 1 : index
    %c0_26 = arith.constant 0 : index
    %18 = vector.load %arg11[%c1_24, %c1_25, %c0_26] : memref<18x18x32xbf16, #tpu.memory_space<vmem>>, vector<16x16x32xbf16>
    %19 = vector.shape_cast %18 : vector<16x16x32xbf16> to vector<256x32xbf16>
    %c0_27 = arith.constant 0 : index
    %c128 = arith.constant 128 : index
    %20 = vector.load %arg12[%c0_27, %c128] : memref<256x288xbf16, #tpu.memory_space<vmem>>, vector<256x32xbf16>
    tpu.vector_store %arg12[%c0_27, %c128], %19 {strides = array<i32>} : memref<256x288xbf16, #tpu.memory_space<vmem>>, vector<256x32xbf16>,
    %c1_28 = arith.constant 1 : index
    %c2_29 = arith.constant 2 : index
    %c0_30 = arith.constant 0 : index
    %21 = vector.load %arg11[%c1_28, %c2_29, %c0_30] : memref<18x18x32xbf16, #tpu.memory_space<vmem>>, vector<16x16x32xbf16>
    %22 = vector.shape_cast %21 : vector<16x16x32xbf16> to vector<256x32xbf16>
    %c0_31 = arith.constant 0 : index
    %c160 = arith.constant 160 : index
    %23 = vector.load %arg12[%c0_31, %c160] : memref<256x288xbf16, #tpu.memory_space<vmem>>, vector<256x32xbf16>
    tpu.vector_store %arg12[%c0_31, %c160], %22 {strides = array<i32>} : memref<256x288xbf16, #tpu.memory_space<vmem>>, vector<256x32xbf16>,
    %c2_32 = arith.constant 2 : index
    %c0_33 = arith.constant 0 : index
    %c0_34 = arith.constant 0 : index
    %24 = vector.load %arg11[%c2_32, %c0_33, %c0_34] : memref<18x18x32xbf16, #tpu.memory_space<vmem>>, vector<16x16x32xbf16>
    %25 = vector.shape_cast %24 : vector<16x16x32xbf16> to vector<256x32xbf16>
    %c0_35 = arith.constant 0 : index
    %c192 = arith.constant 192 : index
    %26 = vector.load %arg12[%c0_35, %c192] : memref<256x288xbf16, #tpu.memory_space<vmem>>, vector<256x32xbf16>
    tpu.vector_store %arg12[%c0_35, %c192], %25 {strides = array<i32>} : memref<256x288xbf16, #tpu.memory_space<vmem>>, vector<256x32xbf16>,
    %c2_36 = arith.constant 2 : index
    %c1_37 = arith.constant 1 : index
    %c0_38 = arith.constant 0 : index
    %27 = vector.load %arg11[%c2_36, %c1_37, %c0_38] : memref<18x18x32xbf16, #tpu.memory_space<vmem>>, vector<16x16x32xbf16>
    %28 = vector.shape_cast %27 : vector<16x16x32xbf16> to vector<256x32xbf16>
    %c0_39 = arith.constant 0 : index
    %c224 = arith.constant 224 : index
    %29 = vector.load %arg12[%c0_39, %c224] : memref<256x288xbf16, #tpu.memory_space<vmem>>, vector<256x32xbf16>
    tpu.vector_store %arg12[%c0_39, %c224], %28 {strides = array<i32>} : memref<256x288xbf16, #tpu.memory_space<vmem>>, vector<256x32xbf16>,
    %c2_40 = arith.constant 2 : index
    %c2_41 = arith.constant 2 : index
    %c0_42 = arith.constant 0 : index
    %30 = vector.load %arg11[%c2_40, %c2_41, %c0_42] : memref<18x18x32xbf16, #tpu.memory_space<vmem>>, vector<16x16x32xbf16>
    %31 = vector.shape_cast %30 : vector<16x16x32xbf16> to vector<256x32xbf16>
    %c0_43 = arith.constant 0 : index
    %c256 = arith.constant 256 : index
    %32 = vector.load %arg12[%c0_43, %c256] : memref<256x288xbf16, #tpu.memory_space<vmem>>, vector<256x32xbf16>
    tpu.vector_store %arg12[%c0_43, %c256], %31 {strides = array<i32>} : memref<256x288xbf16, #tpu.memory_space<vmem>>, vector<256x32xbf16>,
    %c0_44 = arith.constant 0 : index
    %c0_45 = arith.constant 0 : index
    %33 = vector.load %arg12[%c0_44, %c0_45] : memref<256x288xbf16, #tpu.memory_space<vmem>>, vector<256x288xbf16>
    %c0_46 = arith.constant 0 : index
    %c0_47 = arith.constant 0 : index
    %34 = vector.load %arg2[%c0_46, %c0_47] : memref<288x32xbf16, #tpu.memory_space<vmem>>, vector<288x32xbf16>
    %cst_48 = arith.constant dense<0.000000e+00> : vector<256x32xf32>
    %35 = tpu.matmul %33, %34, %cst_48 {dimension_numbers = #tpu.dot_dimension_numbers<[1], [0], [0], [1], [0, 0, 1, 1], [], []>} : vector<256x288xbf16>, vector<288x32xbf16>, vector<256x32xf32> -> vector<256x32xf32>
    %c0_49 = arith.constant 0 : index
    %c0_50 = arith.constant 0 : index
    %36 = vector.load %arg3[%c0_49, %c0_50] : memref<1x32xf32, #tpu.memory_space<vmem>>, vector<1x32xf32>
    %37 = vector.broadcast %36 : vector<1x32xf32> to vector<256x32xf32>
    %38 = arith.addf %35, %37 : vector<256x32xf32>
    %cst_51 = arith.constant 0.000000e+00 : f32
    %39 = vector.broadcast %cst_51 : f32 to vector<256x32xf32>
    %40 = arith.maximumf %38, %39 : vector<256x32xf32>
    %41 = vector.shape_cast %40 : vector<256x32xf32> to vector<16x16x32xf32>
    %42 = arith.truncf %41 : vector<16x16x32xf32> to vector<16x16x32xbf16>
    %c1_52 = arith.constant 1 : index
    %c1_53 = arith.constant 1 : index
    %c0_54 = arith.constant 0 : index
    %43 = vector.load %arg11[%c1_52, %c1_53, %c0_54] : memref<18x18x32xbf16, #tpu.memory_space<vmem>>, vector<16x16x32xbf16>
    tpu.vector_store %arg11[%c1_52, %c1_53, %c0_54], %42 {strides = array<i32>} : memref<18x18x32xbf16, #tpu.memory_space<vmem>>, vector<16x16x32xbf16>,
    %c0_55 = arith.constant 0 : index
    %c0_56 = arith.constant 0 : index
    %c0_57 = arith.constant 0 : index
    %44 = vector.load %arg11[%c0_55, %c0_56, %c0_57] : memref<18x18x32xbf16, #tpu.memory_space<vmem>>, vector<16x16x32xbf16>
    %45 = vector.shape_cast %44 : vector<16x16x32xbf16> to vector<256x32xbf16>
    %c0_58 = arith.constant 0 : index
    %c0_59 = arith.constant 0 : index
    %46 = vector.load %arg12[%c0_58, %c0_59] : memref<256x288xbf16, #tpu.memory_space<vmem>>, vector<256x32xbf16>
    tpu.vector_store %arg12[%c0_58, %c0_59], %45 {strides = array<i32>} : memref<256x288xbf16, #tpu.memory_space<vmem>>, vector<256x32xbf16>,
    %c0_60 = arith.constant 0 : index
    %c1_61 = arith.constant 1 : index
    %c0_62 = arith.constant 0 : index
    %47 = vector.load %arg11[%c0_60, %c1_61, %c0_62] : memref<18x18x32xbf16, #tpu.memory_space<vmem>>, vector<16x16x32xbf16>
    %48 = vector.shape_cast %47 : vector<16x16x32xbf16> to vector<256x32xbf16>
    %c0_63 = arith.constant 0 : index
    %c32_64 = arith.constant 32 : index
    %49 = vector.load %arg12[%c0_63, %c32_64] : memref<256x288xbf16, #tpu.memory_space<vmem>>, vector<256x32xbf16>
    tpu.vector_store %arg12[%c0_63, %c32_64], %48 {strides = array<i32>} : memref<256x288xbf16, #tpu.memory_space<vmem>>, vector<256x32xbf16>,
    %c0_65 = arith.constant 0 : index
    %c2_66 = arith.constant 2 : index
    %c0_67 = arith.constant 0 : index
    %50 = vector.load %arg11[%c0_65, %c2_66, %c0_67] : memref<18x18x32xbf16, #tpu.memory_space<vmem>>, vector<16x16x32xbf16>
    %51 = vector.shape_cast %50 : vector<16x16x32xbf16> to vector<256x32xbf16>
    %c0_68 = arith.constant 0 : index
    %c64_69 = arith.constant 64 : index
    %52 = vector.load %arg12[%c0_68, %c64_69] : memref<256x288xbf16, #tpu.memory_space<vmem>>, vector<256x32xbf16>
    tpu.vector_store %arg12[%c0_68, %c64_69], %51 {strides = array<i32>} : memref<256x288xbf16, #tpu.memory_space<vmem>>, vector<256x32xbf16>,
    %c1_70 = arith.constant 1 : index
    %c0_71 = arith.constant 0 : index
    %c0_72 = arith.constant 0 : index
    %53 = vector.load %arg11[%c1_70, %c0_71, %c0_72] : memref<18x18x32xbf16, #tpu.memory_space<vmem>>, vector<16x16x32xbf16>
    %54 = vector.shape_cast %53 : vector<16x16x32xbf16> to vector<256x32xbf16>
    %c0_73 = arith.constant 0 : index
    %c96_74 = arith.constant 96 : index
    %55 = vector.load %arg12[%c0_73, %c96_74] : memref<256x288xbf16, #tpu.memory_space<vmem>>, vector<256x32xbf16>
    tpu.vector_store %arg12[%c0_73, %c96_74], %54 {strides = array<i32>} : memref<256x288xbf16, #tpu.memory_space<vmem>>, vector<256x32xbf16>,
    %c1_75 = arith.constant 1 : index
    %c1_76 = arith.constant 1 : index
    %c0_77 = arith.constant 0 : index
    %56 = vector.load %arg11[%c1_75, %c1_76, %c0_77] : memref<18x18x32xbf16, #tpu.memory_space<vmem>>, vector<16x16x32xbf16>
    %57 = vector.shape_cast %56 : vector<16x16x32xbf16> to vector<256x32xbf16>
    %c0_78 = arith.constant 0 : index
    %c128_79 = arith.constant 128 : index
    %58 = vector.load %arg12[%c0_78, %c128_79] : memref<256x288xbf16, #tpu.memory_space<vmem>>, vector<256x32xbf16>
    tpu.vector_store %arg12[%c0_78, %c128_79], %57 {strides = array<i32>} : memref<256x288xbf16, #tpu.memory_space<vmem>>, vector<256x32xbf16>,
    %c1_80 = arith.constant 1 : index
    %c2_81 = arith.constant 2 : index
    %c0_82 = arith.constant 0 : index
    %59 = vector.load %arg11[%c1_80, %c2_81, %c0_82] : memref<18x18x32xbf16, #tpu.memory_space<vmem>>, vector<16x16x32xbf16>
    %60 = vector.shape_cast %59 : vector<16x16x32xbf16> to vector<256x32xbf16>
    %c0_83 = arith.constant 0 : index
    %c160_84 = arith.constant 160 : index
    %61 = vector.load %arg12[%c0_83, %c160_84] : memref<256x288xbf16, #tpu.memory_space<vmem>>, vector<256x32xbf16>
    tpu.vector_store %arg12[%c0_83, %c160_84], %60 {strides = array<i32>} : memref<256x288xbf16, #tpu.memory_space<vmem>>, vector<256x32xbf16>,
    %c2_85 = arith.constant 2 : index
    %c0_86 = arith.constant 0 : index
    %c0_87 = arith.constant 0 : index
    %62 = vector.load %arg11[%c2_85, %c0_86, %c0_87] : memref<18x18x32xbf16, #tpu.memory_space<vmem>>, vector<16x16x32xbf16>
    %63 = vector.shape_cast %62 : vector<16x16x32xbf16> to vector<256x32xbf16>
    %c0_88 = arith.constant 0 : index
    %c192_89 = arith.constant 192 : index
    %64 = vector.load %arg12[%c0_88, %c192_89] : memref<256x288xbf16, #tpu.memory_space<vmem>>, vector<256x32xbf16>
    tpu.vector_store %arg12[%c0_88, %c192_89], %63 {strides = array<i32>} : memref<256x288xbf16, #tpu.memory_space<vmem>>, vector<256x32xbf16>,
    %c2_90 = arith.constant 2 : index
    %c1_91 = arith.constant 1 : index
    %c0_92 = arith.constant 0 : index
    %65 = vector.load %arg11[%c2_90, %c1_91, %c0_92] : memref<18x18x32xbf16, #tpu.memory_space<vmem>>, vector<16x16x32xbf16>
    %66 = vector.shape_cast %65 : vector<16x16x32xbf16> to vector<256x32xbf16>
    %c0_93 = arith.constant 0 : index
    %c224_94 = arith.constant 224 : index
    %67 = vector.load %arg12[%c0_93, %c224_94] : memref<256x288xbf16, #tpu.memory_space<vmem>>, vector<256x32xbf16>
    tpu.vector_store %arg12[%c0_93, %c224_94], %66 {strides = array<i32>} : memref<256x288xbf16, #tpu.memory_space<vmem>>, vector<256x32xbf16>,
    %c2_95 = arith.constant 2 : index
    %c2_96 = arith.constant 2 : index
    %c0_97 = arith.constant 0 : index
    %68 = vector.load %arg11[%c2_95, %c2_96, %c0_97] : memref<18x18x32xbf16, #tpu.memory_space<vmem>>, vector<16x16x32xbf16>
    %69 = vector.shape_cast %68 : vector<16x16x32xbf16> to vector<256x32xbf16>
    %c0_98 = arith.constant 0 : index
    %c256_99 = arith.constant 256 : index
    %70 = vector.load %arg12[%c0_98, %c256_99] : memref<256x288xbf16, #tpu.memory_space<vmem>>, vector<256x32xbf16>
    tpu.vector_store %arg12[%c0_98, %c256_99], %69 {strides = array<i32>} : memref<256x288xbf16, #tpu.memory_space<vmem>>, vector<256x32xbf16>,
    %c0_100 = arith.constant 0 : index
    %c0_101 = arith.constant 0 : index
    %71 = vector.load %arg12[%c0_100, %c0_101] : memref<256x288xbf16, #tpu.memory_space<vmem>>, vector<256x288xbf16>
    %c0_102 = arith.constant 0 : index
    %c0_103 = arith.constant 0 : index
    %72 = vector.load %arg4[%c0_102, %c0_103] : memref<288x32xbf16, #tpu.memory_space<vmem>>, vector<288x32xbf16>
    %cst_104 = arith.constant dense<0.000000e+00> : vector<256x32xf32>
    %73 = tpu.matmul %71, %72, %cst_104 {dimension_numbers = #tpu.dot_dimension_numbers<[1], [0], [0], [1], [0, 0, 1, 1], [], []>} : vector<256x288xbf16>, vector<288x32xbf16>, vector<256x32xf32> -> vector<256x32xf32>
    %c0_105 = arith.constant 0 : index
    %c0_106 = arith.constant 0 : index
    %74 = vector.load %arg5[%c0_105, %c0_106] : memref<1x32xf32, #tpu.memory_space<vmem>>, vector<1x32xf32>
    %75 = vector.broadcast %74 : vector<1x32xf32> to vector<256x32xf32>
    %76 = arith.addf %73, %75 : vector<256x32xf32>
    %cst_107 = arith.constant dense<0.000000e+00> : vector<32xf32>
    %77 = vector.multi_reduction <add>, %76, %cst_107 [0] : vector<256x32xf32> to vector<32xf32>
    %78 = vector.shape_cast %77 : vector<32xf32> to vector<1x32xf32>
    %cst_108 = arith.constant 2.560000e+02 : f32
    %79 = vector.broadcast %cst_108 : f32 to vector<1x32xf32>
    %80 = arith.divf %78, %79 : vector<1x32xf32>
    %c0_109 = arith.constant 0 : index
    %c0_110 = arith.constant 0 : index
    %81 = vector.load %arg6[%c0_109, %c0_110] : memref<2x32xf32, #tpu.memory_space<vmem>>, vector<2x32xf32>
    %82 = vector.broadcast %80 : vector<1x32xf32> to vector<2x32xf32>
    %83 = arith.mulf %82, %81 : vector<2x32xf32>
    %cst_111 = arith.constant dense<0.000000e+00> : vector<2xf32>
    %84 = vector.multi_reduction <add>, %83, %cst_111 [1] : vector<2x32xf32> to vector<2xf32>
    %85 = vector.shape_cast %84 : vector<2xf32> to vector<2x1xf32>
    %c0_112 = arith.constant 0 : index
    %c0_113 = arith.constant 0 : index
    %86 = vector.load %arg7[%c0_112, %c0_113] : memref<2x1xf32, #tpu.memory_space<vmem>>, vector<2x1xf32>
    %87 = arith.addf %85, %86 : vector<2x1xf32>
    %cst_114 = arith.constant 0.000000e+00 : f32
    %88 = vector.broadcast %cst_114 : f32 to vector<2x1xf32>
    %89 = arith.maximumf %87, %88 : vector<2x1xf32>
    %c0_115 = arith.constant 0 : index
    %c0_116 = arith.constant 0 : index
    %90 = vector.load %arg8[%c0_115, %c0_116] : memref<2x32xf32, #tpu.memory_space<vmem>>, vector<2x32xf32>
    %91 = vector.broadcast %89 : vector<2x1xf32> to vector<2x32xf32>
    %92 = arith.mulf %91, %90 : vector<2x32xf32>
    %cst_117 = arith.constant dense<0.000000e+00> : vector<32xf32>
    %93 = vector.multi_reduction <add>, %92, %cst_117 [0] : vector<2x32xf32> to vector<32xf32>
    %94 = vector.shape_cast %93 : vector<32xf32> to vector<1x32xf32>
    %c0_118 = arith.constant 0 : index
    %c0_119 = arith.constant 0 : index
    %95 = vector.load %arg9[%c0_118, %c0_119] : memref<1x32xf32, #tpu.memory_space<vmem>>, vector<1x32xf32>
    %96 = arith.addf %94, %95 : vector<1x32xf32>
    %cst_120 = arith.constant 0.000000e+00 : f32
    %97 = vector.broadcast %cst_120 : f32 to vector<1x32xf32>
    %98 = arith.subf %97, %96 : vector<1x32xf32>
    %99 = math.exp %98 : vector<1x32xf32>
    %cst_121 = arith.constant 1.000000e+00 : f32
    %100 = vector.broadcast %cst_121 : f32 to vector<1x32xf32>
    %101 = arith.addf %100, %99 : vector<1x32xf32>
    %102 = tpu.reciprocal %101 {approx = true} : vector<1x32xf32> -> vector<1x32xf32>
    %103 = vector.broadcast %102 : vector<1x32xf32> to vector<256x32xf32>
    %104 = arith.mulf %76, %103 : vector<256x32xf32>
    %105 = vector.shape_cast %3 : vector<16x16x32xf32> to vector<256x32xf32>
    %106 = arith.addf %104, %105 : vector<256x32xf32>
    %107 = vector.shape_cast %106 : vector<256x32xf32> to vector<1x16x16x32xf32>
    %c0_122 = arith.constant 0 : index
    %c0_123 = arith.constant 0 : index
    %c0_124 = arith.constant 0 : index
    %c0_125 = arith.constant 0 : index
    %108 = vector.load %arg10[%c0_122, %c0_123, %c0_124, %c0_125] : memref<1x16x16x32xf32, #tpu.memory_space<vmem>>, vector<1x16x16x32xf32>
    tpu.vector_store %arg10[%c0_122, %c0_123, %c0_124, %c0_125], %107 {strides = array<i32>} : memref<1x16x16x32xf32, #tpu.memory_space<vmem>>, vector<1x16x16x32xf32>,
    return
  }
  func.func @transform_0(%arg0: i32) -> (i32, i32, i32, i32) {
    %c0_i32 = arith.constant 0 : i32
    %c0_i32_0 = arith.constant 0 : i32
    %c0_i32_1 = arith.constant 0 : i32
    %c0_i32_2 = arith.constant 0 : i32
    return %arg0, %c0_i32, %c0_i32_0, %c0_i32_1 : i32, i32, i32, i32
  }
  func.func @transform_1(%arg0: i32) -> (i32, i32) {
    %c0_i32 = arith.constant 0 : i32
    %c0_i32_0 = arith.constant 0 : i32
    %c0_i32_1 = arith.constant 0 : i32
    return %c0_i32, %c0_i32_0 : i32, i32
  }
  func.func @transform_2(%arg0: i32) -> (i32, i32) {
    %c0_i32 = arith.constant 0 : i32
    %c0_i32_0 = arith.constant 0 : i32
    %c0_i32_1 = arith.constant 0 : i32
    return %c0_i32, %c0_i32_0 : i32, i32
  }
  func.func @transform_3(%arg0: i32) -> (i32, i32) {
    %c0_i32 = arith.constant 0 : i32
    %c0_i32_0 = arith.constant 0 : i32
    %c0_i32_1 = arith.constant 0 : i32
    return %c0_i32, %c0_i32_0 : i32, i32
  }
  func.func @transform_4(%arg0: i32) -> (i32, i32) {
    %c0_i32 = arith.constant 0 : i32
    %c0_i32_0 = arith.constant 0 : i32
    %c0_i32_1 = arith.constant 0 : i32
    return %c0_i32, %c0_i32_0 : i32, i32
  }
  func.func @transform_5(%arg0: i32) -> (i32, i32) {
    %c0_i32 = arith.constant 0 : i32
    %c0_i32_0 = arith.constant 0 : i32
    %c0_i32_1 = arith.constant 0 : i32
    return %c0_i32, %c0_i32_0 : i32, i32
  }
  func.func @transform_6(%arg0: i32) -> (i32, i32) {
    %c0_i32 = arith.constant 0 : i32
    %c0_i32_0 = arith.constant 0 : i32
    %c0_i32_1 = arith.constant 0 : i32
    return %c0_i32, %c0_i32_0 : i32, i32
  }
  func.func @transform_7(%arg0: i32) -> (i32, i32) {
    %c0_i32 = arith.constant 0 : i32
    %c0_i32_0 = arith.constant 0 : i32
    %c0_i32_1 = arith.constant 0 : i32
    return %c0_i32, %c0_i32_0 : i32, i32
  }
  func.func @transform_8(%arg0: i32) -> (i32, i32) {
    %c0_i32 = arith.constant 0 : i32
    %c0_i32_0 = arith.constant 0 : i32
    %c0_i32_1 = arith.constant 0 : i32
    return %c0_i32, %c0_i32_0 : i32, i32
  }
  func.func @transform_9(%arg0: i32) -> (i32, i32, i32, i32) {
    %c0_i32 = arith.constant 0 : i32
    %c0_i32_0 = arith.constant 0 : i32
    %c0_i32_1 = arith.constant 0 : i32
    %c0_i32_2 = arith.constant 0 : i32
    return %arg0, %c0_i32, %c0_i32_0, %c0_i32_1 : i32, i32, i32, i32
  }
}

</mosaic_0001>

<llo_original>
// kernel: rcab_forward.1
$region0: #{rcab_forward.1}
  #allocation0 [shape = 'u32[]', space=smem, size = 0x4, offset = 0x4, fixed_abs, tag = 'smem constant byte address 0x4 - core index']
  #allocation1 [shape = 'u32[144,128]{1,0:T(1,128)}', space=vmem, size = 0x12000, scoped, tag = 'internal scratch']
  #allocation2 [shape = 'bf16[18,18,32]{2,1,0:T(8,128)(2,1)}', space=vmem, size = 0x1b000, scoped, tag = 'scratch operand']
  #allocation3 [shape = 'bf16[256,288]{1,0:T(16,128)(2,1)}', space=vmem, size = 0x30000, scoped, tag = 'scratch operand']
  %s0 = inlined_call_operand.vmem [shape: f32[2,16,16,32], index: 0, kind: input, shape index: {}]
  %s1 = inlined_call_operand.vmem [shape: bf16[288,32], index: 1, kind: input, shape index: {}]
  %s2 = inlined_call_operand.vmem [shape: f32[1,32], index: 2, kind: input, shape index: {}]
  %s3 = inlined_call_operand.vmem [shape: bf16[288,32], index: 3, kind: input, shape index: {}]
  %s4 = inlined_call_operand.vmem [shape: f32[1,32], index: 4, kind: input, shape index: {}]
  %s5 = inlined_call_operand.vmem [shape: f32[2,32], index: 5, kind: input, shape index: {}]
  %s6 = inlined_call_operand.vmem [shape: f32[2,1], index: 6, kind: input, shape index: {}]
  %s7 = inlined_call_operand.vmem [shape: f32[2,32], index: 7, kind: input, shape index: {}]
  %s8 = inlined_call_operand.vmem [shape: f32[1,32], index: 8, kind: input, shape index: {}]
  %s9 = inlined_call_operand.hbm [shape: f32[2,16,16,32], index: 9, kind: output, shape index: {}]
  %s10 = sld [smem:[#allocation0]]
  $region69: #{rcab_forward.1} parent=0
    _
  %s12 = ssub.s32 1, %s10
  %s13 = scalar_select 0, %s12, %s10
  $region1: #{rcab_forward.1} parent=0
    #allocation4 [shape = 'u8[262144]{0}', space=vmem, size = 0x40000, scoped, tag = 'output window, operand 0']
    #allocation5 [shape = 's32[2]{0}', space=sflag, size = 0x8, scoped, tag = 'scoped memory for rcab_forward.1']
    %14 = vsyncpa [#allocation5], 0
    %s15 = scalar_lea.sflag [#allocation5], 1
    %16 = vsyncpa %s15, 0
    loop: start=0, step=1, limit=4
    $region2: #{rcab_forward.1} parent=1 // loop_pre_header
      _
    $region3: #{rcab_forward.1} parent=1 // loop_header
      %s18 = sphi 0, %s22
      %p19 = scmp.ge.s32.totalorder %s18, 4
      %s28 = sphi 0, %s30
      %s31 = sphi 0, %s28
      %s32 = sphi 0, %s31
      %s48 = sphi 0, %s32
      %s52 = sphi 0, %s52
      %s54 = sphi 0, %s52
      %s55 = sphi 0, %s54
      %s69 = sphi 0, %s55
      %s73 = sphi 0, %s73
      %s75 = sphi 0, %s73
      %s76 = sphi 0, %s75
      %s90 = sphi 0, %s76
      %s94 = sphi 0, %s94
      %s96 = sphi 0, %s94
      %s97 = sphi 0, %s96
      %s111 = sphi 0, %s97
      %s115 = sphi 0, %s115
      %s117 = sphi 0, %s115
      %s118 = sphi 0, %s117
      %s132 = sphi 0, %s118
      %s136 = sphi 0, %s136
      %s138 = sphi 0, %s136
      %s139 = sphi 0, %s138
      %s153 = sphi 0, %s139
      %s157 = sphi 0, %s157
      %s159 = sphi 0, %s157
      %s160 = sphi 0, %s159
      %s174 = sphi 0, %s160
      %s178 = sphi 0, %s178
      %s180 = sphi 0, %s178
      %s181 = sphi 0, %s180
      %s195 = sphi 0, %s181
      %s199 = sphi 0, %s199
      %s201 = sphi 0, %s199
      %s202 = sphi 0, %s201
      %s216 = sphi 0, %s202
      %s222 = sphi 0, %s224
      %s225 = sphi 0, %s222
      %s226 = sphi 0, %s225
      %s242 = sphi 0, %s226
    $region4: #{rcab_forward.1} parent=1 // loop_header_branch
      %21 = sbr.rel (%p19) target = $region8
    $region5: #{rcab_forward.1} parent=1 // loop_body
      %s23 = ssub.s32 %s18, 1
      %s24 = ssub.s32 %s18, 2
      %s25 = sadd.s32 %s18, 1
      %s26 = ssub.s32 %s18, %s25
      %p27 = scmp.eq.s32.totalorder %s26, 0
      %s29 = sadd.s32 %s28, 1
      %s30 = scalar_select %p27, %s28, %s29
      %p33 = pneg %p27
      %p34 = scmp.eq.s32.totalorder %s18, 1
      %p35 = por %p33, %p34
      %p36 = scmp.ne.s32.totalorder %s28, %s31
      %p37 = scmp.eq.s32.totalorder %s18, 0
      %p38 = por %p36, %p37
      %p39 = scmp.ne.s32.totalorder %s28, %s31
      %p40 = scmp.eq.s32.totalorder %s23, 1
      %p41 = por %p39, %p40
      %p42 = scmp.ne.s32.totalorder %s31, %s32
      %p43 = scmp.eq.s32.totalorder %s23, 0
      %p44 = por %p42, %p43
      %p45 = scmp.ne.s32.totalorder %s31, %s32
      %p46 = scmp.eq.s32.totalorder %s24, 1
      %p47 = por %p45, %p46
      %p49 = scmp.ne.s32.totalorder %s32, %s48
      %p50 = scmp.eq.s32.totalorder %s24, 0
      %p51 = por %p49, %p50
      %s53 = sadd.s32 %s52, 1
      %p56 = scmp.eq.s32.totalorder %s18, 1
      %p57 = scmp.ne.s32.totalorder %s52, %s54
      %p58 = scmp.eq.s32.totalorder %s18, 0
      %p59 = por %p57, %p58
      %p60 = scmp.ne.s32.totalorder %s52, %s54
      %p61 = scmp.eq.s32.totalorder %s23, 1
      %p62 = por %p60, %p61
      %p63 = scmp.ne.s32.totalorder %s54, %s55
      %p64 = scmp.eq.s32.totalorder %s23, 0
      %p65 = por %p63, %p64
      %p66 = scmp.ne.s32.totalorder %s54, %s55
      %p67 = scmp.eq.s32.totalorder %s24, 1
      %p68 = por %p66, %p67
      %p70 = scmp.ne.s32.totalorder %s55, %s69
      %p71 = scmp.eq.s32.totalorder %s24, 0
      %p72 = por %p70, %p71
      %s74 = sadd.s32 %s73, 1
      %p77 = scmp.eq.s32.totalorder %s18, 1
      %p78 = scmp.ne.s32.totalorder %s73, %s75
      %p79 = scmp.eq.s32.totalorder %s18, 0
      %p80 = por %p78, %p79
      %p81 = scmp.ne.s32.totalorder %s73, %s75
      %p82 = scmp.eq.s32.totalorder %s23, 1
      %p83 = por %p81, %p82
      %p84 = scmp.ne.s32.totalorder %s75, %s76
      %p85 = scmp.eq.s32.totalorder %s23, 0
      %p86 = por %p84, %p85
      %p87 = scmp.ne.s32.totalorder %s75, %s76
      %p88 = scmp.eq.s32.totalorder %s24, 1
      %p89 = por %p87, %p88
      %p91 = scmp.ne.s32.totalorder %s76, %s90
      %p92 = scmp.eq.s32.totalorder %s24, 0
      %p93 = por %p91, %p92
      %s95 = sadd.s32 %s94, 1
      %p98 = scmp.eq.s32.totalorder %s18, 1
      %p99 = scmp.ne.s32.totalorder %s94, %s96
      %p100 = scmp.eq.s32.totalorder %s18, 0
      %p101 = por %p99, %p100
      %p102 = scmp.ne.s32.totalorder %s94, %s96
      %p103 = scmp.eq.s32.totalorder %s23, 1
      %p104 = por %p102, %p103
      %p105 = scmp.ne.s32.totalorder %s96, %s97
      %p106 = scmp.eq.s32.totalorder %s23, 0
      %p107 = por %p105, %p106
      %p108 = scmp.ne.s32.totalorder %s96, %s97
      %p109 = scmp.eq.s32.totalorder %s24, 1
      %p110 = por %p108, %p109
      %p112 = scmp.ne.s32.totalorder %s97, %s111
      %p113 = scmp.eq.s32.totalorder %s24, 0
      %p114 = por %p112, %p113
      %s116 = sadd.s32 %s115, 1
      %p119 = scmp.eq.s32.totalorder %s18, 1
      %p120 = scmp.ne.s32.totalorder %s115, %s117
      %p121 = scmp.eq.s32.totalorder %s18, 0
      %p122 = por %p120, %p121
      %p123 = scmp.ne.s32.totalorder %s115, %s117
      %p124 = scmp.eq.s32.totalorder %s23, 1
      %p125 = por %p123, %p124
      %p126 = scmp.ne.s32.totalorder %s117, %s118
      %p127 = scmp.eq.s32.totalorder %s23, 0
      %p128 = por %p126, %p127
      %p129 = scmp.ne.s32.totalorder %s117, %s118
      %p130 = scmp.eq.s32.totalorder %s24, 1
      %p131 = por %p129, %p130
      %p133 = scmp.ne.s32.totalorder %s118, %s132
      %p134 = scmp.eq.s32.totalorder %s24, 0
      %p135 = por %p133, %p134
      %s137 = sadd.s32 %s136, 1
      %p140 = scmp.eq.s32.totalorder %s18, 1
      %p141 = scmp.ne.s32.totalorder %s136, %s138
      %p142 = scmp.eq.s32.totalorder %s18, 0
      %p143 = por %p141, %p142
      %p144 = scmp.ne.s32.totalorder %s136, %s138
      %p145 = scmp.eq.s32.totalorder %s23, 1
      %p146 = por %p144, %p145
      %p147 = scmp.ne.s32.totalorder %s138, %s139
      %p148 = scmp.eq.s32.totalorder %s23, 0
      %p149 = por %p147, %p148
      %p150 = scmp.ne.s32.totalorder %s138, %s139
      %p151 = scmp.eq.s32.totalorder %s24, 1
      %p152 = por %p150, %p151
      %p154 = scmp.ne.s32.totalorder %s139, %s153
      %p155 = scmp.eq.s32.totalorder %s24, 0
      %p156 = por %p154, %p155
      %s158 = sadd.s32 %s157, 1
      %p161 = scmp.eq.s32.totalorder %s18, 1
      %p162 = scmp.ne.s32.totalorder %s157, %s159
      %p163 = scmp.eq.s32.totalorder %s18, 0
      %p164 = por %p162, %p163
      %p165 = scmp.ne.s32.totalorder %s157, %s159
      %p166 = scmp.eq.s32.totalorder %s23, 1
      %p167 = por %p165, %p166
      %p168 = scmp.ne.s32.totalorder %s159, %s160
      %p169 = scmp.eq.s32.totalorder %s23, 0
      %p170 = por %p168, %p169
      %p171 = scmp.ne.s32.totalorder %s159, %s160
      %p172 = scmp.eq.s32.totalorder %s24, 1
      %p173 = por %p171, %p172
      %p175 = scmp.ne.s32.totalorder %s160, %s174
      %p176 = scmp.eq.s32.totalorder %s24, 0
      %p177 = por %p175, %p176
      %s179 = sadd.s32 %s178, 1
      %p182 = scmp.eq.s32.totalorder %s18, 1
      %p183 = scmp.ne.s32.totalorder %s178, %s180
      %p184 = scmp.eq.s32.totalorder %s18, 0
      %p185 = por %p183, %p184
      %p186 = scmp.ne.s32.totalorder %s178, %s180
      %p187 = scmp.eq.s32.totalorder %s23, 1
      %p188 = por %p186, %p187
      %p189 = scmp.ne.s32.totalorder %s180, %s181
      %p190 = scmp.eq.s32.totalorder %s23, 0
      %p191 = por %p189, %p190
      %p192 = scmp.ne.s32.totalorder %s180, %s181
      %p193 = scmp.eq.s32.totalorder %s24, 1
      %p194 = por %p192, %p193
      %p196 = scmp.ne.s32.totalorder %s181, %s195
      %p197 = scmp.eq.s32.totalorder %s24, 0
      %p198 = por %p196, %p197
      %s200 = sadd.s32 %s199, 1
      %p203 = scmp.eq.s32.totalorder %s18, 1
      %p204 = scmp.ne.s32.totalorder %s199, %s201
      %p205 = scmp.eq.s32.totalorder %s18, 0
      %p206 = por %p204, %p205
      %p207 = scmp.ne.s32.totalorder %s199, %s201
      %p208 = scmp.eq.s32.totalorder %s23, 1
      %p209 = por %p207, %p208
      %p210 = scmp.ne.s32.totalorder %s201, %s202
      %p211 = scmp.eq.s32.totalorder %s23, 0
      %p212 = por %p210, %p211
      %p213 = scmp.ne.s32.totalorder %s201, %s202
      %p214 = scmp.eq.s32.totalorder %s24, 1
      %p215 = por %p213, %p214
      %p217 = scmp.ne.s32.totalorder %s202, %s216
      %p218 = scmp.eq.s32.totalorder %s24, 0
      %p219 = por %p217, %p218
      %s220 = ssub.s32 %s18, %s25
      %p221 = scmp.eq.s32.totalorder %s220, 0
      %s223 = sadd.s32 %s222, 1
      %s224 = scalar_select %p221, %s222, %s223
      %p227 = pneg %p221
      %p228 = scmp.eq.s32.totalorder %s18, 1
      %p229 = por %p227, %p228
      %p230 = scmp.ne.s32.totalorder %s222, %s225
      %p231 = scmp.eq.s32.totalorder %s18, 0
      %p232 = por %p230, %p231
      %p233 = scmp.ne.s32.totalorder %s222, %s225
      %p234 = scmp.eq.s32.totalorder %s23, 1
      %p235 = por %p233, %p234
      %p236 = scmp.ne.s32.totalorder %s225, %s226
      %p237 = scmp.eq.s32.totalorder %s23, 0
      %p238 = por %p236, %p237
      %p239 = scmp.ne.s32.totalorder %s225, %s226
      %p240 = scmp.eq.s32.totalorder %s24, 1
      %p241 = por %p239, %p240
      %p243 = scmp.ne.s32.totalorder %s226, %s242
      %p244 = scmp.eq.s32.totalorder %s24, 0
      %p245 = por %p243, %p244
      %p246 = scmp.le.s32.totalorder 1, %s18
      %p247 = scmp.lt.s32.totalorder %s18, 3
      %p248 = pnand %p246, %p247
      %p249 = pneg %p248
      // Predicated region
      $region9: #{rcab_forward.1} parent=5 // pred_check
        _
      $region10: #{rcab_forward.1} parent=5 // pred_check_branch
        %251 = sbr.rel (%p248) target = $region12
      $region11: #{rcab_forward.1} parent=5 // pred_region
        %s252 = ssub.s32 %s18, 1
        // Predicated region
        $region13: #{rcab_forward.1} parent=11 // pred_check
          %p253 = pneg %p65
        $region14: #{rcab_forward.1} parent=11 // pred_check_branch
          %255 = sbr.rel (%p253) target = $region16
        $region15: #{rcab_forward.1} parent=11 // pred_region
          _
        $region16: #{rcab_forward.1} parent=11 // pred_fallthru
          _
        // Predicated region
        $region17: #{rcab_forward.1} parent=11 // pred_check
          %p256 = pneg %p86
        $region18: #{rcab_forward.1} parent=11 // pred_check_branch
          %258 = sbr.rel (%p256) target = $region20
        $region19: #{rcab_forward.1} parent=11 // pred_region
          _
        $region20: #{rcab_forward.1} parent=11 // pred_fallthru
          _
        // Predicated region
        $region21: #{rcab_forward.1} parent=11 // pred_check
          %p259 = pneg %p107
        $region22: #{rcab_forward.1} parent=11 // pred_check_branch
          %261 = sbr.rel (%p259) target = $region24
        $region23: #{rcab_forward.1} parent=11 // pred_region
          _
        $region24: #{rcab_forward.1} parent=11 // pred_fallthru
          _
        // Predicated region
        $region25: #{rcab_forward.1} parent=11 // pred_check
          %p262 = pneg %p128
        $region26: #{rcab_forward.1} parent=11 // pred_check_branch
          %264 = sbr.rel (%p262) target = $region28
        $region27: #{rcab_forward.1} parent=11 // pred_region
          _
        $region28: #{rcab_forward.1} parent=11 // pred_fallthru
          _
        // Predicated region
        $region29: #{rcab_forward.1} parent=11 // pred_check
          %p265 = pneg %p149
        $region30: #{rcab_forward.1} parent=11 // pred_check_branch
          %267 = sbr.rel (%p265) target = $region32
        $region31: #{rcab_forward.1} parent=11 // pred_region
          _
        $region32: #{rcab_forward.1} parent=11 // pred_fallthru
          _
        // Predicated region
        $region33: #{rcab_forward.1} parent=11 // pred_check
          %p268 = pneg %p170
        $region34: #{rcab_forward.1} parent=11 // pred_check_branch
          %270 = sbr.rel (%p268) target = $region36
        $region35: #{rcab_forward.1} parent=11 // pred_region
          _
        $region36: #{rcab_forward.1} parent=11 // pred_fallthru
          _
        // Predicated region
        $region37: #{rcab_forward.1} parent=11 // pred_check
          %p271 = pneg %p191
        $region38: #{rcab_forward.1} parent=11 // pred_check_branch
          %273 = sbr.rel (%p271) target = $region40
        $region39: #{rcab_forward.1} parent=11 // pred_region
          _
        $region40: #{rcab_forward.1} parent=11 // pred_fallthru
          _
        // Predicated region
        $region41: #{rcab_forward.1} parent=11 // pred_check
          %p274 = pneg %p212
        $region42: #{rcab_forward.1} parent=11 // pred_check_branch
          %276 = sbr.rel (%p274) target = $region44
        $region43: #{rcab_forward.1} parent=11 // pred_region
          _
        $region44: #{rcab_forward.1} parent=11 // pred_fallthru
          _
      $region12: #{rcab_forward.1} parent=5 // pred_fallthru
        _
      %p277 = scmp.lt.s32.totalorder %s18, 2
      // Predicated region
      $region45: #{rcab_forward.1} parent=5 // pred_check
        %p278 = pneg %p277
      $region46: #{rcab_forward.1} parent=5 // pred_check_branch
        %280 = sbr.rel (%p278) target = $region48
      $region47: #{rcab_forward.1} parent=5 // pred_region
        // Predicated region
        $region49: #{rcab_forward.1} parent=47 // pred_check
          %p281 = pneg %p38
        $region50: #{rcab_forward.1} parent=47 // pred_check_branch
          %283 = sbr.rel (%p281) target = $region52
        $region51: #{rcab_forward.1} parent=47 // pred_region
          %p284 = scmp.lt.s32.totalorder %s18, 1
          %s285 = scalar_select %p284, %s18, 1
          %s286 = smul.addr %s285, 32
          %s287 = smul.addr %s286, 8
          %s288 = scalar_lea.vmem %s0, %s287
        $region52: #{rcab_forward.1} parent=47 // pred_fallthru
          _
      $region48: #{rcab_forward.1} parent=5 // pred_fallthru
        _
      %p289 = scmp.le.s32.totalorder 1, %s18
      %p290 = scmp.lt.s32.totalorder %s18, 3
      %p291 = pnand %p289, %p290
      %p292 = pneg %p291
      // Predicated region
      $region53: #{rcab_forward.1} parent=5 // pred_check
        _
      $region54: #{rcab_forward.1} parent=5 // pred_check_branch
        %294 = sbr.rel (%p291) target = $region56
      $region55: #{rcab_forward.1} parent=5 // pred_region
        %s295 = ssub.s32 %s18, 1
        %p296 = scmp.lt.s32.totalorder %s23, 1
        %s297 = scalar_select %p296, %s23, 1
        %s298 = smul.addr %s297, 32
        %s299 = smul.addr %s298, 8
        %s300 = scalar_lea.vmem %s0, %s299
        %p301 = pneg %p44
        %p302 = pneg %p41
        %p303 = pneg %p65
        %p304 = pneg %p62
        %p305 = pneg %p86
        %p306 = pneg %p83
        %p307 = pneg %p107
        %p308 = pneg %p104
        %p309 = pneg %p128
        %p310 = pneg %p125
        %p311 = pneg %p149
        %p312 = pneg %p146
        %p313 = pneg %p170
        %p314 = pneg %p167
        %p315 = pneg %p191
        %p316 = pneg %p188
        %p317 = pneg %p212
        %p318 = pneg %p209
        %p319 = pneg %p238
        %p320 = pneg %p235
        %s321 = sand.u32 %s225, 1
        %s322 = scalar_lea.sflag [#allocation5], %s321
        %s323 = sand.u32 %s225, 1
        %s324 = smul.addr %s323, 256
        %s325 = scalar_lea.vmem [#allocation4], %s324
        %p326 = scmp.lt.s32.totalorder %s23, 1
        %s327 = scalar_select %p326, %s23, 1
        %s328 = smul.addr %s327, 32
        %s329 = smul.addr %s328, 8
        %s330 = scalar_lea.vmem %s0, %s329
        %vm332 = vcmask 257024
        %333 = vst.msk [vmem:[#allocation2] sm:$0xf] %vm332, 0
        %334 = vst.msk [vmem:[#allocation2 + $0x4] sm:$0xf] %vm332, 0
        %vm335 = vcmask 253952
        %336 = vst.msk [vmem:[#allocation2 + $0x8] sm:$0x1] %vm335, 0
        %337 = vst.msk [vmem:[#allocation2 + $0xc] sm:$0xf] %vm332, 0
        %338 = vst.msk [vmem:[#allocation2 + $0x10] sm:$0xf] %vm332, 0
        %339 = vst.msk [vmem:[#allocation2 + $0x14] sm:$0x1] %vm335, 0
        %340 = vst.msk [vmem:[#allocation2 + $0x18] sm:$0xf] %vm332, 0
        %341 = vst.msk [vmem:[#allocation2 + $0x1c] sm:$0xf] %vm332, 0
        %342 = vst.msk [vmem:[#allocation2 + $0x20] sm:$0x1] %vm335, 0
        %343 = vst.msk [vmem:[#allocation2 + $0x24] sm:$0xf] %vm332, 0
        %344 = vst.msk [vmem:[#allocation2 + $0x28] sm:$0xf] %vm332, 0
        %345 = vst.msk [vmem:[#allocation2 + $0x2c] sm:$0x1] %vm335, 0
        %346 = vst.msk [vmem:[#allocation2 + $0x30] sm:$0xf] %vm332, 0
        %347 = vst.msk [vmem:[#allocation2 + $0x34] sm:$0xf] %vm332, 0
        %348 = vst.msk [vmem:[#allocation2 + $0x38] sm:$0x1] %vm335, 0
        %349 = vst.msk [vmem:[#allocation2 + $0x3c] sm:$0xf] %vm332, 0
        %350 = vst.msk [vmem:[#allocation2 + $0x40] sm:$0xf] %vm332, 0
        %351 = vst.msk [vmem:[#allocation2 + $0x44] sm:$0x1] %vm335, 0
        %352 = vst.msk [vmem:[#allocation2 + $0x48] sm:$0xf] %vm332, 0
        %353 = vst.msk [vmem:[#allocation2 + $0x4c] sm:$0xf] %vm332, 0
        %354 = vst.msk [vmem:[#allocation2 + $0x50] sm:$0x1] %vm335, 0
        %355 = vst.msk [vmem:[#allocation2 + $0x54] sm:$0xf] %vm332, 0
        %356 = vst.msk [vmem:[#allocation2 + $0x58] sm:$0xf] %vm332, 0
        %357 = vst.msk [vmem:[#allocation2 + $0x5c] sm:$0x1] %vm335, 0
        %358 = vst.msk [vmem:[#allocation2 + $0x60] sm:$0xf] %vm332, 0
        %359 = vst.msk [vmem:[#allocation2 + $0x64] sm:$0xf] %vm332, 0
        %360 = vst.msk [vmem:[#allocation2 + $0x68] sm:$0x1] %vm335, 0
        %361 = vst.msk [vmem:[#allocation2 + $0x6c] sm:$0xf] %vm332, 0
        %362 = vst.msk [vmem:[#allocation2 + $0x70] sm:$0xf] %vm332, 0
        %363 = vst.msk [vmem:[#allocation2 + $0x74] sm:$0x1] %vm335, 0
        %364 = vst.msk [vmem:[#allocation2 + $0x78] sm:$0xf] %vm332, 0
        %365 = vst.msk [vmem:[#allocation2 + $0x7c] sm:$0xf] %vm332, 0
        %366 = vst.msk [vmem:[#allocation2 + $0x80] sm:$0x1] %vm335, 0
        %367 = vst.msk [vmem:[#allocation2 + $0x84] sm:$0xf] %vm332, 0
        %368 = vst.msk [vmem:[#allocation2 + $0x88] sm:$0xf] %vm332, 0
        %369 = vst.msk [vmem:[#allocation2 + $0x8c] sm:$0x1] %vm335, 0
        %370 = vst.msk [vmem:[#allocation2 + $0x90] sm:$0xf] %vm332, 0
        %371 = vst.msk [vmem:[#allocation2 + $0x94] sm:$0xf] %vm332, 0
        %372 = vst.msk [vmem:[#allocation2 + $0x98] sm:$0x1] %vm335, 0
        %373 = vst.msk [vmem:[#allocation2 + $0x9c] sm:$0xf] %vm332, 0
        %374 = vst.msk [vmem:[#allocation2 + $0xa0] sm:$0xf] %vm332, 0
        %375 = vst.msk [vmem:[#allocation2 + $0xa4] sm:$0x1] %vm335, 0
        %376 = vst.msk [vmem:[#allocation2 + $0xa8] sm:$0xf] %vm332, 0
        %377 = vst.msk [vmem:[#allocation2 + $0xac] sm:$0xf] %vm332, 0
        %378 = vst.msk [vmem:[#allocation2 + $0xb0] sm:$0x1] %vm335, 0
        %379 = vst.msk [vmem:[#allocation2 + $0xb4] sm:$0xf] %vm332, 0
        %380 = vst.msk [vmem:[#allocation2 + $0xb8] sm:$0xf] %vm332, 0
        %381 = vst.msk [vmem:[#allocation2 + $0xbc] sm:$0x1] %vm335, 0
        %382 = vst.msk [vmem:[#allocation2 + $0xc0] sm:$0xf] %vm332, 0
        %383 = vst.msk [vmem:[#allocation2 + $0xc4] sm:$0xf] %vm332, 0
        %384 = vst.msk [vmem:[#allocation2 + $0xc8] sm:$0x1] %vm335, 0
        %385 = vst.msk [vmem:[#allocation2 + $0xcc] sm:$0xf] %vm332, 0
        %386 = vst.msk [vmem:[#allocation2 + $0xd0] sm:$0xf] %vm332, 0
        %387 = vst.msk [vmem:[#allocation2 + $0xd4] sm:$0x1] %vm335, 0
        %v388 = vld [vmem:[%s330] sm:$0xff]
        %v389 = vld [vmem:[%s330 + $0x8] sm:$0xff]
        %v390 = vld [vmem:[%s330 + $0x10] sm:$0xff]
        %v391 = vld [vmem:[%s330 + $0x18] sm:$0xff]
        %v392 = vld [vmem:[%s330 + $0x20] sm:$0xff]
        %v393 = vld [vmem:[%s330 + $0x28] sm:$0xff]
        %v394 = vld [vmem:[%s330 + $0x30] sm:$0xff]
        %v395 = vld [vmem:[%s330 + $0x38] sm:$0xff]
        %v396 = vld [vmem:[%s330 + $0x40] sm:$0xff]
        %v397 = vld [vmem:[%s330 + $0x48] sm:$0xff]
        %v398 = vld [vmem:[%s330 + $0x50] sm:$0xff]
        %v399 = vld [vmem:[%s330 + $0x58] sm:$0xff]
        %v400 = vld [vmem:[%s330 + $0x60] sm:$0xff]
        %v401 = vld [vmem:[%s330 + $0x68] sm:$0xff]
        %v402 = vld [vmem:[%s330 + $0x70] sm:$0xff]
        %v403 = vld [vmem:[%s330 + $0x78] sm:$0xff]
        %v404 = vld [vmem:[%s330 + $0x80] sm:$0xff]
        %v405 = vld [vmem:[%s330 + $0x88] sm:$0xff]
        %v406 = vld [vmem:[%s330 + $0x90] sm:$0xff]
        %v407 = vld [vmem:[%s330 + $0x98] sm:$0xff]
        %v408 = vld [vmem:[%s330 + $0xa0] sm:$0xff]
        %v409 = vld [vmem:[%s330 + $0xa8] sm:$0xff]
        %v410 = vld [vmem:[%s330 + $0xb0] sm:$0xff]
        %v411 = vld [vmem:[%s330 + $0xb8] sm:$0xff]
        %v412 = vld [vmem:[%s330 + $0xc0] sm:$0xff]
        %v413 = vld [vmem:[%s330 + $0xc8] sm:$0xff]
        %v414 = vld [vmem:[%s330 + $0xd0] sm:$0xff]
        %v415 = vld [vmem:[%s330 + $0xd8] sm:$0xff]
        %v416 = vld [vmem:[%s330 + $0xe0] sm:$0xff]
        %v417 = vld [vmem:[%s330 + $0xe8] sm:$0xff]
        %v418 = vld [vmem:[%s330 + $0xf0] sm:$0xff]
        %v419 = vld [vmem:[%s330 + $0xf8] sm:$0xff]
        %v420 = vpack.c.bf16 %v389, %v388
        %v421 = vpack.c.bf16 %v391, %v390
        %v422 = vpack.c.bf16 %v393, %v392
        %v423 = vpack.c.bf16 %v395, %v394
        %v424 = vpack.c.bf16 %v397, %v396
        %v425 = vpack.c.bf16 %v399, %v398
        %v426 = vpack.c.bf16 %v401, %v400
        %v427 = vpack.c.bf16 %v403, %v402
        %v428 = vpack.c.bf16 %v405, %v404
        %v429 = vpack.c.bf16 %v407, %v406
        %v430 = vpack.c.bf16 %v409, %v408
        %v431 = vpack.c.bf16 %v411, %v410
        %v432 = vpack.c.bf16 %v413, %v412
        %v433 = vpack.c.bf16 %v415, %v414
        %v434 = vpack.c.bf16 %v417, %v416
        %v435 = vpack.c.bf16 %v419, %v418
        %v452 = vunpack.c.l.b16 %v420
        %v453 = vunpack.c.h.b16 %v420
        %v454 = vunpack.c.l.b16 %v421
        %v455 = vunpack.c.h.b16 %v421
        %v456 = vunpack.c.l.b16 %v422
        %v457 = vunpack.c.h.b16 %v422
        %v458 = vunpack.c.l.b16 %v423
        %v459 = vunpack.c.h.b16 %v423
        %v460 = vunpack.c.l.b16 %v424
        %v461 = vunpack.c.h.b16 %v424
        %v462 = vunpack.c.l.b16 %v425
        %v463 = vunpack.c.h.b16 %v425
        %v464 = vunpack.c.l.b16 %v426
        %v465 = vunpack.c.h.b16 %v426
        %v466 = vunpack.c.l.b16 %v427
        %v467 = vunpack.c.h.b16 %v427
        %v468 = vunpack.c.l.b16 %v428
        %v469 = vunpack.c.h.b16 %v428
        %v470 = vunpack.c.l.b16 %v429
        %v471 = vunpack.c.h.b16 %v429
        %v472 = vunpack.c.l.b16 %v430
        %v473 = vunpack.c.h.b16 %v430
        %v474 = vunpack.c.l.b16 %v431
        %v475 = vunpack.c.h.b16 %v431
        %v476 = vunpack.c.l.b16 %v432
        %v477 = vunpack.c.h.b16 %v432
        %v478 = vunpack.c.l.b16 %v433
        %v479 = vunpack.c.h.b16 %v433
        %v480 = vunpack.c.l.b16 %v434
        %v481 = vunpack.c.h.b16 %v434
        %v482 = vunpack.c.l.b16 %v435
        %v483 = vunpack.c.h.b16 %v435
        %v484 = vpack.c.b16 %v452, %v452
        %v485 = vpack.c.b16 %v453, %v453
        %v486 = vpack.c.b16 %v454, %v454
        %v487 = vpack.c.b16 %v455, %v455
        %v488 = vpack.c.b16 %v456, %v456
        %v489 = vpack.c.b16 %v457, %v457
        %v490 = vpack.c.b16 %v458, %v458
        %v491 = vpack.c.b16 %v459, %v459
        %v492 = vpack.c.b16 %v460, %v460
        %v493 = vpack.c.b16 %v461, %v461
        %v494 = vpack.c.b16 %v462, %v462
        %v495 = vpack.c.b16 %v463, %v463
        %v496 = vpack.c.b16 %v464, %v464
        %v497 = vpack.c.b16 %v465, %v465
        %v498 = vpack.c.b16 %v466, %v466
        %v499 = vpack.c.b16 %v467, %v467
        %v500 = vpack.c.b16 %v468, %v468
        %v501 = vpack.c.b16 %v469, %v469
        %v502 = vpack.c.b16 %v470, %v470
        %v503 = vpack.c.b16 %v471, %v471
        %v504 = vpack.c.b16 %v472, %v472
        %v505 = vpack.c.b16 %v473, %v473
        %v506 = vpack.c.b16 %v474, %v474
        %v507 = vpack.c.b16 %v475, %v475
        %v508 = vpack.c.b16 %v476, %v476
        %v509 = vpack.c.b16 %v477, %v477
        %v510 = vpack.c.b16 %v478, %v478
        %v511 = vpack.c.b16 %v479, %v479
        %v512 = vpack.c.b16 %v480, %v480
        %v513 = vpack.c.b16 %v481, %v481
        %v514 = vpack.c.b16 %v482, %v482
        %v515 = vpack.c.b16 %v483, %v483
        %vm516 = vsmask.f32 256
        %vm517 = vsmask.f32 4368
        %vm518 = vmor %vm516, %vm517
        %v520 = vshrl.u32 %v484, 16
        %v522 = vrot.slane %v520, 7
        %v523 = vshll.u32 %v484, 16
        %v525 = vor.u32 %v522, %v523
        %v526 = vrot.slane %v522, 4
        %v528 = vshrl.u32 %v485, 16
        %v530 = vrot.slane %v528, 7
        %v531 = vshll.u32 %v485, 16
        %v533 = vor.u32 %v530, %v531
        %v534 = vsel %vm518, %v526, %v533
        %v535 = vrot.slane %v530, 4
        %v537 = vshrl.u32 %v486, 16
        %v539 = vrot.slane %v537, 7
        %v540 = vshll.u32 %v486, 16
        %v542 = vor.u32 %v539, %v540
        %v543 = vrot.slane %v539, 4
        %v545 = vshrl.u32 %v487, 16
        %v547 = vrot.slane %v545, 7
        %v548 = vshll.u32 %v487, 16
        %v550 = vor.u32 %v547, %v548
        %v551 = vsel %vm518, %v543, %v550
        %v552 = vrot.slane %v547, 4
        %v554 = vshrl.u32 %v488, 16
        %v556 = vrot.slane %v554, 7
        %v557 = vshll.u32 %v488, 16
        %v559 = vor.u32 %v556, %v557
        %v560 = vrot.slane %v556, 4
        %v562 = vshrl.u32 %v489, 16
        %v564 = vrot.slane %v562, 7
        %v565 = vshll.u32 %v489, 16
        %v567 = vor.u32 %v564, %v565
        %v568 = vsel %vm518, %v560, %v567
        %v569 = vrot.slane %v564, 4
        %v571 = vshrl.u32 %v490, 16
        %v573 = vrot.slane %v571, 7
        %v574 = vshll.u32 %v490, 16
        %v576 = vor.u32 %v573, %v574
        %v577 = vrot.slane %v573, 4
        %v579 = vshrl.u32 %v491, 16
        %v581 = vrot.slane %v579, 7
        %v582 = vshll.u32 %v491, 16
        %v584 = vor.u32 %v581, %v582
        %v585 = vsel %vm518, %v577, %v584
        %v586 = vrot.slane %v581, 4
        %v588 = vshrl.u32 %v492, 16
        %v590 = vrot.slane %v588, 7
        %v591 = vshll.u32 %v492, 16
        %v593 = vor.u32 %v590, %v591
        %v594 = vrot.slane %v590, 4
        %v596 = vshrl.u32 %v493, 16
        %v598 = vrot.slane %v596, 7
        %v599 = vshll.u32 %v493, 16
        %v601 = vor.u32 %v598, %v599
        %v602 = vsel %vm518, %v594, %v601
        %v603 = vrot.slane %v598, 4
        %v605 = vshrl.u32 %v494, 16
        %v607 = vrot.slane %v605, 7
        %v608 = vshll.u32 %v494, 16
        %v610 = vor.u32 %v607, %v608
        %v611 = vrot.slane %v607, 4
        %v613 = vshrl.u32 %v495, 16
        %v615 = vrot.slane %v613, 7
        %v616 = vshll.u32 %v495, 16
        %v618 = vor.u32 %v615, %v616
        %v619 = vsel %vm518, %v611, %v618
        %v620 = vrot.slane %v615, 4
        %v622 = vshrl.u32 %v496, 16
        %v624 = vrot.slane %v622, 7
        %v625 = vshll.u32 %v496, 16
        %v627 = vor.u32 %v624, %v625
        %v628 = vrot.slane %v624, 4
        %v630 = vshrl.u32 %v497, 16
        %v632 = vrot.slane %v630, 7
        %v633 = vshll.u32 %v497, 16
        %v635 = vor.u32 %v632, %v633
        %v636 = vsel %vm518, %v628, %v635
        %v637 = vrot.slane %v632, 4
        %v639 = vshrl.u32 %v498, 16
        %v641 = vrot.slane %v639, 7
        %v642 = vshll.u32 %v498, 16
        %v644 = vor.u32 %v641, %v642
        %v645 = vrot.slane %v641, 4
        %v647 = vshrl.u32 %v499, 16
        %v649 = vrot.slane %v647, 7
        %v650 = vshll.u32 %v499, 16
        %v652 = vor.u32 %v649, %v650
        %v653 = vsel %vm518, %v645, %v652
        %v654 = vrot.slane %v649, 4
        %v656 = vshrl.u32 %v500, 16
        %v658 = vrot.slane %v656, 7
        %v659 = vshll.u32 %v500, 16
        %v661 = vor.u32 %v658, %v659
        %v662 = vrot.slane %v658, 4
        %v664 = vshrl.u32 %v501, 16
        %v666 = vrot.slane %v664, 7
        %v667 = vshll.u32 %v501, 16
        %v669 = vor.u32 %v666, %v667
        %v670 = vsel %vm518, %v662, %v669
        %v671 = vrot.slane %v666, 4
        %v673 = vshrl.u32 %v502, 16
        %v675 = vrot.slane %v673, 7
        %v676 = vshll.u32 %v502, 16
        %v678 = vor.u32 %v675, %v676
        %v679 = vrot.slane %v675, 4
        %v681 = vshrl.u32 %v503, 16
        %v683 = vrot.slane %v681, 7
        %v684 = vshll.u32 %v503, 16
        %v686 = vor.u32 %v683, %v684
        %v687 = vsel %vm518, %v679, %v686
        %v688 = vrot.slane %v683, 4
        %v690 = vshrl.u32 %v504, 16
        %v692 = vrot.slane %v690, 7
        %v693 = vshll.u32 %v504, 16
        %v695 = vor.u32 %v692, %v693
        %v696 = vrot.slane %v692, 4
        %v698 = vshrl.u32 %v505, 16
        %v700 = vrot.slane %v698, 7
        %v701 = vshll.u32 %v505, 16
        %v703 = vor.u32 %v700, %v701
        %v704 = vsel %vm518, %v696, %v703
        %v705 = vrot.slane %v700, 4
        %v707 = vshrl.u32 %v506, 16
        %v709 = vrot.slane %v707, 7
        %v710 = vshll.u32 %v506, 16
        %v712 = vor.u32 %v709, %v710
        %v713 = vrot.slane %v709, 4
        %v715 = vshrl.u32 %v507, 16
        %v717 = vrot.slane %v715, 7
        %v718 = vshll.u32 %v507, 16
        %v720 = vor.u32 %v717, %v718
        %v721 = vsel %vm518, %v713, %v720
        %v722 = vrot.slane %v717, 4
        %v724 = vshrl.u32 %v508, 16
        %v726 = vrot.slane %v724, 7
        %v727 = vshll.u32 %v508, 16
        %v729 = vor.u32 %v726, %v727
        %v730 = vrot.slane %v726, 4
        %v732 = vshrl.u32 %v509, 16
        %v734 = vrot.slane %v732, 7
        %v735 = vshll.u32 %v509, 16
        %v737 = vor.u32 %v734, %v735
        %v738 = vsel %vm518, %v730, %v737
        %v739 = vrot.slane %v734, 4
        %v741 = vshrl.u32 %v510, 16
        %v743 = vrot.slane %v741, 7
        %v744 = vshll.u32 %v510, 16
        %v746 = vor.u32 %v743, %v744
        %v747 = vrot.slane %v743, 4
        %v749 = vshrl.u32 %v511, 16
        %v751 = vrot.slane %v749, 7
        %v752 = vshll.u32 %v511, 16
        %v754 = vor.u32 %v751, %v752
        %v755 = vsel %vm518, %v747, %v754
        %v756 = vrot.slane %v751, 4
        %v758 = vshrl.u32 %v512, 16
        %v760 = vrot.slane %v758, 7
        %v761 = vshll.u32 %v512, 16
        %v763 = vor.u32 %v760, %v761
        %v764 = vrot.slane %v760, 4
        %v766 = vshrl.u32 %v513, 16
        %v768 = vrot.slane %v766, 7
        %v769 = vshll.u32 %v513, 16
        %v771 = vor.u32 %v768, %v769
        %v772 = vsel %vm518, %v764, %v771
        %v773 = vrot.slane %v768, 4
        %v775 = vshrl.u32 %v514, 16
        %v777 = vrot.slane %v775, 7
        %v778 = vshll.u32 %v514, 16
        %v780 = vor.u32 %v777, %v778
        %v781 = vrot.slane %v777, 4
        %v783 = vshrl.u32 %v515, 16
        %v785 = vrot.slane %v783, 7
        %v786 = vshll.u32 %v515, 16
        %v788 = vor.u32 %v785, %v786
        %v789 = vsel %vm518, %v781, %v788
        %v790 = vrot.slane %v785, 4
        %s839 = scalar_lea.vmem [#allocation2], 12
        %vm840 = vcmask 257024
        %vm841 = vsmask.f32 7938
        %vm842 = vmand %vm840, %vm841
        %v843 = vld [vmem:[%s839] sm:$0xf]
        %v844 = vsel %vm842, %v525, %v843
        %845 = vst [vmem:[%s839] sm:$0xf] %v844
        %846 = vst.msk [vmem:[%s839 + $0x4] sm:$0xf] %vm332, %v534
        %vm847 = vcmask 253952
        %vm848 = vmand %vm847, %vm516
        %v849 = vld [vmem:[%s839 + $0x8] sm:$0x1]
        %v850 = vsel %vm848, %v535, %v849
        %851 = vst [vmem:[%s839 + $0x8] sm:$0x1] %v850
        %v852 = vld [vmem:[%s839 + $0xc] sm:$0xf]
        %v853 = vsel %vm842, %v542, %v852
        %854 = vst [vmem:[%s839 + $0xc] sm:$0xf] %v853
        %855 = vst.msk [vmem:[%s839 + $0x10] sm:$0xf] %vm332, %v551
        %v856 = vld [vmem:[%s839 + $0x14] sm:$0x1]
        %v857 = vsel %vm848, %v552, %v856
        %858 = vst [vmem:[%s839 + $0x14] sm:$0x1] %v857
        %v859 = vld [vmem:[%s839 + $0x18] sm:$0xf]
        %v860 = vsel %vm842, %v559, %v859
        %861 = vst [vmem:[%s839 + $0x18] sm:$0xf] %v860
        %862 = vst.msk [vmem:[%s839 + $0x1c] sm:$0xf] %vm332, %v568
        %v863 = vld [vmem:[%s839 + $0x20] sm:$0x1]
        %v864 = vsel %vm848, %v569, %v863
        %865 = vst [vmem:[%s839 + $0x20] sm:$0x1] %v864
        %v866 = vld [vmem:[%s839 + $0x24] sm:$0xf]
        %v867 = vsel %vm842, %v576, %v866
        %868 = vst [vmem:[%s839 + $0x24] sm:$0xf] %v867
        %869 = vst.msk [vmem:[%s839 + $0x28] sm:$0xf] %vm332, %v585
        %v870 = vld [vmem:[%s839 + $0x2c] sm:$0x1]
        %v871 = vsel %vm848, %v586, %v870
        %872 = vst [vmem:[%s839 + $0x2c] sm:$0x1] %v871
        %v873 = vld [vmem:[%s839 + $0x30] sm:$0xf]
        %v874 = vsel %vm842, %v593, %v873
        %875 = vst [vmem:[%s839 + $0x30] sm:$0xf] %v874
        %876 = vst.msk [vmem:[%s839 + $0x34] sm:$0xf] %vm332, %v602
        %v877 = vld [vmem:[%s839 + $0x38] sm:$0x1]
        %v878 = vsel %vm848, %v603, %v877
        %879 = vst [vmem:[%s839 + $0x38] sm:$0x1] %v878
        %v880 = vld [vmem:[%s839 + $0x3c] sm:$0xf]
        %v881 = vsel %vm842, %v610, %v880
        %882 = vst [vmem:[%s839 + $0x3c] sm:$0xf] %v881
        %883 = vst.msk [vmem:[%s839 + $0x40] sm:$0xf] %vm332, %v619
        %v884 = vld [vmem:[%s839 + $0x44] sm:$0x1]
        %v885 = vsel %vm848, %v620, %v884
        %886 = vst [vmem:[%s839 + $0x44] sm:$0x1] %v885
        %v887 = vld [vmem:[%s839 + $0x48] sm:$0xf]
        %v888 = vsel %vm842, %v627, %v887
        %889 = vst [vmem:[%s839 + $0x48] sm:$0xf] %v888
        %890 = vst.msk [vmem:[%s839 + $0x4c] sm:$0xf] %vm332, %v636
        %v891 = vld [vmem:[%s839 + $0x50] sm:$0x1]
        %v892 = vsel %vm848, %v637, %v891
        %893 = vst [vmem:[%s839 + $0x50] sm:$0x1] %v892
        %v894 = vld [vmem:[%s839 + $0x54] sm:$0xf]
        %v895 = vsel %vm842, %v644, %v894
        %896 = vst [vmem:[%s839 + $0x54] sm:$0xf] %v895
        %897 = vst.msk [vmem:[%s839 + $0x58] sm:$0xf] %vm332, %v653
        %v898 = vld [vmem:[%s839 + $0x5c] sm:$0x1]
        %v899 = vsel %vm848, %v654, %v898
        %900 = vst [vmem:[%s839 + $0x5c] sm:$0x1] %v899
        %v901 = vld [vmem:[%s839 + $0x60] sm:$0xf]
        %v902 = vsel %vm842, %v661, %v901
        %903 = vst [vmem:[%s839 + $0x60] sm:$0xf] %v902
        %904 = vst.msk [vmem:[%s839 + $0x64] sm:$0xf] %vm332, %v670
        %v905 = vld [vmem:[%s839 + $0x68] sm:$0x1]
        %v906 = vsel %vm848, %v671, %v905
        %907 = vst [vmem:[%s839 + $0x68] sm:$0x1] %v906
        %v908 = vld [vmem:[%s839 + $0x6c] sm:$0xf]
        %v909 = vsel %vm842, %v678, %v908
        %910 = vst [vmem:[%s839 + $0x6c] sm:$0xf] %v909
        %911 = vst.msk [vmem:[%s839 + $0x70] sm:$0xf] %vm332, %v687
        %v912 = vld [vmem:[%s839 + $0x74] sm:$0x1]
        %v913 = vsel %vm848, %v688, %v912
        %914 = vst [vmem:[%s839 + $0x74] sm:$0x1] %v913
        %v915 = vld [vmem:[%s839 + $0x78] sm:$0xf]
        %v916 = vsel %vm842, %v695, %v915
        %917 = vst [vmem:[%s839 + $0x78] sm:$0xf] %v916
        %918 = vst.msk [vmem:[%s839 + $0x7c] sm:$0xf] %vm332, %v704
        %v919 = vld [vmem:[%s839 + $0x80] sm:$0x1]
        %v920 = vsel %vm848, %v705, %v919
        %921 = vst [vmem:[%s839 + $0x80] sm:$0x1] %v920
        %v922 = vld [vmem:[%s839 + $0x84] sm:$0xf]
        %v923 = vsel %vm842, %v712, %v922
        %924 = vst [vmem:[%s839 + $0x84] sm:$0xf] %v923
        %925 = vst.msk [vmem:[%s839 + $0x88] sm:$0xf] %vm332, %v721
        %v926 = vld [vmem:[%s839 + $0x8c] sm:$0x1]
        %v927 = vsel %vm848, %v722, %v926
        %928 = vst [vmem:[%s839 + $0x8c] sm:$0x1] %v927
        %v929 = vld [vmem:[%s839 + $0x90] sm:$0xf]
        %v930 = vsel %vm842, %v729, %v929
        %931 = vst [vmem:[%s839 + $0x90] sm:$0xf] %v930
        %932 = vst.msk [vmem:[%s839 + $0x94] sm:$0xf] %vm332, %v738
        %v933 = vld [vmem:[%s839 + $0x98] sm:$0x1]
        %v934 = vsel %vm848, %v739, %v933
        %935 = vst [vmem:[%s839 + $0x98] sm:$0x1] %v934
        %v936 = vld [vmem:[%s839 + $0x9c] sm:$0xf]
        %v937 = vsel %vm842, %v746, %v936
        %938 = vst [vmem:[%s839 + $0x9c] sm:$0xf] %v937
        %939 = vst.msk [vmem:[%s839 + $0xa0] sm:$0xf] %vm332, %v755
        %v940 = vld [vmem:[%s839 + $0xa4] sm:$0x1]
        %v941 = vsel %vm848, %v756, %v940
        %942 = vst [vmem:[%s839 + $0xa4] sm:$0x1] %v941
        %v943 = vld [vmem:[%s839 + $0xa8] sm:$0xf]
        %v944 = vsel %vm842, %v763, %v943
        %945 = vst [vmem:[%s839 + $0xa8] sm:$0xf] %v944
        %946 = vst.msk [vmem:[%s839 + $0xac] sm:$0xf] %vm332, %v772
        %v947 = vld [vmem:[%s839 + $0xb0] sm:$0x1]
        %v948 = vsel %vm848, %v773, %v947
        %949 = vst [vmem:[%s839 + $0xb0] sm:$0x1] %v948
        %v950 = vld [vmem:[%s839 + $0xb4] sm:$0xf]
        %v951 = vsel %vm842, %v780, %v950
        %952 = vst [vmem:[%s839 + $0xb4] sm:$0xf] %v951
        %953 = vst.msk [vmem:[%s839 + $0xb8] sm:$0xf] %vm332, %v789
        %v954 = vld [vmem:[%s839 + $0xbc] sm:$0x1]
        %v955 = vsel %vm848, %v790, %v954
        %956 = vst [vmem:[%s839 + $0xbc] sm:$0x1] %v955
        %v957 = vld [vmem:[#allocation2] sm:$0xf]
        %v958 = vld [vmem:[#allocation2 + $0x4] sm:$0xf]
        %v959 = vld [vmem:[#allocation2 + $0xc] sm:$0xf]
        %v960 = vld [vmem:[#allocation2 + $0x10] sm:$0xf]
        %v961 = vld [vmem:[#allocation2 + $0x18] sm:$0xf]
        %v962 = vld [vmem:[#allocation2 + $0x1c] sm:$0xf]
        %v963 = vld [vmem:[#allocation2 + $0x24] sm:$0xf]
        %v964 = vld [vmem:[#allocation2 + $0x28] sm:$0xf]
        %v965 = vld [vmem:[#allocation2 + $0x30] sm:$0xf]
        %v966 = vld [vmem:[#allocation2 + $0x34] sm:$0xf]
        %v967 = vld [vmem:[#allocation2 + $0x3c] sm:$0xf]
        %v968 = vld [vmem:[#allocation2 + $0x40] sm:$0xf]
        %v969 = vld [vmem:[#allocation2 + $0x48] sm:$0xf]
        %v970 = vld [vmem:[#allocation2 + $0x4c] sm:$0xf]
        %v971 = vld [vmem:[#allocation2 + $0x54] sm:$0xf]
        %v972 = vld [vmem:[#allocation2 + $0x58] sm:$0xf]
        %v973 = vld [vmem:[#allocation2 + $0x60] sm:$0xf]
        %v974 = vld [vmem:[#allocation2 + $0x64] sm:$0xf]
        %v975 = vld [vmem:[#allocation2 + $0x6c] sm:$0xf]
        %v976 = vld [vmem:[#allocation2 + $0x70] sm:$0xf]
        %v977 = vld [vmem:[#allocation2 + $0x78] sm:$0xf]
        %v978 = vld [vmem:[#allocation2 + $0x7c] sm:$0xf]
        %v979 = vld [vmem:[#allocation2 + $0x84] sm:$0xf]
        %v980 = vld [vmem:[#allocation2 + $0x88] sm:$0xf]
        %v981 = vld [vmem:[#allocation2 + $0x90] sm:$0xf]
        %v982 = vld [vmem:[#allocation2 + $0x94] sm:$0xf]
        %v983 = vld [vmem:[#allocation2 + $0x9c] sm:$0xf]
        %v984 = vld [vmem:[#allocation2 + $0xa0] sm:$0xf]
        %v985 = vld [vmem:[#allocation2 + $0xa8] sm:$0xf]
        %v986 = vld [vmem:[#allocation2 + $0xac] sm:$0xf]
        %v987 = vld [vmem:[#allocation2 + $0xb4] sm:$0xf]
        %v988 = vld [vmem:[#allocation2 + $0xb8] sm:$0xf]
        %v1021 = vunpack.c.l.b16 %v957
        %v1022 = vunpack.c.l.b16 %v958
        %v1023 = vunpack.c.l.b16 %v959
        %v1024 = vunpack.c.l.b16 %v960
        %v1025 = vunpack.c.l.b16 %v961
        %v1026 = vunpack.c.l.b16 %v962
        %v1027 = vunpack.c.l.b16 %v963
        %v1028 = vunpack.c.l.b16 %v964
        %v1029 = vunpack.c.l.b16 %v965
        %v1030 = vunpack.c.l.b16 %v966
        %v1031 = vunpack.c.l.b16 %v967
        %v1032 = vunpack.c.l.b16 %v968
        %v1033 = vunpack.c.l.b16 %v969
        %v1034 = vunpack.c.l.b16 %v970
        %v1035 = vunpack.c.l.b16 %v971
        %v1036 = vunpack.c.l.b16 %v972
        %v1037 = vunpack.c.l.b16 %v973
        %v1038 = vunpack.c.l.b16 %v974
        %v1039 = vunpack.c.l.b16 %v975
        %v1040 = vunpack.c.l.b16 %v976
        %v1041 = vunpack.c.l.b16 %v977
        %v1042 = vunpack.c.l.b16 %v978
        %v1043 = vunpack.c.l.b16 %v979
        %v1044 = vunpack.c.l.b16 %v980
        %v1045 = vunpack.c.l.b16 %v981
        %v1046 = vunpack.c.l.b16 %v982
        %v1047 = vunpack.c.l.b16 %v983
        %v1048 = vunpack.c.l.b16 %v984
        %v1049 = vunpack.c.l.b16 %v985
        %v1050 = vunpack.c.l.b16 %v986
        %v1051 = vunpack.c.l.b16 %v987
        %v1052 = vunpack.c.l.b16 %v988
        %v1053 = vpack.c.b16 %v1022, %v1021
        %v1054 = vpack.c.b16 %v1024, %v1023
        %v1055 = vpack.c.b16 %v1026, %v1025
        %v1056 = vpack.c.b16 %v1028, %v1027
        %v1057 = vpack.c.b16 %v1030, %v1029
        %v1058 = vpack.c.b16 %v1032, %v1031
        %v1059 = vpack.c.b16 %v1034, %v1033
        %v1060 = vpack.c.b16 %v1036, %v1035
        %v1061 = vpack.c.b16 %v1038, %v1037
        %v1062 = vpack.c.b16 %v1040, %v1039
        %v1063 = vpack.c.b16 %v1042, %v1041
        %v1064 = vpack.c.b16 %v1044, %v1043
        %v1065 = vpack.c.b16 %v1046, %v1045
        %v1066 = vpack.c.b16 %v1048, %v1047
        %v1067 = vpack.c.b16 %v1050, %v1049
        %v1068 = vpack.c.b16 %v1052, %v1051
        %vm1085 = vcmask 261120
        %1086 = vst.msk [vmem:[#allocation3] sm:$0xff] %vm1085, %v1053
        %1087 = vst.msk [vmem:[#allocation3 + $0x18] sm:$0xff] %vm1085, %v1054
        %1088 = vst.msk [vmem:[#allocation3 + $0x30] sm:$0xff] %vm1085, %v1055
        %1089 = vst.msk [vmem:[#allocation3 + $0x48] sm:$0xff] %vm1085, %v1056
        %1090 = vst.msk [vmem:[#allocation3 + $0x60] sm:$0xff] %vm1085, %v1057
        %1091 = vst.msk [vmem:[#allocation3 + $0x78] sm:$0xff] %vm1085, %v1058
        %1092 = vst.msk [vmem:[#allocation3 + $0x90] sm:$0xff] %vm1085, %v1059
        %1093 = vst.msk [vmem:[#allocation3 + $0xa8] sm:$0xff] %vm1085, %v1060
        %1094 = vst.msk [vmem:[#allocation3 + $0xc0] sm:$0xff] %vm1085, %v1061
        %1095 = vst.msk [vmem:[#allocation3 + $0xd8] sm:$0xff] %vm1085, %v1062
        %1096 = vst.msk [vmem:[#allocation3 + $0xf0] sm:$0xff] %vm1085, %v1063
        %1097 = vst.msk [vmem:[#allocation3 + $0x108] sm:$0xff] %vm1085, %v1064
        %1098 = vst.msk [vmem:[#allocation3 + $0x120] sm:$0xff] %vm1085, %v1065
        %1099 = vst.msk [vmem:[#allocation3 + $0x138] sm:$0xff] %vm1085, %v1066
        %1100 = vst.msk [vmem:[#allocation3 + $0x150] sm:$0xff] %vm1085, %v1067
        %1101 = vst.msk [vmem:[#allocation3 + $0x168] sm:$0xff] %vm1085, %v1068
        %v1102 = vld [vmem:[#allocation2] sm:$0xf]
        %v1103 = vld [vmem:[#allocation2 + $0x4] sm:$0xf]
        %v1104 = vld [vmem:[#allocation2 + $0x8] sm:$0x1]
        %v1105 = vld [vmem:[#allocation2 + $0xc] sm:$0xf]
        %v1106 = vld [vmem:[#allocation2 + $0x10] sm:$0xf]
        %v1107 = vld [vmem:[#allocation2 + $0x14] sm:$0x1]
        %v1108 = vld [vmem:[#allocation2 + $0x18] sm:$0xf]
        %v1109 = vld [vmem:[#allocation2 + $0x1c] sm:$0xf]
        %v1110 = vld [vmem:[#allocation2 + $0x20] sm:$0x1]
        %v1111 = vld [vmem:[#allocation2 + $0x24] sm:$0xf]
        %v1112 = vld [vmem:[#allocation2 + $0x28] sm:$0xf]
        %v1113 = vld [vmem:[#allocation2 + $0x2c] sm:$0x1]
        %v1114 = vld [vmem:[#allocation2 + $0x30] sm:$0xf]
        %v1115 = vld [vmem:[#allocation2 + $0x34] sm:$0xf]
        %v1116 = vld [vmem:[#allocation2 + $0x38] sm:$0x1]
        %v1117 = vld [vmem:[#allocation2 + $0x3c] sm:$0xf]
        %v1118 = vld [vmem:[#allocation2 + $0x40] sm:$0xf]
        %v1119 = vld [vmem:[#allocation2 + $0x44] sm:$0x1]
        %v1120 = vld [vmem:[#allocation2 + $0x48] sm:$0xf]
        %v1121 = vld [vmem:[#allocation2 + $0x4c] sm:$0xf]
        %v1122 = vld [vmem:[#allocation2 + $0x50] sm:$0x1]
        %v1123 = vld [vmem:[#allocation2 + $0x54] sm:$0xf]
        %v1124 = vld [vmem:[#allocation2 + $0x58] sm:$0xf]
        %v1125 = vld [vmem:[#allocation2 + $0x5c] sm:$0x1]
        %v1126 = vld [vmem:[#allocation2 + $0x60] sm:$0xf]
        %v1127 = vld [vmem:[#allocation2 + $0x64] sm:$0xf]
        %v1128 = vld [vmem:[#allocation2 + $0x68] sm:$0x1]
        %v1129 = vld [vmem:[#allocation2 + $0x6c] sm:$0xf]
        %v1130 = vld [vmem:[#allocation2 + $0x70] sm:$0xf]
        %v1131 = vld [vmem:[#allocation2 + $0x74] sm:$0x1]
        %v1132 = vld [vmem:[#allocation2 + $0x78] sm:$0xf]
        %v1133 = vld [vmem:[#allocation2 + $0x7c] sm:$0xf]
        %v1134 = vld [vmem:[#allocation2 + $0x80] sm:$0x1]
        %v1135 = vld [vmem:[#allocation2 + $0x84] sm:$0xf]
        %v1136 = vld [vmem:[#allocation2 + $0x88] sm:$0xf]
        %v1137 = vld [vmem:[#allocation2 + $0x8c] sm:$0x1]
        %v1138 = vld [vmem:[#allocation2 + $0x90] sm:$0xf]
        %v1139 = vld [vmem:[#allocation2 + $0x94] sm:$0xf]
        %v1140 = vld [vmem:[#allocation2 + $0x98] sm:$0x1]
        %v1141 = vld [vmem:[#allocation2 + $0x9c] sm:$0xf]
        %v1142 = vld [vmem:[#allocation2 + $0xa0] sm:$0xf]
        %v1143 = vld [vmem:[#allocation2 + $0xa4] sm:$0x1]
        %v1144 = vld [vmem:[#allocation2 + $0xa8] sm:$0xf]
        %v1145 = vld [vmem:[#allocation2 + $0xac] sm:$0xf]
        %v1146 = vld [vmem:[#allocation2 + $0xb0] sm:$0x1]
        %v1147 = vld [vmem:[#allocation2 + $0xb4] sm:$0xf]
        %v1148 = vld [vmem:[#allocation2 + $0xb8] sm:$0xf]
        %v1149 = vld [vmem:[#allocation2 + $0xbc] sm:$0x1]
        %vm1150 = vsmask.f32 3328
        %vm1151 = vsmask.f32 7440
        %vm1152 = vmor %vm1150, %vm1151
        %v1154 = vshrl.u32 %v1102, 16
        %v1156 = vrot.slane %v1154, 4
        %v1157 = vshll.u32 %v1102, 16
        %v1159 = vrot.slane %v1157, 5
        %v1160 = vor.u32 %v1156, %v1159
        %v1161 = vrot.slane %v1160, 4
        %v1163 = vshll.u32 %v1103, 16
        %v1165 = vrot.slane %v1163, 5
        %v1166 = vsel %vm1152, %v1161, %v1165
        %v1167 = vshrl.u32 %v1103, 16
        %v1169 = vrot.slane %v1167, 4
        %v1170 = vor.u32 %v1169, %v1165
        %v1171 = vrot.slane %v1170, 4
        %v1173 = vshll.u32 %v1104, 16
        %v1175 = vrot.slane %v1173, 5
        %v1176 = vsel %vm1152, %v1171, %v1175
        %v1178 = vshrl.u32 %v1105, 16
        %v1180 = vrot.slane %v1178, 4
        %v1181 = vshll.u32 %v1105, 16
        %v1183 = vrot.slane %v1181, 5
        %v1184 = vor.u32 %v1180, %v1183
        %v1185 = vrot.slane %v1184, 4
        %v1187 = vshll.u32 %v1106, 16
        %v1189 = vrot.slane %v1187, 5
        %v1190 = vsel %vm1152, %v1185, %v1189
        %v1191 = vshrl.u32 %v1106, 16
        %v1193 = vrot.slane %v1191, 4
        %v1194 = vor.u32 %v1193, %v1189
        %v1195 = vrot.slane %v1194, 4
        %v1197 = vshll.u32 %v1107, 16
        %v1199 = vrot.slane %v1197, 5
        %v1200 = vsel %vm1152, %v1195, %v1199
        %v1202 = vshrl.u32 %v1108, 16
        %v1204 = vrot.slane %v1202, 4
        %v1205 = vshll.u32 %v1108, 16
        %v1207 = vrot.slane %v1205, 5
        %v1208 = vor.u32 %v1204, %v1207
        %v1209 = vrot.slane %v1208, 4
        %v1211 = vshll.u32 %v1109, 16
        %v1213 = vrot.slane %v1211, 5
        %v1214 = vsel %vm1152, %v1209, %v1213
        %v1215 = vshrl.u32 %v1109, 16
        %v1217 = vrot.slane %v1215, 4
        %v1218 = vor.u32 %v1217, %v1213
        %v1219 = vrot.slane %v1218, 4
        %v1221 = vshll.u32 %v1110, 16
        %v1223 = vrot.slane %v1221, 5
        %v1224 = vsel %vm1152, %v1219, %v1223
        %v1226 = vshrl.u32 %v1111, 16
        %v1228 = vrot.slane %v1226, 4
        %v1229 = vshll.u32 %v1111, 16
        %v1231 = vrot.slane %v1229, 5
        %v1232 = vor.u32 %v1228, %v1231
        %v1233 = vrot.slane %v1232, 4
        %v1235 = vshll.u32 %v1112, 16
        %v1237 = vrot.slane %v1235, 5
        %v1238 = vsel %vm1152, %v1233, %v1237
        %v1239 = vshrl.u32 %v1112, 16
        %v1241 = vrot.slane %v1239, 4
        %v1242 = vor.u32 %v1241, %v1237
        %v1243 = vrot.slane %v1242, 4
        %v1245 = vshll.u32 %v1113, 16
        %v1247 = vrot.slane %v1245, 5
        %v1248 = vsel %vm1152, %v1243, %v1247
        %v1250 = vshrl.u32 %v1114, 16
        %v1252 = vrot.slane %v1250, 4
        %v1253 = vshll.u32 %v1114, 16
        %v1255 = vrot.slane %v1253, 5
        %v1256 = vor.u32 %v1252, %v1255
        %v1257 = vrot.slane %v1256, 4
        %v1259 = vshll.u32 %v1115, 16
        %v1261 = vrot.slane %v1259, 5
        %v1262 = vsel %vm1152, %v1257, %v1261
        %v1263 = vshrl.u32 %v1115, 16
        %v1265 = vrot.slane %v1263, 4
        %v1266 = vor.u32 %v1265, %v1261
        %v1267 = vrot.slane %v1266, 4
        %v1269 = vshll.u32 %v1116, 16
        %v1271 = vrot.slane %v1269, 5
        %v1272 = vsel %vm1152, %v1267, %v1271
        %v1274 = vshrl.u32 %v1117, 16
        %v1276 = vrot.slane %v1274, 4
        %v1277 = vshll.u32 %v1117, 16
        %v1279 = vrot.slane %v1277, 5
        %v1280 = vor.u32 %v1276, %v1279
        %v1281 = vrot.slane %v1280, 4
        %v1283 = vshll.u32 %v1118, 16
        %v1285 = vrot.slane %v1283, 5
        %v1286 = vsel %vm1152, %v1281, %v1285
        %v1287 = vshrl.u32 %v1118, 16
        %v1289 = vrot.slane %v1287, 4
        %v1290 = vor.u32 %v1289, %v1285
        %v1291 = vrot.slane %v1290, 4
        %v1293 = vshll.u32 %v1119, 16
        %v1295 = vrot.slane %v1293, 5
        %v1296 = vsel %vm1152, %v1291, %v1295
        %v1298 = vshrl.u32 %v1120, 16
        %v1300 = vrot.slane %v1298, 4
        %v1301 = vshll.u32 %v1120, 16
        %v1303 = vrot.slane %v1301, 5
        %v1304 = vor.u32 %v1300, %v1303
        %v1305 = vrot.slane %v1304, 4
        %v1307 = vshll.u32 %v1121, 16
        %v1309 = vrot.slane %v1307, 5
        %v1310 = vsel %vm1152, %v1305, %v1309
        %v1311 = vshrl.u32 %v1121, 16
        %v1313 = vrot.slane %v1311, 4
        %v1314 = vor.u32 %v1313, %v1309
        %v1315 = vrot.slane %v1314, 4
        %v1317 = vshll.u32 %v1122, 16
        %v1319 = vrot.slane %v1317, 5
        %v1320 = vsel %vm1152, %v1315, %v1319
        %v1322 = vshrl.u32 %v1123, 16
        %v1324 = vrot.slane %v1322, 4
        %v1325 = vshll.u32 %v1123, 16
        %v1327 = vrot.slane %v1325, 5
        %v1328 = vor.u32 %v1324, %v1327
        %v1329 = vrot.slane %v1328, 4
        %v1331 = vshll.u32 %v1124, 16
        %v1333 = vrot.slane %v1331, 5
        %v1334 = vsel %vm1152, %v1329, %v1333
        %v1335 = vshrl.u32 %v1124, 16
        %v1337 = vrot.slane %v1335, 4
        %v1338 = vor.u32 %v1337, %v1333
        %v1339 = vrot.slane %v1338, 4
        %v1341 = vshll.u32 %v1125, 16
        %v1343 = vrot.slane %v1341, 5
        %v1344 = vsel %vm1152, %v1339, %v1343
        %v1346 = vshrl.u32 %v1126, 16
        %v1348 = vrot.slane %v1346, 4
        %v1349 = vshll.u32 %v1126, 16
        %v1351 = vrot.slane %v1349, 5
        %v1352 = vor.u32 %v1348, %v1351
        %v1353 = vrot.slane %v1352, 4
        %v1355 = vshll.u32 %v1127, 16
        %v1357 = vrot.slane %v1355, 5
        %v1358 = vsel %vm1152, %v1353, %v1357
        %v1359 = vshrl.u32 %v1127, 16
        %v1361 = vrot.slane %v1359, 4
        %v1362 = vor.u32 %v1361, %v1357
        %v1363 = vrot.slane %v1362, 4
        %v1365 = vshll.u32 %v1128, 16
        %v1367 = vrot.slane %v1365, 5
        %v1368 = vsel %vm1152, %v1363, %v1367
        %v1370 = vshrl.u32 %v1129, 16
        %v1372 = vrot.slane %v1370, 4
        %v1373 = vshll.u32 %v1129, 16
        %v1375 = vrot.slane %v1373, 5
        %v1376 = vor.u32 %v1372, %v1375
        %v1377 = vrot.slane %v1376, 4
        %v1379 = vshll.u32 %v1130, 16
        %v1381 = vrot.slane %v1379, 5
        %v1382 = vsel %vm1152, %v1377, %v1381
        %v1383 = vshrl.u32 %v1130, 16
        %v1385 = vrot.slane %v1383, 4
        %v1386 = vor.u32 %v1385, %v1381
        %v1387 = vrot.slane %v1386, 4
        %v1389 = vshll.u32 %v1131, 16
        %v1391 = vrot.slane %v1389, 5
        %v1392 = vsel %vm1152, %v1387, %v1391
        %v1394 = vshrl.u32 %v1132, 16
        %v1396 = vrot.slane %v1394, 4
        %v1397 = vshll.u32 %v1132, 16
        %v1399 = vrot.slane %v1397, 5
        %v1400 = vor.u32 %v1396, %v1399
        %v1401 = vrot.slane %v1400, 4
        %v1403 = vshll.u32 %v1133, 16
        %v1405 = vrot.slane %v1403, 5
        %v1406 = vsel %vm1152, %v1401, %v1405
        %v1407 = vshrl.u32 %v1133, 16
        %v1409 = vrot.slane %v1407, 4
        %v1410 = vor.u32 %v1409, %v1405
        %v1411 = vrot.slane %v1410, 4
        %v1413 = vshll.u32 %v1134, 16
        %v1415 = vrot.slane %v1413, 5
        %v1416 = vsel %vm1152, %v1411, %v1415
        %v1418 = vshrl.u32 %v1135, 16
        %v1420 = vrot.slane %v1418, 4
        %v1421 = vshll.u32 %v1135, 16
        %v1423 = vrot.slane %v1421, 5
        %v1424 = vor.u32 %v1420, %v1423
        %v1425 = vrot.slane %v1424, 4
        %v1427 = vshll.u32 %v1136, 16
        %v1429 = vrot.slane %v1427, 5
        %v1430 = vsel %vm1152, %v1425, %v1429
        %v1431 = vshrl.u32 %v1136, 16
        %v1433 = vrot.slane %v1431, 4
        %v1434 = vor.u32 %v1433, %v1429
        %v1435 = vrot.slane %v1434, 4
        %v1437 = vshll.u32 %v1137, 16
        %v1439 = vrot.slane %v1437, 5
        %v1440 = vsel %vm1152, %v1435, %v1439
        %v1442 = vshrl.u32 %v1138, 16
        %v1444 = vrot.slane %v1442, 4
        %v1445 = vshll.u32 %v1138, 16
        %v1447 = vrot.slane %v1445, 5
        %v1448 = vor.u32 %v1444, %v1447
        %v1449 = vrot.slane %v1448, 4
        %v1451 = vshll.u32 %v1139, 16
        %v1453 = vrot.slane %v1451, 5
        %v1454 = vsel %vm1152, %v1449, %v1453
        %v1455 = vshrl.u32 %v1139, 16
        %v1457 = vrot.slane %v1455, 4
        %v1458 = vor.u32 %v1457, %v1453
        %v1459 = vrot.slane %v1458, 4
        %v1461 = vshll.u32 %v1140, 16
        %v1463 = vrot.slane %v1461, 5
        %v1464 = vsel %vm1152, %v1459, %v1463
        %v1466 = vshrl.u32 %v1141, 16
        %v1468 = vrot.slane %v1466, 4
        %v1469 = vshll.u32 %v1141, 16
        %v1471 = vrot.slane %v1469, 5
        %v1472 = vor.u32 %v1468, %v1471
        %v1473 = vrot.slane %v1472, 4
        %v1475 = vshll.u32 %v1142, 16
        %v1477 = vrot.slane %v1475, 5
        %v1478 = vsel %vm1152, %v1473, %v1477
        %v1479 = vshrl.u32 %v1142, 16
        %v1481 = vrot.slane %v1479, 4
        %v1482 = vor.u32 %v1481, %v1477
        %v1483 = vrot.slane %v1482, 4
        %v1485 = vshll.u32 %v1143, 16
        %v1487 = vrot.slane %v1485, 5
        %v1488 = vsel %vm1152, %v1483, %v1487
        %v1490 = vshrl.u32 %v1144, 16
        %v1492 = vrot.slane %v1490, 4
        %v1493 = vshll.u32 %v1144, 16
        %v1495 = vrot.slane %v1493, 5
        %v1496 = vor.u32 %v1492, %v1495
        %v1497 = vrot.slane %v1496, 4
        %v1499 = vshll.u32 %v1145, 16
        %v1501 = vrot.slane %v1499, 5
        %v1502 = vsel %vm1152, %v1497, %v1501
        %v1503 = vshrl.u32 %v1145, 16
        %v1505 = vrot.slane %v1503, 4
        %v1506 = vor.u32 %v1505, %v1501
        %v1507 = vrot.slane %v1506, 4
        %v1509 = vshll.u32 %v1146, 16
        %v1511 = vrot.slane %v1509, 5
        %v1512 = vsel %vm1152, %v1507, %v1511
        %v1514 = vshrl.u32 %v1147, 16
        %v1516 = vrot.slane %v1514, 4
        %v1517 = vshll.u32 %v1147, 16
        %v1519 = vrot.slane %v1517, 5
        %v1520 = vor.u32 %v1516, %v1519
        %v1521 = vrot.slane %v1520, 4
        %v1523 = vshll.u32 %v1148, 16
        %v1525 = vrot.slane %v1523, 5
        %v1526 = vsel %vm1152, %v1521, %v1525
        %v1527 = vshrl.u32 %v1148, 16
        %v1529 = vrot.slane %v1527, 4
        %v1530 = vor.u32 %v1529, %v1525
        %v1531 = vrot.slane %v1530, 4
        %v1533 = vshll.u32 %v1149, 16
        %v1535 = vrot.slane %v1533, 5
        %v1536 = vsel %vm1152, %v1531, %v1535
        %v1537 = vunpack.c.l.b16 %v1166
        %v1538 = vunpack.c.l.b16 %v1176
        %v1539 = vunpack.c.l.b16 %v1190
        %v1540 = vunpack.c.l.b16 %v1200
        %v1541 = vunpack.c.l.b16 %v1214
        %v1542 = vunpack.c.l.b16 %v1224
        %v1543 = vunpack.c.l.b16 %v1238
        %v1544 = vunpack.c.l.b16 %v1248
        %v1545 = vunpack.c.l.b16 %v1262
        %v1546 = vunpack.c.l.b16 %v1272
        %v1547 = vunpack.c.l.b16 %v1286
        %v1548 = vunpack.c.l.b16 %v1296
        %v1549 = vunpack.c.l.b16 %v1310
        %v1550 = vunpack.c.l.b16 %v1320
        %v1551 = vunpack.c.l.b16 %v1334
        %v1552 = vunpack.c.l.b16 %v1344
        %v1553 = vunpack.c.l.b16 %v1358
        %v1554 = vunpack.c.l.b16 %v1368
        %v1555 = vunpack.c.l.b16 %v1382
        %v1556 = vunpack.c.l.b16 %v1392
        %v1557 = vunpack.c.l.b16 %v1406
        %v1558 = vunpack.c.l.b16 %v1416
        %v1559 = vunpack.c.l.b16 %v1430
        %v1560 = vunpack.c.l.b16 %v1440
        %v1561 = vunpack.c.l.b16 %v1454
        %v1562 = vunpack.c.l.b16 %v1464
        %v1563 = vunpack.c.l.b16 %v1478
        %v1564 = vunpack.c.l.b16 %v1488
        %v1565 = vunpack.c.l.b16 %v1502
        %v1566 = vunpack.c.l.b16 %v1512
        %v1567 = vunpack.c.l.b16 %v1526
        %v1568 = vunpack.c.l.b16 %v1536
        %v1569 = vpack.c.b16 %v1538, %v1537
        %v1570 = vpack.c.b16 %v1540, %v1539
        %v1571 = vpack.c.b16 %v1542, %v1541
        %v1572 = vpack.c.b16 %v1544, %v1543
        %v1573 = vpack.c.b16 %v1546, %v1545
        %v1574 = vpack.c.b16 %v1548, %v1547
        %v1575 = vpack.c.b16 %v1550, %v1549
        %v1576 = vpack.c.b16 %v1552, %v1551
        %v1577 = vpack.c.b16 %v1554, %v1553
        %v1578 = vpack.c.b16 %v1556, %v1555
        %v1579 = vpack.c.b16 %v1558, %v1557
        %v1580 = vpack.c.b16 %v1560, %v1559
        %v1581 = vpack.c.b16 %v1562, %v1561
        %v1582 = vpack.c.b16 %v1564, %v1563
        %v1583 = vpack.c.b16 %v1566, %v1565
        %v1584 = vpack.c.b16 %v1568, %v1567
        %1585 = vrot.lane.b32.xlu0 %v1569, 32
        %v1586 = vpop.permute.xlu0 %1585
        %1587 = vrot.lane.b32.xlu0 %v1570, 32
        %v1588 = vpop.permute.xlu0 %1587
        %1589 = vrot.lane.b32.xlu0 %v1571, 32
        %v1590 = vpop.permute.xlu0 %1589
        %1591 = vrot.lane.b32.xlu0 %v1572, 32
        %v1592 = vpop.permute.xlu0 %1591
        %1593 = vrot.lane.b32.xlu0 %v1573, 32
        %v1594 = vpop.permute.xlu0 %1593
        %1595 = vrot.lane.b32.xlu0 %v1574, 32
        %v1596 = vpop.permute.xlu0 %1595
        %1597 = vrot.lane.b32.xlu0 %v1575, 32
        %v1598 = vpop.permute.xlu0 %1597
        %1599 = vrot.lane.b32.xlu0 %v1576, 32
        %v1600 = vpop.permute.xlu0 %1599
        %1601 = vrot.lane.b32.xlu0 %v1577, 32
        %v1602 = vpop.permute.xlu0 %1601
        %1603 = vrot.lane.b32.xlu0 %v1578, 32
        %v1604 = vpop.permute.xlu0 %1603
        %1605 = vrot.lane.b32.xlu0 %v1579, 32
        %v1606 = vpop.permute.xlu0 %1605
        %1607 = vrot.lane.b32.xlu0 %v1580, 32
        %v1608 = vpop.permute.xlu0 %1607
        %1609 = vrot.lane.b32.xlu0 %v1581, 32
        %v1610 = vpop.permute.xlu0 %1609
        %1611 = vrot.lane.b32.xlu0 %v1582, 32
        %v1612 = vpop.permute.xlu0 %1611
        %1613 = vrot.lane.b32.xlu0 %v1583, 32
        %v1614 = vpop.permute.xlu0 %1613
        %1615 = vrot.lane.b32.xlu0 %v1584, 32
        %v1616 = vpop.permute.xlu0 %1615
        %vm1633 = vcmask 523520
        %1634 = vst.msk [vmem:[#allocation3] sm:$0xff] %vm1633, %v1586
        %1635 = vst.msk [vmem:[#allocation3 + $0x18] sm:$0xff] %vm1633, %v1588
        %1636 = vst.msk [vmem:[#allocation3 + $0x30] sm:$0xff] %vm1633, %v1590
        %1637 = vst.msk [vmem:[#allocation3 + $0x48] sm:$0xff] %vm1633, %v1592
        %1638 = vst.msk [vmem:[#allocation3 + $0x60] sm:$0xff] %vm1633, %v1594
        %1639 = vst.msk [vmem:[#allocation3 + $0x78] sm:$0xff] %vm1633, %v1596
        %1640 = vst.msk [vmem:[#allocation3 + $0x90] sm:$0xff] %vm1633, %v1598
        %1641 = vst.msk [vmem:[#allocation3 + $0xa8] sm:$0xff] %vm1633, %v1600
        %1642 = vst.msk [vmem:[#allocation3 + $0xc0] sm:$0xff] %vm1633, %v1602
        %1643 = vst.msk [vmem:[#allocation3 + $0xd8] sm:$0xff] %vm1633, %v1604
        %1644 = vst.msk [vmem:[#allocation3 + $0xf0] sm:$0xff] %vm1633, %v1606
        %1645 = vst.msk [vmem:[#allocation3 + $0x108] sm:$0xff] %vm1633, %v1608
        %1646 = vst.msk [vmem:[#allocation3 + $0x120] sm:$0xff] %vm1633, %v1610
        %1647 = vst.msk [vmem:[#allocation3 + $0x138] sm:$0xff] %vm1633, %v1612
        %1648 = vst.msk [vmem:[#allocation3 + $0x150] sm:$0xff] %vm1633, %v1614
        %1649 = vst.msk [vmem:[#allocation3 + $0x168] sm:$0xff] %vm1633, %v1616
        %v1650 = vld [vmem:[#allocation2] sm:$0xe]
        %v1651 = vld [vmem:[#allocation2 + $0x4] sm:$0xf]
        %v1652 = vld [vmem:[#allocation2 + $0x8] sm:$0x1]
        %v1653 = vld [vmem:[#allocation2 + $0xc] sm:$0xe]
        %v1654 = vld [vmem:[#allocation2 + $0x10] sm:$0xf]
        %v1655 = vld [vmem:[#allocation2 + $0x14] sm:$0x1]
        %v1656 = vld [vmem:[#allocation2 + $0x18] sm:$0xe]
        %v1657 = vld [vmem:[#allocation2 + $0x1c] sm:$0xf]
        %v1658 = vld [vmem:[#allocation2 + $0x20] sm:$0x1]
        %v1659 = vld [vmem:[#allocation2 + $0x24] sm:$0xe]
        %v1660 = vld [vmem:[#allocation2 + $0x28] sm:$0xf]
        %v1661 = vld [vmem:[#allocation2 + $0x2c] sm:$0x1]
        %v1662 = vld [vmem:[#allocation2 + $0x30] sm:$0xe]
        %v1663 = vld [vmem:[#allocation2 + $0x34] sm:$0xf]
        %v1664 = vld [vmem:[#allocation2 + $0x38] sm:$0x1]
        %v1665 = vld [vmem:[#allocation2 + $0x3c] sm:$0xe]
        %v1666 = vld [vmem:[#allocation2 + $0x40] sm:$0xf]
        %v1667 = vld [vmem:[#allocation2 + $0x44] sm:$0x1]
        %v1668 = vld [vmem:[#allocation2 + $0x48] sm:$0xe]
        %v1669 = vld [vmem:[#allocation2 + $0x4c] sm:$0xf]
        %v1670 = vld [vmem:[#allocation2 + $0x50] sm:$0x1]
        %v1671 = vld [vmem:[#allocation2 + $0x54] sm:$0xe]
        %v1672 = vld [vmem:[#allocation2 + $0x58] sm:$0xf]
        %v1673 = vld [vmem:[#allocation2 + $0x5c] sm:$0x1]
        %v1674 = vld [vmem:[#allocation2 + $0x60] sm:$0xe]
        %v1675 = vld [vmem:[#allocation2 + $0x64] sm:$0xf]
        %v1676 = vld [vmem:[#allocation2 + $0x68] sm:$0x1]
        %v1677 = vld [vmem:[#allocation2 + $0x6c] sm:$0xe]
        %v1678 = vld [vmem:[#allocation2 + $0x70] sm:$0xf]
        %v1679 = vld [vmem:[#allocation2 + $0x74] sm:$0x1]
        %v1680 = vld [vmem:[#allocation2 + $0x78] sm:$0xe]
        %v1681 = vld [vmem:[#allocation2 + $0x7c] sm:$0xf]
        %v1682 = vld [vmem:[#allocation2 + $0x80] sm:$0x1]
        %v1683 = vld [vmem:[#allocation2 + $0x84] sm:$0xe]
        %v1684 = vld [vmem:[#allocation2 + $0x88] sm:$0xf]
        %v1685 = vld [vmem:[#allocation2 + $0x8c] sm:$0x1]
        %v1686 = vld [vmem:[#allocation2 + $0x90] sm:$0xe]
        %v1687 = vld [vmem:[#allocation2 + $0x94] sm:$0xf]
        %v1688 = vld [vmem:[#allocation2 + $0x98] sm:$0x1]
        %v1689 = vld [vmem:[#allocation2 + $0x9c] sm:$0xe]
        %v1690 = vld [vmem:[#allocation2 + $0xa0] sm:$0xf]
        %v1691 = vld [vmem:[#allocation2 + $0xa4] sm:$0x1]
        %v1692 = vld [vmem:[#allocation2 + $0xa8] sm:$0xe]
        %v1693 = vld [vmem:[#allocation2 + $0xac] sm:$0xf]
        %v1694 = vld [vmem:[#allocation2 + $0xb0] sm:$0x1]
        %v1695 = vld [vmem:[#allocation2 + $0xb4] sm:$0xe]
        %v1696 = vld [vmem:[#allocation2 + $0xb8] sm:$0xf]
        %v1697 = vld [vmem:[#allocation2 + $0xbc] sm:$0x1]
        %vm1746 = vcmask 1042432
        %vm1747 = vcmask 1046532
        %vm1748 = vmor %vm1746, %vm1747
        %v1749 = vrot.slane %v1650, 5
        %v1750 = vrot.slane %v1749, 4
        %v1751 = vrot.slane %v1651, 5
        %v1752 = vsel %vm1748, %v1750, %v1751
        %v1753 = vrot.slane %v1751, 4
        %v1754 = vrot.slane %v1652, 5
        %v1755 = vsel %vm1748, %v1753, %v1754
        %v1756 = vrot.slane %v1653, 5
        %v1757 = vrot.slane %v1756, 4
        %v1758 = vrot.slane %v1654, 5
        %v1759 = vsel %vm1748, %v1757, %v1758
        %v1760 = vrot.slane %v1758, 4
        %v1761 = vrot.slane %v1655, 5
        %v1762 = vsel %vm1748, %v1760, %v1761
        %v1763 = vrot.slane %v1656, 5
        %v1764 = vrot.slane %v1763, 4
        %v1765 = vrot.slane %v1657, 5
        %v1766 = vsel %vm1748, %v1764, %v1765
        %v1767 = vrot.slane %v1765, 4
        %v1768 = vrot.slane %v1658, 5
        %v1769 = vsel %vm1748, %v1767, %v1768
        %v1770 = vrot.slane %v1659, 5
        %v1771 = vrot.slane %v1770, 4
        %v1772 = vrot.slane %v1660, 5
        %v1773 = vsel %vm1748, %v1771, %v1772
        %v1774 = vrot.slane %v1772, 4
        %v1775 = vrot.slane %v1661, 5
        %v1776 = vsel %vm1748, %v1774, %v1775
        %v1777 = vrot.slane %v1662, 5
        %v1778 = vrot.slane %v1777, 4
        %v1779 = vrot.slane %v1663, 5
        %v1780 = vsel %vm1748, %v1778, %v1779
        %v1781 = vrot.slane %v1779, 4
        %v1782 = vrot.slane %v1664, 5
        %v1783 = vsel %vm1748, %v1781, %v1782
        %v1784 = vrot.slane %v1665, 5
        %v1785 = vrot.slane %v1784, 4
        %v1786 = vrot.slane %v1666, 5
        %v1787 = vsel %vm1748, %v1785, %v1786
        %v1788 = vrot.slane %v1786, 4
        %v1789 = vrot.slane %v1667, 5
        %v1790 = vsel %vm1748, %v1788, %v1789
        %v1791 = vrot.slane %v1668, 5
        %v1792 = vrot.slane %v1791, 4
        %v1793 = vrot.slane %v1669, 5
        %v1794 = vsel %vm1748, %v1792, %v1793
        %v1795 = vrot.slane %v1793, 4
        %v1796 = vrot.slane %v1670, 5
        %v1797 = vsel %vm1748, %v1795, %v1796
        %v1798 = vrot.slane %v1671, 5
        %v1799 = vrot.slane %v1798, 4
        %v1800 = vrot.slane %v1672, 5
        %v1801 = vsel %vm1748, %v1799, %v1800
        %v1802 = vrot.slane %v1800, 4
        %v1803 = vrot.slane %v1673, 5
        %v1804 = vsel %vm1748, %v1802, %v1803
        %v1805 = vrot.slane %v1674, 5
        %v1806 = vrot.slane %v1805, 4
        %v1807 = vrot.slane %v1675, 5
        %v1808 = vsel %vm1748, %v1806, %v1807
        %v1809 = vrot.slane %v1807, 4
        %v1810 = vrot.slane %v1676, 5
        %v1811 = vsel %vm1748, %v1809, %v1810
        %v1812 = vrot.slane %v1677, 5
        %v1813 = vrot.slane %v1812, 4
        %v1814 = vrot.slane %v1678, 5
        %v1815 = vsel %vm1748, %v1813, %v1814
        %v1816 = vrot.slane %v1814, 4
        %v1817 = vrot.slane %v1679, 5
        %v1818 = vsel %vm1748, %v1816, %v1817
        %v1819 = vrot.slane %v1680, 5
        %v1820 = vrot.slane %v1819, 4
        %v1821 = vrot.slane %v1681, 5
        %v1822 = vsel %vm1748, %v1820, %v1821
        %v1823 = vrot.slane %v1821, 4
        %v1824 = vrot.slane %v1682, 5
        %v1825 = vsel %vm1748, %v1823, %v1824
        %v1826 = vrot.slane %v1683, 5
        %v1827 = vrot.slane %v1826, 4
        %v1828 = vrot.slane %v1684, 5
        %v1829 = vsel %vm1748, %v1827, %v1828
        %v1830 = vrot.slane %v1828, 4
        %v1831 = vrot.slane %v1685, 5
        %v1832 = vsel %vm1748, %v1830, %v1831
        %v1833 = vrot.slane %v1686, 5
        %v1834 = vrot.slane %v1833, 4
        %v1835 = vrot.slane %v1687, 5
        %v1836 = vsel %vm1748, %v1834, %v1835
        %v1837 = vrot.slane %v1835, 4
        %v1838 = vrot.slane %v1688, 5
        %v1839 = vsel %vm1748, %v1837, %v1838
        %v1840 = vrot.slane %v1689, 5
        %v1841 = vrot.slane %v1840, 4
        %v1842 = vrot.slane %v1690, 5
        %v1843 = vsel %vm1748, %v1841, %v1842
        %v1844 = vrot.slane %v1842, 4
        %v1845 = vrot.slane %v1691, 5
        %v1846 = vsel %vm1748, %v1844, %v1845
        %v1847 = vrot.slane %v1692, 5
        %v1848 = vrot.slane %v1847, 4
        %v1849 = vrot.slane %v1693, 5
        %v1850 = vsel %vm1748, %v1848, %v1849
        %v1851 = vrot.slane %v1849, 4
        %v1852 = vrot.slane %v1694, 5
        %v1853 = vsel %vm1748, %v1851, %v1852
        %v1854 = vrot.slane %v1695, 5
        %v1855 = vrot.slane %v1854, 4
        %v1856 = vrot.slane %v1696, 5
        %v1857 = vsel %vm1748, %v1855, %v1856
        %v1858 = vrot.slane %v1856, 4
        %v1859 = vrot.slane %v1697, 5
        %v1860 = vsel %vm1748, %v1858, %v1859
        %v1861 = vunpack.c.l.b16 %v1752
        %v1862 = vunpack.c.l.b16 %v1755
        %v1863 = vunpack.c.l.b16 %v1759
        %v1864 = vunpack.c.l.b16 %v1762
        %v1865 = vunpack.c.l.b16 %v1766
        %v1866 = vunpack.c.l.b16 %v1769
        %v1867 = vunpack.c.l.b16 %v1773
        %v1868 = vunpack.c.l.b16 %v1776
        %v1869 = vunpack.c.l.b16 %v1780
        %v1870 = vunpack.c.l.b16 %v1783
        %v1871 = vunpack.c.l.b16 %v1787
        %v1872 = vunpack.c.l.b16 %v1790
        %v1873 = vunpack.c.l.b16 %v1794
        %v1874 = vunpack.c.l.b16 %v1797
        %v1875 = vunpack.c.l.b16 %v1801
        %v1876 = vunpack.c.l.b16 %v1804
        %v1877 = vunpack.c.l.b16 %v1808
        %v1878 = vunpack.c.l.b16 %v1811
        %v1879 = vunpack.c.l.b16 %v1815
        %v1880 = vunpack.c.l.b16 %v1818
        %v1881 = vunpack.c.l.b16 %v1822
        %v1882 = vunpack.c.l.b16 %v1825
        %v1883 = vunpack.c.l.b16 %v1829
        %v1884 = vunpack.c.l.b16 %v1832
        %v1885 = vunpack.c.l.b16 %v1836
        %v1886 = vunpack.c.l.b16 %v1839
        %v1887 = vunpack.c.l.b16 %v1843
        %v1888 = vunpack.c.l.b16 %v1846
        %v1889 = vunpack.c.l.b16 %v1850
        %v1890 = vunpack.c.l.b16 %v1853
        %v1891 = vunpack.c.l.b16 %v1857
        %v1892 = vunpack.c.l.b16 %v1860
        %v1893 = vpack.c.b16 %v1862, %v1861
        %v1894 = vpack.c.b16 %v1864, %v1863
        %v1895 = vpack.c.b16 %v1866, %v1865
        %v1896 = vpack.c.b16 %v1868, %v1867
        %v1897 = vpack.c.b16 %v1870, %v1869
        %v1898 = vpack.c.b16 %v1872, %v1871
        %v1899 = vpack.c.b16 %v1874, %v1873
        %v1900 = vpack.c.b16 %v1876, %v1875
        %v1901 = vpack.c.b16 %v1878, %v1877
        %v1902 = vpack.c.b16 %v1880, %v1879
        %v1903 = vpack.c.b16 %v1882, %v1881
        %v1904 = vpack.c.b16 %v1884, %v1883
        %v1905 = vpack.c.b16 %v1886, %v1885
        %v1906 = vpack.c.b16 %v1888, %v1887
        %v1907 = vpack.c.b16 %v1890, %v1889
        %v1908 = vpack.c.b16 %v1892, %v1891
        %1909 = vrot.lane.b32.xlu0 %v1893, 64
        %v1910 = vpop.permute.xlu0 %1909
        %1911 = vrot.lane.b32.xlu0 %v1894, 64
        %v1912 = vpop.permute.xlu0 %1911
        %1913 = vrot.lane.b32.xlu0 %v1895, 64
        %v1914 = vpop.permute.xlu0 %1913
        %1915 = vrot.lane.b32.xlu0 %v1896, 64
        %v1916 = vpop.permute.xlu0 %1915
        %1917 = vrot.lane.b32.xlu0 %v1897, 64
        %v1918 = vpop.permute.xlu0 %1917
        %1919 = vrot.lane.b32.xlu0 %v1898, 64
        %v1920 = vpop.permute.xlu0 %1919
        %1921 = vrot.lane.b32.xlu0 %v1899, 64
        %v1922 = vpop.permute.xlu0 %1921
        %1923 = vrot.lane.b32.xlu0 %v1900, 64
        %v1924 = vpop.permute.xlu0 %1923
        %1925 = vrot.lane.b32.xlu0 %v1901, 64
        %v1926 = vpop.permute.xlu0 %1925
        %1927 = vrot.lane.b32.xlu0 %v1902, 64
        %v1928 = vpop.permute.xlu0 %1927
        %1929 = vrot.lane.b32.xlu0 %v1903, 64
        %v1930 = vpop.permute.xlu0 %1929
        %1931 = vrot.lane.b32.xlu0 %v1904, 64
        %v1932 = vpop.permute.xlu0 %1931
        %1933 = vrot.lane.b32.xlu0 %v1905, 64
        %v1934 = vpop.permute.xlu0 %1933
        %1935 = vrot.lane.b32.xlu0 %v1906, 64
        %v1936 = vpop.permute.xlu0 %1935
        %1937 = vrot.lane.b32.xlu0 %v1907, 64
        %v1938 = vpop.permute.xlu0 %1937
        %1939 = vrot.lane.b32.xlu0 %v1908, 64
        %v1940 = vpop.permute.xlu0 %1939
        %vm1957 = vcmask 785920
        %1958 = vst.msk [vmem:[#allocation3] sm:$0xff] %vm1957, %v1910
        %1959 = vst.msk [vmem:[#allocation3 + $0x18] sm:$0xff] %vm1957, %v1912
        %1960 = vst.msk [vmem:[#allocation3 + $0x30] sm:$0xff] %vm1957, %v1914
        %1961 = vst.msk [vmem:[#allocation3 + $0x48] sm:$0xff] %vm1957, %v1916
        %1962 = vst.msk [vmem:[#allocation3 + $0x60] sm:$0xff] %vm1957, %v1918
        %1963 = vst.msk [vmem:[#allocation3 + $0x78] sm:$0xff] %vm1957, %v1920
        %1964 = vst.msk [vmem:[#allocation3 + $0x90] sm:$0xff] %vm1957, %v1922
        %1965 = vst.msk [vmem:[#allocation3 + $0xa8] sm:$0xff] %vm1957, %v1924
        %1966 = vst.msk [vmem:[#allocation3 + $0xc0] sm:$0xff] %vm1957, %v1926
        %1967 = vst.msk [vmem:[#allocation3 + $0xd8] sm:$0xff] %vm1957, %v1928
        %1968 = vst.msk [vmem:[#allocation3 + $0xf0] sm:$0xff] %vm1957, %v1930
        %1969 = vst.msk [vmem:[#allocation3 + $0x108] sm:$0xff] %vm1957, %v1932
        %1970 = vst.msk [vmem:[#allocation3 + $0x120] sm:$0xff] %vm1957, %v1934
        %1971 = vst.msk [vmem:[#allocation3 + $0x138] sm:$0xff] %vm1957, %v1936
        %1972 = vst.msk [vmem:[#allocation3 + $0x150] sm:$0xff] %vm1957, %v1938
        %1973 = vst.msk [vmem:[#allocation3 + $0x168] sm:$0xff] %vm1957, %v1940
        %v1974 = vld [vmem:[%s839] sm:$0xf]
        %v1975 = vld [vmem:[%s839 + $0x4] sm:$0xf]
        %v1976 = vld [vmem:[%s839 + $0xc] sm:$0xf]
        %v1977 = vld [vmem:[%s839 + $0x10] sm:$0xf]
        %v1978 = vld [vmem:[%s839 + $0x18] sm:$0xf]
        %v1979 = vld [vmem:[%s839 + $0x1c] sm:$0xf]
        %v1980 = vld [vmem:[%s839 + $0x24] sm:$0xf]
        %v1981 = vld [vmem:[%s839 + $0x28] sm:$0xf]
        %v1982 = vld [vmem:[%s839 + $0x30] sm:$0xf]
        %v1983 = vld [vmem:[%s839 + $0x34] sm:$0xf]
        %v1984 = vld [vmem:[%s839 + $0x3c] sm:$0xf]
        %v1985 = vld [vmem:[%s839 + $0x40] sm:$0xf]
        %v1986 = vld [vmem:[%s839 + $0x48] sm:$0xf]
        %v1987 = vld [vmem:[%s839 + $0x4c] sm:$0xf]
        %v1988 = vld [vmem:[%s839 + $0x54] sm:$0xf]
        %v1989 = vld [vmem:[%s839 + $0x58] sm:$0xf]
        %v1990 = vld [vmem:[%s839 + $0x60] sm:$0xf]
        %v1991 = vld [vmem:[%s839 + $0x64] sm:$0xf]
        %v1992 = vld [vmem:[%s839 + $0x6c] sm:$0xf]
        %v1993 = vld [vmem:[%s839 + $0x70] sm:$0xf]
        %v1994 = vld [vmem:[%s839 + $0x78] sm:$0xf]
        %v1995 = vld [vmem:[%s839 + $0x7c] sm:$0xf]
        %v1996 = vld [vmem:[%s839 + $0x84] sm:$0xf]
        %v1997 = vld [vmem:[%s839 + $0x88] sm:$0xf]
        %v1998 = vld [vmem:[%s839 + $0x90] sm:$0xf]
        %v1999 = vld [vmem:[%s839 + $0x94] sm:$0xf]
        %v2000 = vld [vmem:[%s839 + $0x9c] sm:$0xf]
        %v2001 = vld [vmem:[%s839 + $0xa0] sm:$0xf]
        %v2002 = vld [vmem:[%s839 + $0xa8] sm:$0xf]
        %v2003 = vld [vmem:[%s839 + $0xac] sm:$0xf]
        %v2004 = vld [vmem:[%s839 + $0xb4] sm:$0xf]
        %v2005 = vld [vmem:[%s839 + $0xb8] sm:$0xf]
        %v2038 = vunpack.c.l.b16 %v1974
        %v2039 = vunpack.c.l.b16 %v1975
        %v2040 = vunpack.c.l.b16 %v1976
        %v2041 = vunpack.c.l.b16 %v1977
        %v2042 = vunpack.c.l.b16 %v1978
        %v2043 = vunpack.c.l.b16 %v1979
        %v2044 = vunpack.c.l.b16 %v1980
        %v2045 = vunpack.c.l.b16 %v1981
        %v2046 = vunpack.c.l.b16 %v1982
        %v2047 = vunpack.c.l.b16 %v1983
        %v2048 = vunpack.c.l.b16 %v1984
        %v2049 = vunpack.c.l.b16 %v1985
        %v2050 = vunpack.c.l.b16 %v1986
        %v2051 = vunpack.c.l.b16 %v1987
        %v2052 = vunpack.c.l.b16 %v1988
        %v2053 = vunpack.c.l.b16 %v1989
        %v2054 = vunpack.c.l.b16 %v1990
        %v2055 = vunpack.c.l.b16 %v1991
        %v2056 = vunpack.c.l.b16 %v1992
        %v2057 = vunpack.c.l.b16 %v1993
        %v2058 = vunpack.c.l.b16 %v1994
        %v2059 = vunpack.c.l.b16 %v1995
        %v2060 = vunpack.c.l.b16 %v1996
        %v2061 = vunpack.c.l.b16 %v1997
        %v2062 = vunpack.c.l.b16 %v1998
        %v2063 = vunpack.c.l.b16 %v1999
        %v2064 = vunpack.c.l.b16 %v2000
        %v2065 = vunpack.c.l.b16 %v2001
        %v2066 = vunpack.c.l.b16 %v2002
        %v2067 = vunpack.c.l.b16 %v2003
        %v2068 = vunpack.c.l.b16 %v2004
        %v2069 = vunpack.c.l.b16 %v2005
        %v2070 = vpack.c.b16 %v2039, %v2038
        %v2071 = vpack.c.b16 %v2041, %v2040
        %v2072 = vpack.c.b16 %v2043, %v2042
        %v2073 = vpack.c.b16 %v2045, %v2044
        %v2074 = vpack.c.b16 %v2047, %v2046
        %v2075 = vpack.c.b16 %v2049, %v2048
        %v2076 = vpack.c.b16 %v2051, %v2050
        %v2077 = vpack.c.b16 %v2053, %v2052
        %v2078 = vpack.c.b16 %v2055, %v2054
        %v2079 = vpack.c.b16 %v2057, %v2056
        %v2080 = vpack.c.b16 %v2059, %v2058
        %v2081 = vpack.c.b16 %v2061, %v2060
        %v2082 = vpack.c.b16 %v2063, %v2062
        %v2083 = vpack.c.b16 %v2065, %v2064
        %v2084 = vpack.c.b16 %v2067, %v2066
        %v2085 = vpack.c.b16 %v2069, %v2068
        %2086 = vrot.lane.b32.xlu0 %v2070, 96
        %v2087 = vpop.permute.xlu0 %2086
        %2088 = vrot.lane.b32.xlu0 %v2071, 96
        %v2089 = vpop.permute.xlu0 %2088
        %2090 = vrot.lane.b32.xlu0 %v2072, 96
        %v2091 = vpop.permute.xlu0 %2090
        %2092 = vrot.lane.b32.xlu0 %v2073, 96
        %v2093 = vpop.permute.xlu0 %2092
        %2094 = vrot.lane.b32.xlu0 %v2074, 96
        %v2095 = vpop.permute.xlu0 %2094
        %2096 = vrot.lane.b32.xlu0 %v2075, 96
        %v2097 = vpop.permute.xlu0 %2096
        %2098 = vrot.lane.b32.xlu0 %v2076, 96
        %v2099 = vpop.permute.xlu0 %2098
        %2100 = vrot.lane.b32.xlu0 %v2077, 96
        %v2101 = vpop.permute.xlu0 %2100
        %2102 = vrot.lane.b32.xlu0 %v2078, 96
        %v2103 = vpop.permute.xlu0 %2102
        %2104 = vrot.lane.b32.xlu0 %v2079, 96
        %v2105 = vpop.permute.xlu0 %2104
        %2106 = vrot.lane.b32.xlu0 %v2080, 96
        %v2107 = vpop.permute.xlu0 %2106
        %2108 = vrot.lane.b32.xlu0 %v2081, 96
        %v2109 = vpop.permute.xlu0 %2108
        %2110 = vrot.lane.b32.xlu0 %v2082, 96
        %v2111 = vpop.permute.xlu0 %2110
        %2112 = vrot.lane.b32.xlu0 %v2083, 96
        %v2113 = vpop.permute.xlu0 %2112
        %2114 = vrot.lane.b32.xlu0 %v2084, 96
        %v2115 = vpop.permute.xlu0 %2114
        %2116 = vrot.lane.b32.xlu0 %v2085, 96
        %v2117 = vpop.permute.xlu0 %2116
        %vm2134 = vcmask 1048320
        %2135 = vst.msk [vmem:[#allocation3] sm:$0xff] %vm2134, %v2087
        %2136 = vst.msk [vmem:[#allocation3 + $0x18] sm:$0xff] %vm2134, %v2089
        %2137 = vst.msk [vmem:[#allocation3 + $0x30] sm:$0xff] %vm2134, %v2091
        %2138 = vst.msk [vmem:[#allocation3 + $0x48] sm:$0xff] %vm2134, %v2093
        %2139 = vst.msk [vmem:[#allocation3 + $0x60] sm:$0xff] %vm2134, %v2095
        %2140 = vst.msk [vmem:[#allocation3 + $0x78] sm:$0xff] %vm2134, %v2097
        %2141 = vst.msk [vmem:[#allocation3 + $0x90] sm:$0xff] %vm2134, %v2099
        %2142 = vst.msk [vmem:[#allocation3 + $0xa8] sm:$0xff] %vm2134, %v2101
        %2143 = vst.msk [vmem:[#allocation3 + $0xc0] sm:$0xff] %vm2134, %v2103
        %2144 = vst.msk [vmem:[#allocation3 + $0xd8] sm:$0xff] %vm2134, %v2105
        %2145 = vst.msk [vmem:[#allocation3 + $0xf0] sm:$0xff] %vm2134, %v2107
        %2146 = vst.msk [vmem:[#allocation3 + $0x108] sm:$0xff] %vm2134, %v2109
        %2147 = vst.msk [vmem:[#allocation3 + $0x120] sm:$0xff] %vm2134, %v2111
        %2148 = vst.msk [vmem:[#allocation3 + $0x138] sm:$0xff] %vm2134, %v2113
        %2149 = vst.msk [vmem:[#allocation3 + $0x150] sm:$0xff] %vm2134, %v2115
        %2150 = vst.msk [vmem:[#allocation3 + $0x168] sm:$0xff] %vm2134, %v2117
        %v2151 = vld [vmem:[%s839] sm:$0xf]
        %v2152 = vld [vmem:[%s839 + $0x4] sm:$0xf]
        %v2153 = vld [vmem:[%s839 + $0x8] sm:$0x1]
        %v2154 = vld [vmem:[%s839 + $0xc] sm:$0xf]
        %v2155 = vld [vmem:[%s839 + $0x10] sm:$0xf]
        %v2156 = vld [vmem:[%s839 + $0x14] sm:$0x1]
        %v2157 = vld [vmem:[%s839 + $0x18] sm:$0xf]
        %v2158 = vld [vmem:[%s839 + $0x1c] sm:$0xf]
        %v2159 = vld [vmem:[%s839 + $0x20] sm:$0x1]
        %v2160 = vld [vmem:[%s839 + $0x24] sm:$0xf]
        %v2161 = vld [vmem:[%s839 + $0x28] sm:$0xf]
        %v2162 = vld [vmem:[%s839 + $0x2c] sm:$0x1]
        %v2163 = vld [vmem:[%s839 + $0x30] sm:$0xf]
        %v2164 = vld [vmem:[%s839 + $0x34] sm:$0xf]
        %v2165 = vld [vmem:[%s839 + $0x38] sm:$0x1]
        %v2166 = vld [vmem:[%s839 + $0x3c] sm:$0xf]
        %v2167 = vld [vmem:[%s839 + $0x40] sm:$0xf]
        %v2168 = vld [vmem:[%s839 + $0x44] sm:$0x1]
        %v2169 = vld [vmem:[%s839 + $0x48] sm:$0xf]
        %v2170 = vld [vmem:[%s839 + $0x4c] sm:$0xf]
        %v2171 = vld [vmem:[%s839 + $0x50] sm:$0x1]
        %v2172 = vld [vmem:[%s839 + $0x54] sm:$0xf]
        %v2173 = vld [vmem:[%s839 + $0x58] sm:$0xf]
        %v2174 = vld [vmem:[%s839 + $0x5c] sm:$0x1]
        %v2175 = vld [vmem:[%s839 + $0x60] sm:$0xf]
        %v2176 = vld [vmem:[%s839 + $0x64] sm:$0xf]
        %v2177 = vld [vmem:[%s839 + $0x68] sm:$0x1]
        %v2178 = vld [vmem:[%s839 + $0x6c] sm:$0xf]
        %v2179 = vld [vmem:[%s839 + $0x70] sm:$0xf]
        %v2180 = vld [vmem:[%s839 + $0x74] sm:$0x1]
        %v2181 = vld [vmem:[%s839 + $0x78] sm:$0xf]
        %v2182 = vld [vmem:[%s839 + $0x7c] sm:$0xf]
        %v2183 = vld [vmem:[%s839 + $0x80] sm:$0x1]
        %v2184 = vld [vmem:[%s839 + $0x84] sm:$0xf]
        %v2185 = vld [vmem:[%s839 + $0x88] sm:$0xf]
        %v2186 = vld [vmem:[%s839 + $0x8c] sm:$0x1]
        %v2187 = vld [vmem:[%s839 + $0x90] sm:$0xf]
        %v2188 = vld [vmem:[%s839 + $0x94] sm:$0xf]
        %v2189 = vld [vmem:[%s839 + $0x98] sm:$0x1]
        %v2190 = vld [vmem:[%s839 + $0x9c] sm:$0xf]
        %v2191 = vld [vmem:[%s839 + $0xa0] sm:$0xf]
        %v2192 = vld [vmem:[%s839 + $0xa4] sm:$0x1]
        %v2193 = vld [vmem:[%s839 + $0xa8] sm:$0xf]
        %v2194 = vld [vmem:[%s839 + $0xac] sm:$0xf]
        %v2195 = vld [vmem:[%s839 + $0xb0] sm:$0x1]
        %v2196 = vld [vmem:[%s839 + $0xb4] sm:$0xf]
        %v2197 = vld [vmem:[%s839 + $0xb8] sm:$0xf]
        %v2198 = vld [vmem:[%s839 + $0xbc] sm:$0x1]
        %v2200 = vshrl.u32 %v2151, 16
        %v2202 = vrot.slane %v2200, 4
        %v2203 = vshll.u32 %v2151, 16
        %v2205 = vrot.slane %v2203, 5
        %v2206 = vor.u32 %v2202, %v2205
        %v2207 = vrot.slane %v2206, 4
        %v2209 = vshll.u32 %v2152, 16
        %v2211 = vrot.slane %v2209, 5
        %v2212 = vsel %vm1152, %v2207, %v2211
        %v2213 = vshrl.u32 %v2152, 16
        %v2215 = vrot.slane %v2213, 4
        %v2216 = vor.u32 %v2215, %v2211
        %v2217 = vrot.slane %v2216, 4
        %v2219 = vshll.u32 %v2153, 16
        %v2221 = vrot.slane %v2219, 5
        %v2222 = vsel %vm1152, %v2217, %v2221
        %v2224 = vshrl.u32 %v2154, 16
        %v2226 = vrot.slane %v2224, 4
        %v2227 = vshll.u32 %v2154, 16
        %v2229 = vrot.slane %v2227, 5
        %v2230 = vor.u32 %v2226, %v2229
        %v2231 = vrot.slane %v2230, 4
        %v2233 = vshll.u32 %v2155, 16
        %v2235 = vrot.slane %v2233, 5
        %v2236 = vsel %vm1152, %v2231, %v2235
        %v2237 = vshrl.u32 %v2155, 16
        %v2239 = vrot.slane %v2237, 4
        %v2240 = vor.u32 %v2239, %v2235
        %v2241 = vrot.slane %v2240, 4
        %v2243 = vshll.u32 %v2156, 16
        %v2245 = vrot.slane %v2243, 5
        %v2246 = vsel %vm1152, %v2241, %v2245
        %v2248 = vshrl.u32 %v2157, 16
        %v2250 = vrot.slane %v2248, 4
        %v2251 = vshll.u32 %v2157, 16
        %v2253 = vrot.slane %v2251, 5
        %v2254 = vor.u32 %v2250, %v2253
        %v2255 = vrot.slane %v2254, 4
        %v2257 = vshll.u32 %v2158, 16
        %v2259 = vrot.slane %v2257, 5
        %v2260 = vsel %vm1152, %v2255, %v2259
        %v2261 = vshrl.u32 %v2158, 16
        %v2263 = vrot.slane %v2261, 4
        %v2264 = vor.u32 %v2263, %v2259
        %v2265 = vrot.slane %v2264, 4
        %v2267 = vshll.u32 %v2159, 16
        %v2269 = vrot.slane %v2267, 5
        %v2270 = vsel %vm1152, %v2265, %v2269
        %v2272 = vshrl.u32 %v2160, 16
        %v2274 = vrot.slane %v2272, 4
        %v2275 = vshll.u32 %v2160, 16
        %v2277 = vrot.slane %v2275, 5
        %v2278 = vor.u32 %v2274, %v2277
        %v2279 = vrot.slane %v2278, 4
        %v2281 = vshll.u32 %v2161, 16
        %v2283 = vrot.slane %v2281, 5
        %v2284 = vsel %vm1152, %v2279, %v2283
        %v2285 = vshrl.u32 %v2161, 16
        %v2287 = vrot.slane %v2285, 4
        %v2288 = vor.u32 %v2287, %v2283
        %v2289 = vrot.slane %v2288, 4
        %v2291 = vshll.u32 %v2162, 16
        %v2293 = vrot.slane %v2291, 5
        %v2294 = vsel %vm1152, %v2289, %v2293
        %v2296 = vshrl.u32 %v2163, 16
        %v2298 = vrot.slane %v2296, 4
        %v2299 = vshll.u32 %v2163, 16
        %v2301 = vrot.slane %v2299, 5
        %v2302 = vor.u32 %v2298, %v2301
        %v2303 = vrot.slane %v2302, 4
        %v2305 = vshll.u32 %v2164, 16
        %v2307 = vrot.slane %v2305, 5
        %v2308 = vsel %vm1152, %v2303, %v2307
        %v2309 = vshrl.u32 %v2164, 16
        %v2311 = vrot.slane %v2309, 4
        %v2312 = vor.u32 %v2311, %v2307
        %v2313 = vrot.slane %v2312, 4
        %v2315 = vshll.u32 %v2165, 16
        %v2317 = vrot.slane %v2315, 5
        %v2318 = vsel %vm1152, %v2313, %v2317
        %v2320 = vshrl.u32 %v2166, 16
        %v2322 = vrot.slane %v2320, 4
        %v2323 = vshll.u32 %v2166, 16
        %v2325 = vrot.slane %v2323, 5
        %v2326 = vor.u32 %v2322, %v2325
        %v2327 = vrot.slane %v2326, 4
        %v2329 = vshll.u32 %v2167, 16
        %v2331 = vrot.slane %v2329, 5
        %v2332 = vsel %vm1152, %v2327, %v2331
        %v2333 = vshrl.u32 %v2167, 16
        %v2335 = vrot.slane %v2333, 4
        %v2336 = vor.u32 %v2335, %v2331
        %v2337 = vrot.slane %v2336, 4
        %v2339 = vshll.u32 %v2168, 16
        %v2341 = vrot.slane %v2339, 5
        %v2342 = vsel %vm1152, %v2337, %v2341
        %v2344 = vshrl.u32 %v2169, 16
        %v2346 = vrot.slane %v2344, 4
        %v2347 = vshll.u32 %v2169, 16
        %v2349 = vrot.slane %v2347, 5
        %v2350 = vor.u32 %v2346, %v2349
        %v2351 = vrot.slane %v2350, 4
        %v2353 = vshll.u32 %v2170, 16
        %v2355 = vrot.slane %v2353, 5
        %v2356 = vsel %vm1152, %v2351, %v2355
        %v2357 = vshrl.u32 %v2170, 16
        %v2359 = vrot.slane %v2357, 4
        %v2360 = vor.u32 %v2359, %v2355
        %v2361 = vrot.slane %v2360, 4
        %v2363 = vshll.u32 %v2171, 16
        %v2365 = vrot.slane %v2363, 5
        %v2366 = vsel %vm1152, %v2361, %v2365
        %v2368 = vshrl.u32 %v2172, 16
        %v2370 = vrot.slane %v2368, 4
        %v2371 = vshll.u32 %v2172, 16
        %v2373 = vrot.slane %v2371, 5
        %v2374 = vor.u32 %v2370, %v2373
        %v2375 = vrot.slane %v2374, 4
        %v2377 = vshll.u32 %v2173, 16
        %v2379 = vrot.slane %v2377, 5
        %v2380 = vsel %vm1152, %v2375, %v2379
        %v2381 = vshrl.u32 %v2173, 16
        %v2383 = vrot.slane %v2381, 4
        %v2384 = vor.u32 %v2383, %v2379
        %v2385 = vrot.slane %v2384, 4
        %v2387 = vshll.u32 %v2174, 16
        %v2389 = vrot.slane %v2387, 5
        %v2390 = vsel %vm1152, %v2385, %v2389
        %v2392 = vshrl.u32 %v2175, 16
        %v2394 = vrot.slane %v2392, 4
        %v2395 = vshll.u32 %v2175, 16
        %v2397 = vrot.slane %v2395, 5
        %v2398 = vor.u32 %v2394, %v2397
        %v2399 = vrot.slane %v2398, 4
        %v2401 = vshll.u32 %v2176, 16
        %v2403 = vrot.slane %v2401, 5
        %v2404 = vsel %vm1152, %v2399, %v2403
        %v2405 = vshrl.u32 %v2176, 16
        %v2407 = vrot.slane %v2405, 4
        %v2408 = vor.u32 %v2407, %v2403
        %v2409 = vrot.slane %v2408, 4
        %v2411 = vshll.u32 %v2177, 16
        %v2413 = vrot.slane %v2411, 5
        %v2414 = vsel %vm1152, %v2409, %v2413
        %v2416 = vshrl.u32 %v2178, 16
        %v2418 = vrot.slane %v2416, 4
        %v2419 = vshll.u32 %v2178, 16
        %v2421 = vrot.slane %v2419, 5
        %v2422 = vor.u32 %v2418, %v2421
        %v2423 = vrot.slane %v2422, 4
        %v2425 = vshll.u32 %v2179, 16
        %v2427 = vrot.slane %v2425, 5
        %v2428 = vsel %vm1152, %v2423, %v2427
        %v2429 = vshrl.u32 %v2179, 16
        %v2431 = vrot.slane %v2429, 4
        %v2432 = vor.u32 %v2431, %v2427
        %v2433 = vrot.slane %v2432, 4
        %v2435 = vshll.u32 %v2180, 16
        %v2437 = vrot.slane %v2435, 5
        %v2438 = vsel %vm1152, %v2433, %v2437
        %v2440 = vshrl.u32 %v2181, 16
        %v2442 = vrot.slane %v2440, 4
        %v2443 = vshll.u32 %v2181, 16
        %v2445 = vrot.slane %v2443, 5
        %v2446 = vor.u32 %v2442, %v2445
        %v2447 = vrot.slane %v2446, 4
        %v2449 = vshll.u32 %v2182, 16
        %v2451 = vrot.slane %v2449, 5
        %v2452 = vsel %vm1152, %v2447, %v2451
        %v2453 = vshrl.u32 %v2182, 16
        %v2455 = vrot.slane %v2453, 4
        %v2456 = vor.u32 %v2455, %v2451
        %v2457 = vrot.slane %v2456, 4
        %v2459 = vshll.u32 %v2183, 16
        %v2461 = vrot.slane %v2459, 5
        %v2462 = vsel %vm1152, %v2457, %v2461
        %v2464 = vshrl.u32 %v2184, 16
        %v2466 = vrot.slane %v2464, 4
        %v2467 = vshll.u32 %v2184, 16
        %v2469 = vrot.slane %v2467, 5
        %v2470 = vor.u32 %v2466, %v2469
        %v2471 = vrot.slane %v2470, 4
        %v2473 = vshll.u32 %v2185, 16
        %v2475 = vrot.slane %v2473, 5
        %v2476 = vsel %vm1152, %v2471, %v2475
        %v2477 = vshrl.u32 %v2185, 16
        %v2479 = vrot.slane %v2477, 4
        %v2480 = vor.u32 %v2479, %v2475
        %v2481 = vrot.slane %v2480, 4
        %v2483 = vshll.u32 %v2186, 16
        %v2485 = vrot.slane %v2483, 5
        %v2486 = vsel %vm1152, %v2481, %v2485
        %v2488 = vshrl.u32 %v2187, 16
        %v2490 = vrot.slane %v2488, 4
        %v2491 = vshll.u32 %v2187, 16
        %v2493 = vrot.slane %v2491, 5
        %v2494 = vor.u32 %v2490, %v2493
        %v2495 = vrot.slane %v2494, 4
        %v2497 = vshll.u32 %v2188, 16
        %v2499 = vrot.slane %v2497, 5
        %v2500 = vsel %vm1152, %v2495, %v2499
        %v2501 = vshrl.u32 %v2188, 16
        %v2503 = vrot.slane %v2501, 4
        %v2504 = vor.u32 %v2503, %v2499
        %v2505 = vrot.slane %v2504, 4
        %v2507 = vshll.u32 %v2189, 16
        %v2509 = vrot.slane %v2507, 5
        %v2510 = vsel %vm1152, %v2505, %v2509
        %v2512 = vshrl.u32 %v2190, 16
        %v2514 = vrot.slane %v2512, 4
        %v2515 = vshll.u32 %v2190, 16
        %v2517 = vrot.slane %v2515, 5
        %v2518 = vor.u32 %v2514, %v2517
        %v2519 = vrot.slane %v2518, 4
        %v2521 = vshll.u32 %v2191, 16
        %v2523 = vrot.slane %v2521, 5
        %v2524 = vsel %vm1152, %v2519, %v2523
        %v2525 = vshrl.u32 %v2191, 16
        %v2527 = vrot.slane %v2525, 4
        %v2528 = vor.u32 %v2527, %v2523
        %v2529 = vrot.slane %v2528, 4
        %v2531 = vshll.u32 %v2192, 16
        %v2533 = vrot.slane %v2531, 5
        %v2534 = vsel %vm1152, %v2529, %v2533
        %v2536 = vshrl.u32 %v2193, 16
        %v2538 = vrot.slane %v2536, 4
        %v2539 = vshll.u32 %v2193, 16
        %v2541 = vrot.slane %v2539, 5
        %v2542 = vor.u32 %v2538, %v2541
        %v2543 = vrot.slane %v2542, 4
        %v2545 = vshll.u32 %v2194, 16
        %v2547 = vrot.slane %v2545, 5
        %v2548 = vsel %vm1152, %v2543, %v2547
        %v2549 = vshrl.u32 %v2194, 16
        %v2551 = vrot.slane %v2549, 4
        %v2552 = vor.u32 %v2551, %v2547
        %v2553 = vrot.slane %v2552, 4
        %v2555 = vshll.u32 %v2195, 16
        %v2557 = vrot.slane %v2555, 5
        %v2558 = vsel %vm1152, %v2553, %v2557
        %v2560 = vshrl.u32 %v2196, 16
        %v2562 = vrot.slane %v2560, 4
        %v2563 = vshll.u32 %v2196, 16
        %v2565 = vrot.slane %v2563, 5
        %v2566 = vor.u32 %v2562, %v2565
        %v2567 = vrot.slane %v2566, 4
        %v2569 = vshll.u32 %v2197, 16
        %v2571 = vrot.slane %v2569, 5
        %v2572 = vsel %vm1152, %v2567, %v2571
        %v2573 = vshrl.u32 %v2197, 16
        %v2575 = vrot.slane %v2573, 4
        %v2576 = vor.u32 %v2575, %v2571
        %v2577 = vrot.slane %v2576, 4
        %v2579 = vshll.u32 %v2198, 16
        %v2581 = vrot.slane %v2579, 5
        %v2582 = vsel %vm1152, %v2577, %v2581
        %v2583 = vunpack.c.l.b16 %v2212
        %v2584 = vunpack.c.l.b16 %v2222
        %v2585 = vunpack.c.l.b16 %v2236
        %v2586 = vunpack.c.l.b16 %v2246
        %v2587 = vunpack.c.l.b16 %v2260
        %v2588 = vunpack.c.l.b16 %v2270
        %v2589 = vunpack.c.l.b16 %v2284
        %v2590 = vunpack.c.l.b16 %v2294
        %v2591 = vunpack.c.l.b16 %v2308
        %v2592 = vunpack.c.l.b16 %v2318
        %v2593 = vunpack.c.l.b16 %v2332
        %v2594 = vunpack.c.l.b16 %v2342
        %v2595 = vunpack.c.l.b16 %v2356
        %v2596 = vunpack.c.l.b16 %v2366
        %v2597 = vunpack.c.l.b16 %v2380
        %v2598 = vunpack.c.l.b16 %v2390
        %v2599 = vunpack.c.l.b16 %v2404
        %v2600 = vunpack.c.l.b16 %v2414
        %v2601 = vunpack.c.l.b16 %v2428
        %v2602 = vunpack.c.l.b16 %v2438
        %v2603 = vunpack.c.l.b16 %v2452
        %v2604 = vunpack.c.l.b16 %v2462
        %v2605 = vunpack.c.l.b16 %v2476
        %v2606 = vunpack.c.l.b16 %v2486
        %v2607 = vunpack.c.l.b16 %v2500
        %v2608 = vunpack.c.l.b16 %v2510
        %v2609 = vunpack.c.l.b16 %v2524
        %v2610 = vunpack.c.l.b16 %v2534
        %v2611 = vunpack.c.l.b16 %v2548
        %v2612 = vunpack.c.l.b16 %v2558
        %v2613 = vunpack.c.l.b16 %v2572
        %v2614 = vunpack.c.l.b16 %v2582
        %v2615 = vpack.c.b16 %v2584, %v2583
        %v2616 = vpack.c.b16 %v2586, %v2585
        %v2617 = vpack.c.b16 %v2588, %v2587
        %v2618 = vpack.c.b16 %v2590, %v2589
        %v2619 = vpack.c.b16 %v2592, %v2591
        %v2620 = vpack.c.b16 %v2594, %v2593
        %v2621 = vpack.c.b16 %v2596, %v2595
        %v2622 = vpack.c.b16 %v2598, %v2597
        %v2623 = vpack.c.b16 %v2600, %v2599
        %v2624 = vpack.c.b16 %v2602, %v2601
        %v2625 = vpack.c.b16 %v2604, %v2603
        %v2626 = vpack.c.b16 %v2606, %v2605
        %v2627 = vpack.c.b16 %v2608, %v2607
        %v2628 = vpack.c.b16 %v2610, %v2609
        %v2629 = vpack.c.b16 %v2612, %v2611
        %v2630 = vpack.c.b16 %v2614, %v2613
        %2647 = vst.msk [vmem:[#allocation3 + $0x8] sm:$0xff] %vm1085, %v2615
        %2648 = vst.msk [vmem:[#allocation3 + $0x20] sm:$0xff] %vm1085, %v2616
        %2649 = vst.msk [vmem:[#allocation3 + $0x38] sm:$0xff] %vm1085, %v2617
        %2650 = vst.msk [vmem:[#allocation3 + $0x50] sm:$0xff] %vm1085, %v2618
        %2651 = vst.msk [vmem:[#allocation3 + $0x68] sm:$0xff] %vm1085, %v2619
        %2652 = vst.msk [vmem:[#allocation3 + $0x80] sm:$0xff] %vm1085, %v2620
        %2653 = vst.msk [vmem:[#allocation3 + $0x98] sm:$0xff] %vm1085, %v2621
        %2654 = vst.msk [vmem:[#allocation3 + $0xb0] sm:$0xff] %vm1085, %v2622
        %2655 = vst.msk [vmem:[#allocation3 + $0xc8] sm:$0xff] %vm1085, %v2623
        %2656 = vst.msk [vmem:[#allocation3 + $0xe0] sm:$0xff] %vm1085, %v2624
        %2657 = vst.msk [vmem:[#allocation3 + $0xf8] sm:$0xff] %vm1085, %v2625
        %2658 = vst.msk [vmem:[#allocation3 + $0x110] sm:$0xff] %vm1085, %v2626
        %2659 = vst.msk [vmem:[#allocation3 + $0x128] sm:$0xff] %vm1085, %v2627
        %2660 = vst.msk [vmem:[#allocation3 + $0x140] sm:$0xff] %vm1085, %v2628
        %2661 = vst.msk [vmem:[#allocation3 + $0x158] sm:$0xff] %vm1085, %v2629
        %2662 = vst.msk [vmem:[#allocation3 + $0x170] sm:$0xff] %vm1085, %v2630
        %v2663 = vld [vmem:[%s839] sm:$0xe]
        %v2664 = vld [vmem:[%s839 + $0x4] sm:$0xf]
        %v2665 = vld [vmem:[%s839 + $0x8] sm:$0x1]
        %v2666 = vld [vmem:[%s839 + $0xc] sm:$0xe]
        %v2667 = vld [vmem:[%s839 + $0x10] sm:$0xf]
        %v2668 = vld [vmem:[%s839 + $0x14] sm:$0x1]
        %v2669 = vld [vmem:[%s839 + $0x18] sm:$0xe]
        %v2670 = vld [vmem:[%s839 + $0x1c] sm:$0xf]
        %v2671 = vld [vmem:[%s839 + $0x20] sm:$0x1]
        %v2672 = vld [vmem:[%s839 + $0x24] sm:$0xe]
        %v2673 = vld [vmem:[%s839 + $0x28] sm:$0xf]
        %v2674 = vld [vmem:[%s839 + $0x2c] sm:$0x1]
        %v2675 = vld [vmem:[%s839 + $0x30] sm:$0xe]
        %v2676 = vld [vmem:[%s839 + $0x34] sm:$0xf]
        %v2677 = vld [vmem:[%s839 + $0x38] sm:$0x1]
        %v2678 = vld [vmem:[%s839 + $0x3c] sm:$0xe]
        %v2679 = vld [vmem:[%s839 + $0x40] sm:$0xf]
        %v2680 = vld [vmem:[%s839 + $0x44] sm:$0x1]
        %v2681 = vld [vmem:[%s839 + $0x48] sm:$0xe]
        %v2682 = vld [vmem:[%s839 + $0x4c] sm:$0xf]
        %v2683 = vld [vmem:[%s839 + $0x50] sm:$0x1]
        %v2684 = vld [vmem:[%s839 + $0x54] sm:$0xe]
        %v2685 = vld [vmem:[%s839 + $0x58] sm:$0xf]
        %v2686 = vld [vmem:[%s839 + $0x5c] sm:$0x1]
        %v2687 = vld [vmem:[%s839 + $0x60] sm:$0xe]
        %v2688 = vld [vmem:[%s839 + $0x64] sm:$0xf]
        %v2689 = vld [vmem:[%s839 + $0x68] sm:$0x1]
        %v2690 = vld [vmem:[%s839 + $0x6c] sm:$0xe]
        %v2691 = vld [vmem:[%s839 + $0x70] sm:$0xf]
        %v2692 = vld [vmem:[%s839 + $0x74] sm:$0x1]
        %v2693 = vld [vmem:[%s839 + $0x78] sm:$0xe]
        %v2694 = vld [vmem:[%s839 + $0x7c] sm:$0xf]
        %v2695 = vld [vmem:[%s839 + $0x80] sm:$0x1]
        %v2696 = vld [vmem:[%s839 + $0x84] sm:$0xe]
        %v2697 = vld [vmem:[%s839 + $0x88] sm:$0xf]
        %v2698 = vld [vmem:[%s839 + $0x8c] sm:$0x1]
        %v2699 = vld [vmem:[%s839 + $0x90] sm:$0xe]
        %v2700 = vld [vmem:[%s839 + $0x94] sm:$0xf]
        %v2701 = vld [vmem:[%s839 + $0x98] sm:$0x1]
        %v2702 = vld [vmem:[%s839 + $0x9c] sm:$0xe]
        %v2703 = vld [vmem:[%s839 + $0xa0] sm:$0xf]
        %v2704 = vld [vmem:[%s839 + $0xa4] sm:$0x1]
        %v2705 = vld [vmem:[%s839 + $0xa8] sm:$0xe]
        %v2706 = vld [vmem:[%s839 + $0xac] sm:$0xf]
        %v2707 = vld [vmem:[%s839 + $0xb0] sm:$0x1]
        %v2708 = vld [vmem:[%s839 + $0xb4] sm:$0xe]
        %v2709 = vld [vmem:[%s839 + $0xb8] sm:$0xf]
        %v2710 = vld [vmem:[%s839 + $0xbc] sm:$0x1]
        %v2759 = vrot.slane %v2663, 5
        %v2760 = vrot.slane %v2759, 4
        %v2761 = vrot.slane %v2664, 5
        %v2762 = vsel %vm1748, %v2760, %v2761
        %v2763 = vrot.slane %v2761, 4
        %v2764 = vrot.slane %v2665, 5
        %v2765 = vsel %vm1748, %v2763, %v2764
        %v2766 = vrot.slane %v2666, 5
        %v2767 = vrot.slane %v2766, 4
        %v2768 = vrot.slane %v2667, 5
        %v2769 = vsel %vm1748, %v2767, %v2768
        %v2770 = vrot.slane %v2768, 4
        %v2771 = vrot.slane %v2668, 5
        %v2772 = vsel %vm1748, %v2770, %v2771
        %v2773 = vrot.slane %v2669, 5
        %v2774 = vrot.slane %v2773, 4
        %v2775 = vrot.slane %v2670, 5
        %v2776 = vsel %vm1748, %v2774, %v2775
        %v2777 = vrot.slane %v2775, 4
        %v2778 = vrot.slane %v2671, 5
        %v2779 = vsel %vm1748, %v2777, %v2778
        %v2780 = vrot.slane %v2672, 5
        %v2781 = vrot.slane %v2780, 4
        %v2782 = vrot.slane %v2673, 5
        %v2783 = vsel %vm1748, %v2781, %v2782
        %v2784 = vrot.slane %v2782, 4
        %v2785 = vrot.slane %v2674, 5
        %v2786 = vsel %vm1748, %v2784, %v2785
        %v2787 = vrot.slane %v2675, 5
        %v2788 = vrot.slane %v2787, 4
        %v2789 = vrot.slane %v2676, 5
        %v2790 = vsel %vm1748, %v2788, %v2789
        %v2791 = vrot.slane %v2789, 4
        %v2792 = vrot.slane %v2677, 5
        %v2793 = vsel %vm1748, %v2791, %v2792
        %v2794 = vrot.slane %v2678, 5
        %v2795 = vrot.slane %v2794, 4
        %v2796 = vrot.slane %v2679, 5
        %v2797 = vsel %vm1748, %v2795, %v2796
        %v2798 = vrot.slane %v2796, 4
        %v2799 = vrot.slane %v2680, 5
        %v2800 = vsel %vm1748, %v2798, %v2799
        %v2801 = vrot.slane %v2681, 5
        %v2802 = vrot.slane %v2801, 4
        %v2803 = vrot.slane %v2682, 5
        %v2804 = vsel %vm1748, %v2802, %v2803
        %v2805 = vrot.slane %v2803, 4
        %v2806 = vrot.slane %v2683, 5
        %v2807 = vsel %vm1748, %v2805, %v2806
        %v2808 = vrot.slane %v2684, 5
        %v2809 = vrot.slane %v2808, 4
        %v2810 = vrot.slane %v2685, 5
        %v2811 = vsel %vm1748, %v2809, %v2810
        %v2812 = vrot.slane %v2810, 4
        %v2813 = vrot.slane %v2686, 5
        %v2814 = vsel %vm1748, %v2812, %v2813
        %v2815 = vrot.slane %v2687, 5
        %v2816 = vrot.slane %v2815, 4
        %v2817 = vrot.slane %v2688, 5
        %v2818 = vsel %vm1748, %v2816, %v2817
        %v2819 = vrot.slane %v2817, 4
        %v2820 = vrot.slane %v2689, 5
        %v2821 = vsel %vm1748, %v2819, %v2820
        %v2822 = vrot.slane %v2690, 5
        %v2823 = vrot.slane %v2822, 4
        %v2824 = vrot.slane %v2691, 5
        %v2825 = vsel %vm1748, %v2823, %v2824
        %v2826 = vrot.slane %v2824, 4
        %v2827 = vrot.slane %v2692, 5
        %v2828 = vsel %vm1748, %v2826, %v2827
        %v2829 = vrot.slane %v2693, 5
        %v2830 = vrot.slane %v2829, 4
        %v2831 = vrot.slane %v2694, 5
        %v2832 = vsel %vm1748, %v2830, %v2831
        %v2833 = vrot.slane %v2831, 4
        %v2834 = vrot.slane %v2695, 5
        %v2835 = vsel %vm1748, %v2833, %v2834
        %v2836 = vrot.slane %v2696, 5
        %v2837 = vrot.slane %v2836, 4
        %v2838 = vrot.slane %v2697, 5
        %v2839 = vsel %vm1748, %v2837, %v2838
        %v2840 = vrot.slane %v2838, 4
        %v2841 = vrot.slane %v2698, 5
        %v2842 = vsel %vm1748, %v2840, %v2841
        %v2843 = vrot.slane %v2699, 5
        %v2844 = vrot.slane %v2843, 4
        %v2845 = vrot.slane %v2700, 5
        %v2846 = vsel %vm1748, %v2844, %v2845
        %v2847 = vrot.slane %v2845, 4
        %v2848 = vrot.slane %v2701, 5
        %v2849 = vsel %vm1748, %v2847, %v2848
        %v2850 = vrot.slane %v2702, 5
        %v2851 = vrot.slane %v2850, 4
        %v2852 = vrot.slane %v2703, 5
        %v2853 = vsel %vm1748, %v2851, %v2852
        %v2854 = vrot.slane %v2852, 4
        %v2855 = vrot.slane %v2704, 5
        %v2856 = vsel %vm1748, %v2854, %v2855
        %v2857 = vrot.slane %v2705, 5
        %v2858 = vrot.slane %v2857, 4
        %v2859 = vrot.slane %v2706, 5
        %v2860 = vsel %vm1748, %v2858, %v2859
        %v2861 = vrot.slane %v2859, 4
        %v2862 = vrot.slane %v2707, 5
        %v2863 = vsel %vm1748, %v2861, %v2862
        %v2864 = vrot.slane %v2708, 5
        %v2865 = vrot.slane %v2864, 4
        %v2866 = vrot.slane %v2709, 5
        %v2867 = vsel %vm1748, %v2865, %v2866
        %v2868 = vrot.slane %v2866, 4
        %v2869 = vrot.slane %v2710, 5
        %v2870 = vsel %vm1748, %v2868, %v2869
        %v2871 = vunpack.c.l.b16 %v2762
        %v2872 = vunpack.c.l.b16 %v2765
        %v2873 = vunpack.c.l.b16 %v2769
        %v2874 = vunpack.c.l.b16 %v2772
        %v2875 = vunpack.c.l.b16 %v2776
        %v2876 = vunpack.c.l.b16 %v2779
        %v2877 = vunpack.c.l.b16 %v2783
        %v2878 = vunpack.c.l.b16 %v2786
        %v2879 = vunpack.c.l.b16 %v2790
        %v2880 = vunpack.c.l.b16 %v2793
        %v2881 = vunpack.c.l.b16 %v2797
        %v2882 = vunpack.c.l.b16 %v2800
        %v2883 = vunpack.c.l.b16 %v2804
        %v2884 = vunpack.c.l.b16 %v2807
        %v2885 = vunpack.c.l.b16 %v2811
        %v2886 = vunpack.c.l.b16 %v2814
        %v2887 = vunpack.c.l.b16 %v2818
        %v2888 = vunpack.c.l.b16 %v2821
        %v2889 = vunpack.c.l.b16 %v2825
        %v2890 = vunpack.c.l.b16 %v2828
        %v2891 = vunpack.c.l.b16 %v2832
        %v2892 = vunpack.c.l.b16 %v2835
        %v2893 = vunpack.c.l.b16 %v2839
        %v2894 = vunpack.c.l.b16 %v2842
        %v2895 = vunpack.c.l.b16 %v2846
        %v2896 = vunpack.c.l.b16 %v2849
        %v2897 = vunpack.c.l.b16 %v2853
        %v2898 = vunpack.c.l.b16 %v2856
        %v2899 = vunpack.c.l.b16 %v2860
        %v2900 = vunpack.c.l.b16 %v2863
        %v2901 = vunpack.c.l.b16 %v2867
        %v2902 = vunpack.c.l.b16 %v2870
        %v2903 = vpack.c.b16 %v2872, %v2871
        %v2904 = vpack.c.b16 %v2874, %v2873
        %v2905 = vpack.c.b16 %v2876, %v2875
        %v2906 = vpack.c.b16 %v2878, %v2877
        %v2907 = vpack.c.b16 %v2880, %v2879
        %v2908 = vpack.c.b16 %v2882, %v2881
        %v2909 = vpack.c.b16 %v2884, %v2883
        %v2910 = vpack.c.b16 %v2886, %v2885
        %v2911 = vpack.c.b16 %v2888, %v2887
        %v2912 = vpack.c.b16 %v2890, %v2889
        %v2913 = vpack.c.b16 %v2892, %v2891
        %v2914 = vpack.c.b16 %v2894, %v2893
        %v2915 = vpack.c.b16 %v2896, %v2895
        %v2916 = vpack.c.b16 %v2898, %v2897
        %v2917 = vpack.c.b16 %v2900, %v2899
        %v2918 = vpack.c.b16 %v2902, %v2901
        %2919 = vrot.lane.b32.xlu0 %v2903, 32
        %v2920 = vpop.permute.xlu0 %2919
        %2921 = vrot.lane.b32.xlu0 %v2904, 32
        %v2922 = vpop.permute.xlu0 %2921
        %2923 = vrot.lane.b32.xlu0 %v2905, 32
        %v2924 = vpop.permute.xlu0 %2923
        %2925 = vrot.lane.b32.xlu0 %v2906, 32
        %v2926 = vpop.permute.xlu0 %2925
        %2927 = vrot.lane.b32.xlu0 %v2907, 32
        %v2928 = vpop.permute.xlu0 %2927
        %2929 = vrot.lane.b32.xlu0 %v2908, 32
        %v2930 = vpop.permute.xlu0 %2929
        %2931 = vrot.lane.b32.xlu0 %v2909, 32
        %v2932 = vpop.permute.xlu0 %2931
        %2933 = vrot.lane.b32.xlu0 %v2910, 32
        %v2934 = vpop.permute.xlu0 %2933
        %2935 = vrot.lane.b32.xlu0 %v2911, 32
        %v2936 = vpop.permute.xlu0 %2935
        %2937 = vrot.lane.b32.xlu0 %v2912, 32
        %v2938 = vpop.permute.xlu0 %2937
        %2939 = vrot.lane.b32.xlu0 %v2913, 32
        %v2940 = vpop.permute.xlu0 %2939
        %2941 = vrot.lane.b32.xlu0 %v2914, 32
        %v2942 = vpop.permute.xlu0 %2941
        %2943 = vrot.lane.b32.xlu0 %v2915, 32
        %v2944 = vpop.permute.xlu0 %2943
        %2945 = vrot.lane.b32.xlu0 %v2916, 32
        %v2946 = vpop.permute.xlu0 %2945
        %2947 = vrot.lane.b32.xlu0 %v2917, 32
        %v2948 = vpop.permute.xlu0 %2947
        %2949 = vrot.lane.b32.xlu0 %v2918, 32
        %v2950 = vpop.permute.xlu0 %2949
        %2967 = vst.msk [vmem:[#allocation3 + $0x8] sm:$0xff] %vm1633, %v2920
        %2968 = vst.msk [vmem:[#allocation3 + $0x20] sm:$0xff] %vm1633, %v2922
        %2969 = vst.msk [vmem:[#allocation3 + $0x38] sm:$0xff] %vm1633, %v2924
        %2970 = vst.msk [vmem:[#allocation3 + $0x50] sm:$0xff] %vm1633, %v2926
        %2971 = vst.msk [vmem:[#allocation3 + $0x68] sm:$0xff] %vm1633, %v2928
        %2972 = vst.msk [vmem:[#allocation3 + $0x80] sm:$0xff] %vm1633, %v2930
        %2973 = vst.msk [vmem:[#allocation3 + $0x98] sm:$0xff] %vm1633, %v2932
        %2974 = vst.msk [vmem:[#allocation3 + $0xb0] sm:$0xff] %vm1633, %v2934
        %2975 = vst.msk [vmem:[#allocation3 + $0xc8] sm:$0xff] %vm1633, %v2936
        %2976 = vst.msk [vmem:[#allocation3 + $0xe0] sm:$0xff] %vm1633, %v2938
        %2977 = vst.msk [vmem:[#allocation3 + $0xf8] sm:$0xff] %vm1633, %v2940
        %2978 = vst.msk [vmem:[#allocation3 + $0x110] sm:$0xff] %vm1633, %v2942
        %2979 = vst.msk [vmem:[#allocation3 + $0x128] sm:$0xff] %vm1633, %v2944
        %2980 = vst.msk [vmem:[#allocation3 + $0x140] sm:$0xff] %vm1633, %v2946
        %2981 = vst.msk [vmem:[#allocation3 + $0x158] sm:$0xff] %vm1633, %v2948
        %2982 = vst.msk [vmem:[#allocation3 + $0x170] sm:$0xff] %vm1633, %v2950
        %s2983 = scalar_lea.vmem [#allocation2], 24
        %v2984 = vld [vmem:[%s2983] sm:$0xf]
        %v2985 = vld [vmem:[%s2983 + $0x4] sm:$0xf]
        %v2986 = vld [vmem:[%s2983 + $0xc] sm:$0xf]
        %v2987 = vld [vmem:[%s2983 + $0x10] sm:$0xf]
        %v2988 = vld [vmem:[%s2983 + $0x18] sm:$0xf]
        %v2989 = vld [vmem:[%s2983 + $0x1c] sm:$0xf]
        %v2990 = vld [vmem:[%s2983 + $0x24] sm:$0xf]
        %v2991 = vld [vmem:[%s2983 + $0x28] sm:$0xf]
        %v2992 = vld [vmem:[%s2983 + $0x30] sm:$0xf]
        %v2993 = vld [vmem:[%s2983 + $0x34] sm:$0xf]
        %v2994 = vld [vmem:[%s2983 + $0x3c] sm:$0xf]
        %v2995 = vld [vmem:[%s2983 + $0x40] sm:$0xf]
        %v2996 = vld [vmem:[%s2983 + $0x48] sm:$0xf]
        %v2997 = vld [vmem:[%s2983 + $0x4c] sm:$0xf]
        %v2998 = vld [vmem:[%s2983 + $0x54] sm:$0xf]
        %v2999 = vld [vmem:[%s2983 + $0x58] sm:$0xf]
        %v3000 = vld [vmem:[%s2983 + $0x60] sm:$0xf]
        %v3001 = vld [vmem:[%s2983 + $0x64] sm:$0xf]
        %v3002 = vld [vmem:[%s2983 + $0x6c] sm:$0xf]
        %v3003 = vld [vmem:[%s2983 + $0x70] sm:$0xf]
        %v3004 = vld [vmem:[%s2983 + $0x78] sm:$0xf]
        %v3005 = vld [vmem:[%s2983 + $0x7c] sm:$0xf]
        %v3006 = vld [vmem:[%s2983 + $0x84] sm:$0xf]
        %v3007 = vld [vmem:[%s2983 + $0x88] sm:$0xf]
        %v3008 = vld [vmem:[%s2983 + $0x90] sm:$0xf]
        %v3009 = vld [vmem:[%s2983 + $0x94] sm:$0xf]
        %v3010 = vld [vmem:[%s2983 + $0x9c] sm:$0xf]
        %v3011 = vld [vmem:[%s2983 + $0xa0] sm:$0xf]
        %v3012 = vld [vmem:[%s2983 + $0xa8] sm:$0xf]
        %v3013 = vld [vmem:[%s2983 + $0xac] sm:$0xf]
        %v3014 = vld [vmem:[%s2983 + $0xb4] sm:$0xf]
        %v3015 = vld [vmem:[%s2983 + $0xb8] sm:$0xf]
        %v3048 = vunpack.c.l.b16 %v2984
        %v3049 = vunpack.c.l.b16 %v2985
        %v3050 = vunpack.c.l.b16 %v2986
        %v3051 = vunpack.c.l.b16 %v2987
        %v3052 = vunpack.c.l.b16 %v2988
        %v3053 = vunpack.c.l.b16 %v2989
        %v3054 = vunpack.c.l.b16 %v2990
        %v3055 = vunpack.c.l.b16 %v2991
        %v3056 = vunpack.c.l.b16 %v2992
        %v3057 = vunpack.c.l.b16 %v2993
        %v3058 = vunpack.c.l.b16 %v2994
        %v3059 = vunpack.c.l.b16 %v2995
        %v3060 = vunpack.c.l.b16 %v2996
        %v3061 = vunpack.c.l.b16 %v2997
        %v3062 = vunpack.c.l.b16 %v2998
        %v3063 = vunpack.c.l.b16 %v2999
        %v3064 = vunpack.c.l.b16 %v3000
        %v3065 = vunpack.c.l.b16 %v3001
        %v3066 = vunpack.c.l.b16 %v3002
        %v3067 = vunpack.c.l.b16 %v3003
        %v3068 = vunpack.c.l.b16 %v3004
        %v3069 = vunpack.c.l.b16 %v3005
        %v3070 = vunpack.c.l.b16 %v3006
        %v3071 = vunpack.c.l.b16 %v3007
        %v3072 = vunpack.c.l.b16 %v3008
        %v3073 = vunpack.c.l.b16 %v3009
        %v3074 = vunpack.c.l.b16 %v3010
        %v3075 = vunpack.c.l.b16 %v3011
        %v3076 = vunpack.c.l.b16 %v3012
        %v3077 = vunpack.c.l.b16 %v3013
        %v3078 = vunpack.c.l.b16 %v3014
        %v3079 = vunpack.c.l.b16 %v3015
        %v3080 = vpack.c.b16 %v3049, %v3048
        %v3081 = vpack.c.b16 %v3051, %v3050
        %v3082 = vpack.c.b16 %v3053, %v3052
        %v3083 = vpack.c.b16 %v3055, %v3054
        %v3084 = vpack.c.b16 %v3057, %v3056
        %v3085 = vpack.c.b16 %v3059, %v3058
        %v3086 = vpack.c.b16 %v3061, %v3060
        %v3087 = vpack.c.b16 %v3063, %v3062
        %v3088 = vpack.c.b16 %v3065, %v3064
        %v3089 = vpack.c.b16 %v3067, %v3066
        %v3090 = vpack.c.b16 %v3069, %v3068
        %v3091 = vpack.c.b16 %v3071, %v3070
        %v3092 = vpack.c.b16 %v3073, %v3072
        %v3093 = vpack.c.b16 %v3075, %v3074
        %v3094 = vpack.c.b16 %v3077, %v3076
        %v3095 = vpack.c.b16 %v3079, %v3078
        %3096 = vrot.lane.b32.xlu0 %v3080, 64
        %v3097 = vpop.permute.xlu0 %3096
        %3098 = vrot.lane.b32.xlu0 %v3081, 64
        %v3099 = vpop.permute.xlu0 %3098
        %3100 = vrot.lane.b32.xlu0 %v3082, 64
        %v3101 = vpop.permute.xlu0 %3100
        %3102 = vrot.lane.b32.xlu0 %v3083, 64
        %v3103 = vpop.permute.xlu0 %3102
        %3104 = vrot.lane.b32.xlu0 %v3084, 64
        %v3105 = vpop.permute.xlu0 %3104
        %3106 = vrot.lane.b32.xlu0 %v3085, 64
        %v3107 = vpop.permute.xlu0 %3106
        %3108 = vrot.lane.b32.xlu0 %v3086, 64
        %v3109 = vpop.permute.xlu0 %3108
        %3110 = vrot.lane.b32.xlu0 %v3087, 64
        %v3111 = vpop.permute.xlu0 %3110
        %3112 = vrot.lane.b32.xlu0 %v3088, 64
        %v3113 = vpop.permute.xlu0 %3112
        %3114 = vrot.lane.b32.xlu0 %v3089, 64
        %v3115 = vpop.permute.xlu0 %3114
        %3116 = vrot.lane.b32.xlu0 %v3090, 64
        %v3117 = vpop.permute.xlu0 %3116
        %3118 = vrot.lane.b32.xlu0 %v3091, 64
        %v3119 = vpop.permute.xlu0 %3118
        %3120 = vrot.lane.b32.xlu0 %v3092, 64
        %v3121 = vpop.permute.xlu0 %3120
        %3122 = vrot.lane.b32.xlu0 %v3093, 64
        %v3123 = vpop.permute.xlu0 %3122
        %3124 = vrot.lane.b32.xlu0 %v3094, 64
        %v3125 = vpop.permute.xlu0 %3124
        %3126 = vrot.lane.b32.xlu0 %v3095, 64
        %v3127 = vpop.permute.xlu0 %3126
        %3144 = vst.msk [vmem:[#allocation3 + $0x8] sm:$0xff] %vm1957, %v3097
        %3145 = vst.msk [vmem:[#allocation3 + $0x20] sm:$0xff] %vm1957, %v3099
        %3146 = vst.msk [vmem:[#allocation3 + $0x38] sm:$0xff] %vm1957, %v3101
        %3147 = vst.msk [vmem:[#allocation3 + $0x50] sm:$0xff] %vm1957, %v3103
        %3148 = vst.msk [vmem:[#allocation3 + $0x68] sm:$0xff] %vm1957, %v3105
        %3149 = vst.msk [vmem:[#allocation3 + $0x80] sm:$0xff] %vm1957, %v3107
        %3150 = vst.msk [vmem:[#allocation3 + $0x98] sm:$0xff] %vm1957, %v3109
        %3151 = vst.msk [vmem:[#allocation3 + $0xb0] sm:$0xff] %vm1957, %v3111
        %3152 = vst.msk [vmem:[#allocation3 + $0xc8] sm:$0xff] %vm1957, %v3113
        %3153 = vst.msk [vmem:[#allocation3 + $0xe0] sm:$0xff] %vm1957, %v3115
        %3154 = vst.msk [vmem:[#allocation3 + $0xf8] sm:$0xff] %vm1957, %v3117
        %3155 = vst.msk [vmem:[#allocation3 + $0x110] sm:$0xff] %vm1957, %v3119
        %3156 = vst.msk [vmem:[#allocation3 + $0x128] sm:$0xff] %vm1957, %v3121
        %3157 = vst.msk [vmem:[#allocation3 + $0x140] sm:$0xff] %vm1957, %v3123
        %3158 = vst.msk [vmem:[#allocation3 + $0x158] sm:$0xff] %vm1957, %v3125
        %3159 = vst.msk [vmem:[#allocation3 + $0x170] sm:$0xff] %vm1957, %v3127
        %v3160 = vld [vmem:[%s2983] sm:$0xf]
        %v3161 = vld [vmem:[%s2983 + $0x4] sm:$0xf]
        %v3162 = vld [vmem:[%s2983 + $0x8] sm:$0x1]
        %v3163 = vld [vmem:[%s2983 + $0xc] sm:$0xf]
        %v3164 = vld [vmem:[%s2983 + $0x10] sm:$0xf]
        %v3165 = vld [vmem:[%s2983 + $0x14] sm:$0x1]
        %v3166 = vld [vmem:[%s2983 + $0x18] sm:$0xf]
        %v3167 = vld [vmem:[%s2983 + $0x1c] sm:$0xf]
        %v3168 = vld [vmem:[%s2983 + $0x20] sm:$0x1]
        %v3169 = vld [vmem:[%s2983 + $0x24] sm:$0xf]
        %v3170 = vld [vmem:[%s2983 + $0x28] sm:$0xf]
        %v3171 = vld [vmem:[%s2983 + $0x2c] sm:$0x1]
        %v3172 = vld [vmem:[%s2983 + $0x30] sm:$0xf]
        %v3173 = vld [vmem:[%s2983 + $0x34] sm:$0xf]
        %v3174 = vld [vmem:[%s2983 + $0x38] sm:$0x1]
        %v3175 = vld [vmem:[%s2983 + $0x3c] sm:$0xf]
        %v3176 = vld [vmem:[%s2983 + $0x40] sm:$0xf]
        %v3177 = vld [vmem:[%s2983 + $0x44] sm:$0x1]
        %v3178 = vld [vmem:[%s2983 + $0x48] sm:$0xf]
        %v3179 = vld [vmem:[%s2983 + $0x4c] sm:$0xf]
        %v3180 = vld [vmem:[%s2983 + $0x50] sm:$0x1]
        %v3181 = vld [vmem:[%s2983 + $0x54] sm:$0xf]
        %v3182 = vld [vmem:[%s2983 + $0x58] sm:$0xf]
        %v3183 = vld [vmem:[%s2983 + $0x5c] sm:$0x1]
        %v3184 = vld [vmem:[%s2983 + $0x60] sm:$0xf]
        %v3185 = vld [vmem:[%s2983 + $0x64] sm:$0xf]
        %v3186 = vld [vmem:[%s2983 + $0x68] sm:$0x1]
        %v3187 = vld [vmem:[%s2983 + $0x6c] sm:$0xf]
        %v3188 = vld [vmem:[%s2983 + $0x70] sm:$0xf]
        %v3189 = vld [vmem:[%s2983 + $0x74] sm:$0x1]
        %v3190 = vld [vmem:[%s2983 + $0x78] sm:$0xf]
        %v3191 = vld [vmem:[%s2983 + $0x7c] sm:$0xf]
        %v3192 = vld [vmem:[%s2983 + $0x80] sm:$0x1]
        %v3193 = vld [vmem:[%s2983 + $0x84] sm:$0xf]
        %v3194 = vld [vmem:[%s2983 + $0x88] sm:$0xf]
        %v3195 = vld [vmem:[%s2983 + $0x8c] sm:$0x1]
        %v3196 = vld [vmem:[%s2983 + $0x90] sm:$0xf]
        %v3197 = vld [vmem:[%s2983 + $0x94] sm:$0xf]
        %v3198 = vld [vmem:[%s2983 + $0x98] sm:$0x1]
        %v3199 = vld [vmem:[%s2983 + $0x9c] sm:$0xf]
        %v3200 = vld [vmem:[%s2983 + $0xa0] sm:$0xf]
        %v3201 = vld [vmem:[%s2983 + $0xa4] sm:$0x1]
        %v3202 = vld [vmem:[%s2983 + $0xa8] sm:$0xf]
        %v3203 = vld [vmem:[%s2983 + $0xac] sm:$0xf]
        %v3204 = vld [vmem:[%s2983 + $0xb0] sm:$0x1]
        %v3205 = vld [vmem:[%s2983 + $0xb4] sm:$0xf]
        %v3206 = vld [vmem:[%s2983 + $0xb8] sm:$0xf]
        %v3207 = vld [vmem:[%s2983 + $0xbc] sm:$0x1]
        %v3209 = vshrl.u32 %v3160, 16
        %v3211 = vrot.slane %v3209, 4
        %v3212 = vshll.u32 %v3160, 16
        %v3214 = vrot.slane %v3212, 5
        %v3215 = vor.u32 %v3211, %v3214
        %v3216 = vrot.slane %v3215, 4
        %v3218 = vshll.u32 %v3161, 16
        %v3220 = vrot.slane %v3218, 5
        %v3221 = vsel %vm1152, %v3216, %v3220
        %v3222 = vshrl.u32 %v3161, 16
        %v3224 = vrot.slane %v3222, 4
        %v3225 = vor.u32 %v3224, %v3220
        %v3226 = vrot.slane %v3225, 4
        %v3228 = vshll.u32 %v3162, 16
        %v3230 = vrot.slane %v3228, 5
        %v3231 = vsel %vm1152, %v3226, %v3230
        %v3233 = vshrl.u32 %v3163, 16
        %v3235 = vrot.slane %v3233, 4
        %v3236 = vshll.u32 %v3163, 16
        %v3238 = vrot.slane %v3236, 5
        %v3239 = vor.u32 %v3235, %v3238
        %v3240 = vrot.slane %v3239, 4
        %v3242 = vshll.u32 %v3164, 16
        %v3244 = vrot.slane %v3242, 5
        %v3245 = vsel %vm1152, %v3240, %v3244
        %v3246 = vshrl.u32 %v3164, 16
        %v3248 = vrot.slane %v3246, 4
        %v3249 = vor.u32 %v3248, %v3244
        %v3250 = vrot.slane %v3249, 4
        %v3252 = vshll.u32 %v3165, 16
        %v3254 = vrot.slane %v3252, 5
        %v3255 = vsel %vm1152, %v3250, %v3254
        %v3257 = vshrl.u32 %v3166, 16
        %v3259 = vrot.slane %v3257, 4
        %v3260 = vshll.u32 %v3166, 16
        %v3262 = vrot.slane %v3260, 5
        %v3263 = vor.u32 %v3259, %v3262
        %v3264 = vrot.slane %v3263, 4
        %v3266 = vshll.u32 %v3167, 16
        %v3268 = vrot.slane %v3266, 5
        %v3269 = vsel %vm1152, %v3264, %v3268
        %v3270 = vshrl.u32 %v3167, 16
        %v3272 = vrot.slane %v3270, 4
        %v3273 = vor.u32 %v3272, %v3268
        %v3274 = vrot.slane %v3273, 4
        %v3276 = vshll.u32 %v3168, 16
        %v3278 = vrot.slane %v3276, 5
        %v3279 = vsel %vm1152, %v3274, %v3278
        %v3281 = vshrl.u32 %v3169, 16
        %v3283 = vrot.slane %v3281, 4
        %v3284 = vshll.u32 %v3169, 16
        %v3286 = vrot.slane %v3284, 5
        %v3287 = vor.u32 %v3283, %v3286
        %v3288 = vrot.slane %v3287, 4
        %v3290 = vshll.u32 %v3170, 16
        %v3292 = vrot.slane %v3290, 5
        %v3293 = vsel %vm1152, %v3288, %v3292
        %v3294 = vshrl.u32 %v3170, 16
        %v3296 = vrot.slane %v3294, 4
        %v3297 = vor.u32 %v3296, %v3292
        %v3298 = vrot.slane %v3297, 4
        %v3300 = vshll.u32 %v3171, 16
        %v3302 = vrot.slane %v3300, 5
        %v3303 = vsel %vm1152, %v3298, %v3302
        %v3305 = vshrl.u32 %v3172, 16
        %v3307 = vrot.slane %v3305, 4
        %v3308 = vshll.u32 %v3172, 16
        %v3310 = vrot.slane %v3308, 5
        %v3311 = vor.u32 %v3307, %v3310
        %v3312 = vrot.slane %v3311, 4
        %v3314 = vshll.u32 %v3173, 16
        %v3316 = vrot.slane %v3314, 5
        %v3317 = vsel %vm1152, %v3312, %v3316
        %v3318 = vshrl.u32 %v3173, 16
        %v3320 = vrot.slane %v3318, 4
        %v3321 = vor.u32 %v3320, %v3316
        %v3322 = vrot.slane %v3321, 4
        %v3324 = vshll.u32 %v3174, 16
        %v3326 = vrot.slane %v3324, 5
        %v3327 = vsel %vm1152, %v3322, %v3326
        %v3329 = vshrl.u32 %v3175, 16
        %v3331 = vrot.slane %v3329, 4
        %v3332 = vshll.u32 %v3175, 16
        %v3334 = vrot.slane %v3332, 5
        %v3335 = vor.u32 %v3331, %v3334
        %v3336 = vrot.slane %v3335, 4
        %v3338 = vshll.u32 %v3176, 16
        %v3340 = vrot.slane %v3338, 5
        %v3341 = vsel %vm1152, %v3336, %v3340
        %v3342 = vshrl.u32 %v3176, 16
        %v3344 = vrot.slane %v3342, 4
        %v3345 = vor.u32 %v3344, %v3340
        %v3346 = vrot.slane %v3345, 4
        %v3348 = vshll.u32 %v3177, 16
        %v3350 = vrot.slane %v3348, 5
        %v3351 = vsel %vm1152, %v3346, %v3350
        %v3353 = vshrl.u32 %v3178, 16
        %v3355 = vrot.slane %v3353, 4
        %v3356 = vshll.u32 %v3178, 16
        %v3358 = vrot.slane %v3356, 5
        %v3359 = vor.u32 %v3355, %v3358
        %v3360 = vrot.slane %v3359, 4
        %v3362 = vshll.u32 %v3179, 16
        %v3364 = vrot.slane %v3362, 5
        %v3365 = vsel %vm1152, %v3360, %v3364
        %v3366 = vshrl.u32 %v3179, 16
        %v3368 = vrot.slane %v3366, 4
        %v3369 = vor.u32 %v3368, %v3364
        %v3370 = vrot.slane %v3369, 4
        %v3372 = vshll.u32 %v3180, 16
        %v3374 = vrot.slane %v3372, 5
        %v3375 = vsel %vm1152, %v3370, %v3374
        %v3377 = vshrl.u32 %v3181, 16
        %v3379 = vrot.slane %v3377, 4
        %v3380 = vshll.u32 %v3181, 16
        %v3382 = vrot.slane %v3380, 5
        %v3383 = vor.u32 %v3379, %v3382
        %v3384 = vrot.slane %v3383, 4
        %v3386 = vshll.u32 %v3182, 16
        %v3388 = vrot.slane %v3386, 5
        %v3389 = vsel %vm1152, %v3384, %v3388
        %v3390 = vshrl.u32 %v3182, 16
        %v3392 = vrot.slane %v3390, 4
        %v3393 = vor.u32 %v3392, %v3388
        %v3394 = vrot.slane %v3393, 4
        %v3396 = vshll.u32 %v3183, 16
        %v3398 = vrot.slane %v3396, 5
        %v3399 = vsel %vm1152, %v3394, %v3398
        %v3401 = vshrl.u32 %v3184, 16
        %v3403 = vrot.slane %v3401, 4
        %v3404 = vshll.u32 %v3184, 16
        %v3406 = vrot.slane %v3404, 5
        %v3407 = vor.u32 %v3403, %v3406
        %v3408 = vrot.slane %v3407, 4
        %v3410 = vshll.u32 %v3185, 16
        %v3412 = vrot.slane %v3410, 5
        %v3413 = vsel %vm1152, %v3408, %v3412
        %v3414 = vshrl.u32 %v3185, 16
        %v3416 = vrot.slane %v3414, 4
        %v3417 = vor.u32 %v3416, %v3412
        %v3418 = vrot.slane %v3417, 4
        %v3420 = vshll.u32 %v3186, 16
        %v3422 = vrot.slane %v3420, 5
        %v3423 = vsel %vm1152, %v3418, %v3422
        %v3425 = vshrl.u32 %v3187, 16
        %v3427 = vrot.slane %v3425, 4
        %v3428 = vshll.u32 %v3187, 16
        %v3430 = vrot.slane %v3428, 5
        %v3431 = vor.u32 %v3427, %v3430
        %v3432 = vrot.slane %v3431, 4
        %v3434 = vshll.u32 %v3188, 16
        %v3436 = vrot.slane %v3434, 5
        %v3437 = vsel %vm1152, %v3432, %v3436
        %v3438 = vshrl.u32 %v3188, 16
        %v3440 = vrot.slane %v3438, 4
        %v3441 = vor.u32 %v3440, %v3436
        %v3442 = vrot.slane %v3441, 4
        %v3444 = vshll.u32 %v3189, 16
        %v3446 = vrot.slane %v3444, 5
        %v3447 = vsel %vm1152, %v3442, %v3446
        %v3449 = vshrl.u32 %v3190, 16
        %v3451 = vrot.slane %v3449, 4
        %v3452 = vshll.u32 %v3190, 16
        %v3454 = vrot.slane %v3452, 5
        %v3455 = vor.u32 %v3451, %v3454
        %v3456 = vrot.slane %v3455, 4
        %v3458 = vshll.u32 %v3191, 16
        %v3460 = vrot.slane %v3458, 5
        %v3461 = vsel %vm1152, %v3456, %v3460
        %v3462 = vshrl.u32 %v3191, 16
        %v3464 = vrot.slane %v3462, 4
        %v3465 = vor.u32 %v3464, %v3460
        %v3466 = vrot.slane %v3465, 4
        %v3468 = vshll.u32 %v3192, 16
        %v3470 = vrot.slane %v3468, 5
        %v3471 = vsel %vm1152, %v3466, %v3470
        %v3473 = vshrl.u32 %v3193, 16
        %v3475 = vrot.slane %v3473, 4
        %v3476 = vshll.u32 %v3193, 16
        %v3478 = vrot.slane %v3476, 5
        %v3479 = vor.u32 %v3475, %v3478
        %v3480 = vrot.slane %v3479, 4
        %v3482 = vshll.u32 %v3194, 16
        %v3484 = vrot.slane %v3482, 5
        %v3485 = vsel %vm1152, %v3480, %v3484
        %v3486 = vshrl.u32 %v3194, 16
        %v3488 = vrot.slane %v3486, 4
        %v3489 = vor.u32 %v3488, %v3484
        %v3490 = vrot.slane %v3489, 4
        %v3492 = vshll.u32 %v3195, 16
        %v3494 = vrot.slane %v3492, 5
        %v3495 = vsel %vm1152, %v3490, %v3494
        %v3497 = vshrl.u32 %v3196, 16
        %v3499 = vrot.slane %v3497, 4
        %v3500 = vshll.u32 %v3196, 16
        %v3502 = vrot.slane %v3500, 5
        %v3503 = vor.u32 %v3499, %v3502
        %v3504 = vrot.slane %v3503, 4
        %v3506 = vshll.u32 %v3197, 16
        %v3508 = vrot.slane %v3506, 5
        %v3509 = vsel %vm1152, %v3504, %v3508
        %v3510 = vshrl.u32 %v3197, 16
        %v3512 = vrot.slane %v3510, 4
        %v3513 = vor.u32 %v3512, %v3508
        %v3514 = vrot.slane %v3513, 4
        %v3516 = vshll.u32 %v3198, 16
        %v3518 = vrot.slane %v3516, 5
        %v3519 = vsel %vm1152, %v3514, %v3518
        %v3521 = vshrl.u32 %v3199, 16
        %v3523 = vrot.slane %v3521, 4
        %v3524 = vshll.u32 %v3199, 16
        %v3526 = vrot.slane %v3524, 5
        %v3527 = vor.u32 %v3523, %v3526
        %v3528 = vrot.slane %v3527, 4
        %v3530 = vshll.u32 %v3200, 16
        %v3532 = vrot.slane %v3530, 5
        %v3533 = vsel %vm1152, %v3528, %v3532
        %v3534 = vshrl.u32 %v3200, 16
        %v3536 = vrot.slane %v3534, 4
        %v3537 = vor.u32 %v3536, %v3532
        %v3538 = vrot.slane %v3537, 4
        %v3540 = vshll.u32 %v3201, 16
        %v3542 = vrot.slane %v3540, 5
        %v3543 = vsel %vm1152, %v3538, %v3542
        %v3545 = vshrl.u32 %v3202, 16
        %v3547 = vrot.slane %v3545, 4
        %v3548 = vshll.u32 %v3202, 16
        %v3550 = vrot.slane %v3548, 5
        %v3551 = vor.u32 %v3547, %v3550
        %v3552 = vrot.slane %v3551, 4
        %v3554 = vshll.u32 %v3203, 16
        %v3556 = vrot.slane %v3554, 5
        %v3557 = vsel %vm1152, %v3552, %v3556
        %v3558 = vshrl.u32 %v3203, 16
        %v3560 = vrot.slane %v3558, 4
        %v3561 = vor.u32 %v3560, %v3556
        %v3562 = vrot.slane %v3561, 4
        %v3564 = vshll.u32 %v3204, 16
        %v3566 = vrot.slane %v3564, 5
        %v3567 = vsel %vm1152, %v3562, %v3566
        %v3569 = vshrl.u32 %v3205, 16
        %v3571 = vrot.slane %v3569, 4
        %v3572 = vshll.u32 %v3205, 16
        %v3574 = vrot.slane %v3572, 5
        %v3575 = vor.u32 %v3571, %v3574
        %v3576 = vrot.slane %v3575, 4
        %v3578 = vshll.u32 %v3206, 16
        %v3580 = vrot.slane %v3578, 5
        %v3581 = vsel %vm1152, %v3576, %v3580
        %v3582 = vshrl.u32 %v3206, 16
        %v3584 = vrot.slane %v3582, 4
        %v3585 = vor.u32 %v3584, %v3580
        %v3586 = vrot.slane %v3585, 4
        %v3588 = vshll.u32 %v3207, 16
        %v3590 = vrot.slane %v3588, 5
        %v3591 = vsel %vm1152, %v3586, %v3590
        %v3592 = vunpack.c.l.b16 %v3221
        %v3593 = vunpack.c.l.b16 %v3231
        %v3594 = vunpack.c.l.b16 %v3245
        %v3595 = vunpack.c.l.b16 %v3255
        %v3596 = vunpack.c.l.b16 %v3269
        %v3597 = vunpack.c.l.b16 %v3279
        %v3598 = vunpack.c.l.b16 %v3293
        %v3599 = vunpack.c.l.b16 %v3303
        %v3600 = vunpack.c.l.b16 %v3317
        %v3601 = vunpack.c.l.b16 %v3327
        %v3602 = vunpack.c.l.b16 %v3341
        %v3603 = vunpack.c.l.b16 %v3351
        %v3604 = vunpack.c.l.b16 %v3365
        %v3605 = vunpack.c.l.b16 %v3375
        %v3606 = vunpack.c.l.b16 %v3389
        %v3607 = vunpack.c.l.b16 %v3399
        %v3608 = vunpack.c.l.b16 %v3413
        %v3609 = vunpack.c.l.b16 %v3423
        %v3610 = vunpack.c.l.b16 %v3437
        %v3611 = vunpack.c.l.b16 %v3447
        %v3612 = vunpack.c.l.b16 %v3461
        %v3613 = vunpack.c.l.b16 %v3471
        %v3614 = vunpack.c.l.b16 %v3485
        %v3615 = vunpack.c.l.b16 %v3495
        %v3616 = vunpack.c.l.b16 %v3509
        %v3617 = vunpack.c.l.b16 %v3519
        %v3618 = vunpack.c.l.b16 %v3533
        %v3619 = vunpack.c.l.b16 %v3543
        %v3620 = vunpack.c.l.b16 %v3557
        %v3621 = vunpack.c.l.b16 %v3567
        %v3622 = vunpack.c.l.b16 %v3581
        %v3623 = vunpack.c.l.b16 %v3591
        %v3624 = vpack.c.b16 %v3593, %v3592
        %v3625 = vpack.c.b16 %v3595, %v3594
        %v3626 = vpack.c.b16 %v3597, %v3596
        %v3627 = vpack.c.b16 %v3599, %v3598
        %v3628 = vpack.c.b16 %v3601, %v3600
        %v3629 = vpack.c.b16 %v3603, %v3602
        %v3630 = vpack.c.b16 %v3605, %v3604
        %v3631 = vpack.c.b16 %v3607, %v3606
        %v3632 = vpack.c.b16 %v3609, %v3608
        %v3633 = vpack.c.b16 %v3611, %v3610
        %v3634 = vpack.c.b16 %v3613, %v3612
        %v3635 = vpack.c.b16 %v3615, %v3614
        %v3636 = vpack.c.b16 %v3617, %v3616
        %v3637 = vpack.c.b16 %v3619, %v3618
        %v3638 = vpack.c.b16 %v3621, %v3620
        %v3639 = vpack.c.b16 %v3623, %v3622
        %3640 = vrot.lane.b32.xlu0 %v3624, 96
        %v3641 = vpop.permute.xlu0 %3640
        %3642 = vrot.lane.b32.xlu0 %v3625, 96
        %v3643 = vpop.permute.xlu0 %3642
        %3644 = vrot.lane.b32.xlu0 %v3626, 96
        %v3645 = vpop.permute.xlu0 %3644
        %3646 = vrot.lane.b32.xlu0 %v3627, 96
        %v3647 = vpop.permute.xlu0 %3646
        %3648 = vrot.lane.b32.xlu0 %v3628, 96
        %v3649 = vpop.permute.xlu0 %3648
        %3650 = vrot.lane.b32.xlu0 %v3629, 96
        %v3651 = vpop.permute.xlu0 %3650
        %3652 = vrot.lane.b32.xlu0 %v3630, 96
        %v3653 = vpop.permute.xlu0 %3652
        %3654 = vrot.lane.b32.xlu0 %v3631, 96
        %v3655 = vpop.permute.xlu0 %3654
        %3656 = vrot.lane.b32.xlu0 %v3632, 96
        %v3657 = vpop.permute.xlu0 %3656
        %3658 = vrot.lane.b32.xlu0 %v3633, 96
        %v3659 = vpop.permute.xlu0 %3658
        %3660 = vrot.lane.b32.xlu0 %v3634, 96
        %v3661 = vpop.permute.xlu0 %3660
        %3662 = vrot.lane.b32.xlu0 %v3635, 96
        %v3663 = vpop.permute.xlu0 %3662
        %3664 = vrot.lane.b32.xlu0 %v3636, 96
        %v3665 = vpop.permute.xlu0 %3664
        %3666 = vrot.lane.b32.xlu0 %v3637, 96
        %v3667 = vpop.permute.xlu0 %3666
        %3668 = vrot.lane.b32.xlu0 %v3638, 96
        %v3669 = vpop.permute.xlu0 %3668
        %3670 = vrot.lane.b32.xlu0 %v3639, 96
        %v3671 = vpop.permute.xlu0 %3670
        %3688 = vst.msk [vmem:[#allocation3 + $0x8] sm:$0xff] %vm2134, %v3641
        %3689 = vst.msk [vmem:[#allocation3 + $0x20] sm:$0xff] %vm2134, %v3643
        %3690 = vst.msk [vmem:[#allocation3 + $0x38] sm:$0xff] %vm2134, %v3645
        %3691 = vst.msk [vmem:[#allocation3 + $0x50] sm:$0xff] %vm2134, %v3647
        %3692 = vst.msk [vmem:[#allocation3 + $0x68] sm:$0xff] %vm2134, %v3649
        %3693 = vst.msk [vmem:[#allocation3 + $0x80] sm:$0xff] %vm2134, %v3651
        %3694 = vst.msk [vmem:[#allocation3 + $0x98] sm:$0xff] %vm2134, %v3653
        %3695 = vst.msk [vmem:[#allocation3 + $0xb0] sm:$0xff] %vm2134, %v3655
        %3696 = vst.msk [vmem:[#allocation3 + $0xc8] sm:$0xff] %vm2134, %v3657
        %3697 = vst.msk [vmem:[#allocation3 + $0xe0] sm:$0xff] %vm2134, %v3659
        %3698 = vst.msk [vmem:[#allocation3 + $0xf8] sm:$0xff] %vm2134, %v3661
        %3699 = vst.msk [vmem:[#allocation3 + $0x110] sm:$0xff] %vm2134, %v3663
        %3700 = vst.msk [vmem:[#allocation3 + $0x128] sm:$0xff] %vm2134, %v3665
        %3701 = vst.msk [vmem:[#allocation3 + $0x140] sm:$0xff] %vm2134, %v3667
        %3702 = vst.msk [vmem:[#allocation3 + $0x158] sm:$0xff] %vm2134, %v3669
        %3703 = vst.msk [vmem:[#allocation3 + $0x170] sm:$0xff] %vm2134, %v3671
        %v3704 = vld [vmem:[%s2983] sm:$0xe]
        %v3705 = vld [vmem:[%s2983 + $0x4] sm:$0xf]
        %v3706 = vld [vmem:[%s2983 + $0x8] sm:$0x1]
        %v3707 = vld [vmem:[%s2983 + $0xc] sm:$0xe]
        %v3708 = vld [vmem:[%s2983 + $0x10] sm:$0xf]
        %v3709 = vld [vmem:[%s2983 + $0x14] sm:$0x1]
        %v3710 = vld [vmem:[%s2983 + $0x18] sm:$0xe]
        %v3711 = vld [vmem:[%s2983 + $0x1c] sm:$0xf]
        %v3712 = vld [vmem:[%s2983 + $0x20] sm:$0x1]
        %v3713 = vld [vmem:[%s2983 + $0x24] sm:$0xe]
        %v3714 = vld [vmem:[%s2983 + $0x28] sm:$0xf]
        %v3715 = vld [vmem:[%s2983 + $0x2c] sm:$0x1]
        %v3716 = vld [vmem:[%s2983 + $0x30] sm:$0xe]
        %v3717 = vld [vmem:[%s2983 + $0x34] sm:$0xf]
        %v3718 = vld [vmem:[%s2983 + $0x38] sm:$0x1]
        %v3719 = vld [vmem:[%s2983 + $0x3c] sm:$0xe]
        %v3720 = vld [vmem:[%s2983 + $0x40] sm:$0xf]
        %v3721 = vld [vmem:[%s2983 + $0x44] sm:$0x1]
        %v3722 = vld [vmem:[%s2983 + $0x48] sm:$0xe]
        %v3723 = vld [vmem:[%s2983 + $0x4c] sm:$0xf]
        %v3724 = vld [vmem:[%s2983 + $0x50] sm:$0x1]
        %v3725 = vld [vmem:[%s2983 + $0x54] sm:$0xe]
        %v3726 = vld [vmem:[%s2983 + $0x58] sm:$0xf]
        %v3727 = vld [vmem:[%s2983 + $0x5c] sm:$0x1]
        %v3728 = vld [vmem:[%s2983 + $0x60] sm:$0xe]
        %v3729 = vld [vmem:[%s2983 + $0x64] sm:$0xf]
        %v3730 = vld [vmem:[%s2983 + $0x68] sm:$0x1]
        %v3731 = vld [vmem:[%s2983 + $0x6c] sm:$0xe]
        %v3732 = vld [vmem:[%s2983 + $0x70] sm:$0xf]
        %v3733 = vld [vmem:[%s2983 + $0x74] sm:$0x1]
        %v3734 = vld [vmem:[%s2983 + $0x78] sm:$0xe]
        %v3735 = vld [vmem:[%s2983 + $0x7c] sm:$0xf]
        %v3736 = vld [vmem:[%s2983 + $0x80] sm:$0x1]
        %v3737 = vld [vmem:[%s2983 + $0x84] sm:$0xe]
        %v3738 = vld [vmem:[%s2983 + $0x88] sm:$0xf]
        %v3739 = vld [vmem:[%s2983 + $0x8c] sm:$0x1]
        %v3740 = vld [vmem:[%s2983 + $0x90] sm:$0xe]
        %v3741 = vld [vmem:[%s2983 + $0x94] sm:$0xf]
        %v3742 = vld [vmem:[%s2983 + $0x98] sm:$0x1]
        %v3743 = vld [vmem:[%s2983 + $0x9c] sm:$0xe]
        %v3744 = vld [vmem:[%s2983 + $0xa0] sm:$0xf]
        %v3745 = vld [vmem:[%s2983 + $0xa4] sm:$0x1]
        %v3746 = vld [vmem:[%s2983 + $0xa8] sm:$0xe]
        %v3747 = vld [vmem:[%s2983 + $0xac] sm:$0xf]
        %v3748 = vld [vmem:[%s2983 + $0xb0] sm:$0x1]
        %v3749 = vld [vmem:[%s2983 + $0xb4] sm:$0xe]
        %v3750 = vld [vmem:[%s2983 + $0xb8] sm:$0xf]
        %v3751 = vld [vmem:[%s2983 + $0xbc] sm:$0x1]
        %v3800 = vrot.slane %v3704, 5
        %v3801 = vrot.slane %v3800, 4
        %v3802 = vrot.slane %v3705, 5
        %v3803 = vsel %vm1748, %v3801, %v3802
        %v3804 = vrot.slane %v3802, 4
        %v3805 = vrot.slane %v3706, 5
        %v3806 = vsel %vm1748, %v3804, %v3805
        %v3807 = vrot.slane %v3707, 5
        %v3808 = vrot.slane %v3807, 4
        %v3809 = vrot.slane %v3708, 5
        %v3810 = vsel %vm1748, %v3808, %v3809
        %v3811 = vrot.slane %v3809, 4
        %v3812 = vrot.slane %v3709, 5
        %v3813 = vsel %vm1748, %v3811, %v3812
        %v3814 = vrot.slane %v3710, 5
        %v3815 = vrot.slane %v3814, 4
        %v3816 = vrot.slane %v3711, 5
        %v3817 = vsel %vm1748, %v3815, %v3816
        %v3818 = vrot.slane %v3816, 4
        %v3819 = vrot.slane %v3712, 5
        %v3820 = vsel %vm1748, %v3818, %v3819
        %v3821 = vrot.slane %v3713, 5
        %v3822 = vrot.slane %v3821, 4
        %v3823 = vrot.slane %v3714, 5
        %v3824 = vsel %vm1748, %v3822, %v3823
        %v3825 = vrot.slane %v3823, 4
        %v3826 = vrot.slane %v3715, 5
        %v3827 = vsel %vm1748, %v3825, %v3826
        %v3828 = vrot.slane %v3716, 5
        %v3829 = vrot.slane %v3828, 4
        %v3830 = vrot.slane %v3717, 5
        %v3831 = vsel %vm1748, %v3829, %v3830
        %v3832 = vrot.slane %v3830, 4
        %v3833 = vrot.slane %v3718, 5
        %v3834 = vsel %vm1748, %v3832, %v3833
        %v3835 = vrot.slane %v3719, 5
        %v3836 = vrot.slane %v3835, 4
        %v3837 = vrot.slane %v3720, 5
        %v3838 = vsel %vm1748, %v3836, %v3837
        %v3839 = vrot.slane %v3837, 4
        %v3840 = vrot.slane %v3721, 5
        %v3841 = vsel %vm1748, %v3839, %v3840
        %v3842 = vrot.slane %v3722, 5
        %v3843 = vrot.slane %v3842, 4
        %v3844 = vrot.slane %v3723, 5
        %v3845 = vsel %vm1748, %v3843, %v3844
        %v3846 = vrot.slane %v3844, 4
        %v3847 = vrot.slane %v3724, 5
        %v3848 = vsel %vm1748, %v3846, %v3847
        %v3849 = vrot.slane %v3725, 5
        %v3850 = vrot.slane %v3849, 4
        %v3851 = vrot.slane %v3726, 5
        %v3852 = vsel %vm1748, %v3850, %v3851
        %v3853 = vrot.slane %v3851, 4
        %v3854 = vrot.slane %v3727, 5
        %v3855 = vsel %vm1748, %v3853, %v3854
        %v3856 = vrot.slane %v3728, 5
        %v3857 = vrot.slane %v3856, 4
        %v3858 = vrot.slane %v3729, 5
        %v3859 = vsel %vm1748, %v3857, %v3858
        %v3860 = vrot.slane %v3858, 4
        %v3861 = vrot.slane %v3730, 5
        %v3862 = vsel %vm1748, %v3860, %v3861
        %v3863 = vrot.slane %v3731, 5
        %v3864 = vrot.slane %v3863, 4
        %v3865 = vrot.slane %v3732, 5
        %v3866 = vsel %vm1748, %v3864, %v3865
        %v3867 = vrot.slane %v3865, 4
        %v3868 = vrot.slane %v3733, 5
        %v3869 = vsel %vm1748, %v3867, %v3868
        %v3870 = vrot.slane %v3734, 5
        %v3871 = vrot.slane %v3870, 4
        %v3872 = vrot.slane %v3735, 5
        %v3873 = vsel %vm1748, %v3871, %v3872
        %v3874 = vrot.slane %v3872, 4
        %v3875 = vrot.slane %v3736, 5
        %v3876 = vsel %vm1748, %v3874, %v3875
        %v3877 = vrot.slane %v3737, 5
        %v3878 = vrot.slane %v3877, 4
        %v3879 = vrot.slane %v3738, 5
        %v3880 = vsel %vm1748, %v3878, %v3879
        %v3881 = vrot.slane %v3879, 4
        %v3882 = vrot.slane %v3739, 5
        %v3883 = vsel %vm1748, %v3881, %v3882
        %v3884 = vrot.slane %v3740, 5
        %v3885 = vrot.slane %v3884, 4
        %v3886 = vrot.slane %v3741, 5
        %v3887 = vsel %vm1748, %v3885, %v3886
        %v3888 = vrot.slane %v3886, 4
        %v3889 = vrot.slane %v3742, 5
        %v3890 = vsel %vm1748, %v3888, %v3889
        %v3891 = vrot.slane %v3743, 5
        %v3892 = vrot.slane %v3891, 4
        %v3893 = vrot.slane %v3744, 5
        %v3894 = vsel %vm1748, %v3892, %v3893
        %v3895 = vrot.slane %v3893, 4
        %v3896 = vrot.slane %v3745, 5
        %v3897 = vsel %vm1748, %v3895, %v3896
        %v3898 = vrot.slane %v3746, 5
        %v3899 = vrot.slane %v3898, 4
        %v3900 = vrot.slane %v3747, 5
        %v3901 = vsel %vm1748, %v3899, %v3900
        %v3902 = vrot.slane %v3900, 4
        %v3903 = vrot.slane %v3748, 5
        %v3904 = vsel %vm1748, %v3902, %v3903
        %v3905 = vrot.slane %v3749, 5
        %v3906 = vrot.slane %v3905, 4
        %v3907 = vrot.slane %v3750, 5
        %v3908 = vsel %vm1748, %v3906, %v3907
        %v3909 = vrot.slane %v3907, 4
        %v3910 = vrot.slane %v3751, 5
        %v3911 = vsel %vm1748, %v3909, %v3910
        %v3912 = vunpack.c.l.b16 %v3803
        %v3913 = vunpack.c.l.b16 %v3806
        %v3914 = vunpack.c.l.b16 %v3810
        %v3915 = vunpack.c.l.b16 %v3813
        %v3916 = vunpack.c.l.b16 %v3817
        %v3917 = vunpack.c.l.b16 %v3820
        %v3918 = vunpack.c.l.b16 %v3824
        %v3919 = vunpack.c.l.b16 %v3827
        %v3920 = vunpack.c.l.b16 %v3831
        %v3921 = vunpack.c.l.b16 %v3834
        %v3922 = vunpack.c.l.b16 %v3838
        %v3923 = vunpack.c.l.b16 %v3841
        %v3924 = vunpack.c.l.b16 %v3845
        %v3925 = vunpack.c.l.b16 %v3848
        %v3926 = vunpack.c.l.b16 %v3852
        %v3927 = vunpack.c.l.b16 %v3855
        %v3928 = vunpack.c.l.b16 %v3859
        %v3929 = vunpack.c.l.b16 %v3862
        %v3930 = vunpack.c.l.b16 %v3866
        %v3931 = vunpack.c.l.b16 %v3869
        %v3932 = vunpack.c.l.b16 %v3873
        %v3933 = vunpack.c.l.b16 %v3876
        %v3934 = vunpack.c.l.b16 %v3880
        %v3935 = vunpack.c.l.b16 %v3883
        %v3936 = vunpack.c.l.b16 %v3887
        %v3937 = vunpack.c.l.b16 %v3890
        %v3938 = vunpack.c.l.b16 %v3894
        %v3939 = vunpack.c.l.b16 %v3897
        %v3940 = vunpack.c.l.b16 %v3901
        %v3941 = vunpack.c.l.b16 %v3904
        %v3942 = vunpack.c.l.b16 %v3908
        %v3943 = vunpack.c.l.b16 %v3911
        %v3944 = vpack.c.b16 %v3913, %v3912
        %v3945 = vpack.c.b16 %v3915, %v3914
        %v3946 = vpack.c.b16 %v3917, %v3916
        %v3947 = vpack.c.b16 %v3919, %v3918
        %v3948 = vpack.c.b16 %v3921, %v3920
        %v3949 = vpack.c.b16 %v3923, %v3922
        %v3950 = vpack.c.b16 %v3925, %v3924
        %v3951 = vpack.c.b16 %v3927, %v3926
        %v3952 = vpack.c.b16 %v3929, %v3928
        %v3953 = vpack.c.b16 %v3931, %v3930
        %v3954 = vpack.c.b16 %v3933, %v3932
        %v3955 = vpack.c.b16 %v3935, %v3934
        %v3956 = vpack.c.b16 %v3937, %v3936
        %v3957 = vpack.c.b16 %v3939, %v3938
        %v3958 = vpack.c.b16 %v3941, %v3940
        %v3959 = vpack.c.b16 %v3943, %v3942
        %3976 = vst.msk [vmem:[#allocation3 + $0x10] sm:$0xff] %vm1085, %v3944
        %3977 = vst.msk [vmem:[#allocation3 + $0x28] sm:$0xff] %vm1085, %v3945
        %3978 = vst.msk [vmem:[#allocation3 + $0x40] sm:$0xff] %vm1085, %v3946
        %3979 = vst.msk [vmem:[#allocation3 + $0x58] sm:$0xff] %vm1085, %v3947
        %3980 = vst.msk [vmem:[#allocation3 + $0x70] sm:$0xff] %vm1085, %v3948
        %3981 = vst.msk [vmem:[#allocation3 + $0x88] sm:$0xff] %vm1085, %v3949
        %3982 = vst.msk [vmem:[#allocation3 + $0xa0] sm:$0xff] %vm1085, %v3950
        %3983 = vst.msk [vmem:[#allocation3 + $0xb8] sm:$0xff] %vm1085, %v3951
        %3984 = vst.msk [vmem:[#allocation3 + $0xd0] sm:$0xff] %vm1085, %v3952
        %3985 = vst.msk [vmem:[#allocation3 + $0xe8] sm:$0xff] %vm1085, %v3953
        %3986 = vst.msk [vmem:[#allocation3 + $0x100] sm:$0xff] %vm1085, %v3954
        %3987 = vst.msk [vmem:[#allocation3 + $0x118] sm:$0xff] %vm1085, %v3955
        %3988 = vst.msk [vmem:[#allocation3 + $0x130] sm:$0xff] %vm1085, %v3956
        %3989 = vst.msk [vmem:[#allocation3 + $0x148] sm:$0xff] %vm1085, %v3957
        %3990 = vst.msk [vmem:[#allocation3 + $0x160] sm:$0xff] %vm1085, %v3958
        %3991 = vst.msk [vmem:[#allocation3 + $0x178] sm:$0xff] %vm1085, %v3959
        %v3992 = vld [vmem:[#allocation3] sm:$0xff]
        %v3993 = vld [vmem:[#allocation3 + $0x8] sm:$0xff]
        %v3994 = vld [vmem:[#allocation3 + $0x10] sm:$0xff]
        %v3995 = vld [vmem:[#allocation3 + $0x18] sm:$0xff]
        %v3996 = vld [vmem:[#allocation3 + $0x20] sm:$0xff]
        %v3997 = vld [vmem:[#allocation3 + $0x28] sm:$0xff]
        %v3998 = vld [vmem:[#allocation3 + $0x30] sm:$0xff]
        %v3999 = vld [vmem:[#allocation3 + $0x38] sm:$0xff]
        %v4000 = vld [vmem:[#allocation3 + $0x40] sm:$0xff]
        %v4001 = vld [vmem:[#allocation3 + $0x48] sm:$0xff]
        %v4002 = vld [vmem:[#allocation3 + $0x50] sm:$0xff]
        %v4003 = vld [vmem:[#allocation3 + $0x58] sm:$0xff]
        %v4004 = vld [vmem:[#allocation3 + $0x60] sm:$0xff]
        %v4005 = vld [vmem:[#allocation3 + $0x68] sm:$0xff]
        %v4006 = vld [vmem:[#allocation3 + $0x70] sm:$0xff]
        %v4007 = vld [vmem:[#allocation3 + $0x78] sm:$0xff]
        %v4008 = vld [vmem:[#allocation3 + $0x80] sm:$0xff]
        %v4009 = vld [vmem:[#allocation3 + $0x88] sm:$0xff]
        %v4010 = vld [vmem:[#allocation3 + $0x90] sm:$0xff]
        %v4011 = vld [vmem:[#allocation3 + $0x98] sm:$0xff]
        %v4012 = vld [vmem:[#allocation3 + $0xa0] sm:$0xff]
        %v4013 = vld [vmem:[#allocation3 + $0xa8] sm:$0xff]
        %v4014 = vld [vmem:[#allocation3 + $0xb0] sm:$0xff]
        %v4015 = vld [vmem:[#allocation3 + $0xb8] sm:$0xff]
        %v4016 = vld [vmem:[#allocation3 + $0xc0] sm:$0xff]
        %v4017 = vld [vmem:[#allocation3 + $0xc8] sm:$0xff]
        %v4018 = vld [vmem:[#allocation3 + $0xd0] sm:$0xff]
        %v4019 = vld [vmem:[#allocation3 + $0xd8] sm:$0xff]
        %v4020 = vld [vmem:[#allocation3 + $0xe0] sm:$0xff]
        %v4021 = vld [vmem:[#allocation3 + $0xe8] sm:$0xff]
        %v4022 = vld [vmem:[#allocation3 + $0xf0] sm:$0xff]
        %v4023 = vld [vmem:[#allocation3 + $0xf8] sm:$0xff]
        %v4024 = vld [vmem:[#allocation3 + $0x100] sm:$0xff]
        %v4025 = vld [vmem:[#allocation3 + $0x108] sm:$0xff]
        %v4026 = vld [vmem:[#allocation3 + $0x110] sm:$0xff]
        %v4027 = vld [vmem:[#allocation3 + $0x118] sm:$0xff]
        %v4028 = vld [vmem:[#allocation3 + $0x120] sm:$0xff]
        %v4029 = vld [vmem:[#allocation3 + $0x128] sm:$0xff]
        %v4030 = vld [vmem:[#allocation3 + $0x130] sm:$0xff]
        %v4031 = vld [vmem:[#allocation3 + $0x138] sm:$0xff]
        %v4032 = vld [vmem:[#allocation3 + $0x140] sm:$0xff]
        %v4033 = vld [vmem:[#allocation3 + $0x148] sm:$0xff]
        %v4034 = vld [vmem:[#allocation3 + $0x150] sm:$0xff]
        %v4035 = vld [vmem:[#allocation3 + $0x158] sm:$0xff]
        %v4036 = vld [vmem:[#allocation3 + $0x160] sm:$0xff]
        %v4037 = vld [vmem:[#allocation3 + $0x168] sm:$0xff]
        %v4038 = vld [vmem:[#allocation3 + $0x170] sm:$0xff]
        %v4039 = vld [vmem:[#allocation3 + $0x178] sm:$0xff]
        %v4040 = vld [vmem:[%s1] sm:$0xf]
        %v4041 = vld [vmem:[%s1 + $0x4] sm:$0xf]
        %v4042 = vld [vmem:[%s1 + $0x8] sm:$0xf]
        %v4043 = vld [vmem:[%s1 + $0xc] sm:$0xf]
        %v4044 = vld [vmem:[%s1 + $0x10] sm:$0xf]
        %v4045 = vld [vmem:[%s1 + $0x14] sm:$0xf]
        %v4046 = vld [vmem:[%s1 + $0x18] sm:$0xf]
        %v4047 = vld [vmem:[%s1 + $0x1c] sm:$0xf]
        %v4048 = vld [vmem:[%s1 + $0x20] sm:$0xf]
        %v4049 = vld [vmem:[%s1 + $0x24] sm:$0xf]
        %v4050 = vld [vmem:[%s1 + $0x28] sm:$0xf]
        %v4051 = vld [vmem:[%s1 + $0x2c] sm:$0xf]
        %v4052 = vld [vmem:[%s1 + $0x30] sm:$0xf]
        %v4053 = vld [vmem:[%s1 + $0x34] sm:$0xf]
        %v4054 = vld [vmem:[%s1 + $0x38] sm:$0xf]
        %v4055 = vld [vmem:[%s1 + $0x3c] sm:$0xf]
        %v4056 = vld [vmem:[%s1 + $0x40] sm:$0xf]
        %v4057 = vld [vmem:[%s1 + $0x44] sm:$0xf]
        %v4058 = vld [vmem:[%s1 + $0x48] sm:$0xf]
        %v4059 = vld [vmem:[%s1 + $0x4c] sm:$0xf]
        %v4060 = vld [vmem:[%s1 + $0x50] sm:$0xf]
        %v4061 = vld [vmem:[%s1 + $0x54] sm:$0xf]
        %v4062 = vld [vmem:[%s1 + $0x58] sm:$0xf]
        %v4063 = vld [vmem:[%s1 + $0x5c] sm:$0xf]
        %v4064 = vld [vmem:[%s1 + $0x60] sm:$0xf]
        %v4065 = vld [vmem:[%s1 + $0x64] sm:$0xf]
        %v4066 = vld [vmem:[%s1 + $0x68] sm:$0xf]
        %v4067 = vld [vmem:[%s1 + $0x6c] sm:$0xf]
        %v4068 = vld [vmem:[%s1 + $0x70] sm:$0xf]
        %v4069 = vld [vmem:[%s1 + $0x74] sm:$0xf]
        %v4070 = vld [vmem:[%s1 + $0x78] sm:$0xf]
        %v4071 = vld [vmem:[%s1 + $0x7c] sm:$0xf]
        %v4072 = vld [vmem:[%s1 + $0x80] sm:$0xf]
        %v4073 = vld [vmem:[%s1 + $0x84] sm:$0xf]
        %v4074 = vld [vmem:[%s1 + $0x88] sm:$0xf]
        %v4075 = vld [vmem:[%s1 + $0x8c] sm:$0xf]
        %v4076 = vld [vmem:[%s2] sm:$0x1]
        %v4078 = vlaneseq
        %v4079 = vshrl.u32 %v4078, 7
        %v4080 = vsub.s32 0, %v4079
        %v4081 = vrot.slane %v4076, %v4080
        %v4119 = vunpack.c.l.b16 %v4040
        %v4120 = vunpack.c.l.b16 %v4041
        %v4121 = vunpack.c.l.b16 %v4042
        %v4122 = vunpack.c.l.b16 %v4043
        %v4123 = vunpack.c.l.b16 %v4044
        %v4124 = vunpack.c.l.b16 %v4045
        %v4125 = vunpack.c.l.b16 %v4046
        %v4126 = vunpack.c.l.b16 %v4047
        %v4127 = vunpack.c.l.b16 %v4048
        %v4128 = vunpack.c.l.b16 %v4049
        %v4129 = vunpack.c.l.b16 %v4050
        %v4130 = vunpack.c.l.b16 %v4051
        %v4131 = vunpack.c.l.b16 %v4052
        %v4132 = vunpack.c.l.b16 %v4053
        %v4133 = vunpack.c.l.b16 %v4054
        %v4134 = vunpack.c.l.b16 %v4055
        %v4135 = vunpack.c.l.b16 %v4056
        %v4136 = vunpack.c.l.b16 %v4057
        %v4137 = vunpack.c.l.b16 %v4058
        %v4138 = vunpack.c.l.b16 %v4059
        %v4139 = vunpack.c.l.b16 %v4060
        %v4140 = vunpack.c.l.b16 %v4061
        %v4141 = vunpack.c.l.b16 %v4062
        %v4142 = vunpack.c.l.b16 %v4063
        %v4143 = vunpack.c.l.b16 %v4064
        %v4144 = vunpack.c.l.b16 %v4065
        %v4145 = vunpack.c.l.b16 %v4066
        %v4146 = vunpack.c.l.b16 %v4067
        %v4147 = vunpack.c.l.b16 %v4068
        %v4148 = vunpack.c.l.b16 %v4069
        %v4149 = vunpack.c.l.b16 %v4070
        %v4150 = vunpack.c.l.b16 %v4071
        %v4151 = vunpack.c.l.b16 %v4072
        %v4152 = vunpack.c.l.b16 %v4073
        %v4153 = vunpack.c.l.b16 %v4074
        %v4154 = vunpack.c.l.b16 %v4075
        %v4155 = vpack.c.b16 %v4120, %v4119
        %v4156 = vpack.c.b16 %v4122, %v4121
        %v4157 = vpack.c.b16 %v4124, %v4123
        %v4158 = vpack.c.b16 %v4126, %v4125
        %v4159 = vpack.c.b16 %v4128, %v4127
        %v4160 = vpack.c.b16 %v4130, %v4129
        %v4161 = vpack.c.b16 %v4132, %v4131
        %v4162 = vpack.c.b16 %v4134, %v4133
        %v4163 = vpack.c.b16 %v4136, %v4135
        %v4164 = vpack.c.b16 %v4138, %v4137
        %v4165 = vpack.c.b16 %v4140, %v4139
        %v4166 = vpack.c.b16 %v4142, %v4141
        %v4167 = vpack.c.b16 %v4144, %v4143
        %v4168 = vpack.c.b16 %v4146, %v4145
        %v4169 = vpack.c.b16 %v4148, %v4147
        %v4170 = vpack.c.b16 %v4150, %v4149
        %v4171 = vpack.c.b16 %v4152, %v4151
        %v4172 = vpack.c.b16 %v4154, %v4153
        %v4192 = vsel %vm1085, %v3994, 0
        %v4195 = vsel %vm1085, %v3997, 0
        %v4198 = vsel %vm1085, %v4000, 0
        %v4201 = vsel %vm1085, %v4003, 0
        %v4204 = vsel %vm1085, %v4006, 0
        %v4207 = vsel %vm1085, %v4009, 0
        %v4210 = vsel %vm1085, %v4012, 0
        %v4213 = vsel %vm1085, %v4015, 0
        %v4216 = vsel %vm1085, %v4018, 0
        %v4219 = vsel %vm1085, %v4021, 0
        %v4222 = vsel %vm1085, %v4024, 0
        %v4225 = vsel %vm1085, %v4027, 0
        %v4228 = vsel %vm1085, %v4030, 0
        %v4231 = vsel %vm1085, %v4033, 0
        %v4234 = vsel %vm1085, %v4036, 0
        %v4237 = vsel %vm1085, %v4039, 0
        %4239 = vmatprep.subr.bf16.mxu0 0
        %4240 = vmatpush1.bf16.msra.mxu0 %v4155
        %4241 = vmatprep.subr.bf16.mxu0 0
        %4242 = vmatpush1.bf16.msra.mxu0 %v4156
        %4243 = vmatprep.subr.bf16.mxu0 0
        %4244 = vmatpush1.bf16.msra.mxu0 %v4157
        %4245 = vmatprep.subr.bf16.mxu0 0
        %4246 = vmatpush1.bf16.msra.mxu0 %v4158
        %4247 = vmatprep.subr.bf16.mxu0 0
        %4248 = vmatpush1.bf16.msra.mxu0 %v4159
        %4249 = vmatprep.subr.bf16.mxu0 0
        %4250 = vmatpush1.bf16.msra.mxu0 %v4160
        %4251 = vmatprep.subr.bf16.mxu0 0
        %4252 = vmatpush1.bf16.msra.mxu0 %v4161
        %4253 = vmatprep.subr.bf16.mxu0 0
        %4254 = vmatpush1.bf16.msra.mxu0 %v4162
        %4255 = vmatprep.subr.bf16.mxu0 0
        %4256 = vmatpush1.bf16.msra.mxu0 %v4163
        %4257 = vmatprep.subr.bf16.mxu0 0
        %4258 = vmatpush1.bf16.msra.mxu0 %v4164
        %4259 = vmatprep.subr.bf16.mxu0 0
        %4260 = vmatpush1.bf16.msra.mxu0 %v4165
        %4261 = vmatprep.subr.bf16.mxu0 0
        %4262 = vmatpush1.bf16.msra.mxu0 %v4166
        %4263 = vmatprep.subr.bf16.mxu0 0
        %4264 = vmatpush1.bf16.msra.mxu0 %v4167
        %4265 = vmatprep.subr.bf16.mxu0 0
        %4266 = vmatpush1.bf16.msra.mxu0 %v4168
        %4267 = vmatprep.subr.bf16.mxu0 0
        %4268 = vmatpush1.bf16.msra.mxu0 %v4169
        %4269 = vmatprep.subr.bf16.mxu0 0
        %4270 = vmatpush1.bf16.msra.mxu0 %v4170
        %4271 = vmatprep.mubr.bf16.mxu0 %v3993
        %4272 = vmatmul.mubr.bf16.gmra.mrb[0].mxu0 %v3992
        %v4273 = vpop.f32.mrb[0].mxu0
        %v4274 = vadd.f32 %v4081, %v4273
        %v4275 = vpop.f32.mrb[0].mxu0
        %v4276 = vpop.f32.mrb[0].mxu0
        %v4277 = vadd.f32 %v4081, %v4276
        %v4278 = vpop.f32.mrb[0].mxu0
        %4279 = vmatprep.mubr.bf16.mxu0 %v3996
        %4280 = vmatmul.mubr.bf16.gmra.mrb[0].mxu0 %v3995
        %v4281 = vpop.f32.mrb[0].mxu0
        %v4282 = vadd.f32 %v4081, %v4281
        %v4283 = vpop.f32.mrb[0].mxu0
        %v4284 = vpop.f32.mrb[0].mxu0
        %v4285 = vadd.f32 %v4081, %v4284
        %v4286 = vpop.f32.mrb[0].mxu0
        %4287 = vmatprep.mubr.bf16.mxu0 %v3999
        %4288 = vmatmul.mubr.bf16.gmra.mrb[0].mxu0 %v3998
        %v4289 = vpop.f32.mrb[0].mxu0
        %v4290 = vadd.f32 %v4081, %v4289
        %v4291 = vpop.f32.mrb[0].mxu0
        %v4292 = vpop.f32.mrb[0].mxu0
        %v4293 = vadd.f32 %v4081, %v4292
        %v4294 = vpop.f32.mrb[0].mxu0
        %4295 = vmatprep.mubr.bf16.mxu0 %v4002
        %4296 = vmatmul.mubr.bf16.gmra.mrb[0].mxu0 %v4001
        %v4297 = vpop.f32.mrb[0].mxu0
        %v4298 = vadd.f32 %v4081, %v4297
        %v4299 = vpop.f32.mrb[0].mxu0
        %v4300 = vpop.f32.mrb[0].mxu0
        %v4301 = vadd.f32 %v4081, %v4300
        %v4302 = vpop.f32.mrb[0].mxu0
        %4303 = vmatprep.mubr.bf16.mxu0 %v4005
        %4304 = vmatmul.mubr.bf16.gmra.mrb[0].mxu0 %v4004
        %v4305 = vpop.f32.mrb[0].mxu0
        %v4306 = vadd.f32 %v4081, %v4305
        %v4307 = vpop.f32.mrb[0].mxu0
        %v4308 = vpop.f32.mrb[0].mxu0
        %v4309 = vadd.f32 %v4081, %v4308
        %v4310 = vpop.f32.mrb[0].mxu0
        %4311 = vmatprep.mubr.bf16.mxu0 %v4008
        %4312 = vmatmul.mubr.bf16.gmra.mrb[0].mxu0 %v4007
        %v4313 = vpop.f32.mrb[0].mxu0
        %v4314 = vadd.f32 %v4081, %v4313
        %v4315 = vpop.f32.mrb[0].mxu0
        %v4316 = vpop.f32.mrb[0].mxu0
        %v4317 = vadd.f32 %v4081, %v4316
        %v4318 = vpop.f32.mrb[0].mxu0
        %4319 = vmatprep.mubr.bf16.mxu0 %v4011
        %4320 = vmatmul.mubr.bf16.gmra.mrb[0].mxu0 %v4010
        %v4321 = vpop.f32.mrb[0].mxu0
        %v4322 = vadd.f32 %v4081, %v4321
        %v4323 = vpop.f32.mrb[0].mxu0
        %v4324 = vpop.f32.mrb[0].mxu0
        %v4325 = vadd.f32 %v4081, %v4324
        %v4326 = vpop.f32.mrb[0].mxu0
        %4327 = vmatprep.mubr.bf16.mxu0 %v4014
        %4328 = vmatmul.mubr.bf16.gmra.mrb[0].mxu0 %v4013
        %v4329 = vpop.f32.mrb[0].mxu0
        %v4330 = vadd.f32 %v4081, %v4329
        %v4331 = vpop.f32.mrb[0].mxu0
        %v4332 = vpop.f32.mrb[0].mxu0
        %v4333 = vadd.f32 %v4081, %v4332
        %v4334 = vpop.f32.mrb[0].mxu0
        %4335 = vmatprep.mubr.bf16.mxu0 %v4017
        %4336 = vmatmul.mubr.bf16.gmra.mrb[0].mxu0 %v4016
        %v4337 = vpop.f32.mrb[0].mxu0
        %v4338 = vadd.f32 %v4081, %v4337
        %v4339 = vpop.f32.mrb[0].mxu0
        %v4340 = vpop.f32.mrb[0].mxu0
        %v4341 = vadd.f32 %v4081, %v4340
        %v4342 = vpop.f32.mrb[0].mxu0
        %4343 = vmatprep.mubr.bf16.mxu0 %v4020
        %4344 = vmatmul.mubr.bf16.gmra.mrb[0].mxu0 %v4019
        %v4345 = vpop.f32.mrb[0].mxu0
        %v4346 = vadd.f32 %v4081, %v4345
        %v4347 = vpop.f32.mrb[0].mxu0
        %v4348 = vpop.f32.mrb[0].mxu0
        %v4349 = vadd.f32 %v4081, %v4348
        %v4350 = vpop.f32.mrb[0].mxu0
        %4351 = vmatprep.mubr.bf16.mxu0 %v4023
        %4352 = vmatmul.mubr.bf16.gmra.mrb[0].mxu0 %v4022
        %v4353 = vpop.f32.mrb[0].mxu0
        %v4354 = vadd.f32 %v4081, %v4353
        %v4355 = vpop.f32.mrb[0].mxu0
        %v4356 = vpop.f32.mrb[0].mxu0
        %v4357 = vadd.f32 %v4081, %v4356
        %v4358 = vpop.f32.mrb[0].mxu0
        %4359 = vmatprep.mubr.bf16.mxu0 %v4026
        %4360 = vmatmul.mubr.bf16.gmra.mrb[0].mxu0 %v4025
        %v4361 = vpop.f32.mrb[0].mxu0
        %v4362 = vadd.f32 %v4081, %v4361
        %v4363 = vpop.f32.mrb[0].mxu0
        %v4364 = vpop.f32.mrb[0].mxu0
        %v4365 = vadd.f32 %v4081, %v4364
        %v4366 = vpop.f32.mrb[0].mxu0
        %4367 = vmatprep.mubr.bf16.mxu0 %v4029
        %4368 = vmatmul.mubr.bf16.gmra.mrb[0].mxu0 %v4028
        %v4369 = vpop.f32.mrb[0].mxu0
        %v4370 = vadd.f32 %v4081, %v4369
        %v4371 = vpop.f32.mrb[0].mxu0
        %v4372 = vpop.f32.mrb[0].mxu0
        %v4373 = vadd.f32 %v4081, %v4372
        %v4374 = vpop.f32.mrb[0].mxu0
        %4375 = vmatprep.mubr.bf16.mxu0 %v4032
        %4376 = vmatmul.mubr.bf16.gmra.mrb[0].mxu0 %v4031
        %v4377 = vpop.f32.mrb[0].mxu0
        %v4378 = vadd.f32 %v4081, %v4377
        %v4379 = vpop.f32.mrb[0].mxu0
        %v4380 = vpop.f32.mrb[0].mxu0
        %v4381 = vadd.f32 %v4081, %v4380
        %v4382 = vpop.f32.mrb[0].mxu0
        %4383 = vmatprep.mubr.bf16.mxu0 %v4035
        %4384 = vmatmul.mubr.bf16.gmra.mrb[0].mxu0 %v4034
        %v4385 = vpop.f32.mrb[0].mxu0
        %v4386 = vadd.f32 %v4081, %v4385
        %v4387 = vpop.f32.mrb[0].mxu0
        %v4388 = vpop.f32.mrb[0].mxu0
        %v4389 = vadd.f32 %v4081, %v4388
        %v4390 = vpop.f32.mrb[0].mxu0
        %4391 = vmatprep.mubr.bf16.mxu0 %v4038
        %4392 = vmatmul.mubr.bf16.gmra.mrb[0].mxu0 %v4037
        %v4393 = vpop.f32.mrb[0].mxu0
        %v4394 = vadd.f32 %v4081, %v4393
        %v4395 = vpop.f32.mrb[0].mxu0
        %v4396 = vpop.f32.mrb[0].mxu0
        %v4397 = vadd.f32 %v4081, %v4396
        %v4398 = vpop.f32.mrb[0].mxu0
        %4399 = vdwg.mxu0
        %4400 = vmatprep.subr.bf16.mxu0 0
        %4401 = vmatpush1.bf16.msra.mxu0 %v4171
        %4402 = vmatprep.subr.bf16.mxu0 0
        %4403 = vmatpush1.bf16.msra.mxu0 %v4172
        %4404 = vmatprep.subr.bf16.mxu0 0
        %4405 = vmatpush1.bf16.msra.mxu0 0
        %4406 = vmatprep.subr.bf16.mxu0 0
        %4407 = vmatpush1.bf16.msra.mxu0 0
        %4408 = vmatprep.subr.bf16.mxu0 0
        %4409 = vmatpush1.bf16.msra.mxu0 0
        %4410 = vmatprep.subr.bf16.mxu0 0
        %4411 = vmatpush1.bf16.msra.mxu0 0
        %4412 = vmatprep.subr.bf16.mxu0 0
        %4413 = vmatpush1.bf16.msra.mxu0 0
        %4414 = vmatprep.subr.bf16.mxu0 0
        %4415 = vmatpush1.bf16.msra.mxu0 0
        %4416 = vmatprep.subr.bf16.mxu0 0
        %4417 = vmatpush1.bf16.msra.mxu0 0
        %4418 = vmatprep.subr.bf16.mxu0 0
        %4419 = vmatpush1.bf16.msra.mxu0 0
        %4420 = vmatprep.subr.bf16.mxu0 0
        %4421 = vmatpush1.bf16.msra.mxu0 0
        %4422 = vmatprep.subr.bf16.mxu0 0
        %4423 = vmatpush1.bf16.msra.mxu0 0
        %4424 = vmatprep.subr.bf16.mxu0 0
        %4425 = vmatpush1.bf16.msra.mxu0 0
        %4426 = vmatprep.subr.bf16.mxu0 0
        %4427 = vmatpush1.bf16.msra.mxu0 0
        %4428 = vmatprep.subr.bf16.mxu0 0
        %4429 = vmatpush1.bf16.msra.mxu0 0
        %4430 = vmatprep.subr.bf16.mxu0 0
        %4431 = vmatpush1.bf16.msra.mxu0 0
        %4432 = vmatprep.mubr.bf16.mxu0 0
        %4433 = vmatmul.mubr.bf16.gmra.mrb[0].mxu0 %v4192
        %v4434 = vpop.f32.mrb[0].mxu0
        %v4435 = vadd.f32 %v4274, %v4434
        %v4436 = vpop.f32.mrb[0].mxu0
        %v4437 = vpop.f32.mrb[0].mxu0
        %v4438 = vadd.f32 %v4277, %v4437
        %v4439 = vpop.f32.mrb[0].mxu0
        %4440 = vmatprep.mubr.bf16.mxu0 0
        %4441 = vmatmul.mubr.bf16.gmra.mrb[0].mxu0 %v4195
        %v4442 = vpop.f32.mrb[0].mxu0
        %v4443 = vadd.f32 %v4282, %v4442
        %v4444 = vpop.f32.mrb[0].mxu0
        %v4445 = vpop.f32.mrb[0].mxu0
        %v4446 = vadd.f32 %v4285, %v4445
        %v4447 = vpop.f32.mrb[0].mxu0
        %4448 = vmatprep.mubr.bf16.mxu0 0
        %4449 = vmatmul.mubr.bf16.gmra.mrb[0].mxu0 %v4198
        %v4450 = vpop.f32.mrb[0].mxu0
        %v4451 = vadd.f32 %v4290, %v4450
        %v4452 = vpop.f32.mrb[0].mxu0
        %v4453 = vpop.f32.mrb[0].mxu0
        %v4454 = vadd.f32 %v4293, %v4453
        %v4455 = vpop.f32.mrb[0].mxu0
        %4456 = vmatprep.mubr.bf16.mxu0 0
        %4457 = vmatmul.mubr.bf16.gmra.mrb[0].mxu0 %v4201
        %v4458 = vpop.f32.mrb[0].mxu0
        %v4459 = vadd.f32 %v4298, %v4458
        %v4460 = vpop.f32.mrb[0].mxu0
        %v4461 = vpop.f32.mrb[0].mxu0
        %v4462 = vadd.f32 %v4301, %v4461
        %v4463 = vpop.f32.mrb[0].mxu0
        %4464 = vmatprep.mubr.bf16.mxu0 0
        %4465 = vmatmul.mubr.bf16.gmra.mrb[0].mxu0 %v4204
        %v4466 = vpop.f32.mrb[0].mxu0
        %v4467 = vadd.f32 %v4306, %v4466
        %v4468 = vpop.f32.mrb[0].mxu0
        %v4469 = vpop.f32.mrb[0].mxu0
        %v4470 = vadd.f32 %v4309, %v4469
        %v4471 = vpop.f32.mrb[0].mxu0
        %4472 = vmatprep.mubr.bf16.mxu0 0
        %4473 = vmatmul.mubr.bf16.gmra.mrb[0].mxu0 %v4207
        %v4474 = vpop.f32.mrb[0].mxu0
        %v4475 = vadd.f32 %v4314, %v4474
        %v4476 = vpop.f32.mrb[0].mxu0
        %v4477 = vpop.f32.mrb[0].mxu0
        %v4478 = vadd.f32 %v4317, %v4477
        %v4479 = vpop.f32.mrb[0].mxu0
        %4480 = vmatprep.mubr.bf16.mxu0 0
        %4481 = vmatmul.mubr.bf16.gmra.mrb[0].mxu0 %v4210
        %v4482 = vpop.f32.mrb[0].mxu0
        %v4483 = vadd.f32 %v4322, %v4482
        %v4484 = vpop.f32.mrb[0].mxu0
        %v4485 = vpop.f32.mrb[0].mxu0
        %v4486 = vadd.f32 %v4325, %v4485
        %v4487 = vpop.f32.mrb[0].mxu0
        %4488 = vmatprep.mubr.bf16.mxu0 0
        %4489 = vmatmul.mubr.bf16.gmra.mrb[0].mxu0 %v4213
        %v4490 = vpop.f32.mrb[0].mxu0
        %v4491 = vadd.f32 %v4330, %v4490
        %v4492 = vpop.f32.mrb[0].mxu0
        %v4493 = vpop.f32.mrb[0].mxu0
        %v4494 = vadd.f32 %v4333, %v4493
        %v4495 = vpop.f32.mrb[0].mxu0
        %4496 = vmatprep.mubr.bf16.mxu0 0
        %4497 = vmatmul.mubr.bf16.gmra.mrb[0].mxu0 %v4216
        %v4498 = vpop.f32.mrb[0].mxu0
        %v4499 = vadd.f32 %v4338, %v4498
        %v4500 = vpop.f32.mrb[0].mxu0
        %v4501 = vpop.f32.mrb[0].mxu0
        %v4502 = vadd.f32 %v4341, %v4501
        %v4503 = vpop.f32.mrb[0].mxu0
        %4504 = vmatprep.mubr.bf16.mxu0 0
        %4505 = vmatmul.mubr.bf16.gmra.mrb[0].mxu0 %v4219
        %v4506 = vpop.f32.mrb[0].mxu0
        %v4507 = vadd.f32 %v4346, %v4506
        %v4508 = vpop.f32.mrb[0].mxu0
        %v4509 = vpop.f32.mrb[0].mxu0
        %v4510 = vadd.f32 %v4349, %v4509
        %v4511 = vpop.f32.mrb[0].mxu0
        %4512 = vmatprep.mubr.bf16.mxu0 0
        %4513 = vmatmul.mubr.bf16.gmra.mrb[0].mxu0 %v4222
        %v4514 = vpop.f32.mrb[0].mxu0
        %v4515 = vadd.f32 %v4354, %v4514
        %v4516 = vpop.f32.mrb[0].mxu0
        %v4517 = vpop.f32.mrb[0].mxu0
        %v4518 = vadd.f32 %v4357, %v4517
        %v4519 = vpop.f32.mrb[0].mxu0
        %4520 = vmatprep.mubr.bf16.mxu0 0
        %4521 = vmatmul.mubr.bf16.gmra.mrb[0].mxu0 %v4225
        %v4522 = vpop.f32.mrb[0].mxu0
        %v4523 = vadd.f32 %v4362, %v4522
        %v4524 = vpop.f32.mrb[0].mxu0
        %v4525 = vpop.f32.mrb[0].mxu0
        %v4526 = vadd.f32 %v4365, %v4525
        %v4527 = vpop.f32.mrb[0].mxu0
        %4528 = vmatprep.mubr.bf16.mxu0 0
        %4529 = vmatmul.mubr.bf16.gmra.mrb[0].mxu0 %v4228
        %v4530 = vpop.f32.mrb[0].mxu0
        %v4531 = vadd.f32 %v4370, %v4530
        %v4532 = vpop.f32.mrb[0].mxu0
        %v4533 = vpop.f32.mrb[0].mxu0
        %v4534 = vadd.f32 %v4373, %v4533
        %v4535 = vpop.f32.mrb[0].mxu0
        %4536 = vmatprep.mubr.bf16.mxu0 0
        %4537 = vmatmul.mubr.bf16.gmra.mrb[0].mxu0 %v4231
        %v4538 = vpop.f32.mrb[0].mxu0
        %v4539 = vadd.f32 %v4378, %v4538
        %v4540 = vpop.f32.mrb[0].mxu0
        %v4541 = vpop.f32.mrb[0].mxu0
        %v4542 = vadd.f32 %v4381, %v4541
        %v4543 = vpop.f32.mrb[0].mxu0
        %4544 = vmatprep.mubr.bf16.mxu0 0
        %4545 = vmatmul.mubr.bf16.gmra.mrb[0].mxu0 %v4234
        %v4546 = vpop.f32.mrb[0].mxu0
        %v4547 = vadd.f32 %v4386, %v4546
        %v4548 = vpop.f32.mrb[0].mxu0
        %v4549 = vpop.f32.mrb[0].mxu0
        %v4550 = vadd.f32 %v4389, %v4549
        %v4551 = vpop.f32.mrb[0].mxu0
        %4552 = vmatprep.mubr.bf16.mxu0 0
        %4553 = vmatmul.mubr.bf16.gmra.mrb[0].mxu0 %v4237
        %v4554 = vpop.f32.mrb[0].mxu0
        %v4555 = vadd.f32 %v4394, %v4554
        %v4556 = vpop.f32.mrb[0].mxu0
        %v4557 = vpop.f32.mrb[0].mxu0
        %v4558 = vadd.f32 %v4397, %v4557
        %v4559 = vpop.f32.mrb[0].mxu0
        %4560 = vdwg.mxu0
        %v4561 = vmax.f32 %v4435, 0.0
        %v4562 = vmax.f32 %v4438, 0.0
        %v4563 = vmax.f32 %v4443, 0.0
        %v4564 = vmax.f32 %v4446, 0.0
        %v4565 = vmax.f32 %v4451, 0.0
        %v4566 = vmax.f32 %v4454, 0.0
        %v4567 = vmax.f32 %v4459, 0.0
        %v4568 = vmax.f32 %v4462, 0.0
        %v4569 = vmax.f32 %v4467, 0.0
        %v4570 = vmax.f32 %v4470, 0.0
        %v4571 = vmax.f32 %v4475, 0.0
        %v4572 = vmax.f32 %v4478, 0.0
        %v4573 = vmax.f32 %v4483, 0.0
        %v4574 = vmax.f32 %v4486, 0.0
        %v4575 = vmax.f32 %v4491, 0.0
        %v4576 = vmax.f32 %v4494, 0.0
        %v4577 = vmax.f32 %v4499, 0.0
        %v4578 = vmax.f32 %v4502, 0.0
        %v4579 = vmax.f32 %v4507, 0.0
        %v4580 = vmax.f32 %v4510, 0.0
        %v4581 = vmax.f32 %v4515, 0.0
        %v4582 = vmax.f32 %v4518, 0.0
        %v4583 = vmax.f32 %v4523, 0.0
        %v4584 = vmax.f32 %v4526, 0.0
        %v4585 = vmax.f32 %v4531, 0.0
        %v4586 = vmax.f32 %v4534, 0.0
        %v4587 = vmax.f32 %v4539, 0.0
        %v4588 = vmax.f32 %v4542, 0.0
        %v4589 = vmax.f32 %v4547, 0.0
        %v4590 = vmax.f32 %v4550, 0.0
        %v4591 = vmax.f32 %v4555, 0.0
        %v4592 = vmax.f32 %v4558, 0.0
        %v4593 = vpack.c.bf16 %v4562, %v4561
        %v4594 = vpack.c.bf16 %v4564, %v4563
        %v4595 = vpack.c.bf16 %v4566, %v4565
        %v4596 = vpack.c.bf16 %v4568, %v4567
        %v4597 = vpack.c.bf16 %v4570, %v4569
        %v4598 = vpack.c.bf16 %v4572, %v4571
        %v4599 = vpack.c.bf16 %v4574, %v4573
        %v4600 = vpack.c.bf16 %v4576, %v4575
        %v4601 = vpack.c.bf16 %v4578, %v4577
        %v4602 = vpack.c.bf16 %v4580, %v4579
        %v4603 = vpack.c.bf16 %v4582, %v4581
        %v4604 = vpack.c.bf16 %v4584, %v4583
        %v4605 = vpack.c.bf16 %v4586, %v4585
        %v4606 = vpack.c.bf16 %v4588, %v4587
        %v4607 = vpack.c.bf16 %v4590, %v4589
        %v4608 = vpack.c.bf16 %v4592, %v4591
        %v4625 = vunpack.c.l.b16 %v4593
        %v4626 = vunpack.c.h.b16 %v4593
        %v4627 = vunpack.c.l.b16 %v4594
        %v4628 = vunpack.c.h.b16 %v4594
        %v4629 = vunpack.c.l.b16 %v4595
        %v4630 = vunpack.c.h.b16 %v4595
        %v4631 = vunpack.c.l.b16 %v4596
        %v4632 = vunpack.c.h.b16 %v4596
        %v4633 = vunpack.c.l.b16 %v4597
        %v4634 = vunpack.c.h.b16 %v4597
        %v4635 = vunpack.c.l.b16 %v4598
        %v4636 = vunpack.c.h.b16 %v4598
        %v4637 = vunpack.c.l.b16 %v4599
        %v4638 = vunpack.c.h.b16 %v4599
        %v4639 = vunpack.c.l.b16 %v4600
        %v4640 = vunpack.c.h.b16 %v4600
        %v4641 = vunpack.c.l.b16 %v4601
        %v4642 = vunpack.c.h.b16 %v4601
        %v4643 = vunpack.c.l.b16 %v4602
        %v4644 = vunpack.c.h.b16 %v4602
        %v4645 = vunpack.c.l.b16 %v4603
        %v4646 = vunpack.c.h.b16 %v4603
        %v4647 = vunpack.c.l.b16 %v4604
        %v4648 = vunpack.c.h.b16 %v4604
        %v4649 = vunpack.c.l.b16 %v4605
        %v4650 = vunpack.c.h.b16 %v4605
        %v4651 = vunpack.c.l.b16 %v4606
        %v4652 = vunpack.c.h.b16 %v4606
        %v4653 = vunpack.c.l.b16 %v4607
        %v4654 = vunpack.c.h.b16 %v4607
        %v4655 = vunpack.c.l.b16 %v4608
        %v4656 = vunpack.c.h.b16 %v4608
        %v4657 = vpack.c.b16 %v4625, %v4625
        %v4658 = vpack.c.b16 %v4626, %v4626
        %v4659 = vpack.c.b16 %v4627, %v4627
        %v4660 = vpack.c.b16 %v4628, %v4628
        %v4661 = vpack.c.b16 %v4629, %v4629
        %v4662 = vpack.c.b16 %v4630, %v4630
        %v4663 = vpack.c.b16 %v4631, %v4631
        %v4664 = vpack.c.b16 %v4632, %v4632
        %v4665 = vpack.c.b16 %v4633, %v4633
        %v4666 = vpack.c.b16 %v4634, %v4634
        %v4667 = vpack.c.b16 %v4635, %v4635
        %v4668 = vpack.c.b16 %v4636, %v4636
        %v4669 = vpack.c.b16 %v4637, %v4637
        %v4670 = vpack.c.b16 %v4638, %v4638
        %v4671 = vpack.c.b16 %v4639, %v4639
        %v4672 = vpack.c.b16 %v4640, %v4640
        %v4673 = vpack.c.b16 %v4641, %v4641
        %v4674 = vpack.c.b16 %v4642, %v4642
        %v4675 = vpack.c.b16 %v4643, %v4643
        %v4676 = vpack.c.b16 %v4644, %v4644
        %v4677 = vpack.c.b16 %v4645, %v4645
        %v4678 = vpack.c.b16 %v4646, %v4646
        %v4679 = vpack.c.b16 %v4647, %v4647
        %v4680 = vpack.c.b16 %v4648, %v4648
        %v4681 = vpack.c.b16 %v4649, %v4649
        %v4682 = vpack.c.b16 %v4650, %v4650
        %v4683 = vpack.c.b16 %v4651, %v4651
        %v4684 = vpack.c.b16 %v4652, %v4652
        %v4685 = vpack.c.b16 %v4653, %v4653
        %v4686 = vpack.c.b16 %v4654, %v4654
        %v4687 = vpack.c.b16 %v4655, %v4655
        %v4688 = vpack.c.b16 %v4656, %v4656
        %v4690 = vshrl.u32 %v4657, 16
        %v4692 = vrot.slane %v4690, 7
        %v4693 = vshll.u32 %v4657, 16
        %v4695 = vor.u32 %v4692, %v4693
        %v4696 = vrot.slane %v4692, 4
        %v4698 = vshrl.u32 %v4658, 16
        %v4700 = vrot.slane %v4698, 7
        %v4701 = vshll.u32 %v4658, 16
        %v4703 = vor.u32 %v4700, %v4701
        %v4704 = vsel %vm518, %v4696, %v4703
        %v4705 = vrot.slane %v4700, 4
        %v4707 = vshrl.u32 %v4659, 16
        %v4709 = vrot.slane %v4707, 7
        %v4710 = vshll.u32 %v4659, 16
        %v4712 = vor.u32 %v4709, %v4710
        %v4713 = vrot.slane %v4709, 4
        %v4715 = vshrl.u32 %v4660, 16
        %v4717 = vrot.slane %v4715, 7
        %v4718 = vshll.u32 %v4660, 16
        %v4720 = vor.u32 %v4717, %v4718
        %v4721 = vsel %vm518, %v4713, %v4720
        %v4722 = vrot.slane %v4717, 4
        %v4724 = vshrl.u32 %v4661, 16
        %v4726 = vrot.slane %v4724, 7
        %v4727 = vshll.u32 %v4661, 16
        %v4729 = vor.u32 %v4726, %v4727
        %v4730 = vrot.slane %v4726, 4
        %v4732 = vshrl.u32 %v4662, 16
        %v4734 = vrot.slane %v4732, 7
        %v4735 = vshll.u32 %v4662, 16
        %v4737 = vor.u32 %v4734, %v4735
        %v4738 = vsel %vm518, %v4730, %v4737
        %v4739 = vrot.slane %v4734, 4
        %v4741 = vshrl.u32 %v4663, 16
        %v4743 = vrot.slane %v4741, 7
        %v4744 = vshll.u32 %v4663, 16
        %v4746 = vor.u32 %v4743, %v4744
        %v4747 = vrot.slane %v4743, 4
        %v4749 = vshrl.u32 %v4664, 16
        %v4751 = vrot.slane %v4749, 7
        %v4752 = vshll.u32 %v4664, 16
        %v4754 = vor.u32 %v4751, %v4752
        %v4755 = vsel %vm518, %v4747, %v4754
        %v4756 = vrot.slane %v4751, 4
        %v4758 = vshrl.u32 %v4665, 16
        %v4760 = vrot.slane %v4758, 7
        %v4761 = vshll.u32 %v4665, 16
        %v4763 = vor.u32 %v4760, %v4761
        %v4764 = vrot.slane %v4760, 4
        %v4766 = vshrl.u32 %v4666, 16
        %v4768 = vrot.slane %v4766, 7
        %v4769 = vshll.u32 %v4666, 16
        %v4771 = vor.u32 %v4768, %v4769
        %v4772 = vsel %vm518, %v4764, %v4771
        %v4773 = vrot.slane %v4768, 4
        %v4775 = vshrl.u32 %v4667, 16
        %v4777 = vrot.slane %v4775, 7
        %v4778 = vshll.u32 %v4667, 16
        %v4780 = vor.u32 %v4777, %v4778
        %v4781 = vrot.slane %v4777, 4
        %v4783 = vshrl.u32 %v4668, 16
        %v4785 = vrot.slane %v4783, 7
        %v4786 = vshll.u32 %v4668, 16
        %v4788 = vor.u32 %v4785, %v4786
        %v4789 = vsel %vm518, %v4781, %v4788
        %v4790 = vrot.slane %v4785, 4
        %v4792 = vshrl.u32 %v4669, 16
        %v4794 = vrot.slane %v4792, 7
        %v4795 = vshll.u32 %v4669, 16
        %v4797 = vor.u32 %v4794, %v4795
        %v4798 = vrot.slane %v4794, 4
        %v4800 = vshrl.u32 %v4670, 16
        %v4802 = vrot.slane %v4800, 7
        %v4803 = vshll.u32 %v4670, 16
        %v4805 = vor.u32 %v4802, %v4803
        %v4806 = vsel %vm518, %v4798, %v4805
        %v4807 = vrot.slane %v4802, 4
        %v4809 = vshrl.u32 %v4671, 16
        %v4811 = vrot.slane %v4809, 7
        %v4812 = vshll.u32 %v4671, 16
        %v4814 = vor.u32 %v4811, %v4812
        %v4815 = vrot.slane %v4811, 4
        %v4817 = vshrl.u32 %v4672, 16
        %v4819 = vrot.slane %v4817, 7
        %v4820 = vshll.u32 %v4672, 16
        %v4822 = vor.u32 %v4819, %v4820
        %v4823 = vsel %vm518, %v4815, %v4822
        %v4824 = vrot.slane %v4819, 4
        %v4826 = vshrl.u32 %v4673, 16
        %v4828 = vrot.slane %v4826, 7
        %v4829 = vshll.u32 %v4673, 16
        %v4831 = vor.u32 %v4828, %v4829
        %v4832 = vrot.slane %v4828, 4
        %v4834 = vshrl.u32 %v4674, 16
        %v4836 = vrot.slane %v4834, 7
        %v4837 = vshll.u32 %v4674, 16
        %v4839 = vor.u32 %v4836, %v4837
        %v4840 = vsel %vm518, %v4832, %v4839
        %v4841 = vrot.slane %v4836, 4
        %v4843 = vshrl.u32 %v4675, 16
        %v4845 = vrot.slane %v4843, 7
        %v4846 = vshll.u32 %v4675, 16
        %v4848 = vor.u32 %v4845, %v4846
        %v4849 = vrot.slane %v4845, 4
        %v4851 = vshrl.u32 %v4676, 16
        %v4853 = vrot.slane %v4851, 7
        %v4854 = vshll.u32 %v4676, 16
        %v4856 = vor.u32 %v4853, %v4854
        %v4857 = vsel %vm518, %v4849, %v4856
        %v4858 = vrot.slane %v4853, 4
        %v4860 = vshrl.u32 %v4677, 16
        %v4862 = vrot.slane %v4860, 7
        %v4863 = vshll.u32 %v4677, 16
        %v4865 = vor.u32 %v4862, %v4863
        %v4866 = vrot.slane %v4862, 4
        %v4868 = vshrl.u32 %v4678, 16
        %v4870 = vrot.slane %v4868, 7
        %v4871 = vshll.u32 %v4678, 16
        %v4873 = vor.u32 %v4870, %v4871
        %v4874 = vsel %vm518, %v4866, %v4873
        %v4875 = vrot.slane %v4870, 4
        %v4877 = vshrl.u32 %v4679, 16
        %v4879 = vrot.slane %v4877, 7
        %v4880 = vshll.u32 %v4679, 16
        %v4882 = vor.u32 %v4879, %v4880
        %v4883 = vrot.slane %v4879, 4
        %v4885 = vshrl.u32 %v4680, 16
        %v4887 = vrot.slane %v4885, 7
        %v4888 = vshll.u32 %v4680, 16
        %v4890 = vor.u32 %v4887, %v4888
        %v4891 = vsel %vm518, %v4883, %v4890
        %v4892 = vrot.slane %v4887, 4
        %v4894 = vshrl.u32 %v4681, 16
        %v4896 = vrot.slane %v4894, 7
        %v4897 = vshll.u32 %v4681, 16
        %v4899 = vor.u32 %v4896, %v4897
        %v4900 = vrot.slane %v4896, 4
        %v4902 = vshrl.u32 %v4682, 16
        %v4904 = vrot.slane %v4902, 7
        %v4905 = vshll.u32 %v4682, 16
        %v4907 = vor.u32 %v4904, %v4905
        %v4908 = vsel %vm518, %v4900, %v4907
        %v4909 = vrot.slane %v4904, 4
        %v4911 = vshrl.u32 %v4683, 16
        %v4913 = vrot.slane %v4911, 7
        %v4914 = vshll.u32 %v4683, 16
        %v4916 = vor.u32 %v4913, %v4914
        %v4917 = vrot.slane %v4913, 4
        %v4919 = vshrl.u32 %v4684, 16
        %v4921 = vrot.slane %v4919, 7
        %v4922 = vshll.u32 %v4684, 16
        %v4924 = vor.u32 %v4921, %v4922
        %v4925 = vsel %vm518, %v4917, %v4924
        %v4926 = vrot.slane %v4921, 4
        %v4928 = vshrl.u32 %v4685, 16
        %v4930 = vrot.slane %v4928, 7
        %v4931 = vshll.u32 %v4685, 16
        %v4933 = vor.u32 %v4930, %v4931
        %v4934 = vrot.slane %v4930, 4
        %v4936 = vshrl.u32 %v4686, 16
        %v4938 = vrot.slane %v4936, 7
        %v4939 = vshll.u32 %v4686, 16
        %v4941 = vor.u32 %v4938, %v4939
        %v4942 = vsel %vm518, %v4934, %v4941
        %v4943 = vrot.slane %v4938, 4
        %v4945 = vshrl.u32 %v4687, 16
        %v4947 = vrot.slane %v4945, 7
        %v4948 = vshll.u32 %v4687, 16
        %v4950 = vor.u32 %v4947, %v4948
        %v4951 = vrot.slane %v4947, 4
        %v4953 = vshrl.u32 %v4688, 16
        %v4955 = vrot.slane %v4953, 7
        %v4956 = vshll.u32 %v4688, 16
        %v4958 = vor.u32 %v4955, %v4956
        %v4959 = vsel %vm518, %v4951, %v4958
        %v4960 = vrot.slane %v4955, 4
        %v5009 = vld [vmem:[%s839] sm:$0xf]
        %v5010 = vsel %vm842, %v4695, %v5009
        %5011 = vst [vmem:[%s839] sm:$0xf] %v5010
        %5012 = vst.msk [vmem:[%s839 + $0x4] sm:$0xf] %vm332, %v4704
        %v5013 = vld [vmem:[%s839 + $0x8] sm:$0x1]
        %v5014 = vsel %vm848, %v4705, %v5013
        %5015 = vst [vmem:[%s839 + $0x8] sm:$0x1] %v5014
        %v5016 = vld [vmem:[%s839 + $0xc] sm:$0xf]
        %v5017 = vsel %vm842, %v4712, %v5016
        %5018 = vst [vmem:[%s839 + $0xc] sm:$0xf] %v5017
        %5019 = vst.msk [vmem:[%s839 + $0x10] sm:$0xf] %vm332, %v4721
        %v5020 = vld [vmem:[%s839 + $0x14] sm:$0x1]
        %v5021 = vsel %vm848, %v4722, %v5020
        %5022 = vst [vmem:[%s839 + $0x14] sm:$0x1] %v5021
        %v5023 = vld [vmem:[%s839 + $0x18] sm:$0xf]
        %v5024 = vsel %vm842, %v4729, %v5023
        %5025 = vst [vmem:[%s839 + $0x18] sm:$0xf] %v5024
        %5026 = vst.msk [vmem:[%s839 + $0x1c] sm:$0xf] %vm332, %v4738
        %v5027 = vld [vmem:[%s839 + $0x20] sm:$0x1]
        %v5028 = vsel %vm848, %v4739, %v5027
        %5029 = vst [vmem:[%s839 + $0x20] sm:$0x1] %v5028
        %v5030 = vld [vmem:[%s839 + $0x24] sm:$0xf]
        %v5031 = vsel %vm842, %v4746, %v5030
        %5032 = vst [vmem:[%s839 + $0x24] sm:$0xf] %v5031
        %5033 = vst.msk [vmem:[%s839 + $0x28] sm:$0xf] %vm332, %v4755
        %v5034 = vld [vmem:[%s839 + $0x2c] sm:$0x1]
        %v5035 = vsel %vm848, %v4756, %v5034
        %5036 = vst [vmem:[%s839 + $0x2c] sm:$0x1] %v5035
        %v5037 = vld [vmem:[%s839 + $0x30] sm:$0xf]
        %v5038 = vsel %vm842, %v4763, %v5037
        %5039 = vst [vmem:[%s839 + $0x30] sm:$0xf] %v5038
        %5040 = vst.msk [vmem:[%s839 + $0x34] sm:$0xf] %vm332, %v4772
        %v5041 = vld [vmem:[%s839 + $0x38] sm:$0x1]
        %v5042 = vsel %vm848, %v4773, %v5041
        %5043 = vst [vmem:[%s839 + $0x38] sm:$0x1] %v5042
        %v5044 = vld [vmem:[%s839 + $0x3c] sm:$0xf]
        %v5045 = vsel %vm842, %v4780, %v5044
        %5046 = vst [vmem:[%s839 + $0x3c] sm:$0xf] %v5045
        %5047 = vst.msk [vmem:[%s839 + $0x40] sm:$0xf] %vm332, %v4789
        %v5048 = vld [vmem:[%s839 + $0x44] sm:$0x1]
        %v5049 = vsel %vm848, %v4790, %v5048
        %5050 = vst [vmem:[%s839 + $0x44] sm:$0x1] %v5049
        %v5051 = vld [vmem:[%s839 + $0x48] sm:$0xf]
        %v5052 = vsel %vm842, %v4797, %v5051
        %5053 = vst [vmem:[%s839 + $0x48] sm:$0xf] %v5052
        %5054 = vst.msk [vmem:[%s839 + $0x4c] sm:$0xf] %vm332, %v4806
        %v5055 = vld [vmem:[%s839 + $0x50] sm:$0x1]
        %v5056 = vsel %vm848, %v4807, %v5055
        %5057 = vst [vmem:[%s839 + $0x50] sm:$0x1] %v5056
        %v5058 = vld [vmem:[%s839 + $0x54] sm:$0xf]
        %v5059 = vsel %vm842, %v4814, %v5058
        %5060 = vst [vmem:[%s839 + $0x54] sm:$0xf] %v5059
        %5061 = vst.msk [vmem:[%s839 + $0x58] sm:$0xf] %vm332, %v4823
        %v5062 = vld [vmem:[%s839 + $0x5c] sm:$0x1]
        %v5063 = vsel %vm848, %v4824, %v5062
        %5064 = vst [vmem:[%s839 + $0x5c] sm:$0x1] %v5063
        %v5065 = vld [vmem:[%s839 + $0x60] sm:$0xf]
        %v5066 = vsel %vm842, %v4831, %v5065
        %5067 = vst [vmem:[%s839 + $0x60] sm:$0xf] %v5066
        %5068 = vst.msk [vmem:[%s839 + $0x64] sm:$0xf] %vm332, %v4840
        %v5069 = vld [vmem:[%s839 + $0x68] sm:$0x1]
        %v5070 = vsel %vm848, %v4841, %v5069
        %5071 = vst [vmem:[%s839 + $0x68] sm:$0x1] %v5070
        %v5072 = vld [vmem:[%s839 + $0x6c] sm:$0xf]
        %v5073 = vsel %vm842, %v4848, %v5072
        %5074 = vst [vmem:[%s839 + $0x6c] sm:$0xf] %v5073
        %5075 = vst.msk [vmem:[%s839 + $0x70] sm:$0xf] %vm332, %v4857
        %v5076 = vld [vmem:[%s839 + $0x74] sm:$0x1]
        %v5077 = vsel %vm848, %v4858, %v5076
        %5078 = vst [vmem:[%s839 + $0x74] sm:$0x1] %v5077
        %v5079 = vld [vmem:[%s839 + $0x78] sm:$0xf]
        %v5080 = vsel %vm842, %v4865, %v5079
        %5081 = vst [vmem:[%s839 + $0x78] sm:$0xf] %v5080
        %5082 = vst.msk [vmem:[%s839 + $0x7c] sm:$0xf] %vm332, %v4874
        %v5083 = vld [vmem:[%s839 + $0x80] sm:$0x1]
        %v5084 = vsel %vm848, %v4875, %v5083
        %5085 = vst [vmem:[%s839 + $0x80] sm:$0x1] %v5084
        %v5086 = vld [vmem:[%s839 + $0x84] sm:$0xf]
        %v5087 = vsel %vm842, %v4882, %v5086
        %5088 = vst [vmem:[%s839 + $0x84] sm:$0xf] %v5087
        %5089 = vst.msk [vmem:[%s839 + $0x88] sm:$0xf] %vm332, %v4891
        %v5090 = vld [vmem:[%s839 + $0x8c] sm:$0x1]
        %v5091 = vsel %vm848, %v4892, %v5090
        %5092 = vst [vmem:[%s839 + $0x8c] sm:$0x1] %v5091
        %v5093 = vld [vmem:[%s839 + $0x90] sm:$0xf]
        %v5094 = vsel %vm842, %v4899, %v5093
        %5095 = vst [vmem:[%s839 + $0x90] sm:$0xf] %v5094
        %5096 = vst.msk [vmem:[%s839 + $0x94] sm:$0xf] %vm332, %v4908
        %v5097 = vld [vmem:[%s839 + $0x98] sm:$0x1]
        %v5098 = vsel %vm848, %v4909, %v5097
        %5099 = vst [vmem:[%s839 + $0x98] sm:$0x1] %v5098
        %v5100 = vld [vmem:[%s839 + $0x9c] sm:$0xf]
        %v5101 = vsel %vm842, %v4916, %v5100
        %5102 = vst [vmem:[%s839 + $0x9c] sm:$0xf] %v5101
        %5103 = vst.msk [vmem:[%s839 + $0xa0] sm:$0xf] %vm332, %v4925
        %v5104 = vld [vmem:[%s839 + $0xa4] sm:$0x1]
        %v5105 = vsel %vm848, %v4926, %v5104
        %5106 = vst [vmem:[%s839 + $0xa4] sm:$0x1] %v5105
        %v5107 = vld [vmem:[%s839 + $0xa8] sm:$0xf]
        %v5108 = vsel %vm842, %v4933, %v5107
        %5109 = vst [vmem:[%s839 + $0xa8] sm:$0xf] %v5108
        %5110 = vst.msk [vmem:[%s839 + $0xac] sm:$0xf] %vm332, %v4942
        %v5111 = vld [vmem:[%s839 + $0xb0] sm:$0x1]
        %v5112 = vsel %vm848, %v4943, %v5111
        %5113 = vst [vmem:[%s839 + $0xb0] sm:$0x1] %v5112
        %v5114 = vld [vmem:[%s839 + $0xb4] sm:$0xf]
        %v5115 = vsel %vm842, %v4950, %v5114
        %5116 = vst [vmem:[%s839 + $0xb4] sm:$0xf] %v5115
        %5117 = vst.msk [vmem:[%s839 + $0xb8] sm:$0xf] %vm332, %v4959
        %v5118 = vld [vmem:[%s839 + $0xbc] sm:$0x1]
        %v5119 = vsel %vm848, %v4960, %v5118
        %5120 = vst [vmem:[%s839 + $0xbc] sm:$0x1] %v5119
        %v5121 = vld [vmem:[#allocation2] sm:$0xf]
        %v5122 = vld [vmem:[#allocation2 + $0x4] sm:$0xf]
        %v5123 = vld [vmem:[#allocation2 + $0xc] sm:$0xf]
        %v5124 = vld [vmem:[#allocation2 + $0x10] sm:$0xf]
        %v5125 = vld [vmem:[#allocation2 + $0x18] sm:$0xf]
        %v5126 = vld [vmem:[#allocation2 + $0x1c] sm:$0xf]
        %v5127 = vld [vmem:[#allocation2 + $0x24] sm:$0xf]
        %v5128 = vld [vmem:[#allocation2 + $0x28] sm:$0xf]
        %v5129 = vld [vmem:[#allocation2 + $0x30] sm:$0xf]
        %v5130 = vld [vmem:[#allocation2 + $0x34] sm:$0xf]
        %v5131 = vld [vmem:[#allocation2 + $0x3c] sm:$0xf]
        %v5132 = vld [vmem:[#allocation2 + $0x40] sm:$0xf]
        %v5133 = vld [vmem:[#allocation2 + $0x48] sm:$0xf]
        %v5134 = vld [vmem:[#allocation2 + $0x4c] sm:$0xf]
        %v5135 = vld [vmem:[#allocation2 + $0x54] sm:$0xf]
        %v5136 = vld [vmem:[#allocation2 + $0x58] sm:$0xf]
        %v5137 = vld [vmem:[#allocation2 + $0x60] sm:$0xf]
        %v5138 = vld [vmem:[#allocation2 + $0x64] sm:$0xf]
        %v5139 = vld [vmem:[#allocation2 + $0x6c] sm:$0xf]
        %v5140 = vld [vmem:[#allocation2 + $0x70] sm:$0xf]
        %v5141 = vld [vmem:[#allocation2 + $0x78] sm:$0xf]
        %v5142 = vld [vmem:[#allocation2 + $0x7c] sm:$0xf]
        %v5143 = vld [vmem:[#allocation2 + $0x84] sm:$0xf]
        %v5144 = vld [vmem:[#allocation2 + $0x88] sm:$0xf]
        %v5145 = vld [vmem:[#allocation2 + $0x90] sm:$0xf]
        %v5146 = vld [vmem:[#allocation2 + $0x94] sm:$0xf]
        %v5147 = vld [vmem:[#allocation2 + $0x9c] sm:$0xf]
        %v5148 = vld [vmem:[#allocation2 + $0xa0] sm:$0xf]
        %v5149 = vld [vmem:[#allocation2 + $0xa8] sm:$0xf]
        %v5150 = vld [vmem:[#allocation2 + $0xac] sm:$0xf]
        %v5151 = vld [vmem:[#allocation2 + $0xb4] sm:$0xf]
        %v5152 = vld [vmem:[#allocation2 + $0xb8] sm:$0xf]
        %v5185 = vunpack.c.l.b16 %v5121
        %v5186 = vunpack.c.l.b16 %v5122
        %v5187 = vunpack.c.l.b16 %v5123
        %v5188 = vunpack.c.l.b16 %v5124
        %v5189 = vunpack.c.l.b16 %v5125
        %v5190 = vunpack.c.l.b16 %v5126
        %v5191 = vunpack.c.l.b16 %v5127
        %v5192 = vunpack.c.l.b16 %v5128
        %v5193 = vunpack.c.l.b16 %v5129
        %v5194 = vunpack.c.l.b16 %v5130
        %v5195 = vunpack.c.l.b16 %v5131
        %v5196 = vunpack.c.l.b16 %v5132
        %v5197 = vunpack.c.l.b16 %v5133
        %v5198 = vunpack.c.l.b16 %v5134
        %v5199 = vunpack.c.l.b16 %v5135
        %v5200 = vunpack.c.l.b16 %v5136
        %v5201 = vunpack.c.l.b16 %v5137
        %v5202 = vunpack.c.l.b16 %v5138
        %v5203 = vunpack.c.l.b16 %v5139
        %v5204 = vunpack.c.l.b16 %v5140
        %v5205 = vunpack.c.l.b16 %v5141
        %v5206 = vunpack.c.l.b16 %v5142
        %v5207 = vunpack.c.l.b16 %v5143
        %v5208 = vunpack.c.l.b16 %v5144
        %v5209 = vunpack.c.l.b16 %v5145
        %v5210 = vunpack.c.l.b16 %v5146
        %v5211 = vunpack.c.l.b16 %v5147
        %v5212 = vunpack.c.l.b16 %v5148
        %v5213 = vunpack.c.l.b16 %v5149
        %v5214 = vunpack.c.l.b16 %v5150
        %v5215 = vunpack.c.l.b16 %v5151
        %v5216 = vunpack.c.l.b16 %v5152
        %v5217 = vpack.c.b16 %v5186, %v5185
        %v5218 = vpack.c.b16 %v5188, %v5187
        %v5219 = vpack.c.b16 %v5190, %v5189
        %v5220 = vpack.c.b16 %v5192, %v5191
        %v5221 = vpack.c.b16 %v5194, %v5193
        %v5222 = vpack.c.b16 %v5196, %v5195
        %v5223 = vpack.c.b16 %v5198, %v5197
        %v5224 = vpack.c.b16 %v5200, %v5199
        %v5225 = vpack.c.b16 %v5202, %v5201
        %v5226 = vpack.c.b16 %v5204, %v5203
        %v5227 = vpack.c.b16 %v5206, %v5205
        %v5228 = vpack.c.b16 %v5208, %v5207
        %v5229 = vpack.c.b16 %v5210, %v5209
        %v5230 = vpack.c.b16 %v5212, %v5211
        %v5231 = vpack.c.b16 %v5214, %v5213
        %v5232 = vpack.c.b16 %v5216, %v5215
        %5249 = vst.msk [vmem:[#allocation3] sm:$0xff] %vm1085, %v5217
        %5250 = vst.msk [vmem:[#allocation3 + $0x18] sm:$0xff] %vm1085, %v5218
        %5251 = vst.msk [vmem:[#allocation3 + $0x30] sm:$0xff] %vm1085, %v5219
        %5252 = vst.msk [vmem:[#allocation3 + $0x48] sm:$0xff] %vm1085, %v5220
        %5253 = vst.msk [vmem:[#allocation3 + $0x60] sm:$0xff] %vm1085, %v5221
        %5254 = vst.msk [vmem:[#allocation3 + $0x78] sm:$0xff] %vm1085, %v5222
        %5255 = vst.msk [vmem:[#allocation3 + $0x90] sm:$0xff] %vm1085, %v5223
        %5256 = vst.msk [vmem:[#allocation3 + $0xa8] sm:$0xff] %vm1085, %v5224
        %5257 = vst.msk [vmem:[#allocation3 + $0xc0] sm:$0xff] %vm1085, %v5225
        %5258 = vst.msk [vmem:[#allocation3 + $0xd8] sm:$0xff] %vm1085, %v5226
        %5259 = vst.msk [vmem:[#allocation3 + $0xf0] sm:$0xff] %vm1085, %v5227
        %5260 = vst.msk [vmem:[#allocation3 + $0x108] sm:$0xff] %vm1085, %v5228
        %5261 = vst.msk [vmem:[#allocation3 + $0x120] sm:$0xff] %vm1085, %v5229
        %5262 = vst.msk [vmem:[#allocation3 + $0x138] sm:$0xff] %vm1085, %v5230
        %5263 = vst.msk [vmem:[#allocation3 + $0x150] sm:$0xff] %vm1085, %v5231
        %5264 = vst.msk [vmem:[#allocation3 + $0x168] sm:$0xff] %vm1085, %v5232
        %v5265 = vld [vmem:[#allocation2] sm:$0xf]
        %v5266 = vld [vmem:[#allocation2 + $0x4] sm:$0xf]
        %v5267 = vld [vmem:[#allocation2 + $0x8] sm:$0x1]
        %v5268 = vld [vmem:[#allocation2 + $0xc] sm:$0xf]
        %v5269 = vld [vmem:[#allocation2 + $0x10] sm:$0xf]
        %v5270 = vld [vmem:[#allocation2 + $0x14] sm:$0x1]
        %v5271 = vld [vmem:[#allocation2 + $0x18] sm:$0xf]
        %v5272 = vld [vmem:[#allocation2 + $0x1c] sm:$0xf]
        %v5273 = vld [vmem:[#allocation2 + $0x20] sm:$0x1]
        %v5274 = vld [vmem:[#allocation2 + $0x24] sm:$0xf]
        %v5275 = vld [vmem:[#allocation2 + $0x28] sm:$0xf]
        %v5276 = vld [vmem:[#allocation2 + $0x2c] sm:$0x1]
        %v5277 = vld [vmem:[#allocation2 + $0x30] sm:$0xf]
        %v5278 = vld [vmem:[#allocation2 + $0x34] sm:$0xf]
        %v5279 = vld [vmem:[#allocation2 + $0x38] sm:$0x1]
        %v5280 = vld [vmem:[#allocation2 + $0x3c] sm:$0xf]
        %v5281 = vld [vmem:[#allocation2 + $0x40] sm:$0xf]
        %v5282 = vld [vmem:[#allocation2 + $0x44] sm:$0x1]
        %v5283 = vld [vmem:[#allocation2 + $0x48] sm:$0xf]
        %v5284 = vld [vmem:[#allocation2 + $0x4c] sm:$0xf]
        %v5285 = vld [vmem:[#allocation2 + $0x50] sm:$0x1]
        %v5286 = vld [vmem:[#allocation2 + $0x54] sm:$0xf]
        %v5287 = vld [vmem:[#allocation2 + $0x58] sm:$0xf]
        %v5288 = vld [vmem:[#allocation2 + $0x5c] sm:$0x1]
        %v5289 = vld [vmem:[#allocation2 + $0x60] sm:$0xf]
        %v5290 = vld [vmem:[#allocation2 + $0x64] sm:$0xf]
        %v5291 = vld [vmem:[#allocation2 + $0x68] sm:$0x1]
        %v5292 = vld [vmem:[#allocation2 + $0x6c] sm:$0xf]
        %v5293 = vld [vmem:[#allocation2 + $0x70] sm:$0xf]
        %v5294 = vld [vmem:[#allocation2 + $0x74] sm:$0x1]
        %v5295 = vld [vmem:[#allocation2 + $0x78] sm:$0xf]
        %v5296 = vld [vmem:[#allocation2 + $0x7c] sm:$0xf]
        %v5297 = vld [vmem:[#allocation2 + $0x80] sm:$0x1]
        %v5298 = vld [vmem:[#allocation2 + $0x84] sm:$0xf]
        %v5299 = vld [vmem:[#allocation2 + $0x88] sm:$0xf]
        %v5300 = vld [vmem:[#allocation2 + $0x8c] sm:$0x1]
        %v5301 = vld [vmem:[#allocation2 + $0x90] sm:$0xf]
        %v5302 = vld [vmem:[#allocation2 + $0x94] sm:$0xf]
        %v5303 = vld [vmem:[#allocation2 + $0x98] sm:$0x1]
        %v5304 = vld [vmem:[#allocation2 + $0x9c] sm:$0xf]
        %v5305 = vld [vmem:[#allocation2 + $0xa0] sm:$0xf]
        %v5306 = vld [vmem:[#allocation2 + $0xa4] sm:$0x1]
        %v5307 = vld [vmem:[#allocation2 + $0xa8] sm:$0xf]
        %v5308 = vld [vmem:[#allocation2 + $0xac] sm:$0xf]
        %v5309 = vld [vmem:[#allocation2 + $0xb0] sm:$0x1]
        %v5310 = vld [vmem:[#allocation2 + $0xb4] sm:$0xf]
        %v5311 = vld [vmem:[#allocation2 + $0xb8] sm:$0xf]
        %v5312 = vld [vmem:[#allocation2 + $0xbc] sm:$0x1]
        %v5314 = vshrl.u32 %v5265, 16
        %v5316 = vrot.slane %v5314, 4
        %v5317 = vshll.u32 %v5265, 16
        %v5319 = vrot.slane %v5317, 5
        %v5320 = vor.u32 %v5316, %v5319
        %v5321 = vrot.slane %v5320, 4
        %v5323 = vshll.u32 %v5266, 16
        %v5325 = vrot.slane %v5323, 5
        %v5326 = vsel %vm1152, %v5321, %v5325
        %v5327 = vshrl.u32 %v5266, 16
        %v5329 = vrot.slane %v5327, 4
        %v5330 = vor.u32 %v5329, %v5325
        %v5331 = vrot.slane %v5330, 4
        %v5333 = vshll.u32 %v5267, 16
        %v5335 = vrot.slane %v5333, 5
        %v5336 = vsel %vm1152, %v5331, %v5335
        %v5338 = vshrl.u32 %v5268, 16
        %v5340 = vrot.slane %v5338, 4
        %v5341 = vshll.u32 %v5268, 16
        %v5343 = vrot.slane %v5341, 5
        %v5344 = vor.u32 %v5340, %v5343
        %v5345 = vrot.slane %v5344, 4
        %v5347 = vshll.u32 %v5269, 16
        %v5349 = vrot.slane %v5347, 5
        %v5350 = vsel %vm1152, %v5345, %v5349
        %v5351 = vshrl.u32 %v5269, 16
        %v5353 = vrot.slane %v5351, 4
        %v5354 = vor.u32 %v5353, %v5349
        %v5355 = vrot.slane %v5354, 4
        %v5357 = vshll.u32 %v5270, 16
        %v5359 = vrot.slane %v5357, 5
        %v5360 = vsel %vm1152, %v5355, %v5359
        %v5362 = vshrl.u32 %v5271, 16
        %v5364 = vrot.slane %v5362, 4
        %v5365 = vshll.u32 %v5271, 16
        %v5367 = vrot.slane %v5365, 5
        %v5368 = vor.u32 %v5364, %v5367
        %v5369 = vrot.slane %v5368, 4
        %v5371 = vshll.u32 %v5272, 16
        %v5373 = vrot.slane %v5371, 5
        %v5374 = vsel %vm1152, %v5369, %v5373
        %v5375 = vshrl.u32 %v5272, 16
        %v5377 = vrot.slane %v5375, 4
        %v5378 = vor.u32 %v5377, %v5373
        %v5379 = vrot.slane %v5378, 4
        %v5381 = vshll.u32 %v5273, 16
        %v5383 = vrot.slane %v5381, 5
        %v5384 = vsel %vm1152, %v5379, %v5383
        %v5386 = vshrl.u32 %v5274, 16
        %v5388 = vrot.slane %v5386, 4
        %v5389 = vshll.u32 %v5274, 16
        %v5391 = vrot.slane %v5389, 5
        %v5392 = vor.u32 %v5388, %v5391
        %v5393 = vrot.slane %v5392, 4
        %v5395 = vshll.u32 %v5275, 16
        %v5397 = vrot.slane %v5395, 5
        %v5398 = vsel %vm1152, %v5393, %v5397
        %v5399 = vshrl.u32 %v5275, 16
        %v5401 = vrot.slane %v5399, 4
        %v5402 = vor.u32 %v5401, %v5397
        %v5403 = vrot.slane %v5402, 4
        %v5405 = vshll.u32 %v5276, 16
        %v5407 = vrot.slane %v5405, 5
        %v5408 = vsel %vm1152, %v5403, %v5407
        %v5410 = vshrl.u32 %v5277, 16
        %v5412 = vrot.slane %v5410, 4
        %v5413 = vshll.u32 %v5277, 16
        %v5415 = vrot.slane %v5413, 5
        %v5416 = vor.u32 %v5412, %v5415
        %v5417 = vrot.slane %v5416, 4
        %v5419 = vshll.u32 %v5278, 16
        %v5421 = vrot.slane %v5419, 5
        %v5422 = vsel %vm1152, %v5417, %v5421
        %v5423 = vshrl.u32 %v5278, 16
        %v5425 = vrot.slane %v5423, 4
        %v5426 = vor.u32 %v5425, %v5421
        %v5427 = vrot.slane %v5426, 4
        %v5429 = vshll.u32 %v5279, 16
        %v5431 = vrot.slane %v5429, 5
        %v5432 = vsel %vm1152, %v5427, %v5431
        %v5434 = vshrl.u32 %v5280, 16
        %v5436 = vrot.slane %v5434, 4
        %v5437 = vshll.u32 %v5280, 16
        %v5439 = vrot.slane %v5437, 5
        %v5440 = vor.u32 %v5436, %v5439
        %v5441 = vrot.slane %v5440, 4
        %v5443 = vshll.u32 %v5281, 16
        %v5445 = vrot.slane %v5443, 5
        %v5446 = vsel %vm1152, %v5441, %v5445
        %v5447 = vshrl.u32 %v5281, 16
        %v5449 = vrot.slane %v5447, 4
        %v5450 = vor.u32 %v5449, %v5445
        %v5451 = vrot.slane %v5450, 4
        %v5453 = vshll.u32 %v5282, 16
        %v5455 = vrot.slane %v5453, 5
        %v5456 = vsel %vm1152, %v5451, %v5455
        %v5458 = vshrl.u32 %v5283, 16
        %v5460 = vrot.slane %v5458, 4
        %v5461 = vshll.u32 %v5283, 16
        %v5463 = vrot.slane %v5461, 5
        %v5464 = vor.u32 %v5460, %v5463
        %v5465 = vrot.slane %v5464, 4
        %v5467 = vshll.u32 %v5284, 16
        %v5469 = vrot.slane %v5467, 5
        %v5470 = vsel %vm1152, %v5465, %v5469
        %v5471 = vshrl.u32 %v5284, 16
        %v5473 = vrot.slane %v5471, 4
        %v5474 = vor.u32 %v5473, %v5469
        %v5475 = vrot.slane %v5474, 4
        %v5477 = vshll.u32 %v5285, 16
        %v5479 = vrot.slane %v5477, 5
        %v5480 = vsel %vm1152, %v5475, %v5479
        %v5482 = vshrl.u32 %v5286, 16
        %v5484 = vrot.slane %v5482, 4
        %v5485 = vshll.u32 %v5286, 16
        %v5487 = vrot.slane %v5485, 5
        %v5488 = vor.u32 %v5484, %v5487
        %v5489 = vrot.slane %v5488, 4
        %v5491 = vshll.u32 %v5287, 16
        %v5493 = vrot.slane %v5491, 5
        %v5494 = vsel %vm1152, %v5489, %v5493
        %v5495 = vshrl.u32 %v5287, 16
        %v5497 = vrot.slane %v5495, 4
        %v5498 = vor.u32 %v5497, %v5493
        %v5499 = vrot.slane %v5498, 4
        %v5501 = vshll.u32 %v5288, 16
        %v5503 = vrot.slane %v5501, 5
        %v5504 = vsel %vm1152, %v5499, %v5503
        %v5506 = vshrl.u32 %v5289, 16
        %v5508 = vrot.slane %v5506, 4
        %v5509 = vshll.u32 %v5289, 16
        %v5511 = vrot.slane %v5509, 5
        %v5512 = vor.u32 %v5508, %v5511
        %v5513 = vrot.slane %v5512, 4
        %v5515 = vshll.u32 %v5290, 16
        %v5517 = vrot.slane %v5515, 5
        %v5518 = vsel %vm1152, %v5513, %v5517
        %v5519 = vshrl.u32 %v5290, 16
        %v5521 = vrot.slane %v5519, 4
        %v5522 = vor.u32 %v5521, %v5517
        %v5523 = vrot.slane %v5522, 4
        %v5525 = vshll.u32 %v5291, 16
        %v5527 = vrot.slane %v5525, 5
        %v5528 = vsel %vm1152, %v5523, %v5527
        %v5530 = vshrl.u32 %v5292, 16
        %v5532 = vrot.slane %v5530, 4
        %v5533 = vshll.u32 %v5292, 16
        %v5535 = vrot.slane %v5533, 5
        %v5536 = vor.u32 %v5532, %v5535
        %v5537 = vrot.slane %v5536, 4
        %v5539 = vshll.u32 %v5293, 16
        %v5541 = vrot.slane %v5539, 5
        %v5542 = vsel %vm1152, %v5537, %v5541
        %v5543 = vshrl.u32 %v5293, 16
        %v5545 = vrot.slane %v5543, 4
        %v5546 = vor.u32 %v5545, %v5541
        %v5547 = vrot.slane %v5546, 4
        %v5549 = vshll.u32 %v5294, 16
        %v5551 = vrot.slane %v5549, 5
        %v5552 = vsel %vm1152, %v5547, %v5551
        %v5554 = vshrl.u32 %v5295, 16
        %v5556 = vrot.slane %v5554, 4
        %v5557 = vshll.u32 %v5295, 16
        %v5559 = vrot.slane %v5557, 5
        %v5560 = vor.u32 %v5556, %v5559
        %v5561 = vrot.slane %v5560, 4
        %v5563 = vshll.u32 %v5296, 16
        %v5565 = vrot.slane %v5563, 5
        %v5566 = vsel %vm1152, %v5561, %v5565
        %v5567 = vshrl.u32 %v5296, 16
        %v5569 = vrot.slane %v5567, 4
        %v5570 = vor.u32 %v5569, %v5565
        %v5571 = vrot.slane %v5570, 4
        %v5573 = vshll.u32 %v5297, 16
        %v5575 = vrot.slane %v5573, 5
        %v5576 = vsel %vm1152, %v5571, %v5575
        %v5578 = vshrl.u32 %v5298, 16
        %v5580 = vrot.slane %v5578, 4
        %v5581 = vshll.u32 %v5298, 16
        %v5583 = vrot.slane %v5581, 5
        %v5584 = vor.u32 %v5580, %v5583
        %v5585 = vrot.slane %v5584, 4
        %v5587 = vshll.u32 %v5299, 16
        %v5589 = vrot.slane %v5587, 5
        %v5590 = vsel %vm1152, %v5585, %v5589
        %v5591 = vshrl.u32 %v5299, 16
        %v5593 = vrot.slane %v5591, 4
        %v5594 = vor.u32 %v5593, %v5589
        %v5595 = vrot.slane %v5594, 4
        %v5597 = vshll.u32 %v5300, 16
        %v5599 = vrot.slane %v5597, 5
        %v5600 = vsel %vm1152, %v5595, %v5599
        %v5602 = vshrl.u32 %v5301, 16
        %v5604 = vrot.slane %v5602, 4
        %v5605 = vshll.u32 %v5301, 16
        %v5607 = vrot.slane %v5605, 5
        %v5608 = vor.u32 %v5604, %v5607
        %v5609 = vrot.slane %v5608, 4
        %v5611 = vshll.u32 %v5302, 16
        %v5613 = vrot.slane %v5611, 5
        %v5614 = vsel %vm1152, %v5609, %v5613
        %v5615 = vshrl.u32 %v5302, 16
        %v5617 = vrot.slane %v5615, 4
        %v5618 = vor.u32 %v5617, %v5613
        %v5619 = vrot.slane %v5618, 4
        %v5621 = vshll.u32 %v5303, 16
        %v5623 = vrot.slane %v5621, 5
        %v5624 = vsel %vm1152, %v5619, %v5623
        %v5626 = vshrl.u32 %v5304, 16
        %v5628 = vrot.slane %v5626, 4
        %v5629 = vshll.u32 %v5304, 16
        %v5631 = vrot.slane %v5629, 5
        %v5632 = vor.u32 %v5628, %v5631
        %v5633 = vrot.slane %v5632, 4
        %v5635 = vshll.u32 %v5305, 16
        %v5637 = vrot.slane %v5635, 5
        %v5638 = vsel %vm1152, %v5633, %v5637
        %v5639 = vshrl.u32 %v5305, 16
        %v5641 = vrot.slane %v5639, 4
        %v5642 = vor.u32 %v5641, %v5637
        %v5643 = vrot.slane %v5642, 4
        %v5645 = vshll.u32 %v5306, 16
        %v5647 = vrot.slane %v5645, 5
        %v5648 = vsel %vm1152, %v5643, %v5647
        %v5650 = vshrl.u32 %v5307, 16
        %v5652 = vrot.slane %v5650, 4
        %v5653 = vshll.u32 %v5307, 16
        %v5655 = vrot.slane %v5653, 5
        %v5656 = vor.u32 %v5652, %v5655
        %v5657 = vrot.slane %v5656, 4
        %v5659 = vshll.u32 %v5308, 16
        %v5661 = vrot.slane %v5659, 5
        %v5662 = vsel %vm1152, %v5657, %v5661
        %v5663 = vshrl.u32 %v5308, 16
        %v5665 = vrot.slane %v5663, 4
        %v5666 = vor.u32 %v5665, %v5661
        %v5667 = vrot.slane %v5666, 4
        %v5669 = vshll.u32 %v5309, 16
        %v5671 = vrot.slane %v5669, 5
        %v5672 = vsel %vm1152, %v5667, %v5671
        %v5674 = vshrl.u32 %v5310, 16
        %v5676 = vrot.slane %v5674, 4
        %v5677 = vshll.u32 %v5310, 16
        %v5679 = vrot.slane %v5677, 5
        %v5680 = vor.u32 %v5676, %v5679
        %v5681 = vrot.slane %v5680, 4
        %v5683 = vshll.u32 %v5311, 16
        %v5685 = vrot.slane %v5683, 5
        %v5686 = vsel %vm1152, %v5681, %v5685
        %v5687 = vshrl.u32 %v5311, 16
        %v5689 = vrot.slane %v5687, 4
        %v5690 = vor.u32 %v5689, %v5685
        %v5691 = vrot.slane %v5690, 4
        %v5693 = vshll.u32 %v5312, 16
        %v5695 = vrot.slane %v5693, 5
        %v5696 = vsel %vm1152, %v5691, %v5695
        %v5697 = vunpack.c.l.b16 %v5326
        %v5698 = vunpack.c.l.b16 %v5336
        %v5699 = vunpack.c.l.b16 %v5350
        %v5700 = vunpack.c.l.b16 %v5360
        %v5701 = vunpack.c.l.b16 %v5374
        %v5702 = vunpack.c.l.b16 %v5384
        %v5703 = vunpack.c.l.b16 %v5398
        %v5704 = vunpack.c.l.b16 %v5408
        %v5705 = vunpack.c.l.b16 %v5422
        %v5706 = vunpack.c.l.b16 %v5432
        %v5707 = vunpack.c.l.b16 %v5446
        %v5708 = vunpack.c.l.b16 %v5456
        %v5709 = vunpack.c.l.b16 %v5470
        %v5710 = vunpack.c.l.b16 %v5480
        %v5711 = vunpack.c.l.b16 %v5494
        %v5712 = vunpack.c.l.b16 %v5504
        %v5713 = vunpack.c.l.b16 %v5518
        %v5714 = vunpack.c.l.b16 %v5528
        %v5715 = vunpack.c.l.b16 %v5542
        %v5716 = vunpack.c.l.b16 %v5552
        %v5717 = vunpack.c.l.b16 %v5566
        %v5718 = vunpack.c.l.b16 %v5576
        %v5719 = vunpack.c.l.b16 %v5590
        %v5720 = vunpack.c.l.b16 %v5600
        %v5721 = vunpack.c.l.b16 %v5614
        %v5722 = vunpack.c.l.b16 %v5624
        %v5723 = vunpack.c.l.b16 %v5638
        %v5724 = vunpack.c.l.b16 %v5648
        %v5725 = vunpack.c.l.b16 %v5662
        %v5726 = vunpack.c.l.b16 %v5672
        %v5727 = vunpack.c.l.b16 %v5686
        %v5728 = vunpack.c.l.b16 %v5696
        %v5729 = vpack.c.b16 %v5698, %v5697
        %v5730 = vpack.c.b16 %v5700, %v5699
        %v5731 = vpack.c.b16 %v5702, %v5701
        %v5732 = vpack.c.b16 %v5704, %v5703
        %v5733 = vpack.c.b16 %v5706, %v5705
        %v5734 = vpack.c.b16 %v5708, %v5707
        %v5735 = vpack.c.b16 %v5710, %v5709
        %v5736 = vpack.c.b16 %v5712, %v5711
        %v5737 = vpack.c.b16 %v5714, %v5713
        %v5738 = vpack.c.b16 %v5716, %v5715
        %v5739 = vpack.c.b16 %v5718, %v5717
        %v5740 = vpack.c.b16 %v5720, %v5719
        %v5741 = vpack.c.b16 %v5722, %v5721
        %v5742 = vpack.c.b16 %v5724, %v5723
        %v5743 = vpack.c.b16 %v5726, %v5725
        %v5744 = vpack.c.b16 %v5728, %v5727
        %5745 = vrot.lane.b32.xlu0 %v5729, 32
        %v5746 = vpop.permute.xlu0 %5745
        %5747 = vrot.lane.b32.xlu0 %v5730, 32
        %v5748 = vpop.permute.xlu0 %5747
        %5749 = vrot.lane.b32.xlu0 %v5731, 32
        %v5750 = vpop.permute.xlu0 %5749
        %5751 = vrot.lane.b32.xlu0 %v5732, 32
        %v5752 = vpop.permute.xlu0 %5751
        %5753 = vrot.lane.b32.xlu0 %v5733, 32
        %v5754 = vpop.permute.xlu0 %5753
        %5755 = vrot.lane.b32.xlu0 %v5734, 32
        %v5756 = vpop.permute.xlu0 %5755
        %5757 = vrot.lane.b32.xlu0 %v5735, 32
        %v5758 = vpop.permute.xlu0 %5757
        %5759 = vrot.lane.b32.xlu0 %v5736, 32
        %v5760 = vpop.permute.xlu0 %5759
        %5761 = vrot.lane.b32.xlu0 %v5737, 32
        %v5762 = vpop.permute.xlu0 %5761
        %5763 = vrot.lane.b32.xlu0 %v5738, 32
        %v5764 = vpop.permute.xlu0 %5763
        %5765 = vrot.lane.b32.xlu0 %v5739, 32
        %v5766 = vpop.permute.xlu0 %5765
        %5767 = vrot.lane.b32.xlu0 %v5740, 32
        %v5768 = vpop.permute.xlu0 %5767
        %5769 = vrot.lane.b32.xlu0 %v5741, 32
        %v5770 = vpop.permute.xlu0 %5769
        %5771 = vrot.lane.b32.xlu0 %v5742, 32
        %v5772 = vpop.permute.xlu0 %5771
        %5773 = vrot.lane.b32.xlu0 %v5743, 32
        %v5774 = vpop.permute.xlu0 %5773
        %5775 = vrot.lane.b32.xlu0 %v5744, 32
        %v5776 = vpop.permute.xlu0 %5775
        %5793 = vst.msk [vmem:[#allocation3] sm:$0xff] %vm1633, %v5746
        %5794 = vst.msk [vmem:[#allocation3 + $0x18] sm:$0xff] %vm1633, %v5748
        %5795 = vst.msk [vmem:[#allocation3 + $0x30] sm:$0xff] %vm1633, %v5750
        %5796 = vst.msk [vmem:[#allocation3 + $0x48] sm:$0xff] %vm1633, %v5752
        %5797 = vst.msk [vmem:[#allocation3 + $0x60] sm:$0xff] %vm1633, %v5754
        %5798 = vst.msk [vmem:[#allocation3 + $0x78] sm:$0xff] %vm1633, %v5756
        %5799 = vst.msk [vmem:[#allocation3 + $0x90] sm:$0xff] %vm1633, %v5758
        %5800 = vst.msk [vmem:[#allocation3 + $0xa8] sm:$0xff] %vm1633, %v5760
        %5801 = vst.msk [vmem:[#allocation3 + $0xc0] sm:$0xff] %vm1633, %v5762
        %5802 = vst.msk [vmem:[#allocation3 + $0xd8] sm:$0xff] %vm1633, %v5764
        %5803 = vst.msk [vmem:[#allocation3 + $0xf0] sm:$0xff] %vm1633, %v5766
        %5804 = vst.msk [vmem:[#allocation3 + $0x108] sm:$0xff] %vm1633, %v5768
        %5805 = vst.msk [vmem:[#allocation3 + $0x120] sm:$0xff] %vm1633, %v5770
        %5806 = vst.msk [vmem:[#allocation3 + $0x138] sm:$0xff] %vm1633, %v5772
        %5807 = vst.msk [vmem:[#allocation3 + $0x150] sm:$0xff] %vm1633, %v5774
        %5808 = vst.msk [vmem:[#allocation3 + $0x168] sm:$0xff] %vm1633, %v5776
        %v5809 = vld [vmem:[#allocation2] sm:$0xe]
        %v5810 = vld [vmem:[#allocation2 + $0x4] sm:$0xf]
        %v5811 = vld [vmem:[#allocation2 + $0x8] sm:$0x1]
        %v5812 = vld [vmem:[#allocation2 + $0xc] sm:$0xe]
        %v5813 = vld [vmem:[#allocation2 + $0x10] sm:$0xf]
        %v5814 = vld [vmem:[#allocation2 + $0x14] sm:$0x1]
        %v5815 = vld [vmem:[#allocation2 + $0x18] sm:$0xe]
        %v5816 = vld [vmem:[#allocation2 + $0x1c] sm:$0xf]
        %v5817 = vld [vmem:[#allocation2 + $0x20] sm:$0x1]
        %v5818 = vld [vmem:[#allocation2 + $0x24] sm:$0xe]
        %v5819 = vld [vmem:[#allocation2 + $0x28] sm:$0xf]
        %v5820 = vld [vmem:[#allocation2 + $0x2c] sm:$0x1]
        %v5821 = vld [vmem:[#allocation2 + $0x30] sm:$0xe]
        %v5822 = vld [vmem:[#allocation2 + $0x34] sm:$0xf]
        %v5823 = vld [vmem:[#allocation2 + $0x38] sm:$0x1]
        %v5824 = vld [vmem:[#allocation2 + $0x3c] sm:$0xe]
        %v5825 = vld [vmem:[#allocation2 + $0x40] sm:$0xf]
        %v5826 = vld [vmem:[#allocation2 + $0x44] sm:$0x1]
        %v5827 = vld [vmem:[#allocation2 + $0x48] sm:$0xe]
        %v5828 = vld [vmem:[#allocation2 + $0x4c] sm:$0xf]
        %v5829 = vld [vmem:[#allocation2 + $0x50] sm:$0x1]
        %v5830 = vld [vmem:[#allocation2 + $0x54] sm:$0xe]
        %v5831 = vld [vmem:[#allocation2 + $0x58] sm:$0xf]
        %v5832 = vld [vmem:[#allocation2 + $0x5c] sm:$0x1]
        %v5833 = vld [vmem:[#allocation2 + $0x60] sm:$0xe]
        %v5834 = vld [vmem:[#allocation2 + $0x64] sm:$0xf]
        %v5835 = vld [vmem:[#allocation2 + $0x68] sm:$0x1]
        %v5836 = vld [vmem:[#allocation2 + $0x6c] sm:$0xe]
        %v5837 = vld [vmem:[#allocation2 + $0x70] sm:$0xf]
        %v5838 = vld [vmem:[#allocation2 + $0x74] sm:$0x1]
        %v5839 = vld [vmem:[#allocation2 + $0x78] sm:$0xe]
        %v5840 = vld [vmem:[#allocation2 + $0x7c] sm:$0xf]
        %v5841 = vld [vmem:[#allocation2 + $0x80] sm:$0x1]
        %v5842 = vld [vmem:[#allocation2 + $0x84] sm:$0xe]
        %v5843 = vld [vmem:[#allocation2 + $0x88] sm:$0xf]
        %v5844 = vld [vmem:[#allocation2 + $0x8c] sm:$0x1]
        %v5845 = vld [vmem:[#allocation2 + $0x90] sm:$0xe]
        %v5846 = vld [vmem:[#allocation2 + $0x94] sm:$0xf]
        %v5847 = vld [vmem:[#allocation2 + $0x98] sm:$0x1]
        %v5848 = vld [vmem:[#allocation2 + $0x9c] sm:$0xe]
        %v5849 = vld [vmem:[#allocation2 + $0xa0] sm:$0xf]
        %v5850 = vld [vmem:[#allocation2 + $0xa4] sm:$0x1]
        %v5851 = vld [vmem:[#allocation2 + $0xa8] sm:$0xe]
        %v5852 = vld [vmem:[#allocation2 + $0xac] sm:$0xf]
        %v5853 = vld [vmem:[#allocation2 + $0xb0] sm:$0x1]
        %v5854 = vld [vmem:[#allocation2 + $0xb4] sm:$0xe]
        %v5855 = vld [vmem:[#allocation2 + $0xb8] sm:$0xf]
        %v5856 = vld [vmem:[#allocation2 + $0xbc] sm:$0x1]
        %v5905 = vrot.slane %v5809, 5
        %v5906 = vrot.slane %v5905, 4
        %v5907 = vrot.slane %v5810, 5
        %v5908 = vsel %vm1748, %v5906, %v5907
        %v5909 = vrot.slane %v5907, 4
        %v5910 = vrot.slane %v5811, 5
        %v5911 = vsel %vm1748, %v5909, %v5910
        %v5912 = vrot.slane %v5812, 5
        %v5913 = vrot.slane %v5912, 4
        %v5914 = vrot.slane %v5813, 5
        %v5915 = vsel %vm1748, %v5913, %v5914
        %v5916 = vrot.slane %v5914, 4
        %v5917 = vrot.slane %v5814, 5
        %v5918 = vsel %vm1748, %v5916, %v5917
        %v5919 = vrot.slane %v5815, 5
        %v5920 = vrot.slane %v5919, 4
        %v5921 = vrot.slane %v5816, 5
        %v5922 = vsel %vm1748, %v5920, %v5921
        %v5923 = vrot.slane %v5921, 4
        %v5924 = vrot.slane %v5817, 5
        %v5925 = vsel %vm1748, %v5923, %v5924
        %v5926 = vrot.slane %v5818, 5
        %v5927 = vrot.slane %v5926, 4
        %v5928 = vrot.slane %v5819, 5
        %v5929 = vsel %vm1748, %v5927, %v5928
        %v5930 = vrot.slane %v5928, 4
        %v5931 = vrot.slane %v5820, 5
        %v5932 = vsel %vm1748, %v5930, %v5931
        %v5933 = vrot.slane %v5821, 5
        %v5934 = vrot.slane %v5933, 4
        %v5935 = vrot.slane %v5822, 5
        %v5936 = vsel %vm1748, %v5934, %v5935
        %v5937 = vrot.slane %v5935, 4
        %v5938 = vrot.slane %v5823, 5
        %v5939 = vsel %vm1748, %v5937, %v5938
        %v5940 = vrot.slane %v5824, 5
        %v5941 = vrot.slane %v5940, 4
        %v5942 = vrot.slane %v5825, 5
        %v5943 = vsel %vm1748, %v5941, %v5942
        %v5944 = vrot.slane %v5942, 4
        %v5945 = vrot.slane %v5826, 5
        %v5946 = vsel %vm1748, %v5944, %v5945
        %v5947 = vrot.slane %v5827, 5
        %v5948 = vrot.slane %v5947, 4
        %v5949 = vrot.slane %v5828, 5
        %v5950 = vsel %vm1748, %v5948, %v5949
        %v5951 = vrot.slane %v5949, 4
        %v5952 = vrot.slane %v5829, 5
        %v5953 = vsel %vm1748, %v5951, %v5952
        %v5954 = vrot.slane %v5830, 5
        %v5955 = vrot.slane %v5954, 4
        %v5956 = vrot.slane %v5831, 5
        %v5957 = vsel %vm1748, %v5955, %v5956
        %v5958 = vrot.slane %v5956, 4
        %v5959 = vrot.slane %v5832, 5
        %v5960 = vsel %vm1748, %v5958, %v5959
        %v5961 = vrot.slane %v5833, 5
        %v5962 = vrot.slane %v5961, 4
        %v5963 = vrot.slane %v5834, 5
        %v5964 = vsel %vm1748, %v5962, %v5963
        %v5965 = vrot.slane %v5963, 4
        %v5966 = vrot.slane %v5835, 5
        %v5967 = vsel %vm1748, %v5965, %v5966
        %v5968 = vrot.slane %v5836, 5
        %v5969 = vrot.slane %v5968, 4
        %v5970 = vrot.slane %v5837, 5
        %v5971 = vsel %vm1748, %v5969, %v5970
        %v5972 = vrot.slane %v5970, 4
        %v5973 = vrot.slane %v5838, 5
        %v5974 = vsel %vm1748, %v5972, %v5973
        %v5975 = vrot.slane %v5839, 5
        %v5976 = vrot.slane %v5975, 4
        %v5977 = vrot.slane %v5840, 5
        %v5978 = vsel %vm1748, %v5976, %v5977
        %v5979 = vrot.slane %v5977, 4
        %v5980 = vrot.slane %v5841, 5
        %v5981 = vsel %vm1748, %v5979, %v5980
        %v5982 = vrot.slane %v5842, 5
        %v5983 = vrot.slane %v5982, 4
        %v5984 = vrot.slane %v5843, 5
        %v5985 = vsel %vm1748, %v5983, %v5984
        %v5986 = vrot.slane %v5984, 4
        %v5987 = vrot.slane %v5844, 5
        %v5988 = vsel %vm1748, %v5986, %v5987
        %v5989 = vrot.slane %v5845, 5
        %v5990 = vrot.slane %v5989, 4
        %v5991 = vrot.slane %v5846, 5
        %v5992 = vsel %vm1748, %v5990, %v5991
        %v5993 = vrot.slane %v5991, 4
        %v5994 = vrot.slane %v5847, 5
        %v5995 = vsel %vm1748, %v5993, %v5994
        %v5996 = vrot.slane %v5848, 5
        %v5997 = vrot.slane %v5996, 4
        %v5998 = vrot.slane %v5849, 5
        %v5999 = vsel %vm1748, %v5997, %v5998
        %v6000 = vrot.slane %v5998, 4
        %v6001 = vrot.slane %v5850, 5
        %v6002 = vsel %vm1748, %v6000, %v6001
        %v6003 = vrot.slane %v5851, 5
        %v6004 = vrot.slane %v6003, 4
        %v6005 = vrot.slane %v5852, 5
        %v6006 = vsel %vm1748, %v6004, %v6005
        %v6007 = vrot.slane %v6005, 4
        %v6008 = vrot.slane %v5853, 5
        %v6009 = vsel %vm1748, %v6007, %v6008
        %v6010 = vrot.slane %v5854, 5
        %v6011 = vrot.slane %v6010, 4
        %v6012 = vrot.slane %v5855, 5
        %v6013 = vsel %vm1748, %v6011, %v6012
        %v6014 = vrot.slane %v6012, 4
        %v6015 = vrot.slane %v5856, 5
        %v6016 = vsel %vm1748, %v6014, %v6015
        %v6017 = vunpack.c.l.b16 %v5908
        %v6018 = vunpack.c.l.b16 %v5911
        %v6019 = vunpack.c.l.b16 %v5915
        %v6020 = vunpack.c.l.b16 %v5918
        %v6021 = vunpack.c.l.b16 %v5922
        %v6022 = vunpack.c.l.b16 %v5925
        %v6023 = vunpack.c.l.b16 %v5929
        %v6024 = vunpack.c.l.b16 %v5932
        %v6025 = vunpack.c.l.b16 %v5936
        %v6026 = vunpack.c.l.b16 %v5939
        %v6027 = vunpack.c.l.b16 %v5943
        %v6028 = vunpack.c.l.b16 %v5946
        %v6029 = vunpack.c.l.b16 %v5950
        %v6030 = vunpack.c.l.b16 %v5953
        %v6031 = vunpack.c.l.b16 %v5957
        %v6032 = vunpack.c.l.b16 %v5960
        %v6033 = vunpack.c.l.b16 %v5964
        %v6034 = vunpack.c.l.b16 %v5967
        %v6035 = vunpack.c.l.b16 %v5971
        %v6036 = vunpack.c.l.b16 %v5974
        %v6037 = vunpack.c.l.b16 %v5978
        %v6038 = vunpack.c.l.b16 %v5981
        %v6039 = vunpack.c.l.b16 %v5985
        %v6040 = vunpack.c.l.b16 %v5988
        %v6041 = vunpack.c.l.b16 %v5992
        %v6042 = vunpack.c.l.b16 %v5995
        %v6043 = vunpack.c.l.b16 %v5999
        %v6044 = vunpack.c.l.b16 %v6002
        %v6045 = vunpack.c.l.b16 %v6006
        %v6046 = vunpack.c.l.b16 %v6009
        %v6047 = vunpack.c.l.b16 %v6013
        %v6048 = vunpack.c.l.b16 %v6016
        %v6049 = vpack.c.b16 %v6018, %v6017
        %v6050 = vpack.c.b16 %v6020, %v6019
        %v6051 = vpack.c.b16 %v6022, %v6021
        %v6052 = vpack.c.b16 %v6024, %v6023
        %v6053 = vpack.c.b16 %v6026, %v6025
        %v6054 = vpack.c.b16 %v6028, %v6027
        %v6055 = vpack.c.b16 %v6030, %v6029
        %v6056 = vpack.c.b16 %v6032, %v6031
        %v6057 = vpack.c.b16 %v6034, %v6033
        %v6058 = vpack.c.b16 %v6036, %v6035
        %v6059 = vpack.c.b16 %v6038, %v6037
        %v6060 = vpack.c.b16 %v6040, %v6039
        %v6061 = vpack.c.b16 %v6042, %v6041
        %v6062 = vpack.c.b16 %v6044, %v6043
        %v6063 = vpack.c.b16 %v6046, %v6045
        %v6064 = vpack.c.b16 %v6048, %v6047
        %6065 = vrot.lane.b32.xlu0 %v6049, 64
        %v6066 = vpop.permute.xlu0 %6065
        %6067 = vrot.lane.b32.xlu0 %v6050, 64
        %v6068 = vpop.permute.xlu0 %6067
        %6069 = vrot.lane.b32.xlu0 %v6051, 64
        %v6070 = vpop.permute.xlu0 %6069
        %6071 = vrot.lane.b32.xlu0 %v6052, 64
        %v6072 = vpop.permute.xlu0 %6071
        %6073 = vrot.lane.b32.xlu0 %v6053, 64
        %v6074 = vpop.permute.xlu0 %6073
        %6075 = vrot.lane.b32.xlu0 %v6054, 64
        %v6076 = vpop.permute.xlu0 %6075
        %6077 = vrot.lane.b32.xlu0 %v6055, 64
        %v6078 = vpop.permute.xlu0 %6077
        %6079 = vrot.lane.b32.xlu0 %v6056, 64
        %v6080 = vpop.permute.xlu0 %6079
        %6081 = vrot.lane.b32.xlu0 %v6057, 64
        %v6082 = vpop.permute.xlu0 %6081
        %6083 = vrot.lane.b32.xlu0 %v6058, 64
        %v6084 = vpop.permute.xlu0 %6083
        %6085 = vrot.lane.b32.xlu0 %v6059, 64
        %v6086 = vpop.permute.xlu0 %6085
        %6087 = vrot.lane.b32.xlu0 %v6060, 64
        %v6088 = vpop.permute.xlu0 %6087
        %6089 = vrot.lane.b32.xlu0 %v6061, 64
        %v6090 = vpop.permute.xlu0 %6089
        %6091 = vrot.lane.b32.xlu0 %v6062, 64
        %v6092 = vpop.permute.xlu0 %6091
        %6093 = vrot.lane.b32.xlu0 %v6063, 64
        %v6094 = vpop.permute.xlu0 %6093
        %6095 = vrot.lane.b32.xlu0 %v6064, 64
        %v6096 = vpop.permute.xlu0 %6095
        %6113 = vst.msk [vmem:[#allocation3] sm:$0xff] %vm1957, %v6066
        %6114 = vst.msk [vmem:[#allocation3 + $0x18] sm:$0xff] %vm1957, %v6068
        %6115 = vst.msk [vmem:[#allocation3 + $0x30] sm:$0xff] %vm1957, %v6070
        %6116 = vst.msk [vmem:[#allocation3 + $0x48] sm:$0xff] %vm1957, %v6072
        %6117 = vst.msk [vmem:[#allocation3 + $0x60] sm:$0xff] %vm1957, %v6074
        %6118 = vst.msk [vmem:[#allocation3 + $0x78] sm:$0xff] %vm1957, %v6076
        %6119 = vst.msk [vmem:[#allocation3 + $0x90] sm:$0xff] %vm1957, %v6078
        %6120 = vst.msk [vmem:[#allocation3 + $0xa8] sm:$0xff] %vm1957, %v6080
        %6121 = vst.msk [vmem:[#allocation3 + $0xc0] sm:$0xff] %vm1957, %v6082
        %6122 = vst.msk [vmem:[#allocation3 + $0xd8] sm:$0xff] %vm1957, %v6084
        %6123 = vst.msk [vmem:[#allocation3 + $0xf0] sm:$0xff] %vm1957, %v6086
        %6124 = vst.msk [vmem:[#allocation3 + $0x108] sm:$0xff] %vm1957, %v6088
        %6125 = vst.msk [vmem:[#allocation3 + $0x120] sm:$0xff] %vm1957, %v6090
        %6126 = vst.msk [vmem:[#allocation3 + $0x138] sm:$0xff] %vm1957, %v6092
        %6127 = vst.msk [vmem:[#allocation3 + $0x150] sm:$0xff] %vm1957, %v6094
        %6128 = vst.msk [vmem:[#allocation3 + $0x168] sm:$0xff] %vm1957, %v6096
        %v6129 = vld [vmem:[%s839] sm:$0xf]
        %v6130 = vld [vmem:[%s839 + $0x4] sm:$0xf]
        %v6131 = vld [vmem:[%s839 + $0xc] sm:$0xf]
        %v6132 = vld [vmem:[%s839 + $0x10] sm:$0xf]
        %v6133 = vld [vmem:[%s839 + $0x18] sm:$0xf]
        %v6134 = vld [vmem:[%s839 + $0x1c] sm:$0xf]
        %v6135 = vld [vmem:[%s839 + $0x24] sm:$0xf]
        %v6136 = vld [vmem:[%s839 + $0x28] sm:$0xf]
        %v6137 = vld [vmem:[%s839 + $0x30] sm:$0xf]
        %v6138 = vld [vmem:[%s839 + $0x34] sm:$0xf]
        %v6139 = vld [vmem:[%s839 + $0x3c] sm:$0xf]
        %v6140 = vld [vmem:[%s839 + $0x40] sm:$0xf]
        %v6141 = vld [vmem:[%s839 + $0x48] sm:$0xf]
        %v6142 = vld [vmem:[%s839 + $0x4c] sm:$0xf]
        %v6143 = vld [vmem:[%s839 + $0x54] sm:$0xf]
        %v6144 = vld [vmem:[%s839 + $0x58] sm:$0xf]
        %v6145 = vld [vmem:[%s839 + $0x60] sm:$0xf]
        %v6146 = vld [vmem:[%s839 + $0x64] sm:$0xf]
        %v6147 = vld [vmem:[%s839 + $0x6c] sm:$0xf]
        %v6148 = vld [vmem:[%s839 + $0x70] sm:$0xf]
        %v6149 = vld [vmem:[%s839 + $0x78] sm:$0xf]
        %v6150 = vld [vmem:[%s839 + $0x7c] sm:$0xf]
        %v6151 = vld [vmem:[%s839 + $0x84] sm:$0xf]
        %v6152 = vld [vmem:[%s839 + $0x88] sm:$0xf]
        %v6153 = vld [vmem:[%s839 + $0x90] sm:$0xf]
        %v6154 = vld [vmem:[%s839 + $0x94] sm:$0xf]
        %v6155 = vld [vmem:[%s839 + $0x9c] sm:$0xf]
        %v6156 = vld [vmem:[%s839 + $0xa0] sm:$0xf]
        %v6157 = vld [vmem:[%s839 + $0xa8] sm:$0xf]
        %v6158 = vld [vmem:[%s839 + $0xac] sm:$0xf]
        %v6159 = vld [vmem:[%s839 + $0xb4] sm:$0xf]
        %v6160 = vld [vmem:[%s839 + $0xb8] sm:$0xf]
        %v6193 = vunpack.c.l.b16 %v6129
        %v6194 = vunpack.c.l.b16 %v6130
        %v6195 = vunpack.c.l.b16 %v6131
        %v6196 = vunpack.c.l.b16 %v6132
        %v6197 = vunpack.c.l.b16 %v6133
        %v6198 = vunpack.c.l.b16 %v6134
        %v6199 = vunpack.c.l.b16 %v6135
        %v6200 = vunpack.c.l.b16 %v6136
        %v6201 = vunpack.c.l.b16 %v6137
        %v6202 = vunpack.c.l.b16 %v6138
        %v6203 = vunpack.c.l.b16 %v6139
        %v6204 = vunpack.c.l.b16 %v6140
        %v6205 = vunpack.c.l.b16 %v6141
        %v6206 = vunpack.c.l.b16 %v6142
        %v6207 = vunpack.c.l.b16 %v6143
        %v6208 = vunpack.c.l.b16 %v6144
        %v6209 = vunpack.c.l.b16 %v6145
        %v6210 = vunpack.c.l.b16 %v6146
        %v6211 = vunpack.c.l.b16 %v6147
        %v6212 = vunpack.c.l.b16 %v6148
        %v6213 = vunpack.c.l.b16 %v6149
        %v6214 = vunpack.c.l.b16 %v6150
        %v6215 = vunpack.c.l.b16 %v6151
        %v6216 = vunpack.c.l.b16 %v6152
        %v6217 = vunpack.c.l.b16 %v6153
        %v6218 = vunpack.c.l.b16 %v6154
        %v6219 = vunpack.c.l.b16 %v6155
        %v6220 = vunpack.c.l.b16 %v6156
        %v6221 = vunpack.c.l.b16 %v6157
        %v6222 = vunpack.c.l.b16 %v6158
        %v6223 = vunpack.c.l.b16 %v6159
        %v6224 = vunpack.c.l.b16 %v6160
        %v6225 = vpack.c.b16 %v6194, %v6193
        %v6226 = vpack.c.b16 %v6196, %v6195
        %v6227 = vpack.c.b16 %v6198, %v6197
        %v6228 = vpack.c.b16 %v6200, %v6199
        %v6229 = vpack.c.b16 %v6202, %v6201
        %v6230 = vpack.c.b16 %v6204, %v6203
        %v6231 = vpack.c.b16 %v6206, %v6205
        %v6232 = vpack.c.b16 %v6208, %v6207
        %v6233 = vpack.c.b16 %v6210, %v6209
        %v6234 = vpack.c.b16 %v6212, %v6211
        %v6235 = vpack.c.b16 %v6214, %v6213
        %v6236 = vpack.c.b16 %v6216, %v6215
        %v6237 = vpack.c.b16 %v6218, %v6217
        %v6238 = vpack.c.b16 %v6220, %v6219
        %v6239 = vpack.c.b16 %v6222, %v6221
        %v6240 = vpack.c.b16 %v6224, %v6223
        %6241 = vrot.lane.b32.xlu0 %v6225, 96
        %v6242 = vpop.permute.xlu0 %6241
        %6243 = vrot.lane.b32.xlu0 %v6226, 96
        %v6244 = vpop.permute.xlu0 %6243
        %6245 = vrot.lane.b32.xlu0 %v6227, 96
        %v6246 = vpop.permute.xlu0 %6245
        %6247 = vrot.lane.b32.xlu0 %v6228, 96
        %v6248 = vpop.permute.xlu0 %6247
        %6249 = vrot.lane.b32.xlu0 %v6229, 96
        %v6250 = vpop.permute.xlu0 %6249
        %6251 = vrot.lane.b32.xlu0 %v6230, 96
        %v6252 = vpop.permute.xlu0 %6251
        %6253 = vrot.lane.b32.xlu0 %v6231, 96
        %v6254 = vpop.permute.xlu0 %6253
        %6255 = vrot.lane.b32.xlu0 %v6232, 96
        %v6256 = vpop.permute.xlu0 %6255
        %6257 = vrot.lane.b32.xlu0 %v6233, 96
        %v6258 = vpop.permute.xlu0 %6257
        %6259 = vrot.lane.b32.xlu0 %v6234, 96
        %v6260 = vpop.permute.xlu0 %6259
        %6261 = vrot.lane.b32.xlu0 %v6235, 96
        %v6262 = vpop.permute.xlu0 %6261
        %6263 = vrot.lane.b32.xlu0 %v6236, 96
        %v6264 = vpop.permute.xlu0 %6263
        %6265 = vrot.lane.b32.xlu0 %v6237, 96
        %v6266 = vpop.permute.xlu0 %6265
        %6267 = vrot.lane.b32.xlu0 %v6238, 96
        %v6268 = vpop.permute.xlu0 %6267
        %6269 = vrot.lane.b32.xlu0 %v6239, 96
        %v6270 = vpop.permute.xlu0 %6269
        %6271 = vrot.lane.b32.xlu0 %v6240, 96
        %v6272 = vpop.permute.xlu0 %6271
        %6289 = vst.msk [vmem:[#allocation3] sm:$0xff] %vm2134, %v6242
        %6290 = vst.msk [vmem:[#allocation3 + $0x18] sm:$0xff] %vm2134, %v6244
        %6291 = vst.msk [vmem:[#allocation3 + $0x30] sm:$0xff] %vm2134, %v6246
        %6292 = vst.msk [vmem:[#allocation3 + $0x48] sm:$0xff] %vm2134, %v6248
        %6293 = vst.msk [vmem:[#allocation3 + $0x60] sm:$0xff] %vm2134, %v6250
        %6294 = vst.msk [vmem:[#allocation3 + $0x78] sm:$0xff] %vm2134, %v6252
        %6295 = vst.msk [vmem:[#allocation3 + $0x90] sm:$0xff] %vm2134, %v6254
        %6296 = vst.msk [vmem:[#allocation3 + $0xa8] sm:$0xff] %vm2134, %v6256
        %6297 = vst.msk [vmem:[#allocation3 + $0xc0] sm:$0xff] %vm2134, %v6258
        %6298 = vst.msk [vmem:[#allocation3 + $0xd8] sm:$0xff] %vm2134, %v6260
        %6299 = vst.msk [vmem:[#allocation3 + $0xf0] sm:$0xff] %vm2134, %v6262
        %6300 = vst.msk [vmem:[#allocation3 + $0x108] sm:$0xff] %vm2134, %v6264
        %6301 = vst.msk [vmem:[#allocation3 + $0x120] sm:$0xff] %vm2134, %v6266
        %6302 = vst.msk [vmem:[#allocation3 + $0x138] sm:$0xff] %vm2134, %v6268
        %6303 = vst.msk [vmem:[#allocation3 + $0x150] sm:$0xff] %vm2134, %v6270
        %6304 = vst.msk [vmem:[#allocation3 + $0x168] sm:$0xff] %vm2134, %v6272
        %v6305 = vld [vmem:[%s839] sm:$0xf]
        %v6306 = vld [vmem:[%s839 + $0x4] sm:$0xf]
        %v6307 = vld [vmem:[%s839 + $0x8] sm:$0x1]
        %v6308 = vld [vmem:[%s839 + $0xc] sm:$0xf]
        %v6309 = vld [vmem:[%s839 + $0x10] sm:$0xf]
        %v6310 = vld [vmem:[%s839 + $0x14] sm:$0x1]
        %v6311 = vld [vmem:[%s839 + $0x18] sm:$0xf]
        %v6312 = vld [vmem:[%s839 + $0x1c] sm:$0xf]
        %v6313 = vld [vmem:[%s839 + $0x20] sm:$0x1]
        %v6314 = vld [vmem:[%s839 + $0x24] sm:$0xf]
        %v6315 = vld [vmem:[%s839 + $0x28] sm:$0xf]
        %v6316 = vld [vmem:[%s839 + $0x2c] sm:$0x1]
        %v6317 = vld [vmem:[%s839 + $0x30] sm:$0xf]
        %v6318 = vld [vmem:[%s839 + $0x34] sm:$0xf]
        %v6319 = vld [vmem:[%s839 + $0x38] sm:$0x1]
        %v6320 = vld [vmem:[%s839 + $0x3c] sm:$0xf]
        %v6321 = vld [vmem:[%s839 + $0x40] sm:$0xf]
        %v6322 = vld [vmem:[%s839 + $0x44] sm:$0x1]
        %v6323 = vld [vmem:[%s839 + $0x48] sm:$0xf]
        %v6324 = vld [vmem:[%s839 + $0x4c] sm:$0xf]
        %v6325 = vld [vmem:[%s839 + $0x50] sm:$0x1]
        %v6326 = vld [vmem:[%s839 + $0x54] sm:$0xf]
        %v6327 = vld [vmem:[%s839 + $0x58] sm:$0xf]
        %v6328 = vld [vmem:[%s839 + $0x5c] sm:$0x1]
        %v6329 = vld [vmem:[%s839 + $0x60] sm:$0xf]
        %v6330 = vld [vmem:[%s839 + $0x64] sm:$0xf]
        %v6331 = vld [vmem:[%s839 + $0x68] sm:$0x1]
        %v6332 = vld [vmem:[%s839 + $0x6c] sm:$0xf]
        %v6333 = vld [vmem:[%s839 + $0x70] sm:$0xf]
        %v6334 = vld [vmem:[%s839 + $0x74] sm:$0x1]
        %v6335 = vld [vmem:[%s839 + $0x78] sm:$0xf]
        %v6336 = vld [vmem:[%s839 + $0x7c] sm:$0xf]
        %v6337 = vld [vmem:[%s839 + $0x80] sm:$0x1]
        %v6338 = vld [vmem:[%s839 + $0x84] sm:$0xf]
        %v6339 = vld [vmem:[%s839 + $0x88] sm:$0xf]
        %v6340 = vld [vmem:[%s839 + $0x8c] sm:$0x1]
        %v6341 = vld [vmem:[%s839 + $0x90] sm:$0xf]
        %v6342 = vld [vmem:[%s839 + $0x94] sm:$0xf]
        %v6343 = vld [vmem:[%s839 + $0x98] sm:$0x1]
        %v6344 = vld [vmem:[%s839 + $0x9c] sm:$0xf]
        %v6345 = vld [vmem:[%s839 + $0xa0] sm:$0xf]
        %v6346 = vld [vmem:[%s839 + $0xa4] sm:$0x1]
        %v6347 = vld [vmem:[%s839 + $0xa8] sm:$0xf]
        %v6348 = vld [vmem:[%s839 + $0xac] sm:$0xf]
        %v6349 = vld [vmem:[%s839 + $0xb0] sm:$0x1]
        %v6350 = vld [vmem:[%s839 + $0xb4] sm:$0xf]
        %v6351 = vld [vmem:[%s839 + $0xb8] sm:$0xf]
        %v6352 = vld [vmem:[%s839 + $0xbc] sm:$0x1]
        %v6354 = vshrl.u32 %v6305, 16
        %v6356 = vrot.slane %v6354, 4
        %v6357 = vshll.u32 %v6305, 16
        %v6359 = vrot.slane %v6357, 5
        %v6360 = vor.u32 %v6356, %v6359
        %v6361 = vrot.slane %v6360, 4
        %v6363 = vshll.u32 %v6306, 16
        %v6365 = vrot.slane %v6363, 5
        %v6366 = vsel %vm1152, %v6361, %v6365
        %v6367 = vshrl.u32 %v6306, 16
        %v6369 = vrot.slane %v6367, 4
        %v6370 = vor.u32 %v6369, %v6365
        %v6371 = vrot.slane %v6370, 4
        %v6373 = vshll.u32 %v6307, 16
        %v6375 = vrot.slane %v6373, 5
        %v6376 = vsel %vm1152, %v6371, %v6375
        %v6378 = vshrl.u32 %v6308, 16
        %v6380 = vrot.slane %v6378, 4
        %v6381 = vshll.u32 %v6308, 16
        %v6383 = vrot.slane %v6381, 5
        %v6384 = vor.u32 %v6380, %v6383
        %v6385 = vrot.slane %v6384, 4
        %v6387 = vshll.u32 %v6309, 16
        %v6389 = vrot.slane %v6387, 5
        %v6390 = vsel %vm1152, %v6385, %v6389
        %v6391 = vshrl.u32 %v6309, 16
        %v6393 = vrot.slane %v6391, 4
        %v6394 = vor.u32 %v6393, %v6389
        %v6395 = vrot.slane %v6394, 4
        %v6397 = vshll.u32 %v6310, 16
        %v6399 = vrot.slane %v6397, 5
        %v6400 = vsel %vm1152, %v6395, %v6399
        %v6402 = vshrl.u32 %v6311, 16
        %v6404 = vrot.slane %v6402, 4
        %v6405 = vshll.u32 %v6311, 16
        %v6407 = vrot.slane %v6405, 5
        %v6408 = vor.u32 %v6404, %v6407
        %v6409 = vrot.slane %v6408, 4
        %v6411 = vshll.u32 %v6312, 16
        %v6413 = vrot.slane %v6411, 5
        %v6414 = vsel %vm1152, %v6409, %v6413
        %v6415 = vshrl.u32 %v6312, 16
        %v6417 = vrot.slane %v6415, 4
        %v6418 = vor.u32 %v6417, %v6413
        %v6419 = vrot.slane %v6418, 4
        %v6421 = vshll.u32 %v6313, 16
        %v6423 = vrot.slane %v6421, 5
        %v6424 = vsel %vm1152, %v6419, %v6423
        %v6426 = vshrl.u32 %v6314, 16
        %v6428 = vrot.slane %v6426, 4
        %v6429 = vshll.u32 %v6314, 16
        %v6431 = vrot.slane %v6429, 5
        %v6432 = vor.u32 %v6428, %v6431
        %v6433 = vrot.slane %v6432, 4
        %v6435 = vshll.u32 %v6315, 16
        %v6437 = vrot.slane %v6435, 5
        %v6438 = vsel %vm1152, %v6433, %v6437
        %v6439 = vshrl.u32 %v6315, 16
        %v6441 = vrot.slane %v6439, 4
        %v6442 = vor.u32 %v6441, %v6437
        %v6443 = vrot.slane %v6442, 4
        %v6445 = vshll.u32 %v6316, 16
        %v6447 = vrot.slane %v6445, 5
        %v6448 = vsel %vm1152, %v6443, %v6447
        %v6450 = vshrl.u32 %v6317, 16
        %v6452 = vrot.slane %v6450, 4
        %v6453 = vshll.u32 %v6317, 16
        %v6455 = vrot.slane %v6453, 5
        %v6456 = vor.u32 %v6452, %v6455
        %v6457 = vrot.slane %v6456, 4
        %v6459 = vshll.u32 %v6318, 16
        %v6461 = vrot.slane %v6459, 5
        %v6462 = vsel %vm1152, %v6457, %v6461
        %v6463 = vshrl.u32 %v6318, 16
        %v6465 = vrot.slane %v6463, 4
        %v6466 = vor.u32 %v6465, %v6461
        %v6467 = vrot.slane %v6466, 4
        %v6469 = vshll.u32 %v6319, 16
        %v6471 = vrot.slane %v6469, 5
        %v6472 = vsel %vm1152, %v6467, %v6471
        %v6474 = vshrl.u32 %v6320, 16
        %v6476 = vrot.slane %v6474, 4
        %v6477 = vshll.u32 %v6320, 16
        %v6479 = vrot.slane %v6477, 5
        %v6480 = vor.u32 %v6476, %v6479
        %v6481 = vrot.slane %v6480, 4
        %v6483 = vshll.u32 %v6321, 16
        %v6485 = vrot.slane %v6483, 5
        %v6486 = vsel %vm1152, %v6481, %v6485
        %v6487 = vshrl.u32 %v6321, 16
        %v6489 = vrot.slane %v6487, 4
        %v6490 = vor.u32 %v6489, %v6485
        %v6491 = vrot.slane %v6490, 4
        %v6493 = vshll.u32 %v6322, 16
        %v6495 = vrot.slane %v6493, 5
        %v6496 = vsel %vm1152, %v6491, %v6495
        %v6498 = vshrl.u32 %v6323, 16
        %v6500 = vrot.slane %v6498, 4
        %v6501 = vshll.u32 %v6323, 16
        %v6503 = vrot.slane %v6501, 5
        %v6504 = vor.u32 %v6500, %v6503
        %v6505 = vrot.slane %v6504, 4
        %v6507 = vshll.u32 %v6324, 16
        %v6509 = vrot.slane %v6507, 5
        %v6510 = vsel %vm1152, %v6505, %v6509
        %v6511 = vshrl.u32 %v6324, 16
        %v6513 = vrot.slane %v6511, 4
        %v6514 = vor.u32 %v6513, %v6509
        %v6515 = vrot.slane %v6514, 4
        %v6517 = vshll.u32 %v6325, 16
        %v6519 = vrot.slane %v6517, 5
        %v6520 = vsel %vm1152, %v6515, %v6519
        %v6522 = vshrl.u32 %v6326, 16
        %v6524 = vrot.slane %v6522, 4
        %v6525 = vshll.u32 %v6326, 16
        %v6527 = vrot.slane %v6525, 5
        %v6528 = vor.u32 %v6524, %v6527
        %v6529 = vrot.slane %v6528, 4
        %v6531 = vshll.u32 %v6327, 16
        %v6533 = vrot.slane %v6531, 5
        %v6534 = vsel %vm1152, %v6529, %v6533
        %v6535 = vshrl.u32 %v6327, 16
        %v6537 = vrot.slane %v6535, 4
        %v6538 = vor.u32 %v6537, %v6533
        %v6539 = vrot.slane %v6538, 4
        %v6541 = vshll.u32 %v6328, 16
        %v6543 = vrot.slane %v6541, 5
        %v6544 = vsel %vm1152, %v6539, %v6543
        %v6546 = vshrl.u32 %v6329, 16
        %v6548 = vrot.slane %v6546, 4
        %v6549 = vshll.u32 %v6329, 16
        %v6551 = vrot.slane %v6549, 5
        %v6552 = vor.u32 %v6548, %v6551
        %v6553 = vrot.slane %v6552, 4
        %v6555 = vshll.u32 %v6330, 16
        %v6557 = vrot.slane %v6555, 5
        %v6558 = vsel %vm1152, %v6553, %v6557
        %v6559 = vshrl.u32 %v6330, 16
        %v6561 = vrot.slane %v6559, 4
        %v6562 = vor.u32 %v6561, %v6557
        %v6563 = vrot.slane %v6562, 4
        %v6565 = vshll.u32 %v6331, 16
        %v6567 = vrot.slane %v6565, 5
        %v6568 = vsel %vm1152, %v6563, %v6567
        %v6570 = vshrl.u32 %v6332, 16
        %v6572 = vrot.slane %v6570, 4
        %v6573 = vshll.u32 %v6332, 16
        %v6575 = vrot.slane %v6573, 5
        %v6576 = vor.u32 %v6572, %v6575
        %v6577 = vrot.slane %v6576, 4
        %v6579 = vshll.u32 %v6333, 16
        %v6581 = vrot.slane %v6579, 5
        %v6582 = vsel %vm1152, %v6577, %v6581
        %v6583 = vshrl.u32 %v6333, 16
        %v6585 = vrot.slane %v6583, 4
        %v6586 = vor.u32 %v6585, %v6581
        %v6587 = vrot.slane %v6586, 4
        %v6589 = vshll.u32 %v6334, 16
        %v6591 = vrot.slane %v6589, 5
        %v6592 = vsel %vm1152, %v6587, %v6591
        %v6594 = vshrl.u32 %v6335, 16
        %v6596 = vrot.slane %v6594, 4
        %v6597 = vshll.u32 %v6335, 16
        %v6599 = vrot.slane %v6597, 5
        %v6600 = vor.u32 %v6596, %v6599
        %v6601 = vrot.slane %v6600, 4
        %v6603 = vshll.u32 %v6336, 16
        %v6605 = vrot.slane %v6603, 5
        %v6606 = vsel %vm1152, %v6601, %v6605
        %v6607 = vshrl.u32 %v6336, 16
        %v6609 = vrot.slane %v6607, 4
        %v6610 = vor.u32 %v6609, %v6605
        %v6611 = vrot.slane %v6610, 4
        %v6613 = vshll.u32 %v6337, 16
        %v6615 = vrot.slane %v6613, 5
        %v6616 = vsel %vm1152, %v6611, %v6615
        %v6618 = vshrl.u32 %v6338, 16
        %v6620 = vrot.slane %v6618, 4
        %v6621 = vshll.u32 %v6338, 16
        %v6623 = vrot.slane %v6621, 5
        %v6624 = vor.u32 %v6620, %v6623
        %v6625 = vrot.slane %v6624, 4
        %v6627 = vshll.u32 %v6339, 16
        %v6629 = vrot.slane %v6627, 5
        %v6630 = vsel %vm1152, %v6625, %v6629
        %v6631 = vshrl.u32 %v6339, 16
        %v6633 = vrot.slane %v6631, 4
        %v6634 = vor.u32 %v6633, %v6629
        %v6635 = vrot.slane %v6634, 4
        %v6637 = vshll.u32 %v6340, 16
        %v6639 = vrot.slane %v6637, 5
        %v6640 = vsel %vm1152, %v6635, %v6639
        %v6642 = vshrl.u32 %v6341, 16
        %v6644 = vrot.slane %v6642, 4
        %v6645 = vshll.u32 %v6341, 16
        %v6647 = vrot.slane %v6645, 5
        %v6648 = vor.u32 %v6644, %v6647
        %v6649 = vrot.slane %v6648, 4
        %v6651 = vshll.u32 %v6342, 16
        %v6653 = vrot.slane %v6651, 5
        %v6654 = vsel %vm1152, %v6649, %v6653
        %v6655 = vshrl.u32 %v6342, 16
        %v6657 = vrot.slane %v6655, 4
        %v6658 = vor.u32 %v6657, %v6653
        %v6659 = vrot.slane %v6658, 4
        %v6661 = vshll.u32 %v6343, 16
        %v6663 = vrot.slane %v6661, 5
        %v6664 = vsel %vm1152, %v6659, %v6663
        %v6666 = vshrl.u32 %v6344, 16
        %v6668 = vrot.slane %v6666, 4
        %v6669 = vshll.u32 %v6344, 16
        %v6671 = vrot.slane %v6669, 5
        %v6672 = vor.u32 %v6668, %v6671
        %v6673 = vrot.slane %v6672, 4
        %v6675 = vshll.u32 %v6345, 16
        %v6677 = vrot.slane %v6675, 5
        %v6678 = vsel %vm1152, %v6673, %v6677
        %v6679 = vshrl.u32 %v6345, 16
        %v6681 = vrot.slane %v6679, 4
        %v6682 = vor.u32 %v6681, %v6677
        %v6683 = vrot.slane %v6682, 4
        %v6685 = vshll.u32 %v6346, 16
        %v6687 = vrot.slane %v6685, 5
        %v6688 = vsel %vm1152, %v6683, %v6687
        %v6690 = vshrl.u32 %v6347, 16
        %v6692 = vrot.slane %v6690, 4
        %v6693 = vshll.u32 %v6347, 16
        %v6695 = vrot.slane %v6693, 5
        %v6696 = vor.u32 %v6692, %v6695
        %v6697 = vrot.slane %v6696, 4
        %v6699 = vshll.u32 %v6348, 16
        %v6701 = vrot.slane %v6699, 5
        %v6702 = vsel %vm1152, %v6697, %v6701
        %v6703 = vshrl.u32 %v6348, 16
        %v6705 = vrot.slane %v6703, 4
        %v6706 = vor.u32 %v6705, %v6701
        %v6707 = vrot.slane %v6706, 4
        %v6709 = vshll.u32 %v6349, 16
        %v6711 = vrot.slane %v6709, 5
        %v6712 = vsel %vm1152, %v6707, %v6711
        %v6714 = vshrl.u32 %v6350, 16
        %v6716 = vrot.slane %v6714, 4
        %v6717 = vshll.u32 %v6350, 16
        %v6719 = vrot.slane %v6717, 5
        %v6720 = vor.u32 %v6716, %v6719
        %v6721 = vrot.slane %v6720, 4
        %v6723 = vshll.u32 %v6351, 16
        %v6725 = vrot.slane %v6723, 5
        %v6726 = vsel %vm1152, %v6721, %v6725
        %v6727 = vshrl.u32 %v6351, 16
        %v6729 = vrot.slane %v6727, 4
        %v6730 = vor.u32 %v6729, %v6725
        %v6731 = vrot.slane %v6730, 4
        %v6733 = vshll.u32 %v6352, 16
        %v6735 = vrot.slane %v6733, 5
        %v6736 = vsel %vm1152, %v6731, %v6735
        %v6737 = vunpack.c.l.b16 %v6366
        %v6738 = vunpack.c.l.b16 %v6376
        %v6739 = vunpack.c.l.b16 %v6390
        %v6740 = vunpack.c.l.b16 %v6400
        %v6741 = vunpack.c.l.b16 %v6414
        %v6742 = vunpack.c.l.b16 %v6424
        %v6743 = vunpack.c.l.b16 %v6438
        %v6744 = vunpack.c.l.b16 %v6448
        %v6745 = vunpack.c.l.b16 %v6462
        %v6746 = vunpack.c.l.b16 %v6472
        %v6747 = vunpack.c.l.b16 %v6486
        %v6748 = vunpack.c.l.b16 %v6496
        %v6749 = vunpack.c.l.b16 %v6510
        %v6750 = vunpack.c.l.b16 %v6520
        %v6751 = vunpack.c.l.b16 %v6534
        %v6752 = vunpack.c.l.b16 %v6544
        %v6753 = vunpack.c.l.b16 %v6558
        %v6754 = vunpack.c.l.b16 %v6568
        %v6755 = vunpack.c.l.b16 %v6582
        %v6756 = vunpack.c.l.b16 %v6592
        %v6757 = vunpack.c.l.b16 %v6606
        %v6758 = vunpack.c.l.b16 %v6616
        %v6759 = vunpack.c.l.b16 %v6630
        %v6760 = vunpack.c.l.b16 %v6640
        %v6761 = vunpack.c.l.b16 %v6654
        %v6762 = vunpack.c.l.b16 %v6664
        %v6763 = vunpack.c.l.b16 %v6678
        %v6764 = vunpack.c.l.b16 %v6688
        %v6765 = vunpack.c.l.b16 %v6702
        %v6766 = vunpack.c.l.b16 %v6712
        %v6767 = vunpack.c.l.b16 %v6726
        %v6768 = vunpack.c.l.b16 %v6736
        %v6769 = vpack.c.b16 %v6738, %v6737
        %v6770 = vpack.c.b16 %v6740, %v6739
        %v6771 = vpack.c.b16 %v6742, %v6741
        %v6772 = vpack.c.b16 %v6744, %v6743
        %v6773 = vpack.c.b16 %v6746, %v6745
        %v6774 = vpack.c.b16 %v6748, %v6747
        %v6775 = vpack.c.b16 %v6750, %v6749
        %v6776 = vpack.c.b16 %v6752, %v6751
        %v6777 = vpack.c.b16 %v6754, %v6753
        %v6778 = vpack.c.b16 %v6756, %v6755
        %v6779 = vpack.c.b16 %v6758, %v6757
        %v6780 = vpack.c.b16 %v6760, %v6759
        %v6781 = vpack.c.b16 %v6762, %v6761
        %v6782 = vpack.c.b16 %v6764, %v6763
        %v6783 = vpack.c.b16 %v6766, %v6765
        %v6784 = vpack.c.b16 %v6768, %v6767
        %6801 = vst.msk [vmem:[#allocation3 + $0x8] sm:$0xff] %vm1085, %v6769
        %6802 = vst.msk [vmem:[#allocation3 + $0x20] sm:$0xff] %vm1085, %v6770
        %6803 = vst.msk [vmem:[#allocation3 + $0x38] sm:$0xff] %vm1085, %v6771
        %6804 = vst.msk [vmem:[#allocation3 + $0x50] sm:$0xff] %vm1085, %v6772
        %6805 = vst.msk [vmem:[#allocation3 + $0x68] sm:$0xff] %vm1085, %v6773
        %6806 = vst.msk [vmem:[#allocation3 + $0x80] sm:$0xff] %vm1085, %v6774
        %6807 = vst.msk [vmem:[#allocation3 + $0x98] sm:$0xff] %vm1085, %v6775
        %6808 = vst.msk [vmem:[#allocation3 + $0xb0] sm:$0xff] %vm1085, %v6776
        %6809 = vst.msk [vmem:[#allocation3 + $0xc8] sm:$0xff] %vm1085, %v6777
        %6810 = vst.msk [vmem:[#allocation3 + $0xe0] sm:$0xff] %vm1085, %v6778
        %6811 = vst.msk [vmem:[#allocation3 + $0xf8] sm:$0xff] %vm1085, %v6779
        %6812 = vst.msk [vmem:[#allocation3 + $0x110] sm:$0xff] %vm1085, %v6780
        %6813 = vst.msk [vmem:[#allocation3 + $0x128] sm:$0xff] %vm1085, %v6781
        %6814 = vst.msk [vmem:[#allocation3 + $0x140] sm:$0xff] %vm1085, %v6782
        %6815 = vst.msk [vmem:[#allocation3 + $0x158] sm:$0xff] %vm1085, %v6783
        %6816 = vst.msk [vmem:[#allocation3 + $0x170] sm:$0xff] %vm1085, %v6784
        %v6817 = vld [vmem:[%s839] sm:$0xe]
        %v6818 = vld [vmem:[%s839 + $0x4] sm:$0xf]
        %v6819 = vld [vmem:[%s839 + $0x8] sm:$0x1]
        %v6820 = vld [vmem:[%s839 + $0xc] sm:$0xe]
        %v6821 = vld [vmem:[%s839 + $0x10] sm:$0xf]
        %v6822 = vld [vmem:[%s839 + $0x14] sm:$0x1]
        %v6823 = vld [vmem:[%s839 + $0x18] sm:$0xe]
        %v6824 = vld [vmem:[%s839 + $0x1c] sm:$0xf]
        %v6825 = vld [vmem:[%s839 + $0x20] sm:$0x1]
        %v6826 = vld [vmem:[%s839 + $0x24] sm:$0xe]
        %v6827 = vld [vmem:[%s839 + $0x28] sm:$0xf]
        %v6828 = vld [vmem:[%s839 + $0x2c] sm:$0x1]
        %v6829 = vld [vmem:[%s839 + $0x30] sm:$0xe]
        %v6830 = vld [vmem:[%s839 + $0x34] sm:$0xf]
        %v6831 = vld [vmem:[%s839 + $0x38] sm:$0x1]
        %v6832 = vld [vmem:[%s839 + $0x3c] sm:$0xe]
        %v6833 = vld [vmem:[%s839 + $0x40] sm:$0xf]
        %v6834 = vld [vmem:[%s839 + $0x44] sm:$0x1]
        %v6835 = vld [vmem:[%s839 + $0x48] sm:$0xe]
        %v6836 = vld [vmem:[%s839 + $0x4c] sm:$0xf]
        %v6837 = vld [vmem:[%s839 + $0x50] sm:$0x1]
        %v6838 = vld [vmem:[%s839 + $0x54] sm:$0xe]
        %v6839 = vld [vmem:[%s839 + $0x58] sm:$0xf]
        %v6840 = vld [vmem:[%s839 + $0x5c] sm:$0x1]
        %v6841 = vld [vmem:[%s839 + $0x60] sm:$0xe]
        %v6842 = vld [vmem:[%s839 + $0x64] sm:$0xf]
        %v6843 = vld [vmem:[%s839 + $0x68] sm:$0x1]
        %v6844 = vld [vmem:[%s839 + $0x6c] sm:$0xe]
        %v6845 = vld [vmem:[%s839 + $0x70] sm:$0xf]
        %v6846 = vld [vmem:[%s839 + $0x74] sm:$0x1]
        %v6847 = vld [vmem:[%s839 + $0x78] sm:$0xe]
        %v6848 = vld [vmem:[%s839 + $0x7c] sm:$0xf]
        %v6849 = vld [vmem:[%s839 + $0x80] sm:$0x1]
        %v6850 = vld [vmem:[%s839 + $0x84] sm:$0xe]
        %v6851 = vld [vmem:[%s839 + $0x88] sm:$0xf]
        %v6852 = vld [vmem:[%s839 + $0x8c] sm:$0x1]
        %v6853 = vld [vmem:[%s839 + $0x90] sm:$0xe]
        %v6854 = vld [vmem:[%s839 + $0x94] sm:$0xf]
        %v6855 = vld [vmem:[%s839 + $0x98] sm:$0x1]
        %v6856 = vld [vmem:[%s839 + $0x9c] sm:$0xe]
        %v6857 = vld [vmem:[%s839 + $0xa0] sm:$0xf]
        %v6858 = vld [vmem:[%s839 + $0xa4] sm:$0x1]
        %v6859 = vld [vmem:[%s839 + $0xa8] sm:$0xe]
        %v6860 = vld [vmem:[%s839 + $0xac] sm:$0xf]
        %v6861 = vld [vmem:[%s839 + $0xb0] sm:$0x1]
        %v6862 = vld [vmem:[%s839 + $0xb4] sm:$0xe]
        %v6863 = vld [vmem:[%s839 + $0xb8] sm:$0xf]
        %v6864 = vld [vmem:[%s839 + $0xbc] sm:$0x1]
        %v6913 = vrot.slane %v6817, 5
        %v6914 = vrot.slane %v6913, 4
        %v6915 = vrot.slane %v6818, 5
        %v6916 = vsel %vm1748, %v6914, %v6915
        %v6917 = vrot.slane %v6915, 4
        %v6918 = vrot.slane %v6819, 5
        %v6919 = vsel %vm1748, %v6917, %v6918
        %v6920 = vrot.slane %v6820, 5
        %v6921 = vrot.slane %v6920, 4
        %v6922 = vrot.slane %v6821, 5
        %v6923 = vsel %vm1748, %v6921, %v6922
        %v6924 = vrot.slane %v6922, 4
        %v6925 = vrot.slane %v6822, 5
        %v6926 = vsel %vm1748, %v6924, %v6925
        %v6927 = vrot.slane %v6823, 5
        %v6928 = vrot.slane %v6927, 4
        %v6929 = vrot.slane %v6824, 5
        %v6930 = vsel %vm1748, %v6928, %v6929
        %v6931 = vrot.slane %v6929, 4
        %v6932 = vrot.slane %v6825, 5
        %v6933 = vsel %vm1748, %v6931, %v6932
        %v6934 = vrot.slane %v6826, 5
        %v6935 = vrot.slane %v6934, 4
        %v6936 = vrot.slane %v6827, 5
        %v6937 = vsel %vm1748, %v6935, %v6936
        %v6938 = vrot.slane %v6936, 4
        %v6939 = vrot.slane %v6828, 5
        %v6940 = vsel %vm1748, %v6938, %v6939
        %v6941 = vrot.slane %v6829, 5
        %v6942 = vrot.slane %v6941, 4
        %v6943 = vrot.slane %v6830, 5
        %v6944 = vsel %vm1748, %v6942, %v6943
        %v6945 = vrot.slane %v6943, 4
        %v6946 = vrot.slane %v6831, 5
        %v6947 = vsel %vm1748, %v6945, %v6946
        %v6948 = vrot.slane %v6832, 5
        %v6949 = vrot.slane %v6948, 4
        %v6950 = vrot.slane %v6833, 5
        %v6951 = vsel %vm1748, %v6949, %v6950
        %v6952 = vrot.slane %v6950, 4
        %v6953 = vrot.slane %v6834, 5
        %v6954 = vsel %vm1748, %v6952, %v6953
        %v6955 = vrot.slane %v6835, 5
        %v6956 = vrot.slane %v6955, 4
        %v6957 = vrot.slane %v6836, 5
        %v6958 = vsel %vm1748, %v6956, %v6957
        %v6959 = vrot.slane %v6957, 4
        %v6960 = vrot.slane %v6837, 5
        %v6961 = vsel %vm1748, %v6959, %v6960
        %v6962 = vrot.slane %v6838, 5
        %v6963 = vrot.slane %v6962, 4
        %v6964 = vrot.slane %v6839, 5
        %v6965 = vsel %vm1748, %v6963, %v6964
        %v6966 = vrot.slane %v6964, 4
        %v6967 = vrot.slane %v6840, 5
        %v6968 = vsel %vm1748, %v6966, %v6967
        %v6969 = vrot.slane %v6841, 5
        %v6970 = vrot.slane %v6969, 4
        %v6971 = vrot.slane %v6842, 5
        %v6972 = vsel %vm1748, %v6970, %v6971
        %v6973 = vrot.slane %v6971, 4
        %v6974 = vrot.slane %v6843, 5
        %v6975 = vsel %vm1748, %v6973, %v6974
        %v6976 = vrot.slane %v6844, 5
        %v6977 = vrot.slane %v6976, 4
        %v6978 = vrot.slane %v6845, 5
        %v6979 = vsel %vm1748, %v6977, %v6978
        %v6980 = vrot.slane %v6978, 4
        %v6981 = vrot.slane %v6846, 5
        %v6982 = vsel %vm1748, %v6980, %v6981
        %v6983 = vrot.slane %v6847, 5
        %v6984 = vrot.slane %v6983, 4
        %v6985 = vrot.slane %v6848, 5
        %v6986 = vsel %vm1748, %v6984, %v6985
        %v6987 = vrot.slane %v6985, 4
        %v6988 = vrot.slane %v6849, 5
        %v6989 = vsel %vm1748, %v6987, %v6988
        %v6990 = vrot.slane %v6850, 5
        %v6991 = vrot.slane %v6990, 4
        %v6992 = vrot.slane %v6851, 5
        %v6993 = vsel %vm1748, %v6991, %v6992
        %v6994 = vrot.slane %v6992, 4
        %v6995 = vrot.slane %v6852, 5
        %v6996 = vsel %vm1748, %v6994, %v6995
        %v6997 = vrot.slane %v6853, 5
        %v6998 = vrot.slane %v6997, 4
        %v6999 = vrot.slane %v6854, 5
        %v7000 = vsel %vm1748, %v6998, %v6999
        %v7001 = vrot.slane %v6999, 4
        %v7002 = vrot.slane %v6855, 5
        %v7003 = vsel %vm1748, %v7001, %v7002
        %v7004 = vrot.slane %v6856, 5
        %v7005 = vrot.slane %v7004, 4
        %v7006 = vrot.slane %v6857, 5
        %v7007 = vsel %vm1748, %v7005, %v7006
        %v7008 = vrot.slane %v7006, 4
        %v7009 = vrot.slane %v6858, 5
        %v7010 = vsel %vm1748, %v7008, %v7009
        %v7011 = vrot.slane %v6859, 5
        %v7012 = vrot.slane %v7011, 4
        %v7013 = vrot.slane %v6860, 5
        %v7014 = vsel %vm1748, %v7012, %v7013
        %v7015 = vrot.slane %v7013, 4
        %v7016 = vrot.slane %v6861, 5
        %v7017 = vsel %vm1748, %v7015, %v7016
        %v7018 = vrot.slane %v6862, 5
        %v7019 = vrot.slane %v7018, 4
        %v7020 = vrot.slane %v6863, 5
        %v7021 = vsel %vm1748, %v7019, %v7020
        %v7022 = vrot.slane %v7020, 4
        %v7023 = vrot.slane %v6864, 5
        %v7024 = vsel %vm1748, %v7022, %v7023
        %v7025 = vunpack.c.l.b16 %v6916
        %v7026 = vunpack.c.l.b16 %v6919
        %v7027 = vunpack.c.l.b16 %v6923
        %v7028 = vunpack.c.l.b16 %v6926
        %v7029 = vunpack.c.l.b16 %v6930
        %v7030 = vunpack.c.l.b16 %v6933
        %v7031 = vunpack.c.l.b16 %v6937
        %v7032 = vunpack.c.l.b16 %v6940
        %v7033 = vunpack.c.l.b16 %v6944
        %v7034 = vunpack.c.l.b16 %v6947
        %v7035 = vunpack.c.l.b16 %v6951
        %v7036 = vunpack.c.l.b16 %v6954
        %v7037 = vunpack.c.l.b16 %v6958
        %v7038 = vunpack.c.l.b16 %v6961
        %v7039 = vunpack.c.l.b16 %v6965
        %v7040 = vunpack.c.l.b16 %v6968
        %v7041 = vunpack.c.l.b16 %v6972
        %v7042 = vunpack.c.l.b16 %v6975
        %v7043 = vunpack.c.l.b16 %v6979
        %v7044 = vunpack.c.l.b16 %v6982
        %v7045 = vunpack.c.l.b16 %v6986
        %v7046 = vunpack.c.l.b16 %v6989
        %v7047 = vunpack.c.l.b16 %v6993
        %v7048 = vunpack.c.l.b16 %v6996
        %v7049 = vunpack.c.l.b16 %v7000
        %v7050 = vunpack.c.l.b16 %v7003
        %v7051 = vunpack.c.l.b16 %v7007
        %v7052 = vunpack.c.l.b16 %v7010
        %v7053 = vunpack.c.l.b16 %v7014
        %v7054 = vunpack.c.l.b16 %v7017
        %v7055 = vunpack.c.l.b16 %v7021
        %v7056 = vunpack.c.l.b16 %v7024
        %v7057 = vpack.c.b16 %v7026, %v7025
        %v7058 = vpack.c.b16 %v7028, %v7027
        %v7059 = vpack.c.b16 %v7030, %v7029
        %v7060 = vpack.c.b16 %v7032, %v7031
        %v7061 = vpack.c.b16 %v7034, %v7033
        %v7062 = vpack.c.b16 %v7036, %v7035
        %v7063 = vpack.c.b16 %v7038, %v7037
        %v7064 = vpack.c.b16 %v7040, %v7039
        %v7065 = vpack.c.b16 %v7042, %v7041
        %v7066 = vpack.c.b16 %v7044, %v7043
        %v7067 = vpack.c.b16 %v7046, %v7045
        %v7068 = vpack.c.b16 %v7048, %v7047
        %v7069 = vpack.c.b16 %v7050, %v7049
        %v7070 = vpack.c.b16 %v7052, %v7051
        %v7071 = vpack.c.b16 %v7054, %v7053
        %v7072 = vpack.c.b16 %v7056, %v7055
        %7073 = vrot.lane.b32.xlu0 %v7057, 32
        %v7074 = vpop.permute.xlu0 %7073
        %7075 = vrot.lane.b32.xlu0 %v7058, 32
        %v7076 = vpop.permute.xlu0 %7075
        %7077 = vrot.lane.b32.xlu0 %v7059, 32
        %v7078 = vpop.permute.xlu0 %7077
        %7079 = vrot.lane.b32.xlu0 %v7060, 32
        %v7080 = vpop.permute.xlu0 %7079
        %7081 = vrot.lane.b32.xlu0 %v7061, 32
        %v7082 = vpop.permute.xlu0 %7081
        %7083 = vrot.lane.b32.xlu0 %v7062, 32
        %v7084 = vpop.permute.xlu0 %7083
        %7085 = vrot.lane.b32.xlu0 %v7063, 32
        %v7086 = vpop.permute.xlu0 %7085
        %7087 = vrot.lane.b32.xlu0 %v7064, 32
        %v7088 = vpop.permute.xlu0 %7087
        %7089 = vrot.lane.b32.xlu0 %v7065, 32
        %v7090 = vpop.permute.xlu0 %7089
        %7091 = vrot.lane.b32.xlu0 %v7066, 32
        %v7092 = vpop.permute.xlu0 %7091
        %7093 = vrot.lane.b32.xlu0 %v7067, 32
        %v7094 = vpop.permute.xlu0 %7093
        %7095 = vrot.lane.b32.xlu0 %v7068, 32
        %v7096 = vpop.permute.xlu0 %7095
        %7097 = vrot.lane.b32.xlu0 %v7069, 32
        %v7098 = vpop.permute.xlu0 %7097
        %7099 = vrot.lane.b32.xlu0 %v7070, 32
        %v7100 = vpop.permute.xlu0 %7099
        %7101 = vrot.lane.b32.xlu0 %v7071, 32
        %v7102 = vpop.permute.xlu0 %7101
        %7103 = vrot.lane.b32.xlu0 %v7072, 32
        %v7104 = vpop.permute.xlu0 %7103
        %7121 = vst.msk [vmem:[#allocation3 + $0x8] sm:$0xff] %vm1633, %v7074
        %7122 = vst.msk [vmem:[#allocation3 + $0x20] sm:$0xff] %vm1633, %v7076
        %7123 = vst.msk [vmem:[#allocation3 + $0x38] sm:$0xff] %vm1633, %v7078
        %7124 = vst.msk [vmem:[#allocation3 + $0x50] sm:$0xff] %vm1633, %v7080
        %7125 = vst.msk [vmem:[#allocation3 + $0x68] sm:$0xff] %vm1633, %v7082
        %7126 = vst.msk [vmem:[#allocation3 + $0x80] sm:$0xff] %vm1633, %v7084
        %7127 = vst.msk [vmem:[#allocation3 + $0x98] sm:$0xff] %vm1633, %v7086
        %7128 = vst.msk [vmem:[#allocation3 + $0xb0] sm:$0xff] %vm1633, %v7088
        %7129 = vst.msk [vmem:[#allocation3 + $0xc8] sm:$0xff] %vm1633, %v7090
        %7130 = vst.msk [vmem:[#allocation3 + $0xe0] sm:$0xff] %vm1633, %v7092
        %7131 = vst.msk [vmem:[#allocation3 + $0xf8] sm:$0xff] %vm1633, %v7094
        %7132 = vst.msk [vmem:[#allocation3 + $0x110] sm:$0xff] %vm1633, %v7096
        %7133 = vst.msk [vmem:[#allocation3 + $0x128] sm:$0xff] %vm1633, %v7098
        %7134 = vst.msk [vmem:[#allocation3 + $0x140] sm:$0xff] %vm1633, %v7100
        %7135 = vst.msk [vmem:[#allocation3 + $0x158] sm:$0xff] %vm1633, %v7102
        %7136 = vst.msk [vmem:[#allocation3 + $0x170] sm:$0xff] %vm1633, %v7104
        %v7137 = vld [vmem:[%s2983] sm:$0xf]
        %v7138 = vld [vmem:[%s2983 + $0x4] sm:$0xf]
        %v7139 = vld [vmem:[%s2983 + $0xc] sm:$0xf]
        %v7140 = vld [vmem:[%s2983 + $0x10] sm:$0xf]
        %v7141 = vld [vmem:[%s2983 + $0x18] sm:$0xf]
        %v7142 = vld [vmem:[%s2983 + $0x1c] sm:$0xf]
        %v7143 = vld [vmem:[%s2983 + $0x24] sm:$0xf]
        %v7144 = vld [vmem:[%s2983 + $0x28] sm:$0xf]
        %v7145 = vld [vmem:[%s2983 + $0x30] sm:$0xf]
        %v7146 = vld [vmem:[%s2983 + $0x34] sm:$0xf]
        %v7147 = vld [vmem:[%s2983 + $0x3c] sm:$0xf]
        %v7148 = vld [vmem:[%s2983 + $0x40] sm:$0xf]
        %v7149 = vld [vmem:[%s2983 + $0x48] sm:$0xf]
        %v7150 = vld [vmem:[%s2983 + $0x4c] sm:$0xf]
        %v7151 = vld [vmem:[%s2983 + $0x54] sm:$0xf]
        %v7152 = vld [vmem:[%s2983 + $0x58] sm:$0xf]
        %v7153 = vld [vmem:[%s2983 + $0x60] sm:$0xf]
        %v7154 = vld [vmem:[%s2983 + $0x64] sm:$0xf]
        %v7155 = vld [vmem:[%s2983 + $0x6c] sm:$0xf]
        %v7156 = vld [vmem:[%s2983 + $0x70] sm:$0xf]
        %v7157 = vld [vmem:[%s2983 + $0x78] sm:$0xf]
        %v7158 = vld [vmem:[%s2983 + $0x7c] sm:$0xf]
        %v7159 = vld [vmem:[%s2983 + $0x84] sm:$0xf]
        %v7160 = vld [vmem:[%s2983 + $0x88] sm:$0xf]
        %v7161 = vld [vmem:[%s2983 + $0x90] sm:$0xf]
        %v7162 = vld [vmem:[%s2983 + $0x94] sm:$0xf]
        %v7163 = vld [vmem:[%s2983 + $0x9c] sm:$0xf]
        %v7164 = vld [vmem:[%s2983 + $0xa0] sm:$0xf]
        %v7165 = vld [vmem:[%s2983 + $0xa8] sm:$0xf]
        %v7166 = vld [vmem:[%s2983 + $0xac] sm:$0xf]
        %v7167 = vld [vmem:[%s2983 + $0xb4] sm:$0xf]
        %v7168 = vld [vmem:[%s2983 + $0xb8] sm:$0xf]
        %v7201 = vunpack.c.l.b16 %v7137
        %v7202 = vunpack.c.l.b16 %v7138
        %v7203 = vunpack.c.l.b16 %v7139
        %v7204 = vunpack.c.l.b16 %v7140
        %v7205 = vunpack.c.l.b16 %v7141
        %v7206 = vunpack.c.l.b16 %v7142
        %v7207 = vunpack.c.l.b16 %v7143
        %v7208 = vunpack.c.l.b16 %v7144
        %v7209 = vunpack.c.l.b16 %v7145
        %v7210 = vunpack.c.l.b16 %v7146
        %v7211 = vunpack.c.l.b16 %v7147
        %v7212 = vunpack.c.l.b16 %v7148
        %v7213 = vunpack.c.l.b16 %v7149
        %v7214 = vunpack.c.l.b16 %v7150
        %v7215 = vunpack.c.l.b16 %v7151
        %v7216 = vunpack.c.l.b16 %v7152
        %v7217 = vunpack.c.l.b16 %v7153
        %v7218 = vunpack.c.l.b16 %v7154
        %v7219 = vunpack.c.l.b16 %v7155
        %v7220 = vunpack.c.l.b16 %v7156
        %v7221 = vunpack.c.l.b16 %v7157
        %v7222 = vunpack.c.l.b16 %v7158
        %v7223 = vunpack.c.l.b16 %v7159
        %v7224 = vunpack.c.l.b16 %v7160
        %v7225 = vunpack.c.l.b16 %v7161
        %v7226 = vunpack.c.l.b16 %v7162
        %v7227 = vunpack.c.l.b16 %v7163
        %v7228 = vunpack.c.l.b16 %v7164
        %v7229 = vunpack.c.l.b16 %v7165
        %v7230 = vunpack.c.l.b16 %v7166
        %v7231 = vunpack.c.l.b16 %v7167
        %v7232 = vunpack.c.l.b16 %v7168
        %v7233 = vpack.c.b16 %v7202, %v7201
        %v7234 = vpack.c.b16 %v7204, %v7203
        %v7235 = vpack.c.b16 %v7206, %v7205
        %v7236 = vpack.c.b16 %v7208, %v7207
        %v7237 = vpack.c.b16 %v7210, %v7209
        %v7238 = vpack.c.b16 %v7212, %v7211
        %v7239 = vpack.c.b16 %v7214, %v7213
        %v7240 = vpack.c.b16 %v7216, %v7215
        %v7241 = vpack.c.b16 %v7218, %v7217
        %v7242 = vpack.c.b16 %v7220, %v7219
        %v7243 = vpack.c.b16 %v7222, %v7221
        %v7244 = vpack.c.b16 %v7224, %v7223
        %v7245 = vpack.c.b16 %v7226, %v7225
        %v7246 = vpack.c.b16 %v7228, %v7227
        %v7247 = vpack.c.b16 %v7230, %v7229
        %v7248 = vpack.c.b16 %v7232, %v7231
        %7249 = vrot.lane.b32.xlu0 %v7233, 64
        %v7250 = vpop.permute.xlu0 %7249
        %7251 = vrot.lane.b32.xlu0 %v7234, 64
        %v7252 = vpop.permute.xlu0 %7251
        %7253 = vrot.lane.b32.xlu0 %v7235, 64
        %v7254 = vpop.permute.xlu0 %7253
        %7255 = vrot.lane.b32.xlu0 %v7236, 64
        %v7256 = vpop.permute.xlu0 %7255
        %7257 = vrot.lane.b32.xlu0 %v7237, 64
        %v7258 = vpop.permute.xlu0 %7257
        %7259 = vrot.lane.b32.xlu0 %v7238, 64
        %v7260 = vpop.permute.xlu0 %7259
        %7261 = vrot.lane.b32.xlu0 %v7239, 64
        %v7262 = vpop.permute.xlu0 %7261
        %7263 = vrot.lane.b32.xlu0 %v7240, 64
        %v7264 = vpop.permute.xlu0 %7263
        %7265 = vrot.lane.b32.xlu0 %v7241, 64
        %v7266 = vpop.permute.xlu0 %7265
        %7267 = vrot.lane.b32.xlu0 %v7242, 64
        %v7268 = vpop.permute.xlu0 %7267
        %7269 = vrot.lane.b32.xlu0 %v7243, 64
        %v7270 = vpop.permute.xlu0 %7269
        %7271 = vrot.lane.b32.xlu0 %v7244, 64
        %v7272 = vpop.permute.xlu0 %7271
        %7273 = vrot.lane.b32.xlu0 %v7245, 64
        %v7274 = vpop.permute.xlu0 %7273
        %7275 = vrot.lane.b32.xlu0 %v7246, 64
        %v7276 = vpop.permute.xlu0 %7275
        %7277 = vrot.lane.b32.xlu0 %v7247, 64
        %v7278 = vpop.permute.xlu0 %7277
        %7279 = vrot.lane.b32.xlu0 %v7248, 64
        %v7280 = vpop.permute.xlu0 %7279
        %7297 = vst.msk [vmem:[#allocation3 + $0x8] sm:$0xff] %vm1957, %v7250
        %7298 = vst.msk [vmem:[#allocation3 + $0x20] sm:$0xff] %vm1957, %v7252
        %7299 = vst.msk [vmem:[#allocation3 + $0x38] sm:$0xff] %vm1957, %v7254
        %7300 = vst.msk [vmem:[#allocation3 + $0x50] sm:$0xff] %vm1957, %v7256
        %7301 = vst.msk [vmem:[#allocation3 + $0x68] sm:$0xff] %vm1957, %v7258
        %7302 = vst.msk [vmem:[#allocation3 + $0x80] sm:$0xff] %vm1957, %v7260
        %7303 = vst.msk [vmem:[#allocation3 + $0x98] sm:$0xff] %vm1957, %v7262
        %7304 = vst.msk [vmem:[#allocation3 + $0xb0] sm:$0xff] %vm1957, %v7264
        %7305 = vst.msk [vmem:[#allocation3 + $0xc8] sm:$0xff] %vm1957, %v7266
        %7306 = vst.msk [vmem:[#allocation3 + $0xe0] sm:$0xff] %vm1957, %v7268
        %7307 = vst.msk [vmem:[#allocation3 + $0xf8] sm:$0xff] %vm1957, %v7270
        %7308 = vst.msk [vmem:[#allocation3 + $0x110] sm:$0xff] %vm1957, %v7272
        %7309 = vst.msk [vmem:[#allocation3 + $0x128] sm:$0xff] %vm1957, %v7274
        %7310 = vst.msk [vmem:[#allocation3 + $0x140] sm:$0xff] %vm1957, %v7276
        %7311 = vst.msk [vmem:[#allocation3 + $0x158] sm:$0xff] %vm1957, %v7278
        %7312 = vst.msk [vmem:[#allocation3 + $0x170] sm:$0xff] %vm1957, %v7280
        %v7313 = vld [vmem:[%s2983] sm:$0xf]
        %v7314 = vld [vmem:[%s2983 + $0x4] sm:$0xf]
        %v7315 = vld [vmem:[%s2983 + $0x8] sm:$0x1]
        %v7316 = vld [vmem:[%s2983 + $0xc] sm:$0xf]
        %v7317 = vld [vmem:[%s2983 + $0x10] sm:$0xf]
        %v7318 = vld [vmem:[%s2983 + $0x14] sm:$0x1]
        %v7319 = vld [vmem:[%s2983 + $0x18] sm:$0xf]
        %v7320 = vld [vmem:[%s2983 + $0x1c] sm:$0xf]
        %v7321 = vld [vmem:[%s2983 + $0x20] sm:$0x1]
        %v7322 = vld [vmem:[%s2983 + $0x24] sm:$0xf]
        %v7323 = vld [vmem:[%s2983 + $0x28] sm:$0xf]
        %v7324 = vld [vmem:[%s2983 + $0x2c] sm:$0x1]
        %v7325 = vld [vmem:[%s2983 + $0x30] sm:$0xf]
        %v7326 = vld [vmem:[%s2983 + $0x34] sm:$0xf]
        %v7327 = vld [vmem:[%s2983 + $0x38] sm:$0x1]
        %v7328 = vld [vmem:[%s2983 + $0x3c] sm:$0xf]
        %v7329 = vld [vmem:[%s2983 + $0x40] sm:$0xf]
        %v7330 = vld [vmem:[%s2983 + $0x44] sm:$0x1]
        %v7331 = vld [vmem:[%s2983 + $0x48] sm:$0xf]
        %v7332 = vld [vmem:[%s2983 + $0x4c] sm:$0xf]
        %v7333 = vld [vmem:[%s2983 + $0x50] sm:$0x1]
        %v7334 = vld [vmem:[%s2983 + $0x54] sm:$0xf]
        %v7335 = vld [vmem:[%s2983 + $0x58] sm:$0xf]
        %v7336 = vld [vmem:[%s2983 + $0x5c] sm:$0x1]
        %v7337 = vld [vmem:[%s2983 + $0x60] sm:$0xf]
        %v7338 = vld [vmem:[%s2983 + $0x64] sm:$0xf]
        %v7339 = vld [vmem:[%s2983 + $0x68] sm:$0x1]
        %v7340 = vld [vmem:[%s2983 + $0x6c] sm:$0xf]
        %v7341 = vld [vmem:[%s2983 + $0x70] sm:$0xf]
        %v7342 = vld [vmem:[%s2983 + $0x74] sm:$0x1]
        %v7343 = vld [vmem:[%s2983 + $0x78] sm:$0xf]
        %v7344 = vld [vmem:[%s2983 + $0x7c] sm:$0xf]
        %v7345 = vld [vmem:[%s2983 + $0x80] sm:$0x1]
        %v7346 = vld [vmem:[%s2983 + $0x84] sm:$0xf]
        %v7347 = vld [vmem:[%s2983 + $0x88] sm:$0xf]
        %v7348 = vld [vmem:[%s2983 + $0x8c] sm:$0x1]
        %v7349 = vld [vmem:[%s2983 + $0x90] sm:$0xf]
        %v7350 = vld [vmem:[%s2983 + $0x94] sm:$0xf]
        %v7351 = vld [vmem:[%s2983 + $0x98] sm:$0x1]
        %v7352 = vld [vmem:[%s2983 + $0x9c] sm:$0xf]
        %v7353 = vld [vmem:[%s2983 + $0xa0] sm:$0xf]
        %v7354 = vld [vmem:[%s2983 + $0xa4] sm:$0x1]
        %v7355 = vld [vmem:[%s2983 + $0xa8] sm:$0xf]
        %v7356 = vld [vmem:[%s2983 + $0xac] sm:$0xf]
        %v7357 = vld [vmem:[%s2983 + $0xb0] sm:$0x1]
        %v7358 = vld [vmem:[%s2983 + $0xb4] sm:$0xf]
        %v7359 = vld [vmem:[%s2983 + $0xb8] sm:$0xf]
        %v7360 = vld [vmem:[%s2983 + $0xbc] sm:$0x1]
        %v7362 = vshrl.u32 %v7313, 16
        %v7364 = vrot.slane %v7362, 4
        %v7365 = vshll.u32 %v7313, 16
        %v7367 = vrot.slane %v7365, 5
        %v7368 = vor.u32 %v7364, %v7367
        %v7369 = vrot.slane %v7368, 4
        %v7371 = vshll.u32 %v7314, 16
        %v7373 = vrot.slane %v7371, 5
        %v7374 = vsel %vm1152, %v7369, %v7373
        %v7375 = vshrl.u32 %v7314, 16
        %v7377 = vrot.slane %v7375, 4
        %v7378 = vor.u32 %v7377, %v7373
        %v7379 = vrot.slane %v7378, 4
        %v7381 = vshll.u32 %v7315, 16
        %v7383 = vrot.slane %v7381, 5
        %v7384 = vsel %vm1152, %v7379, %v7383
        %v7386 = vshrl.u32 %v7316, 16
        %v7388 = vrot.slane %v7386, 4
        %v7389 = vshll.u32 %v7316, 16
        %v7391 = vrot.slane %v7389, 5
        %v7392 = vor.u32 %v7388, %v7391
        %v7393 = vrot.slane %v7392, 4
        %v7395 = vshll.u32 %v7317, 16
        %v7397 = vrot.slane %v7395, 5
        %v7398 = vsel %vm1152, %v7393, %v7397
        %v7399 = vshrl.u32 %v7317, 16
        %v7401 = vrot.slane %v7399, 4
        %v7402 = vor.u32 %v7401, %v7397
        %v7403 = vrot.slane %v7402, 4
        %v7405 = vshll.u32 %v7318, 16
        %v7407 = vrot.slane %v7405, 5
        %v7408 = vsel %vm1152, %v7403, %v7407
        %v7410 = vshrl.u32 %v7319, 16
        %v7412 = vrot.slane %v7410, 4
        %v7413 = vshll.u32 %v7319, 16
        %v7415 = vrot.slane %v7413, 5
        %v7416 = vor.u32 %v7412, %v7415
        %v7417 = vrot.slane %v7416, 4
        %v7419 = vshll.u32 %v7320, 16
        %v7421 = vrot.slane %v7419, 5
        %v7422 = vsel %vm1152, %v7417, %v7421
        %v7423 = vshrl.u32 %v7320, 16
        %v7425 = vrot.slane %v7423, 4
        %v7426 = vor.u32 %v7425, %v7421
        %v7427 = vrot.slane %v7426, 4
        %v7429 = vshll.u32 %v7321, 16
        %v7431 = vrot.slane %v7429, 5
        %v7432 = vsel %vm1152, %v7427, %v7431
        %v7434 = vshrl.u32 %v7322, 16
        %v7436 = vrot.slane %v7434, 4
        %v7437 = vshll.u32 %v7322, 16
        %v7439 = vrot.slane %v7437, 5
        %v7440 = vor.u32 %v7436, %v7439
        %v7441 = vrot.slane %v7440, 4
        %v7443 = vshll.u32 %v7323, 16
        %v7445 = vrot.slane %v7443, 5
        %v7446 = vsel %vm1152, %v7441, %v7445
        %v7447 = vshrl.u32 %v7323, 16
        %v7449 = vrot.slane %v7447, 4
        %v7450 = vor.u32 %v7449, %v7445
        %v7451 = vrot.slane %v7450, 4
        %v7453 = vshll.u32 %v7324, 16
        %v7455 = vrot.slane %v7453, 5
        %v7456 = vsel %vm1152, %v7451, %v7455
        %v7458 = vshrl.u32 %v7325, 16
        %v7460 = vrot.slane %v7458, 4
        %v7461 = vshll.u32 %v7325, 16
        %v7463 = vrot.slane %v7461, 5
        %v7464 = vor.u32 %v7460, %v7463
        %v7465 = vrot.slane %v7464, 4
        %v7467 = vshll.u32 %v7326, 16
        %v7469 = vrot.slane %v7467, 5
        %v7470 = vsel %vm1152, %v7465, %v7469
        %v7471 = vshrl.u32 %v7326, 16
        %v7473 = vrot.slane %v7471, 4
        %v7474 = vor.u32 %v7473, %v7469
        %v7475 = vrot.slane %v7474, 4
        %v7477 = vshll.u32 %v7327, 16
        %v7479 = vrot.slane %v7477, 5
        %v7480 = vsel %vm1152, %v7475, %v7479
        %v7482 = vshrl.u32 %v7328, 16
        %v7484 = vrot.slane %v7482, 4
        %v7485 = vshll.u32 %v7328, 16
        %v7487 = vrot.slane %v7485, 5
        %v7488 = vor.u32 %v7484, %v7487
        %v7489 = vrot.slane %v7488, 4
        %v7491 = vshll.u32 %v7329, 16
        %v7493 = vrot.slane %v7491, 5
        %v7494 = vsel %vm1152, %v7489, %v7493
        %v7495 = vshrl.u32 %v7329, 16
        %v7497 = vrot.slane %v7495, 4
        %v7498 = vor.u32 %v7497, %v7493
        %v7499 = vrot.slane %v7498, 4
        %v7501 = vshll.u32 %v7330, 16
        %v7503 = vrot.slane %v7501, 5
        %v7504 = vsel %vm1152, %v7499, %v7503
        %v7506 = vshrl.u32 %v7331, 16
        %v7508 = vrot.slane %v7506, 4
        %v7509 = vshll.u32 %v7331, 16
        %v7511 = vrot.slane %v7509, 5
        %v7512 = vor.u32 %v7508, %v7511
        %v7513 = vrot.slane %v7512, 4
        %v7515 = vshll.u32 %v7332, 16
        %v7517 = vrot.slane %v7515, 5
        %v7518 = vsel %vm1152, %v7513, %v7517
        %v7519 = vshrl.u32 %v7332, 16
        %v7521 = vrot.slane %v7519, 4
        %v7522 = vor.u32 %v7521, %v7517
        %v7523 = vrot.slane %v7522, 4
        %v7525 = vshll.u32 %v7333, 16
        %v7527 = vrot.slane %v7525, 5
        %v7528 = vsel %vm1152, %v7523, %v7527
        %v7530 = vshrl.u32 %v7334, 16
        %v7532 = vrot.slane %v7530, 4
        %v7533 = vshll.u32 %v7334, 16
        %v7535 = vrot.slane %v7533, 5
        %v7536 = vor.u32 %v7532, %v7535
        %v7537 = vrot.slane %v7536, 4
        %v7539 = vshll.u32 %v7335, 16
        %v7541 = vrot.slane %v7539, 5
        %v7542 = vsel %vm1152, %v7537, %v7541
        %v7543 = vshrl.u32 %v7335, 16
        %v7545 = vrot.slane %v7543, 4
        %v7546 = vor.u32 %v7545, %v7541
        %v7547 = vrot.slane %v7546, 4
        %v7549 = vshll.u32 %v7336, 16
        %v7551 = vrot.slane %v7549, 5
        %v7552 = vsel %vm1152, %v7547, %v7551
        %v7554 = vshrl.u32 %v7337, 16
        %v7556 = vrot.slane %v7554, 4
        %v7557 = vshll.u32 %v7337, 16
        %v7559 = vrot.slane %v7557, 5
        %v7560 = vor.u32 %v7556, %v7559
        %v7561 = vrot.slane %v7560, 4
        %v7563 = vshll.u32 %v7338, 16
        %v7565 = vrot.slane %v7563, 5
        %v7566 = vsel %vm1152, %v7561, %v7565
        %v7567 = vshrl.u32 %v7338, 16
        %v7569 = vrot.slane %v7567, 4
        %v7570 = vor.u32 %v7569, %v7565
        %v7571 = vrot.slane %v7570, 4
        %v7573 = vshll.u32 %v7339, 16
        %v7575 = vrot.slane %v7573, 5
        %v7576 = vsel %vm1152, %v7571, %v7575
        %v7578 = vshrl.u32 %v7340, 16
        %v7580 = vrot.slane %v7578, 4
        %v7581 = vshll.u32 %v7340, 16
        %v7583 = vrot.slane %v7581, 5
        %v7584 = vor.u32 %v7580, %v7583
        %v7585 = vrot.slane %v7584, 4
        %v7587 = vshll.u32 %v7341, 16
        %v7589 = vrot.slane %v7587, 5
        %v7590 = vsel %vm1152, %v7585, %v7589
        %v7591 = vshrl.u32 %v7341, 16
        %v7593 = vrot.slane %v7591, 4
        %v7594 = vor.u32 %v7593, %v7589
        %v7595 = vrot.slane %v7594, 4
        %v7597 = vshll.u32 %v7342, 16
        %v7599 = vrot.slane %v7597, 5
        %v7600 = vsel %vm1152, %v7595, %v7599
        %v7602 = vshrl.u32 %v7343, 16
        %v7604 = vrot.slane %v7602, 4
        %v7605 = vshll.u32 %v7343, 16
        %v7607 = vrot.slane %v7605, 5
        %v7608 = vor.u32 %v7604, %v7607
        %v7609 = vrot.slane %v7608, 4
        %v7611 = vshll.u32 %v7344, 16
        %v7613 = vrot.slane %v7611, 5
        %v7614 = vsel %vm1152, %v7609, %v7613
        %v7615 = vshrl.u32 %v7344, 16
        %v7617 = vrot.slane %v7615, 4
        %v7618 = vor.u32 %v7617, %v7613
        %v7619 = vrot.slane %v7618, 4
        %v7621 = vshll.u32 %v7345, 16
        %v7623 = vrot.slane %v7621, 5
        %v7624 = vsel %vm1152, %v7619, %v7623
        %v7626 = vshrl.u32 %v7346, 16
        %v7628 = vrot.slane %v7626, 4
        %v7629 = vshll.u32 %v7346, 16
        %v7631 = vrot.slane %v7629, 5
        %v7632 = vor.u32 %v7628, %v7631
        %v7633 = vrot.slane %v7632, 4
        %v7635 = vshll.u32 %v7347, 16
        %v7637 = vrot.slane %v7635, 5
        %v7638 = vsel %vm1152, %v7633, %v7637
        %v7639 = vshrl.u32 %v7347, 16
        %v7641 = vrot.slane %v7639, 4
        %v7642 = vor.u32 %v7641, %v7637
        %v7643 = vrot.slane %v7642, 4
        %v7645 = vshll.u32 %v7348, 16
        %v7647 = vrot.slane %v7645, 5
        %v7648 = vsel %vm1152, %v7643, %v7647
        %v7650 = vshrl.u32 %v7349, 16
        %v7652 = vrot.slane %v7650, 4
        %v7653 = vshll.u32 %v7349, 16
        %v7655 = vrot.slane %v7653, 5
        %v7656 = vor.u32 %v7652, %v7655
        %v7657 = vrot.slane %v7656, 4
        %v7659 = vshll.u32 %v7350, 16
        %v7661 = vrot.slane %v7659, 5
        %v7662 = vsel %vm1152, %v7657, %v7661
        %v7663 = vshrl.u32 %v7350, 16
        %v7665 = vrot.slane %v7663, 4
        %v7666 = vor.u32 %v7665, %v7661
        %v7667 = vrot.slane %v7666, 4
        %v7669 = vshll.u32 %v7351, 16
        %v7671 = vrot.slane %v7669, 5
        %v7672 = vsel %vm1152, %v7667, %v7671
        %v7674 = vshrl.u32 %v7352, 16
        %v7676 = vrot.slane %v7674, 4
        %v7677 = vshll.u32 %v7352, 16
        %v7679 = vrot.slane %v7677, 5
        %v7680 = vor.u32 %v7676, %v7679
        %v7681 = vrot.slane %v7680, 4
        %v7683 = vshll.u32 %v7353, 16
        %v7685 = vrot.slane %v7683, 5
        %v7686 = vsel %vm1152, %v7681, %v7685
        %v7687 = vshrl.u32 %v7353, 16
        %v7689 = vrot.slane %v7687, 4
        %v7690 = vor.u32 %v7689, %v7685
        %v7691 = vrot.slane %v7690, 4
        %v7693 = vshll.u32 %v7354, 16
        %v7695 = vrot.slane %v7693, 5
        %v7696 = vsel %vm1152, %v7691, %v7695
        %v7698 = vshrl.u32 %v7355, 16
        %v7700 = vrot.slane %v7698, 4
        %v7701 = vshll.u32 %v7355, 16
        %v7703 = vrot.slane %v7701, 5
        %v7704 = vor.u32 %v7700, %v7703
        %v7705 = vrot.slane %v7704, 4
        %v7707 = vshll.u32 %v7356, 16
        %v7709 = vrot.slane %v7707, 5
        %v7710 = vsel %vm1152, %v7705, %v7709
        %v7711 = vshrl.u32 %v7356, 16
        %v7713 = vrot.slane %v7711, 4
        %v7714 = vor.u32 %v7713, %v7709
        %v7715 = vrot.slane %v7714, 4
        %v7717 = vshll.u32 %v7357, 16
        %v7719 = vrot.slane %v7717, 5
        %v7720 = vsel %vm1152, %v7715, %v7719
        %v7722 = vshrl.u32 %v7358, 16
        %v7724 = vrot.slane %v7722, 4
        %v7725 = vshll.u32 %v7358, 16
        %v7727 = vrot.slane %v7725, 5
        %v7728 = vor.u32 %v7724, %v7727
        %v7729 = vrot.slane %v7728, 4
        %v7731 = vshll.u32 %v7359, 16
        %v7733 = vrot.slane %v7731, 5
        %v7734 = vsel %vm1152, %v7729, %v7733
        %v7735 = vshrl.u32 %v7359, 16
        %v7737 = vrot.slane %v7735, 4
        %v7738 = vor.u32 %v7737, %v7733
        %v7739 = vrot.slane %v7738, 4
        %v7741 = vshll.u32 %v7360, 16
        %v7743 = vrot.slane %v7741, 5
        %v7744 = vsel %vm1152, %v7739, %v7743
        %v7745 = vunpack.c.l.b16 %v7374
        %v7746 = vunpack.c.l.b16 %v7384
        %v7747 = vunpack.c.l.b16 %v7398
        %v7748 = vunpack.c.l.b16 %v7408
        %v7749 = vunpack.c.l.b16 %v7422
        %v7750 = vunpack.c.l.b16 %v7432
        %v7751 = vunpack.c.l.b16 %v7446
        %v7752 = vunpack.c.l.b16 %v7456
        %v7753 = vunpack.c.l.b16 %v7470
        %v7754 = vunpack.c.l.b16 %v7480
        %v7755 = vunpack.c.l.b16 %v7494
        %v7756 = vunpack.c.l.b16 %v7504
        %v7757 = vunpack.c.l.b16 %v7518
        %v7758 = vunpack.c.l.b16 %v7528
        %v7759 = vunpack.c.l.b16 %v7542
        %v7760 = vunpack.c.l.b16 %v7552
        %v7761 = vunpack.c.l.b16 %v7566
        %v7762 = vunpack.c.l.b16 %v7576
        %v7763 = vunpack.c.l.b16 %v7590
        %v7764 = vunpack.c.l.b16 %v7600
        %v7765 = vunpack.c.l.b16 %v7614
        %v7766 = vunpack.c.l.b16 %v7624
        %v7767 = vunpack.c.l.b16 %v7638
        %v7768 = vunpack.c.l.b16 %v7648
        %v7769 = vunpack.c.l.b16 %v7662
        %v7770 = vunpack.c.l.b16 %v7672
        %v7771 = vunpack.c.l.b16 %v7686
        %v7772 = vunpack.c.l.b16 %v7696
        %v7773 = vunpack.c.l.b16 %v7710
        %v7774 = vunpack.c.l.b16 %v7720
        %v7775 = vunpack.c.l.b16 %v7734
        %v7776 = vunpack.c.l.b16 %v7744
        %v7777 = vpack.c.b16 %v7746, %v7745
        %v7778 = vpack.c.b16 %v7748, %v7747
        %v7779 = vpack.c.b16 %v7750, %v7749
        %v7780 = vpack.c.b16 %v7752, %v7751
        %v7781 = vpack.c.b16 %v7754, %v7753
        %v7782 = vpack.c.b16 %v7756, %v7755
        %v7783 = vpack.c.b16 %v7758, %v7757
        %v7784 = vpack.c.b16 %v7760, %v7759
        %v7785 = vpack.c.b16 %v7762, %v7761
        %v7786 = vpack.c.b16 %v7764, %v7763
        %v7787 = vpack.c.b16 %v7766, %v7765
        %v7788 = vpack.c.b16 %v7768, %v7767
        %v7789 = vpack.c.b16 %v7770, %v7769
        %v7790 = vpack.c.b16 %v7772, %v7771
        %v7791 = vpack.c.b16 %v7774, %v7773
        %v7792 = vpack.c.b16 %v7776, %v7775
        %7793 = vrot.lane.b32.xlu0 %v7777, 96
        %v7794 = vpop.permute.xlu0 %7793
        %7795 = vrot.lane.b32.xlu0 %v7778, 96
        %v7796 = vpop.permute.xlu0 %7795
        %7797 = vrot.lane.b32.xlu0 %v7779, 96
        %v7798 = vpop.permute.xlu0 %7797
        %7799 = vrot.lane.b32.xlu0 %v7780, 96
        %v7800 = vpop.permute.xlu0 %7799
        %7801 = vrot.lane.b32.xlu0 %v7781, 96
        %v7802 = vpop.permute.xlu0 %7801
        %7803 = vrot.lane.b32.xlu0 %v7782, 96
        %v7804 = vpop.permute.xlu0 %7803
        %7805 = vrot.lane.b32.xlu0 %v7783, 96
        %v7806 = vpop.permute.xlu0 %7805
        %7807 = vrot.lane.b32.xlu0 %v7784, 96
        %v7808 = vpop.permute.xlu0 %7807
        %7809 = vrot.lane.b32.xlu0 %v7785, 96
        %v7810 = vpop.permute.xlu0 %7809
        %7811 = vrot.lane.b32.xlu0 %v7786, 96
        %v7812 = vpop.permute.xlu0 %7811
        %7813 = vrot.lane.b32.xlu0 %v7787, 96
        %v7814 = vpop.permute.xlu0 %7813
        %7815 = vrot.lane.b32.xlu0 %v7788, 96
        %v7816 = vpop.permute.xlu0 %7815
        %7817 = vrot.lane.b32.xlu0 %v7789, 96
        %v7818 = vpop.permute.xlu0 %7817
        %7819 = vrot.lane.b32.xlu0 %v7790, 96
        %v7820 = vpop.permute.xlu0 %7819
        %7821 = vrot.lane.b32.xlu0 %v7791, 96
        %v7822 = vpop.permute.xlu0 %7821
        %7823 = vrot.lane.b32.xlu0 %v7792, 96
        %v7824 = vpop.permute.xlu0 %7823
        %7841 = vst.msk [vmem:[#allocation3 + $0x8] sm:$0xff] %vm2134, %v7794
        %7842 = vst.msk [vmem:[#allocation3 + $0x20] sm:$0xff] %vm2134, %v7796
        %7843 = vst.msk [vmem:[#allocation3 + $0x38] sm:$0xff] %vm2134, %v7798
        %7844 = vst.msk [vmem:[#allocation3 + $0x50] sm:$0xff] %vm2134, %v7800
        %7845 = vst.msk [vmem:[#allocation3 + $0x68] sm:$0xff] %vm2134, %v7802
        %7846 = vst.msk [vmem:[#allocation3 + $0x80] sm:$0xff] %vm2134, %v7804
        %7847 = vst.msk [vmem:[#allocation3 + $0x98] sm:$0xff] %vm2134, %v7806
        %7848 = vst.msk [vmem:[#allocation3 + $0xb0] sm:$0xff] %vm2134, %v7808
        %7849 = vst.msk [vmem:[#allocation3 + $0xc8] sm:$0xff] %vm2134, %v7810
        %7850 = vst.msk [vmem:[#allocation3 + $0xe0] sm:$0xff] %vm2134, %v7812
        %7851 = vst.msk [vmem:[#allocation3 + $0xf8] sm:$0xff] %vm2134, %v7814
        %7852 = vst.msk [vmem:[#allocation3 + $0x110] sm:$0xff] %vm2134, %v7816
        %7853 = vst.msk [vmem:[#allocation3 + $0x128] sm:$0xff] %vm2134, %v7818
        %7854 = vst.msk [vmem:[#allocation3 + $0x140] sm:$0xff] %vm2134, %v7820
        %7855 = vst.msk [vmem:[#allocation3 + $0x158] sm:$0xff] %vm2134, %v7822
        %7856 = vst.msk [vmem:[#allocation3 + $0x170] sm:$0xff] %vm2134, %v7824
        %v7857 = vld [vmem:[%s2983] sm:$0xe]
        %v7858 = vld [vmem:[%s2983 + $0x4] sm:$0xf]
        %v7859 = vld [vmem:[%s2983 + $0x8] sm:$0x1]
        %v7860 = vld [vmem:[%s2983 + $0xc] sm:$0xe]
        %v7861 = vld [vmem:[%s2983 + $0x10] sm:$0xf]
        %v7862 = vld [vmem:[%s2983 + $0x14] sm:$0x1]
        %v7863 = vld [vmem:[%s2983 + $0x18] sm:$0xe]
        %v7864 = vld [vmem:[%s2983 + $0x1c] sm:$0xf]
        %v7865 = vld [vmem:[%s2983 + $0x20] sm:$0x1]
        %v7866 = vld [vmem:[%s2983 + $0x24] sm:$0xe]
        %v7867 = vld [vmem:[%s2983 + $0x28] sm:$0xf]
        %v7868 = vld [vmem:[%s2983 + $0x2c] sm:$0x1]
        %v7869 = vld [vmem:[%s2983 + $0x30] sm:$0xe]
        %v7870 = vld [vmem:[%s2983 + $0x34] sm:$0xf]
        %v7871 = vld [vmem:[%s2983 + $0x38] sm:$0x1]
        %v7872 = vld [vmem:[%s2983 + $0x3c] sm:$0xe]
        %v7873 = vld [vmem:[%s2983 + $0x40] sm:$0xf]
        %v7874 = vld [vmem:[%s2983 + $0x44] sm:$0x1]
        %v7875 = vld [vmem:[%s2983 + $0x48] sm:$0xe]
        %v7876 = vld [vmem:[%s2983 + $0x4c] sm:$0xf]
        %v7877 = vld [vmem:[%s2983 + $0x50] sm:$0x1]
        %v7878 = vld [vmem:[%s2983 + $0x54] sm:$0xe]
        %v7879 = vld [vmem:[%s2983 + $0x58] sm:$0xf]
        %v7880 = vld [vmem:[%s2983 + $0x5c] sm:$0x1]
        %v7881 = vld [vmem:[%s2983 + $0x60] sm:$0xe]
        %v7882 = vld [vmem:[%s2983 + $0x64] sm:$0xf]
        %v7883 = vld [vmem:[%s2983 + $0x68] sm:$0x1]
        %v7884 = vld [vmem:[%s2983 + $0x6c] sm:$0xe]
        %v7885 = vld [vmem:[%s2983 + $0x70] sm:$0xf]
        %v7886 = vld [vmem:[%s2983 + $0x74] sm:$0x1]
        %v7887 = vld [vmem:[%s2983 + $0x78] sm:$0xe]
        %v7888 = vld [vmem:[%s2983 + $0x7c] sm:$0xf]
        %v7889 = vld [vmem:[%s2983 + $0x80] sm:$0x1]
        %v7890 = vld [vmem:[%s2983 + $0x84] sm:$0xe]
        %v7891 = vld [vmem:[%s2983 + $0x88] sm:$0xf]
        %v7892 = vld [vmem:[%s2983 + $0x8c] sm:$0x1]
        %v7893 = vld [vmem:[%s2983 + $0x90] sm:$0xe]
        %v7894 = vld [vmem:[%s2983 + $0x94] sm:$0xf]
        %v7895 = vld [vmem:[%s2983 + $0x98] sm:$0x1]
        %v7896 = vld [vmem:[%s2983 + $0x9c] sm:$0xe]
        %v7897 = vld [vmem:[%s2983 + $0xa0] sm:$0xf]
        %v7898 = vld [vmem:[%s2983 + $0xa4] sm:$0x1]
        %v7899 = vld [vmem:[%s2983 + $0xa8] sm:$0xe]
        %v7900 = vld [vmem:[%s2983 + $0xac] sm:$0xf]
        %v7901 = vld [vmem:[%s2983 + $0xb0] sm:$0x1]
        %v7902 = vld [vmem:[%s2983 + $0xb4] sm:$0xe]
        %v7903 = vld [vmem:[%s2983 + $0xb8] sm:$0xf]
        %v7904 = vld [vmem:[%s2983 + $0xbc] sm:$0x1]
        %v7953 = vrot.slane %v7857, 5
        %v7954 = vrot.slane %v7953, 4
        %v7955 = vrot.slane %v7858, 5
        %v7956 = vsel %vm1748, %v7954, %v7955
        %v7957 = vrot.slane %v7955, 4
        %v7958 = vrot.slane %v7859, 5
        %v7959 = vsel %vm1748, %v7957, %v7958
        %v7960 = vrot.slane %v7860, 5
        %v7961 = vrot.slane %v7960, 4
        %v7962 = vrot.slane %v7861, 5
        %v7963 = vsel %vm1748, %v7961, %v7962
        %v7964 = vrot.slane %v7962, 4
        %v7965 = vrot.slane %v7862, 5
        %v7966 = vsel %vm1748, %v7964, %v7965
        %v7967 = vrot.slane %v7863, 5
        %v7968 = vrot.slane %v7967, 4
        %v7969 = vrot.slane %v7864, 5
        %v7970 = vsel %vm1748, %v7968, %v7969
        %v7971 = vrot.slane %v7969, 4
        %v7972 = vrot.slane %v7865, 5
        %v7973 = vsel %vm1748, %v7971, %v7972
        %v7974 = vrot.slane %v7866, 5
        %v7975 = vrot.slane %v7974, 4
        %v7976 = vrot.slane %v7867, 5
        %v7977 = vsel %vm1748, %v7975, %v7976
        %v7978 = vrot.slane %v7976, 4
        %v7979 = vrot.slane %v7868, 5
        %v7980 = vsel %vm1748, %v7978, %v7979
        %v7981 = vrot.slane %v7869, 5
        %v7982 = vrot.slane %v7981, 4
        %v7983 = vrot.slane %v7870, 5
        %v7984 = vsel %vm1748, %v7982, %v7983
        %v7985 = vrot.slane %v7983, 4
        %v7986 = vrot.slane %v7871, 5
        %v7987 = vsel %vm1748, %v7985, %v7986
        %v7988 = vrot.slane %v7872, 5
        %v7989 = vrot.slane %v7988, 4
        %v7990 = vrot.slane %v7873, 5
        %v7991 = vsel %vm1748, %v7989, %v7990
        %v7992 = vrot.slane %v7990, 4
        %v7993 = vrot.slane %v7874, 5
        %v7994 = vsel %vm1748, %v7992, %v7993
        %v7995 = vrot.slane %v7875, 5
        %v7996 = vrot.slane %v7995, 4
        %v7997 = vrot.slane %v7876, 5
        %v7998 = vsel %vm1748, %v7996, %v7997
        %v7999 = vrot.slane %v7997, 4
        %v8000 = vrot.slane %v7877, 5
        %v8001 = vsel %vm1748, %v7999, %v8000
        %v8002 = vrot.slane %v7878, 5
        %v8003 = vrot.slane %v8002, 4
        %v8004 = vrot.slane %v7879, 5
        %v8005 = vsel %vm1748, %v8003, %v8004
        %v8006 = vrot.slane %v8004, 4
        %v8007 = vrot.slane %v7880, 5
        %v8008 = vsel %vm1748, %v8006, %v8007
        %v8009 = vrot.slane %v7881, 5
        %v8010 = vrot.slane %v8009, 4
        %v8011 = vrot.slane %v7882, 5
        %v8012 = vsel %vm1748, %v8010, %v8011
        %v8013 = vrot.slane %v8011, 4
        %v8014 = vrot.slane %v7883, 5
        %v8015 = vsel %vm1748, %v8013, %v8014
        %v8016 = vrot.slane %v7884, 5
        %v8017 = vrot.slane %v8016, 4
        %v8018 = vrot.slane %v7885, 5
        %v8019 = vsel %vm1748, %v8017, %v8018
        %v8020 = vrot.slane %v8018, 4
        %v8021 = vrot.slane %v7886, 5
        %v8022 = vsel %vm1748, %v8020, %v8021
        %v8023 = vrot.slane %v7887, 5
        %v8024 = vrot.slane %v8023, 4
        %v8025 = vrot.slane %v7888, 5
        %v8026 = vsel %vm1748, %v8024, %v8025
        %v8027 = vrot.slane %v8025, 4
        %v8028 = vrot.slane %v7889, 5
        %v8029 = vsel %vm1748, %v8027, %v8028
        %v8030 = vrot.slane %v7890, 5
        %v8031 = vrot.slane %v8030, 4
        %v8032 = vrot.slane %v7891, 5
        %v8033 = vsel %vm1748, %v8031, %v8032
        %v8034 = vrot.slane %v8032, 4
        %v8035 = vrot.slane %v7892, 5
        %v8036 = vsel %vm1748, %v8034, %v8035
        %v8037 = vrot.slane %v7893, 5
        %v8038 = vrot.slane %v8037, 4
        %v8039 = vrot.slane %v7894, 5
        %v8040 = vsel %vm1748, %v8038, %v8039
        %v8041 = vrot.slane %v8039, 4
        %v8042 = vrot.slane %v7895, 5
        %v8043 = vsel %vm1748, %v8041, %v8042
        %v8044 = vrot.slane %v7896, 5
        %v8045 = vrot.slane %v8044, 4
        %v8046 = vrot.slane %v7897, 5
        %v8047 = vsel %vm1748, %v8045, %v8046
        %v8048 = vrot.slane %v8046, 4
        %v8049 = vrot.slane %v7898, 5
        %v8050 = vsel %vm1748, %v8048, %v8049
        %v8051 = vrot.slane %v7899, 5
        %v8052 = vrot.slane %v8051, 4
        %v8053 = vrot.slane %v7900, 5
        %v8054 = vsel %vm1748, %v8052, %v8053
        %v8055 = vrot.slane %v8053, 4
        %v8056 = vrot.slane %v7901, 5
        %v8057 = vsel %vm1748, %v8055, %v8056
        %v8058 = vrot.slane %v7902, 5
        %v8059 = vrot.slane %v8058, 4
        %v8060 = vrot.slane %v7903, 5
        %v8061 = vsel %vm1748, %v8059, %v8060
        %v8062 = vrot.slane %v8060, 4
        %v8063 = vrot.slane %v7904, 5
        %v8064 = vsel %vm1748, %v8062, %v8063
        %v8065 = vunpack.c.l.b16 %v7956
        %v8066 = vunpack.c.l.b16 %v7959
        %v8067 = vunpack.c.l.b16 %v7963
        %v8068 = vunpack.c.l.b16 %v7966
        %v8069 = vunpack.c.l.b16 %v7970
        %v8070 = vunpack.c.l.b16 %v7973
        %v8071 = vunpack.c.l.b16 %v7977
        %v8072 = vunpack.c.l.b16 %v7980
        %v8073 = vunpack.c.l.b16 %v7984
        %v8074 = vunpack.c.l.b16 %v7987
        %v8075 = vunpack.c.l.b16 %v7991
        %v8076 = vunpack.c.l.b16 %v7994
        %v8077 = vunpack.c.l.b16 %v7998
        %v8078 = vunpack.c.l.b16 %v8001
        %v8079 = vunpack.c.l.b16 %v8005
        %v8080 = vunpack.c.l.b16 %v8008
        %v8081 = vunpack.c.l.b16 %v8012
        %v8082 = vunpack.c.l.b16 %v8015
        %v8083 = vunpack.c.l.b16 %v8019
        %v8084 = vunpack.c.l.b16 %v8022
        %v8085 = vunpack.c.l.b16 %v8026
        %v8086 = vunpack.c.l.b16 %v8029
        %v8087 = vunpack.c.l.b16 %v8033
        %v8088 = vunpack.c.l.b16 %v8036
        %v8089 = vunpack.c.l.b16 %v8040
        %v8090 = vunpack.c.l.b16 %v8043
        %v8091 = vunpack.c.l.b16 %v8047
        %v8092 = vunpack.c.l.b16 %v8050
        %v8093 = vunpack.c.l.b16 %v8054
        %v8094 = vunpack.c.l.b16 %v8057
        %v8095 = vunpack.c.l.b16 %v8061
        %v8096 = vunpack.c.l.b16 %v8064
        %v8097 = vpack.c.b16 %v8066, %v8065
        %v8098 = vpack.c.b16 %v8068, %v8067
        %v8099 = vpack.c.b16 %v8070, %v8069
        %v8100 = vpack.c.b16 %v8072, %v8071
        %v8101 = vpack.c.b16 %v8074, %v8073
        %v8102 = vpack.c.b16 %v8076, %v8075
        %v8103 = vpack.c.b16 %v8078, %v8077
        %v8104 = vpack.c.b16 %v8080, %v8079
        %v8105 = vpack.c.b16 %v8082, %v8081
        %v8106 = vpack.c.b16 %v8084, %v8083
        %v8107 = vpack.c.b16 %v8086, %v8085
        %v8108 = vpack.c.b16 %v8088, %v8087
        %v8109 = vpack.c.b16 %v8090, %v8089
        %v8110 = vpack.c.b16 %v8092, %v8091
        %v8111 = vpack.c.b16 %v8094, %v8093
        %v8112 = vpack.c.b16 %v8096, %v8095
        %8129 = vst.msk [vmem:[#allocation3 + $0x10] sm:$0xff] %vm1085, %v8097
        %8130 = vst.msk [vmem:[#allocation3 + $0x28] sm:$0xff] %vm1085, %v8098
        %8131 = vst.msk [vmem:[#allocation3 + $0x40] sm:$0xff] %vm1085, %v8099
        %8132 = vst.msk [vmem:[#allocation3 + $0x58] sm:$0xff] %vm1085, %v8100
        %8133 = vst.msk [vmem:[#allocation3 + $0x70] sm:$0xff] %vm1085, %v8101
        %8134 = vst.msk [vmem:[#allocation3 + $0x88] sm:$0xff] %vm1085, %v8102
        %8135 = vst.msk [vmem:[#allocation3 + $0xa0] sm:$0xff] %vm1085, %v8103
        %8136 = vst.msk [vmem:[#allocation3 + $0xb8] sm:$0xff] %vm1085, %v8104
        %8137 = vst.msk [vmem:[#allocation3 + $0xd0] sm:$0xff] %vm1085, %v8105
        %8138 = vst.msk [vmem:[#allocation3 + $0xe8] sm:$0xff] %vm1085, %v8106
        %8139 = vst.msk [vmem:[#allocation3 + $0x100] sm:$0xff] %vm1085, %v8107
        %8140 = vst.msk [vmem:[#allocation3 + $0x118] sm:$0xff] %vm1085, %v8108
        %8141 = vst.msk [vmem:[#allocation3 + $0x130] sm:$0xff] %vm1085, %v8109
        %8142 = vst.msk [vmem:[#allocation3 + $0x148] sm:$0xff] %vm1085, %v8110
        %8143 = vst.msk [vmem:[#allocation3 + $0x160] sm:$0xff] %vm1085, %v8111
        %8144 = vst.msk [vmem:[#allocation3 + $0x178] sm:$0xff] %vm1085, %v8112
        %v8145 = vld [vmem:[#allocation3] sm:$0xff]
        %v8146 = vld [vmem:[#allocation3 + $0x8] sm:$0xff]
        %v8147 = vld [vmem:[#allocation3 + $0x10] sm:$0xff]
        %v8148 = vld [vmem:[#allocation3 + $0x18] sm:$0xff]
        %v8149 = vld [vmem:[#allocation3 + $0x20] sm:$0xff]
        %v8150 = vld [vmem:[#allocation3 + $0x28] sm:$0xff]
        %v8151 = vld [vmem:[#allocation3 + $0x30] sm:$0xff]
        %v8152 = vld [vmem:[#allocation3 + $0x38] sm:$0xff]
        %v8153 = vld [vmem:[#allocation3 + $0x40] sm:$0xff]
        %v8154 = vld [vmem:[#allocation3 + $0x48] sm:$0xff]
        %v8155 = vld [vmem:[#allocation3 + $0x50] sm:$0xff]
        %v8156 = vld [vmem:[#allocation3 + $0x58] sm:$0xff]
        %v8157 = vld [vmem:[#allocation3 + $0x60] sm:$0xff]
        %v8158 = vld [vmem:[#allocation3 + $0x68] sm:$0xff]
        %v8159 = vld [vmem:[#allocation3 + $0x70] sm:$0xff]
        %v8160 = vld [vmem:[#allocation3 + $0x78] sm:$0xff]
        %v8161 = vld [vmem:[#allocation3 + $0x80] sm:$0xff]
        %v8162 = vld [vmem:[#allocation3 + $0x88] sm:$0xff]
        %v8163 = vld [vmem:[#allocation3 + $0x90] sm:$0xff]
        %v8164 = vld [vmem:[#allocation3 + $0x98] sm:$0xff]
        %v8165 = vld [vmem:[#allocation3 + $0xa0] sm:$0xff]
        %v8166 = vld [vmem:[#allocation3 + $0xa8] sm:$0xff]
        %v8167 = vld [vmem:[#allocation3 + $0xb0] sm:$0xff]
        %v8168 = vld [vmem:[#allocation3 + $0xb8] sm:$0xff]
        %v8169 = vld [vmem:[#allocation3 + $0xc0] sm:$0xff]
        %v8170 = vld [vmem:[#allocation3 + $0xc8] sm:$0xff]
        %v8171 = vld [vmem:[#allocation3 + $0xd0] sm:$0xff]
        %v8172 = vld [vmem:[#allocation3 + $0xd8] sm:$0xff]
        %v8173 = vld [vmem:[#allocation3 + $0xe0] sm:$0xff]
        %v8174 = vld [vmem:[#allocation3 + $0xe8] sm:$0xff]
        %v8175 = vld [vmem:[#allocation3 + $0xf0] sm:$0xff]
        %v8176 = vld [vmem:[#allocation3 + $0xf8] sm:$0xff]
        %v8177 = vld [vmem:[#allocation3 + $0x100] sm:$0xff]
        %v8178 = vld [vmem:[#allocation3 + $0x108] sm:$0xff]
        %v8179 = vld [vmem:[#allocation3 + $0x110] sm:$0xff]
        %v8180 = vld [vmem:[#allocation3 + $0x118] sm:$0xff]
        %v8181 = vld [vmem:[#allocation3 + $0x120] sm:$0xff]
        %v8182 = vld [vmem:[#allocation3 + $0x128] sm:$0xff]
        %v8183 = vld [vmem:[#allocation3 + $0x130] sm:$0xff]
        %v8184 = vld [vmem:[#allocation3 + $0x138] sm:$0xff]
        %v8185 = vld [vmem:[#allocation3 + $0x140] sm:$0xff]
        %v8186 = vld [vmem:[#allocation3 + $0x148] sm:$0xff]
        %v8187 = vld [vmem:[#allocation3 + $0x150] sm:$0xff]
        %v8188 = vld [vmem:[#allocation3 + $0x158] sm:$0xff]
        %v8189 = vld [vmem:[#allocation3 + $0x160] sm:$0xff]
        %v8190 = vld [vmem:[#allocation3 + $0x168] sm:$0xff]
        %v8191 = vld [vmem:[#allocation3 + $0x170] sm:$0xff]
        %v8192 = vld [vmem:[#allocation3 + $0x178] sm:$0xff]
        %v8193 = vld [vmem:[%s3] sm:$0xf]
        %v8194 = vld [vmem:[%s3 + $0x4] sm:$0xf]
        %v8195 = vld [vmem:[%s3 + $0x8] sm:$0xf]
        %v8196 = vld [vmem:[%s3 + $0xc] sm:$0xf]
        %v8197 = vld [vmem:[%s3 + $0x10] sm:$0xf]
        %v8198 = vld [vmem:[%s3 + $0x14] sm:$0xf]
        %v8199 = vld [vmem:[%s3 + $0x18] sm:$0xf]
        %v8200 = vld [vmem:[%s3 + $0x1c] sm:$0xf]
        %v8201 = vld [vmem:[%s3 + $0x20] sm:$0xf]
        %v8202 = vld [vmem:[%s3 + $0x24] sm:$0xf]
        %v8203 = vld [vmem:[%s3 + $0x28] sm:$0xf]
        %v8204 = vld [vmem:[%s3 + $0x2c] sm:$0xf]
        %v8205 = vld [vmem:[%s3 + $0x30] sm:$0xf]
        %v8206 = vld [vmem:[%s3 + $0x34] sm:$0xf]
        %v8207 = vld [vmem:[%s3 + $0x38] sm:$0xf]
        %v8208 = vld [vmem:[%s3 + $0x3c] sm:$0xf]
        %v8209 = vld [vmem:[%s3 + $0x40] sm:$0xf]
        %v8210 = vld [vmem:[%s3 + $0x44] sm:$0xf]
        %v8211 = vld [vmem:[%s3 + $0x48] sm:$0xf]
        %v8212 = vld [vmem:[%s3 + $0x4c] sm:$0xf]
        %v8213 = vld [vmem:[%s3 + $0x50] sm:$0xf]
        %v8214 = vld [vmem:[%s3 + $0x54] sm:$0xf]
        %v8215 = vld [vmem:[%s3 + $0x58] sm:$0xf]
        %v8216 = vld [vmem:[%s3 + $0x5c] sm:$0xf]
        %v8217 = vld [vmem:[%s3 + $0x60] sm:$0xf]
        %v8218 = vld [vmem:[%s3 + $0x64] sm:$0xf]
        %v8219 = vld [vmem:[%s3 + $0x68] sm:$0xf]
        %v8220 = vld [vmem:[%s3 + $0x6c] sm:$0xf]
        %v8221 = vld [vmem:[%s3 + $0x70] sm:$0xf]
        %v8222 = vld [vmem:[%s3 + $0x74] sm:$0xf]
        %v8223 = vld [vmem:[%s3 + $0x78] sm:$0xf]
        %v8224 = vld [vmem:[%s3 + $0x7c] sm:$0xf]
        %v8225 = vld [vmem:[%s3 + $0x80] sm:$0xf]
        %v8226 = vld [vmem:[%s3 + $0x84] sm:$0xf]
        %v8227 = vld [vmem:[%s3 + $0x88] sm:$0xf]
        %v8228 = vld [vmem:[%s3 + $0x8c] sm:$0xf]
        %v8229 = vld [vmem:[%s4] sm:$0x1]
        %v8231 = vlaneseq
        %v8232 = vshrl.u32 %v8231, 7
        %v8233 = vsub.s32 0, %v8232
        %v8234 = vrot.slane %v8229, %v8233
        %v8272 = vunpack.c.l.b16 %v8193
        %v8273 = vunpack.c.l.b16 %v8194
        %v8274 = vunpack.c.l.b16 %v8195
        %v8275 = vunpack.c.l.b16 %v8196
        %v8276 = vunpack.c.l.b16 %v8197
        %v8277 = vunpack.c.l.b16 %v8198
        %v8278 = vunpack.c.l.b16 %v8199
        %v8279 = vunpack.c.l.b16 %v8200
        %v8280 = vunpack.c.l.b16 %v8201
        %v8281 = vunpack.c.l.b16 %v8202
        %v8282 = vunpack.c.l.b16 %v8203
        %v8283 = vunpack.c.l.b16 %v8204
        %v8284 = vunpack.c.l.b16 %v8205
        %v8285 = vunpack.c.l.b16 %v8206
        %v8286 = vunpack.c.l.b16 %v8207
        %v8287 = vunpack.c.l.b16 %v8208
        %v8288 = vunpack.c.l.b16 %v8209
        %v8289 = vunpack.c.l.b16 %v8210
        %v8290 = vunpack.c.l.b16 %v8211
        %v8291 = vunpack.c.l.b16 %v8212
        %v8292 = vunpack.c.l.b16 %v8213
        %v8293 = vunpack.c.l.b16 %v8214
        %v8294 = vunpack.c.l.b16 %v8215
        %v8295 = vunpack.c.l.b16 %v8216
        %v8296 = vunpack.c.l.b16 %v8217
        %v8297 = vunpack.c.l.b16 %v8218
        %v8298 = vunpack.c.l.b16 %v8219
        %v8299 = vunpack.c.l.b16 %v8220
        %v8300 = vunpack.c.l.b16 %v8221
        %v8301 = vunpack.c.l.b16 %v8222
        %v8302 = vunpack.c.l.b16 %v8223
        %v8303 = vunpack.c.l.b16 %v8224
        %v8304 = vunpack.c.l.b16 %v8225
        %v8305 = vunpack.c.l.b16 %v8226
        %v8306 = vunpack.c.l.b16 %v8227
        %v8307 = vunpack.c.l.b16 %v8228
        %v8308 = vpack.c.b16 %v8273, %v8272
        %v8309 = vpack.c.b16 %v8275, %v8274
        %v8310 = vpack.c.b16 %v8277, %v8276
        %v8311 = vpack.c.b16 %v8279, %v8278
        %v8312 = vpack.c.b16 %v8281, %v8280
        %v8313 = vpack.c.b16 %v8283, %v8282
        %v8314 = vpack.c.b16 %v8285, %v8284
        %v8315 = vpack.c.b16 %v8287, %v8286
        %v8316 = vpack.c.b16 %v8289, %v8288
        %v8317 = vpack.c.b16 %v8291, %v8290
        %v8318 = vpack.c.b16 %v8293, %v8292
        %v8319 = vpack.c.b16 %v8295, %v8294
        %v8320 = vpack.c.b16 %v8297, %v8296
        %v8321 = vpack.c.b16 %v8299, %v8298
        %v8322 = vpack.c.b16 %v8301, %v8300
        %v8323 = vpack.c.b16 %v8303, %v8302
        %v8324 = vpack.c.b16 %v8305, %v8304
        %v8325 = vpack.c.b16 %v8307, %v8306
        %v8345 = vsel %vm1085, %v8147, 0
        %v8348 = vsel %vm1085, %v8150, 0
        %v8351 = vsel %vm1085, %v8153, 0
        %v8354 = vsel %vm1085, %v8156, 0
        %v8357 = vsel %vm1085, %v8159, 0
        %v8360 = vsel %vm1085, %v8162, 0
        %v8363 = vsel %vm1085, %v8165, 0
        %v8366 = vsel %vm1085, %v8168, 0
        %v8369 = vsel %vm1085, %v8171, 0
        %v8372 = vsel %vm1085, %v8174, 0
        %v8375 = vsel %vm1085, %v8177, 0
        %v8378 = vsel %vm1085, %v8180, 0
        %v8381 = vsel %vm1085, %v8183, 0
        %v8384 = vsel %vm1085, %v8186, 0
        %v8387 = vsel %vm1085, %v8189, 0
        %v8390 = vsel %vm1085, %v8192, 0
        %8392 = vmatprep.subr.bf16.mxu0 0
        %8393 = vmatpush1.bf16.msra.mxu0 %v8308
        %8394 = vmatprep.subr.bf16.mxu0 0
        %8395 = vmatpush1.bf16.msra.mxu0 %v8309
        %8396 = vmatprep.subr.bf16.mxu0 0
        %8397 = vmatpush1.bf16.msra.mxu0 %v8310
        %8398 = vmatprep.subr.bf16.mxu0 0
        %8399 = vmatpush1.bf16.msra.mxu0 %v8311
        %8400 = vmatprep.subr.bf16.mxu0 0
        %8401 = vmatpush1.bf16.msra.mxu0 %v8312
        %8402 = vmatprep.subr.bf16.mxu0 0
        %8403 = vmatpush1.bf16.msra.mxu0 %v8313
        %8404 = vmatprep.subr.bf16.mxu0 0
        %8405 = vmatpush1.bf16.msra.mxu0 %v8314
        %8406 = vmatprep.subr.bf16.mxu0 0
        %8407 = vmatpush1.bf16.msra.mxu0 %v8315
        %8408 = vmatprep.subr.bf16.mxu0 0
        %8409 = vmatpush1.bf16.msra.mxu0 %v8316
        %8410 = vmatprep.subr.bf16.mxu0 0
        %8411 = vmatpush1.bf16.msra.mxu0 %v8317
        %8412 = vmatprep.subr.bf16.mxu0 0
        %8413 = vmatpush1.bf16.msra.mxu0 %v8318
        %8414 = vmatprep.subr.bf16.mxu0 0
        %8415 = vmatpush1.bf16.msra.mxu0 %v8319
        %8416 = vmatprep.subr.bf16.mxu0 0
        %8417 = vmatpush1.bf16.msra.mxu0 %v8320
        %8418 = vmatprep.subr.bf16.mxu0 0
        %8419 = vmatpush1.bf16.msra.mxu0 %v8321
        %8420 = vmatprep.subr.bf16.mxu0 0
        %8421 = vmatpush1.bf16.msra.mxu0 %v8322
        %8422 = vmatprep.subr.bf16.mxu0 0
        %8423 = vmatpush1.bf16.msra.mxu0 %v8323
        %8424 = vmatprep.mubr.bf16.mxu0 %v8146
        %8425 = vmatmul.mubr.bf16.gmra.mrb[0].mxu0 %v8145
        %v8426 = vpop.f32.mrb[0].mxu0
        %v8427 = vadd.f32 %v8234, %v8426
        %v8428 = vpop.f32.mrb[0].mxu0
        %v8429 = vpop.f32.mrb[0].mxu0
        %v8430 = vadd.f32 %v8234, %v8429
        %v8431 = vpop.f32.mrb[0].mxu0
        %8432 = vmatprep.mubr.bf16.mxu0 %v8149
        %8433 = vmatmul.mubr.bf16.gmra.mrb[0].mxu0 %v8148
        %v8434 = vpop.f32.mrb[0].mxu0
        %v8435 = vadd.f32 %v8234, %v8434
        %v8436 = vpop.f32.mrb[0].mxu0
        %v8437 = vpop.f32.mrb[0].mxu0
        %v8438 = vadd.f32 %v8234, %v8437
        %v8439 = vpop.f32.mrb[0].mxu0
        %8440 = vmatprep.mubr.bf16.mxu0 %v8152
        %8441 = vmatmul.mubr.bf16.gmra.mrb[0].mxu0 %v8151
        %v8442 = vpop.f32.mrb[0].mxu0
        %v8443 = vadd.f32 %v8234, %v8442
        %v8444 = vpop.f32.mrb[0].mxu0
        %v8445 = vpop.f32.mrb[0].mxu0
        %v8446 = vadd.f32 %v8234, %v8445
        %v8447 = vpop.f32.mrb[0].mxu0
        %8448 = vmatprep.mubr.bf16.mxu0 %v8155
        %8449 = vmatmul.mubr.bf16.gmra.mrb[0].mxu0 %v8154
        %v8450 = vpop.f32.mrb[0].mxu0
        %v8451 = vadd.f32 %v8234, %v8450
        %v8452 = vpop.f32.mrb[0].mxu0
        %v8453 = vpop.f32.mrb[0].mxu0
        %v8454 = vadd.f32 %v8234, %v8453
        %v8455 = vpop.f32.mrb[0].mxu0
        %8456 = vmatprep.mubr.bf16.mxu0 %v8158
        %8457 = vmatmul.mubr.bf16.gmra.mrb[0].mxu0 %v8157
        %v8458 = vpop.f32.mrb[0].mxu0
        %v8459 = vadd.f32 %v8234, %v8458
        %v8460 = vpop.f32.mrb[0].mxu0
        %v8461 = vpop.f32.mrb[0].mxu0
        %v8462 = vadd.f32 %v8234, %v8461
        %v8463 = vpop.f32.mrb[0].mxu0
        %8464 = vmatprep.mubr.bf16.mxu0 %v8161
        %8465 = vmatmul.mubr.bf16.gmra.mrb[0].mxu0 %v8160
        %v8466 = vpop.f32.mrb[0].mxu0
        %v8467 = vadd.f32 %v8234, %v8466
        %v8468 = vpop.f32.mrb[0].mxu0
        %v8469 = vpop.f32.mrb[0].mxu0
        %v8470 = vadd.f32 %v8234, %v8469
        %v8471 = vpop.f32.mrb[0].mxu0
        %8472 = vmatprep.mubr.bf16.mxu0 %v8164
        %8473 = vmatmul.mubr.bf16.gmra.mrb[0].mxu0 %v8163
        %v8474 = vpop.f32.mrb[0].mxu0
        %v8475 = vadd.f32 %v8234, %v8474
        %v8476 = vpop.f32.mrb[0].mxu0
        %v8477 = vpop.f32.mrb[0].mxu0
        %v8478 = vadd.f32 %v8234, %v8477
        %v8479 = vpop.f32.mrb[0].mxu0
        %8480 = vmatprep.mubr.bf16.mxu0 %v8167
        %8481 = vmatmul.mubr.bf16.gmra.mrb[0].mxu0 %v8166
        %v8482 = vpop.f32.mrb[0].mxu0
        %v8483 = vadd.f32 %v8234, %v8482
        %v8484 = vpop.f32.mrb[0].mxu0
        %v8485 = vpop.f32.mrb[0].mxu0
        %v8486 = vadd.f32 %v8234, %v8485
        %v8487 = vpop.f32.mrb[0].mxu0
        %8488 = vmatprep.mubr.bf16.mxu0 %v8170
        %8489 = vmatmul.mubr.bf16.gmra.mrb[0].mxu0 %v8169
        %v8490 = vpop.f32.mrb[0].mxu0
        %v8491 = vadd.f32 %v8234, %v8490
        %v8492 = vpop.f32.mrb[0].mxu0
        %v8493 = vpop.f32.mrb[0].mxu0
        %v8494 = vadd.f32 %v8234, %v8493
        %v8495 = vpop.f32.mrb[0].mxu0
        %8496 = vmatprep.mubr.bf16.mxu0 %v8173
        %8497 = vmatmul.mubr.bf16.gmra.mrb[0].mxu0 %v8172
        %v8498 = vpop.f32.mrb[0].mxu0
        %v8499 = vadd.f32 %v8234, %v8498
        %v8500 = vpop.f32.mrb[0].mxu0
        %v8501 = vpop.f32.mrb[0].mxu0
        %v8502 = vadd.f32 %v8234, %v8501
        %v8503 = vpop.f32.mrb[0].mxu0
        %8504 = vmatprep.mubr.bf16.mxu0 %v8176
        %8505 = vmatmul.mubr.bf16.gmra.mrb[0].mxu0 %v8175
        %v8506 = vpop.f32.mrb[0].mxu0
        %v8507 = vadd.f32 %v8234, %v8506
        %v8508 = vpop.f32.mrb[0].mxu0
        %v8509 = vpop.f32.mrb[0].mxu0
        %v8510 = vadd.f32 %v8234, %v8509
        %v8511 = vpop.f32.mrb[0].mxu0
        %8512 = vmatprep.mubr.bf16.mxu0 %v8179
        %8513 = vmatmul.mubr.bf16.gmra.mrb[0].mxu0 %v8178
        %v8514 = vpop.f32.mrb[0].mxu0
        %v8515 = vadd.f32 %v8234, %v8514
        %v8516 = vpop.f32.mrb[0].mxu0
        %v8517 = vpop.f32.mrb[0].mxu0
        %v8518 = vadd.f32 %v8234, %v8517
        %v8519 = vpop.f32.mrb[0].mxu0
        %8520 = vmatprep.mubr.bf16.mxu0 %v8182
        %8521 = vmatmul.mubr.bf16.gmra.mrb[0].mxu0 %v8181
        %v8522 = vpop.f32.mrb[0].mxu0
        %v8523 = vadd.f32 %v8234, %v8522
        %v8524 = vpop.f32.mrb[0].mxu0
        %v8525 = vpop.f32.mrb[0].mxu0
        %v8526 = vadd.f32 %v8234, %v8525
        %v8527 = vpop.f32.mrb[0].mxu0
        %8528 = vmatprep.mubr.bf16.mxu0 %v8185
        %8529 = vmatmul.mubr.bf16.gmra.mrb[0].mxu0 %v8184
        %v8530 = vpop.f32.mrb[0].mxu0
        %v8531 = vadd.f32 %v8234, %v8530
        %v8532 = vpop.f32.mrb[0].mxu0
        %v8533 = vpop.f32.mrb[0].mxu0
        %v8534 = vadd.f32 %v8234, %v8533
        %v8535 = vpop.f32.mrb[0].mxu0
        %8536 = vmatprep.mubr.bf16.mxu0 %v8188
        %8537 = vmatmul.mubr.bf16.gmra.mrb[0].mxu0 %v8187
        %v8538 = vpop.f32.mrb[0].mxu0
        %v8539 = vadd.f32 %v8234, %v8538
        %v8540 = vpop.f32.mrb[0].mxu0
        %v8541 = vpop.f32.mrb[0].mxu0
        %v8542 = vadd.f32 %v8234, %v8541
        %v8543 = vpop.f32.mrb[0].mxu0
        %8544 = vmatprep.mubr.bf16.mxu0 %v8191
        %8545 = vmatmul.mubr.bf16.gmra.mrb[0].mxu0 %v8190
        %v8546 = vpop.f32.mrb[0].mxu0
        %v8547 = vadd.f32 %v8234, %v8546
        %v8548 = vpop.f32.mrb[0].mxu0
        %v8549 = vpop.f32.mrb[0].mxu0
        %v8550 = vadd.f32 %v8234, %v8549
        %v8551 = vpop.f32.mrb[0].mxu0
        %8552 = vdwg.mxu0
        %8553 = vmatprep.subr.bf16.mxu0 0
        %8554 = vmatpush1.bf16.msra.mxu0 %v8324
        %8555 = vmatprep.subr.bf16.mxu0 0
        %8556 = vmatpush1.bf16.msra.mxu0 %v8325
        %8557 = vmatprep.subr.bf16.mxu0 0
        %8558 = vmatpush1.bf16.msra.mxu0 0
        %8559 = vmatprep.subr.bf16.mxu0 0
        %8560 = vmatpush1.bf16.msra.mxu0 0
        %8561 = vmatprep.subr.bf16.mxu0 0
        %8562 = vmatpush1.bf16.msra.mxu0 0
        %8563 = vmatprep.subr.bf16.mxu0 0
        %8564 = vmatpush1.bf16.msra.mxu0 0
        %8565 = vmatprep.subr.bf16.mxu0 0
        %8566 = vmatpush1.bf16.msra.mxu0 0
        %8567 = vmatprep.subr.bf16.mxu0 0
        %8568 = vmatpush1.bf16.msra.mxu0 0
        %8569 = vmatprep.subr.bf16.mxu0 0
        %8570 = vmatpush1.bf16.msra.mxu0 0
        %8571 = vmatprep.subr.bf16.mxu0 0
        %8572 = vmatpush1.bf16.msra.mxu0 0
        %8573 = vmatprep.subr.bf16.mxu0 0
        %8574 = vmatpush1.bf16.msra.mxu0 0
        %8575 = vmatprep.subr.bf16.mxu0 0
        %8576 = vmatpush1.bf16.msra.mxu0 0
        %8577 = vmatprep.subr.bf16.mxu0 0
        %8578 = vmatpush1.bf16.msra.mxu0 0
        %8579 = vmatprep.subr.bf16.mxu0 0
        %8580 = vmatpush1.bf16.msra.mxu0 0
        %8581 = vmatprep.subr.bf16.mxu0 0
        %8582 = vmatpush1.bf16.msra.mxu0 0
        %8583 = vmatprep.subr.bf16.mxu0 0
        %8584 = vmatpush1.bf16.msra.mxu0 0
        %8585 = vmatprep.mubr.bf16.mxu0 0
        %8586 = vmatmul.mubr.bf16.gmra.mrb[0].mxu0 %v8345
        %v8587 = vpop.f32.mrb[0].mxu0
        %v8588 = vadd.f32 %v8427, %v8587
        %v8589 = vpop.f32.mrb[0].mxu0
        %v8590 = vpop.f32.mrb[0].mxu0
        %v8591 = vadd.f32 %v8430, %v8590
        %v8592 = vpop.f32.mrb[0].mxu0
        %8593 = vmatprep.mubr.bf16.mxu0 0
        %8594 = vmatmul.mubr.bf16.gmra.mrb[0].mxu0 %v8348
        %v8595 = vpop.f32.mrb[0].mxu0
        %v8596 = vadd.f32 %v8435, %v8595
        %v8597 = vpop.f32.mrb[0].mxu0
        %v8598 = vpop.f32.mrb[0].mxu0
        %v8599 = vadd.f32 %v8438, %v8598
        %v8600 = vpop.f32.mrb[0].mxu0
        %8601 = vmatprep.mubr.bf16.mxu0 0
        %8602 = vmatmul.mubr.bf16.gmra.mrb[0].mxu0 %v8351
        %v8603 = vpop.f32.mrb[0].mxu0
        %v8604 = vadd.f32 %v8443, %v8603
        %v8605 = vpop.f32.mrb[0].mxu0
        %v8606 = vpop.f32.mrb[0].mxu0
        %v8607 = vadd.f32 %v8446, %v8606
        %v8608 = vpop.f32.mrb[0].mxu0
        %8609 = vmatprep.mubr.bf16.mxu0 0
        %8610 = vmatmul.mubr.bf16.gmra.mrb[0].mxu0 %v8354
        %v8611 = vpop.f32.mrb[0].mxu0
        %v8612 = vadd.f32 %v8451, %v8611
        %v8613 = vpop.f32.mrb[0].mxu0
        %v8614 = vpop.f32.mrb[0].mxu0
        %v8615 = vadd.f32 %v8454, %v8614
        %v8616 = vpop.f32.mrb[0].mxu0
        %8617 = vmatprep.mubr.bf16.mxu0 0
        %8618 = vmatmul.mubr.bf16.gmra.mrb[0].mxu0 %v8357
        %v8619 = vpop.f32.mrb[0].mxu0
        %v8620 = vadd.f32 %v8459, %v8619
        %v8621 = vpop.f32.mrb[0].mxu0
        %v8622 = vpop.f32.mrb[0].mxu0
        %v8623 = vadd.f32 %v8462, %v8622
        %v8624 = vpop.f32.mrb[0].mxu0
        %8625 = vmatprep.mubr.bf16.mxu0 0
        %8626 = vmatmul.mubr.bf16.gmra.mrb[0].mxu0 %v8360
        %v8627 = vpop.f32.mrb[0].mxu0
        %v8628 = vadd.f32 %v8467, %v8627
        %v8629 = vpop.f32.mrb[0].mxu0
        %v8630 = vpop.f32.mrb[0].mxu0
        %v8631 = vadd.f32 %v8470, %v8630
        %v8632 = vpop.f32.mrb[0].mxu0
        %8633 = vmatprep.mubr.bf16.mxu0 0
        %8634 = vmatmul.mubr.bf16.gmra.mrb[0].mxu0 %v8363
        %v8635 = vpop.f32.mrb[0].mxu0
        %v8636 = vadd.f32 %v8475, %v8635
        %v8637 = vpop.f32.mrb[0].mxu0
        %v8638 = vpop.f32.mrb[0].mxu0
        %v8639 = vadd.f32 %v8478, %v8638
        %v8640 = vpop.f32.mrb[0].mxu0
        %8641 = vmatprep.mubr.bf16.mxu0 0
        %8642 = vmatmul.mubr.bf16.gmra.mrb[0].mxu0 %v8366
        %v8643 = vpop.f32.mrb[0].mxu0
        %v8644 = vadd.f32 %v8483, %v8643
        %v8645 = vpop.f32.mrb[0].mxu0
        %v8646 = vpop.f32.mrb[0].mxu0
        %v8647 = vadd.f32 %v8486, %v8646
        %v8648 = vpop.f32.mrb[0].mxu0
        %8649 = vmatprep.mubr.bf16.mxu0 0
        %8650 = vmatmul.mubr.bf16.gmra.mrb[0].mxu0 %v8369
        %v8651 = vpop.f32.mrb[0].mxu0
        %v8652 = vadd.f32 %v8491, %v8651
        %v8653 = vpop.f32.mrb[0].mxu0
        %v8654 = vpop.f32.mrb[0].mxu0
        %v8655 = vadd.f32 %v8494, %v8654
        %v8656 = vpop.f32.mrb[0].mxu0
        %8657 = vmatprep.mubr.bf16.mxu0 0
        %8658 = vmatmul.mubr.bf16.gmra.mrb[0].mxu0 %v8372
        %v8659 = vpop.f32.mrb[0].mxu0
        %v8660 = vadd.f32 %v8499, %v8659
        %v8661 = vpop.f32.mrb[0].mxu0
        %v8662 = vpop.f32.mrb[0].mxu0
        %v8663 = vadd.f32 %v8502, %v8662
        %v8664 = vpop.f32.mrb[0].mxu0
        %8665 = vmatprep.mubr.bf16.mxu0 0
        %8666 = vmatmul.mubr.bf16.gmra.mrb[0].mxu0 %v8375
        %v8667 = vpop.f32.mrb[0].mxu0
        %v8668 = vadd.f32 %v8507, %v8667
        %v8669 = vpop.f32.mrb[0].mxu0
        %v8670 = vpop.f32.mrb[0].mxu0
        %v8671 = vadd.f32 %v8510, %v8670
        %v8672 = vpop.f32.mrb[0].mxu0
        %8673 = vmatprep.mubr.bf16.mxu0 0
        %8674 = vmatmul.mubr.bf16.gmra.mrb[0].mxu0 %v8378
        %v8675 = vpop.f32.mrb[0].mxu0
        %v8676 = vadd.f32 %v8515, %v8675
        %v8677 = vpop.f32.mrb[0].mxu0
        %v8678 = vpop.f32.mrb[0].mxu0
        %v8679 = vadd.f32 %v8518, %v8678
        %v8680 = vpop.f32.mrb[0].mxu0
        %8681 = vmatprep.mubr.bf16.mxu0 0
        %8682 = vmatmul.mubr.bf16.gmra.mrb[0].mxu0 %v8381
        %v8683 = vpop.f32.mrb[0].mxu0
        %v8684 = vadd.f32 %v8523, %v8683
        %v8685 = vpop.f32.mrb[0].mxu0
        %v8686 = vpop.f32.mrb[0].mxu0
        %v8687 = vadd.f32 %v8526, %v8686
        %v8688 = vpop.f32.mrb[0].mxu0
        %8689 = vmatprep.mubr.bf16.mxu0 0
        %8690 = vmatmul.mubr.bf16.gmra.mrb[0].mxu0 %v8384
        %v8691 = vpop.f32.mrb[0].mxu0
        %v8692 = vadd.f32 %v8531, %v8691
        %v8693 = vpop.f32.mrb[0].mxu0
        %v8694 = vpop.f32.mrb[0].mxu0
        %v8695 = vadd.f32 %v8534, %v8694
        %v8696 = vpop.f32.mrb[0].mxu0
        %8697 = vmatprep.mubr.bf16.mxu0 0
        %8698 = vmatmul.mubr.bf16.gmra.mrb[0].mxu0 %v8387
        %v8699 = vpop.f32.mrb[0].mxu0
        %v8700 = vadd.f32 %v8539, %v8699
        %v8701 = vpop.f32.mrb[0].mxu0
        %v8702 = vpop.f32.mrb[0].mxu0
        %v8703 = vadd.f32 %v8542, %v8702
        %v8704 = vpop.f32.mrb[0].mxu0
        %8705 = vmatprep.mubr.bf16.mxu0 0
        %8706 = vmatmul.mubr.bf16.gmra.mrb[0].mxu0 %v8390
        %v8707 = vpop.f32.mrb[0].mxu0
        %v8708 = vadd.f32 %v8547, %v8707
        %v8709 = vpop.f32.mrb[0].mxu0
        %v8710 = vpop.f32.mrb[0].mxu0
        %v8711 = vadd.f32 %v8550, %v8710
        %v8712 = vpop.f32.mrb[0].mxu0
        %8713 = vdwg.mxu0
        %v8714 = vsel %vm1085, %v8588, 0.0
        %v8715 = vsel %vm1085, %v8591, 0.0
        %v8716 = vadd.f32 %v8714, %v8715
        %v8717 = vsel %vm1085, %v8596, 0.0
        %v8718 = vadd.f32 %v8716, %v8717
        %v8719 = vsel %vm1085, %v8599, 0.0
        %v8720 = vadd.f32 %v8718, %v8719
        %v8721 = vsel %vm1085, %v8604, 0.0
        %v8722 = vadd.f32 %v8720, %v8721
        %v8723 = vsel %vm1085, %v8607, 0.0
        %v8724 = vadd.f32 %v8722, %v8723
        %v8725 = vsel %vm1085, %v8612, 0.0
        %v8726 = vadd.f32 %v8724, %v8725
        %v8727 = vsel %vm1085, %v8615, 0.0
        %v8728 = vadd.f32 %v8726, %v8727
        %v8729 = vsel %vm1085, %v8620, 0.0
        %v8730 = vadd.f32 %v8728, %v8729
        %v8731 = vsel %vm1085, %v8623, 0.0
        %v8732 = vadd.f32 %v8730, %v8731
        %v8733 = vsel %vm1085, %v8628, 0.0
        %v8734 = vadd.f32 %v8732, %v8733
        %v8735 = vsel %vm1085, %v8631, 0.0
        %v8736 = vadd.f32 %v8734, %v8735
        %v8737 = vsel %vm1085, %v8636, 0.0
        %v8738 = vadd.f32 %v8736, %v8737
        %v8739 = vsel %vm1085, %v8639, 0.0
        %v8740 = vadd.f32 %v8738, %v8739
        %v8741 = vsel %vm1085, %v8644, 0.0
        %v8742 = vadd.f32 %v8740, %v8741
        %v8743 = vsel %vm1085, %v8647, 0.0
        %v8744 = vadd.f32 %v8742, %v8743
        %v8745 = vsel %vm1085, %v8652, 0.0
        %v8746 = vadd.f32 %v8744, %v8745
        %v8747 = vsel %vm1085, %v8655, 0.0
        %v8748 = vadd.f32 %v8746, %v8747
        %v8749 = vsel %vm1085, %v8660, 0.0
        %v8750 = vadd.f32 %v8748, %v8749
        %v8751 = vsel %vm1085, %v8663, 0.0
        %v8752 = vadd.f32 %v8750, %v8751
        %v8753 = vsel %vm1085, %v8668, 0.0
        %v8754 = vadd.f32 %v8752, %v8753
        %v8755 = vsel %vm1085, %v8671, 0.0
        %v8756 = vadd.f32 %v8754, %v8755
        %v8757 = vsel %vm1085, %v8676, 0.0
        %v8758 = vadd.f32 %v8756, %v8757
        %v8759 = vsel %vm1085, %v8679, 0.0
        %v8760 = vadd.f32 %v8758, %v8759
        %v8761 = vsel %vm1085, %v8684, 0.0
        %v8762 = vadd.f32 %v8760, %v8761
        %v8763 = vsel %vm1085, %v8687, 0.0
        %v8764 = vadd.f32 %v8762, %v8763
        %v8765 = vsel %vm1085, %v8692, 0.0
        %v8766 = vadd.f32 %v8764, %v8765
        %v8767 = vsel %vm1085, %v8695, 0.0
        %v8768 = vadd.f32 %v8766, %v8767
        %v8769 = vsel %vm1085, %v8700, 0.0
        %v8770 = vadd.f32 %v8768, %v8769
        %v8771 = vsel %vm1085, %v8703, 0.0
        %v8772 = vadd.f32 %v8770, %v8771
        %v8773 = vsel %vm1085, %v8708, 0.0
        %v8774 = vadd.f32 %v8772, %v8773
        %v8775 = vsel %vm1085, %v8711, 0.0
        %v8776 = vadd.f32 %v8774, %v8775
        %v8777 = vrot.slane %v8776, 4
        %v8778 = vadd.f32 %v8776, %v8777
        %v8779 = vrot.slane %v8778, 2
        %v8780 = vadd.f32 %v8778, %v8779
        %v8781 = vrot.slane %v8780, 1
        %v8782 = vadd.f32 %v8780, %v8781
        %v8783 = vrcp.pop 256.0
        %v8784 = vmul.f32 %v8782, %v8783
        %v8785 = vld [vmem:[%s5] sm:$0x3]
        %v8786 = vmul.f32 %v8784, %v8785
        %vm8787 = vcmask 254976
        %v8788 = vsel %vm8787, %v8786, 0.0
        %8789 = vadd.xlane.f32.xlu0 %v8788
        %v8790 = vpop.xlane.xlu0 %8789
        %v8791 = vld [vmem:[%s6] sm:$0x3]
        %v8792 = vadd.f32 %v8790, %v8791
        %v8793 = vmax.f32 %v8792, 0.0
        %v8794 = vld [vmem:[%s7] sm:$0x3]
        %8796 = vset.pattern.permute.xlu0 0
        %8797 = vperm.xlu0 %8796, %v8793
        %v8798 = vpop.permute.xlu0 %8797
        %v8800 = vmul.f32 %v8798, %v8794
        %v8801 = vsel %vm8787, %v8800, 0.0
        %v8802 = vrot.slane %v8801, 4
        %v8803 = vadd.f32 %v8801, %v8802
        %v8804 = vrot.slane %v8803, 2
        %v8805 = vadd.f32 %v8803, %v8804
        %v8806 = vrot.slane %v8805, 1
        %v8807 = vadd.f32 %v8805, %v8806
        %v8808 = vld [vmem:[%s8] sm:$0x1]
        %v8809 = vadd.f32 %v8807, %v8808
        %v8810 = vsub.f32 0.0, %v8809
        %v8811 = vmul.f32 %v8810, 1.442695
        %v8812 = vpow.pop %v8811
        %v8813 = vadd.f32 %v8812, 1.0
        %v8814 = vrcp.pop %v8813
        %v8815 = vlaneseq
        %v8816 = vshrl.u32 %v8815, 7
        %v8817 = vsub.s32 0, %v8816
        %v8818 = vrot.slane %v8814, %v8817
        %v8819 = vmul.f32 %v8588, %v8818
        %v8820 = vmul.f32 %v8591, %v8818
        %v8821 = vmul.f32 %v8596, %v8818
        %v8822 = vmul.f32 %v8599, %v8818
        %v8823 = vmul.f32 %v8604, %v8818
        %v8824 = vmul.f32 %v8607, %v8818
        %v8825 = vmul.f32 %v8612, %v8818
        %v8826 = vmul.f32 %v8615, %v8818
        %v8827 = vmul.f32 %v8620, %v8818
        %v8828 = vmul.f32 %v8623, %v8818
        %v8829 = vmul.f32 %v8628, %v8818
        %v8830 = vmul.f32 %v8631, %v8818
        %v8831 = vmul.f32 %v8636, %v8818
        %v8832 = vmul.f32 %v8639, %v8818
        %v8833 = vmul.f32 %v8644, %v8818
        %v8834 = vmul.f32 %v8647, %v8818
        %v8835 = vmul.f32 %v8652, %v8818
        %v8836 = vmul.f32 %v8655, %v8818
        %v8837 = vmul.f32 %v8660, %v8818
        %v8838 = vmul.f32 %v8663, %v8818
        %v8839 = vmul.f32 %v8668, %v8818
        %v8840 = vmul.f32 %v8671, %v8818
        %v8841 = vmul.f32 %v8676, %v8818
        %v8842 = vmul.f32 %v8679, %v8818
        %v8843 = vmul.f32 %v8684, %v8818
        %v8844 = vmul.f32 %v8687, %v8818
        %v8845 = vmul.f32 %v8692, %v8818
        %v8846 = vmul.f32 %v8695, %v8818
        %v8847 = vmul.f32 %v8700, %v8818
        %v8848 = vmul.f32 %v8703, %v8818
        %v8849 = vmul.f32 %v8708, %v8818
        %v8850 = vmul.f32 %v8711, %v8818
        %v8851 = vadd.f32 %v8819, %v388
        %v8852 = vadd.f32 %v8820, %v389
        %v8853 = vadd.f32 %v8821, %v390
        %v8854 = vadd.f32 %v8822, %v391
        %v8855 = vadd.f32 %v8823, %v392
        %v8856 = vadd.f32 %v8824, %v393
        %v8857 = vadd.f32 %v8825, %v394
        %v8858 = vadd.f32 %v8826, %v395
        %v8859 = vadd.f32 %v8827, %v396
        %v8860 = vadd.f32 %v8828, %v397
        %v8861 = vadd.f32 %v8829, %v398
        %v8862 = vadd.f32 %v8830, %v399
        %v8863 = vadd.f32 %v8831, %v400
        %v8864 = vadd.f32 %v8832, %v401
        %v8865 = vadd.f32 %v8833, %v402
        %v8866 = vadd.f32 %v8834, %v403
        %v8867 = vadd.f32 %v8835, %v404
        %v8868 = vadd.f32 %v8836, %v405
        %v8869 = vadd.f32 %v8837, %v406
        %v8870 = vadd.f32 %v8838, %v407
        %v8871 = vadd.f32 %v8839, %v408
        %v8872 = vadd.f32 %v8840, %v409
        %v8873 = vadd.f32 %v8841, %v410
        %v8874 = vadd.f32 %v8842, %v411
        %v8875 = vadd.f32 %v8843, %v412
        %v8876 = vadd.f32 %v8844, %v413
        %v8877 = vadd.f32 %v8845, %v414
        %v8878 = vadd.f32 %v8846, %v415
        %v8879 = vadd.f32 %v8847, %v416
        %v8880 = vadd.f32 %v8848, %v417
        %v8881 = vadd.f32 %v8849, %v418
        %v8882 = vadd.f32 %v8850, %v419
        %8883 = vst.msk [vmem:[%s325] sm:$0xff] %vm1085, %v8851
        %8884 = vst.msk [vmem:[%s325 + $0x8] sm:$0xff] %vm1085, %v8852
        %8885 = vst.msk [vmem:[%s325 + $0x10] sm:$0xff] %vm1085, %v8853
        %8886 = vst.msk [vmem:[%s325 + $0x18] sm:$0xff] %vm1085, %v8854
        %8887 = vst.msk [vmem:[%s325 + $0x20] sm:$0xff] %vm1085, %v8855
        %8888 = vst.msk [vmem:[%s325 + $0x28] sm:$0xff] %vm1085, %v8856
        %8889 = vst.msk [vmem:[%s325 + $0x30] sm:$0xff] %vm1085, %v8857
        %8890 = vst.msk [vmem:[%s325 + $0x38] sm:$0xff] %vm1085, %v8858
        %8891 = vst.msk [vmem:[%s325 + $0x40] sm:$0xff] %vm1085, %v8859
        %8892 = vst.msk [vmem:[%s325 + $0x48] sm:$0xff] %vm1085, %v8860
        %8893 = vst.msk [vmem:[%s325 + $0x50] sm:$0xff] %vm1085, %v8861
        %8894 = vst.msk [vmem:[%s325 + $0x58] sm:$0xff] %vm1085, %v8862
        %8895 = vst.msk [vmem:[%s325 + $0x60] sm:$0xff] %vm1085, %v8863
        %8896 = vst.msk [vmem:[%s325 + $0x68] sm:$0xff] %vm1085, %v8864
        %8897 = vst.msk [vmem:[%s325 + $0x70] sm:$0xff] %vm1085, %v8865
        %8898 = vst.msk [vmem:[%s325 + $0x78] sm:$0xff] %vm1085, %v8866
        %8899 = vst.msk [vmem:[%s325 + $0x80] sm:$0xff] %vm1085, %v8867
        %8900 = vst.msk [vmem:[%s325 + $0x88] sm:$0xff] %vm1085, %v8868
        %8901 = vst.msk [vmem:[%s325 + $0x90] sm:$0xff] %vm1085, %v8869
        %8902 = vst.msk [vmem:[%s325 + $0x98] sm:$0xff] %vm1085, %v8870
        %8903 = vst.msk [vmem:[%s325 + $0xa0] sm:$0xff] %vm1085, %v8871
        %8904 = vst.msk [vmem:[%s325 + $0xa8] sm:$0xff] %vm1085, %v8872
        %8905 = vst.msk [vmem:[%s325 + $0xb0] sm:$0xff] %vm1085, %v8873
        %8906 = vst.msk [vmem:[%s325 + $0xb8] sm:$0xff] %vm1085, %v8874
        %8907 = vst.msk [vmem:[%s325 + $0xc0] sm:$0xff] %vm1085, %v8875
        %8908 = vst.msk [vmem:[%s325 + $0xc8] sm:$0xff] %vm1085, %v8876
        %8909 = vst.msk [vmem:[%s325 + $0xd0] sm:$0xff] %vm1085, %v8877
        %8910 = vst.msk [vmem:[%s325 + $0xd8] sm:$0xff] %vm1085, %v8878
        %8911 = vst.msk [vmem:[%s325 + $0xe0] sm:$0xff] %vm1085, %v8879
        %8912 = vst.msk [vmem:[%s325 + $0xe8] sm:$0xff] %vm1085, %v8880
        %8913 = vst.msk [vmem:[%s325 + $0xf0] sm:$0xff] %vm1085, %v8881
        %8914 = vst.msk [vmem:[%s325 + $0xf8] sm:$0xff] %vm1085, %v8882
        %s8915 = sand.u32 %s225, 1
        %s8916 = scalar_lea.sflag [#allocation5], %s8915
        %s8917 = sand.u32 %s225, 1
        %s8918 = smul.addr %s8917, 256
        %s8919 = scalar_lea.vmem [#allocation4], %s8918
        // Predicated region
        $region57: #{rcab_forward.1} parent=55 // pred_check
          %p8920 = pneg %p235
        $region58: #{rcab_forward.1} parent=55 // pred_check_branch
          %8922 = sbr.rel (%p8920) target = $region60
        $region59: #{rcab_forward.1} parent=55 // pred_region
          %s8924 = ssub.s32 4096, 4096
          %8925 = vsyncadd %s8916, %s8924
          %s8926 = smul.addr %s23, 32
          %s8927 = smul.addr %s8926, 128
          %s8928 = scalar_lea.hbm %s9, %s8927
          %s8929 = sshll.u32 %s8919, 4
          %s8930 = int_to_ptr.vmem [resolvable:$true] %s8929
          %8935 = dma.vmem_to_hbm [thread:$0]  %s8930, 4096, %s8928, %s8916, 128, 128, 8
        $region60: #{rcab_forward.1} parent=55 // pred_fallthru
          _
      $region56: #{rcab_forward.1} parent=5 // pred_fallthru
        _
      %p8936 = scmp.le.s32.totalorder 2, %s18
      // Predicated region
      $region61: #{rcab_forward.1} parent=5 // pred_check
        %p8937 = pneg %p8936
      $region62: #{rcab_forward.1} parent=5 // pred_check_branch
        %8939 = sbr.rel (%p8937) target = $region64
      $region63: #{rcab_forward.1} parent=5 // pred_region
        %s8940 = ssub.s32 %s18, 2
        // Predicated region
        $region65: #{rcab_forward.1} parent=63 // pred_check
          %p8941 = pneg %p241
        $region66: #{rcab_forward.1} parent=63 // pred_check_branch
          %8943 = sbr.rel (%p8941) target = $region68
        $region67: #{rcab_forward.1} parent=63 // pred_region
          %s8944 = sand.u32 %s226, 1
          %s8945 = scalar_lea.sflag [#allocation5], %s8944
          %s8946 = sand.u32 %s226, 1
          %s8947 = smul.addr %s8946, 256
          %s8948 = scalar_lea.vmem [#allocation4], %s8947
          %8949 = dma.done %s8945, 4096
        $region68: #{rcab_forward.1} parent=63 // pred_fallthru
          _
      $region64: #{rcab_forward.1} parent=5 // pred_fallthru
        _
    $region6: #{rcab_forward.1} parent=1 // loop_footer
      %s22 = sadd.s32 1, %s18
    $region7: #{rcab_forward.1} parent=1 // loop_footer_branch
      %17 = sbr.rel target = $region3
    $region8: #{rcab_forward.1} parent=1 // loop_exit
      _
    %8950 = vsyncpa [#allocation5], 1
    %s8951 = scalar_lea.sflag [#allocation5], 1
    %8952 = vsyncpa %s8951, 1

</llo_original>
